<compile_context>
chip_gen: v7x
topology: tpu7x:2x2x1
jax: 0.10.0
libtpu: 0.0.40
codegen_flags: <defaults>
</compile_context>

<pallas_src>
import functools

import jax
import jax.numpy as jnp
import numpy as np
from jax import lax
from jax.experimental import pallas as pl
from jax.experimental.pallas import tpu as pltpu


# ----------------------------- fused VGG block kernel -----------------------------
def _vgg_block_kernel(*refs, num_layers, H, W):
    # refs = (x_ref, w_0, b_0, ..., w_{L-1}, b_{L-1}, o_ref, pad_in, [pad_a, [pad_b]])
    x_ref = refs[0]
    wb_refs = refs[1:1 + 2 * num_layers]
    o_ref = refs[1 + 2 * num_layers]
    scratch = refs[2 + 2 * num_layers:]
    pad_in, interm = scratch[0], scratch[1:]

    # In-kernel halo handling: zero the padded scratch buffers, then fill the interior.
    pad_in[...] = jnp.zeros(pad_in.shape, pad_in.dtype)
    for buf in interm:
        buf[...] = jnp.zeros(buf.shape, buf.dtype)
    pad_in[1:H + 1, 1:W + 1, :] = x_ref[0]                       # (H, W, Cin) bf16

    cur = pad_in
    for layer in range(num_layers):
        w_ref = wb_refs[2 * layer]                               # (3, 3, Cin_l, Cout) bf16
        b_ref = wb_refs[2 * layer + 1]                           # (1, Cout) f32
        cin_l = w_ref.shape[2]
        cout = w_ref.shape[3]

        # 3x3 conv as 9 shifted (H*W, Cin) @ (Cin, Cout) MXU matmuls, bf16 operands,
        # f32 accumulation.  Accumulator is (H*W, Cout) f32 and stays vreg/VMEM resident.
        acc = jnp.zeros((H * W, cout), jnp.float32)
        for dy in range(3):
            for dx in range(3):
                patch = cur[dy:dy + H, dx:dx + W, :]             # (H, W, Cin_l) bf16, static slice
                acc = acc + jnp.dot(patch.reshape(H * W, cin_l),
                                    w_ref[dy, dx],
                                    preferred_element_type=jnp.float32)

        y = jnp.maximum(acc + b_ref[...], 0.0)                   # bias + ReLU in f32
        y = y.reshape(H, W, cout)

        if layer + 1 < num_layers:
            # Next layer's padded input stays in VMEM as bf16 -- no HBM round trip.
            nxt = interm[layer % 2]
            nxt[1:H + 1, 1:W + 1, :] = y.astype(nxt.dtype)
            cur = nxt
        else:
            # Fused 2x2 / stride-2 max-pool on the f32 value (assumes even H, W).
            hh, wh = H // 2, W // 2
            y = jnp.max(y.reshape(hh, 2, W, cout), axis=1)       # pool over H (leading-dim split)
            y = jnp.max(y.reshape(hh, wh, 2, cout), axis=2)      # pool over W
            o_ref[...] = y.reshape(1, hh, wh, cout).astype(o_ref.dtype)


def vgg_block_pallas(x_nhwc, params):
    """x_nhwc: (N, H, W, Cin) f32.  params: list of (w_hwio, b).  Returns (N, H//2, W//2, Cout) f32."""
    N, H, W, cin = x_nhwc.shape
    cout = params[0][0].shape[-1]
    num_layers = len(params)
    hh, wh = H // 2, W // 2

    in_specs = [pl.BlockSpec((1, H, W, cin), lambda n: (n, 0, 0, 0))]
    args = [x_nhwc.astype(jnp.bfloat16)]                         # bf16 storage halves input DMA
    for w, b in params:
        cin_l = w.shape[2]
        in_specs.append(pl.BlockSpec((3, 3, cin_l, cout), lambda n: (0, 0, 0, 0)))
        in_specs.append(pl.BlockSpec((1, cout), lambda n: (0, 0)))
        args.append(w.astype(jnp.bfloat16))                      # bf16 MXU operands
        args.append(b.reshape(1, cout).astype(jnp.float32))      # bias stays f32

    # Padded VMEM scratch: one buffer for the (Cin) input, up to two ping-pong (Cout) buffers
    # for the intermediate layer activations (bf16).
    scratch = [pltpu.VMEM((H + 2, W + 2, cin), jnp.bfloat16)]
    for _ in range(min(num_layers - 1, 2)):
        scratch.append(pltpu.VMEM((H + 2, W + 2, cout), jnp.bfloat16))

    kernel = functools.partial(_vgg_block_kernel, num_layers=num_layers, H=H, W=W)
    return pl.pallas_call(
        kernel,
        out_shape=jax.ShapeDtypeStruct((N, hh, wh, cout), jnp.float32),
        grid=(N,),
        in_specs=in_specs,
        out_specs=pl.BlockSpec((1, hh, wh, cout), lambda n: (n, 0, 0, 0)),
        scratch_shapes=scratch,
        compiler_params=pltpu.CompilerParams(
            dimension_semantics=("parallel",),                   # batch axis -> megacore sharding
            vmem_limit_bytes=32 * 1024 * 1024,
        ),
    )(*args)


# ----------------------------- VGG_BLOCK forward -----------------------------
def init_vgg_block_params(key, in_channel, out_channel, num_layers):
    params = []
    cin = in_channel
    for _ in range(num_layers):
        key, wk, bk = jax.random.split(key, 3)
        w = jax.random.normal(wk, (3, 3, cin, out_channel), jnp.float32) * np.sqrt(
            2.0 / (9.0 * cin))
        b = 0.01 * jax.random.normal(bk, (out_channel,), jnp.float32)
        params.append((w, b))
        cin = out_channel
    return params


@jax.jit
def vgg_block_forward(x_nchw, params):
    # x_nchw: (N, C, H, W) like PyTorch; returns (N, out_channel, H//2, W//2).
    x = jnp.transpose(x_nchw, (0, 2, 3, 1))                      # NCHW -> NHWC (glue)
    y = vgg_block_pallas(x, params)
    return jnp.transpose(y, (0, 3, 1, 2))                        # NHWC -> NCHW (glue)


# ----------------------------- Pure-JAX references -----------------------------
def vgg_block_reference(x_nchw, params, emulate_bf16=False):
    # emulate_bf16=True mirrors the kernel's mixed precision (bf16 operands / bf16
    # intermediate storage, f32 accumulation) so a tight tolerance can be used.
    x = jnp.transpose(x_nchw, (0, 2, 3, 1))
    if emulate_bf16:
        x = x.astype(jnp.bfloat16).astype(jnp.float32)
    for li, (w, b) in enumerate(params):
        if emulate_bf16:
            w = w.astype(jnp.bfloat16).astype(jnp.float32)
        x = lax.conv_general_dilated(
            x, w, window_strides=(1, 1), padding="SAME",
            dimension_numbers=("NHWC", "HWIO", "NHWC")) + b
        x = jnp.maximum(x, 0.0)
        if emulate_bf16 and li + 1 < len(params):
            x = x.astype(jnp.bfloat16).astype(jnp.float32)
    N, H, W, C = x.shape
    x = x.reshape(N, H // 2, 2, W // 2, 2, C).max(axis=(2, 4))
    return jnp.transpose(x, (0, 3, 1, 2))


if __name__ == "__main__":
    key = jax.random.PRNGKey(0)
    key, xk, pk = jax.random.split(key, 3)

    # Small shapes consistent with the module: batch=2, in_channels=4, spatial=16.
    N, Cin, H, W = 2, 4, 16, 16
    out_channel, num_layers = 8, 2

    x = jax.random.normal(xk, (N, Cin, H, W), jnp.float32)
    params = init_vgg_block_params(pk, Cin, out_channel, num_layers)

    out = vgg_block_forward(x, params)
    out = jax.block_until_ready(out)
    assert out.shape == (N, out_channel, H // 2, W // 2), out.shape

    # Tight check against a reference that mirrors the kernel's bf16-operand / f32-accum math.
    ref_bf16 = vgg_block_reference(x, params, emulate_bf16=True)
    np.testing.assert_allclose(np.asarray(out), np.asarray(ref_bf16), rtol=1e-2, atol=1e-2)

    # Loose check against the exact f32 module semantics (bf16 MXU operands => ~1e-2 error).
    ref_f32 = vgg_block_reference(x, params, emulate_bf16=False)
    np.testing.assert_allclose(np.asarray(out), np.asarray(ref_f32), rtol=1e-1, atol=1e-1)

    print("KERNEL_OK")
</pallas_src>

<mosaic_0001>
module attributes {stable_mosaic.version = 11 : i64} {
  func.func @_vgg_block_kernel(%arg0: i32, %arg1: memref<1x16x16x4xbf16, #tpu.memory_space<vmem>>, %arg2: memref<3x3x4x8xbf16, #tpu.memory_space<vmem>>, %arg3: memref<1x8xf32, #tpu.memory_space<vmem>>, %arg4: memref<3x3x8x8xbf16, #tpu.memory_space<vmem>>, %arg5: memref<1x8xf32, #tpu.memory_space<vmem>>, %arg6: memref<1x8x8x8xf32, #tpu.memory_space<vmem>>, %arg7: memref<18x18x4xbf16, #tpu.memory_space<vmem>>, %arg8: memref<18x18x8xbf16, #tpu.memory_space<vmem>>) attributes {dimension_semantics = [#tpu.dimension_semantics<parallel>], iteration_bounds = array<i64: 2>, scalar_prefetch = 0 : i64, scratch_operands = 2 : i64, tpu.core_type = #tpu.core_type<tc>, window_params = [{transform_indices = @transform_0, window_bounds = array<i64: 1, 16, 16, 4>}, {pipeline_mode = #tpu.pipeline_mode<synchronous>, transform_indices = @transform_1, window_bounds = array<i64: 3, 3, 4, 8>}, {pipeline_mode = #tpu.pipeline_mode<synchronous>, transform_indices = @transform_2, window_bounds = array<i64: 1, 8>}, {pipeline_mode = #tpu.pipeline_mode<synchronous>, transform_indices = @transform_3, window_bounds = array<i64: 3, 3, 8, 8>}, {pipeline_mode = #tpu.pipeline_mode<synchronous>, transform_indices = @transform_4, window_bounds = array<i64: 1, 8>}, {transform_indices = @transform_5, window_bounds = array<i64: 1, 8, 8, 8>}]} {
    %cst = arith.constant 0.000000e+00 : bf16
    %0 = vector.broadcast %cst : bf16 to vector<18x18x4xbf16>
    %c0 = arith.constant 0 : index
    %c0_0 = arith.constant 0 : index
    %c0_1 = arith.constant 0 : index
    %1 = vector.load %arg7[%c0, %c0_0, %c0_1] : memref<18x18x4xbf16, #tpu.memory_space<vmem>>, vector<18x18x4xbf16>
    tpu.vector_store %arg7[%c0, %c0_0, %c0_1], %0 {strides = array<i32>} : memref<18x18x4xbf16, #tpu.memory_space<vmem>>, vector<18x18x4xbf16>,
    %cst_2 = arith.constant 0.000000e+00 : bf16
    %2 = vector.broadcast %cst_2 : bf16 to vector<18x18x8xbf16>
    %c0_3 = arith.constant 0 : index
    %c0_4 = arith.constant 0 : index
    %c0_5 = arith.constant 0 : index
    %3 = vector.load %arg8[%c0_3, %c0_4, %c0_5] : memref<18x18x8xbf16, #tpu.memory_space<vmem>>, vector<18x18x8xbf16>
    tpu.vector_store %arg8[%c0_3, %c0_4, %c0_5], %2 {strides = array<i32>} : memref<18x18x8xbf16, #tpu.memory_space<vmem>>, vector<18x18x8xbf16>,
    %c0_6 = arith.constant 0 : index
    %c0_7 = arith.constant 0 : index
    %c0_8 = arith.constant 0 : index
    %c0_9 = arith.constant 0 : index
    %4 = vector.load %arg1[%c0_6, %c0_7, %c0_8, %c0_9] : memref<1x16x16x4xbf16, #tpu.memory_space<vmem>>, vector<1x16x16x4xbf16>
    %5 = vector.shape_cast %4 : vector<1x16x16x4xbf16> to vector<16x16x4xbf16>
    %c1 = arith.constant 1 : index
    %c1_10 = arith.constant 1 : index
    %c0_11 = arith.constant 0 : index
    %6 = vector.load %arg7[%c1, %c1_10, %c0_11] : memref<18x18x4xbf16, #tpu.memory_space<vmem>>, vector<16x16x4xbf16>
    tpu.vector_store %arg7[%c1, %c1_10, %c0_11], %5 {strides = array<i32>} : memref<18x18x4xbf16, #tpu.memory_space<vmem>>, vector<16x16x4xbf16>,
    %cst_12 = arith.constant 0.000000e+00 : f32
    %7 = vector.broadcast %cst_12 : f32 to vector<256x8xf32>
    %c0_13 = arith.constant 0 : index
    %c0_14 = arith.constant 0 : index
    %c0_15 = arith.constant 0 : index
    %8 = vector.load %arg7[%c0_13, %c0_14, %c0_15] : memref<18x18x4xbf16, #tpu.memory_space<vmem>>, vector<16x16x4xbf16>
    %9 = vector.shape_cast %8 : vector<16x16x4xbf16> to vector<256x4xbf16>
    %c0_16 = arith.constant 0 : index
    %c0_17 = arith.constant 0 : index
    %c0_18 = arith.constant 0 : index
    %c0_19 = arith.constant 0 : index
    %10 = vector.load %arg2[%c0_16, %c0_17, %c0_18, %c0_19] : memref<3x3x4x8xbf16, #tpu.memory_space<vmem>>, vector<1x1x4x8xbf16>
    %11 = vector.shape_cast %10 : vector<1x1x4x8xbf16> to vector<4x8xbf16>
    %cst_20 = arith.constant dense<0.000000e+00> : vector<256x8xf32>
    %12 = tpu.matmul %9, %11, %cst_20 {dimension_numbers = #tpu.dot_dimension_numbers<[1], [0], [0], [1], [0, 0, 1, 1], [], []>} : vector<256x4xbf16>, vector<4x8xbf16>, vector<256x8xf32> -> vector<256x8xf32>
    %13 = arith.addf %7, %12 : vector<256x8xf32>
    %c0_21 = arith.constant 0 : index
    %c1_22 = arith.constant 1 : index
    %c0_23 = arith.constant 0 : index
    %14 = vector.load %arg7[%c0_21, %c1_22, %c0_23] : memref<18x18x4xbf16, #tpu.memory_space<vmem>>, vector<16x16x4xbf16>
    %15 = vector.shape_cast %14 : vector<16x16x4xbf16> to vector<256x4xbf16>
    %c0_24 = arith.constant 0 : index
    %c1_25 = arith.constant 1 : index
    %c0_26 = arith.constant 0 : index
    %c0_27 = arith.constant 0 : index
    %16 = vector.load %arg2[%c0_24, %c1_25, %c0_26, %c0_27] : memref<3x3x4x8xbf16, #tpu.memory_space<vmem>>, vector<1x1x4x8xbf16>
    %17 = vector.shape_cast %16 : vector<1x1x4x8xbf16> to vector<4x8xbf16>
    %cst_28 = arith.constant dense<0.000000e+00> : vector<256x8xf32>
    %18 = tpu.matmul %15, %17, %cst_28 {dimension_numbers = #tpu.dot_dimension_numbers<[1], [0], [0], [1], [0, 0, 1, 1], [], []>} : vector<256x4xbf16>, vector<4x8xbf16>, vector<256x8xf32> -> vector<256x8xf32>
    %19 = arith.addf %13, %18 : vector<256x8xf32>
    %c0_29 = arith.constant 0 : index
    %c2 = arith.constant 2 : index
    %c0_30 = arith.constant 0 : index
    %20 = vector.load %arg7[%c0_29, %c2, %c0_30] : memref<18x18x4xbf16, #tpu.memory_space<vmem>>, vector<16x16x4xbf16>
    %21 = vector.shape_cast %20 : vector<16x16x4xbf16> to vector<256x4xbf16>
    %c0_31 = arith.constant 0 : index
    %c2_32 = arith.constant 2 : index
    %c0_33 = arith.constant 0 : index
    %c0_34 = arith.constant 0 : index
    %22 = vector.load %arg2[%c0_31, %c2_32, %c0_33, %c0_34] : memref<3x3x4x8xbf16, #tpu.memory_space<vmem>>, vector<1x1x4x8xbf16>
    %23 = vector.shape_cast %22 : vector<1x1x4x8xbf16> to vector<4x8xbf16>
    %cst_35 = arith.constant dense<0.000000e+00> : vector<256x8xf32>
    %24 = tpu.matmul %21, %23, %cst_35 {dimension_numbers = #tpu.dot_dimension_numbers<[1], [0], [0], [1], [0, 0, 1, 1], [], []>} : vector<256x4xbf16>, vector<4x8xbf16>, vector<256x8xf32> -> vector<256x8xf32>
    %25 = arith.addf %19, %24 : vector<256x8xf32>
    %c1_36 = arith.constant 1 : index
    %c0_37 = arith.constant 0 : index
    %c0_38 = arith.constant 0 : index
    %26 = vector.load %arg7[%c1_36, %c0_37, %c0_38] : memref<18x18x4xbf16, #tpu.memory_space<vmem>>, vector<16x16x4xbf16>
    %27 = vector.shape_cast %26 : vector<16x16x4xbf16> to vector<256x4xbf16>
    %c1_39 = arith.constant 1 : index
    %c0_40 = arith.constant 0 : index
    %c0_41 = arith.constant 0 : index
    %c0_42 = arith.constant 0 : index
    %28 = vector.load %arg2[%c1_39, %c0_40, %c0_41, %c0_42] : memref<3x3x4x8xbf16, #tpu.memory_space<vmem>>, vector<1x1x4x8xbf16>
    %29 = vector.shape_cast %28 : vector<1x1x4x8xbf16> to vector<4x8xbf16>
    %cst_43 = arith.constant dense<0.000000e+00> : vector<256x8xf32>
    %30 = tpu.matmul %27, %29, %cst_43 {dimension_numbers = #tpu.dot_dimension_numbers<[1], [0], [0], [1], [0, 0, 1, 1], [], []>} : vector<256x4xbf16>, vector<4x8xbf16>, vector<256x8xf32> -> vector<256x8xf32>
    %31 = arith.addf %25, %30 : vector<256x8xf32>
    %c1_44 = arith.constant 1 : index
    %c1_45 = arith.constant 1 : index
    %c0_46 = arith.constant 0 : index
    %32 = vector.load %arg7[%c1_44, %c1_45, %c0_46] : memref<18x18x4xbf16, #tpu.memory_space<vmem>>, vector<16x16x4xbf16>
    %33 = vector.shape_cast %32 : vector<16x16x4xbf16> to vector<256x4xbf16>
    %c1_47 = arith.constant 1 : index
    %c1_48 = arith.constant 1 : index
    %c0_49 = arith.constant 0 : index
    %c0_50 = arith.constant 0 : index
    %34 = vector.load %arg2[%c1_47, %c1_48, %c0_49, %c0_50] : memref<3x3x4x8xbf16, #tpu.memory_space<vmem>>, vector<1x1x4x8xbf16>
    %35 = vector.shape_cast %34 : vector<1x1x4x8xbf16> to vector<4x8xbf16>
    %cst_51 = arith.constant dense<0.000000e+00> : vector<256x8xf32>
    %36 = tpu.matmul %33, %35, %cst_51 {dimension_numbers = #tpu.dot_dimension_numbers<[1], [0], [0], [1], [0, 0, 1, 1], [], []>} : vector<256x4xbf16>, vector<4x8xbf16>, vector<256x8xf32> -> vector<256x8xf32>
    %37 = arith.addf %31, %36 : vector<256x8xf32>
    %c1_52 = arith.constant 1 : index
    %c2_53 = arith.constant 2 : index
    %c0_54 = arith.constant 0 : index
    %38 = vector.load %arg7[%c1_52, %c2_53, %c0_54] : memref<18x18x4xbf16, #tpu.memory_space<vmem>>, vector<16x16x4xbf16>
    %39 = vector.shape_cast %38 : vector<16x16x4xbf16> to vector<256x4xbf16>
    %c1_55 = arith.constant 1 : index
    %c2_56 = arith.constant 2 : index
    %c0_57 = arith.constant 0 : index
    %c0_58 = arith.constant 0 : index
    %40 = vector.load %arg2[%c1_55, %c2_56, %c0_57, %c0_58] : memref<3x3x4x8xbf16, #tpu.memory_space<vmem>>, vector<1x1x4x8xbf16>
    %41 = vector.shape_cast %40 : vector<1x1x4x8xbf16> to vector<4x8xbf16>
    %cst_59 = arith.constant dense<0.000000e+00> : vector<256x8xf32>
    %42 = tpu.matmul %39, %41, %cst_59 {dimension_numbers = #tpu.dot_dimension_numbers<[1], [0], [0], [1], [0, 0, 1, 1], [], []>} : vector<256x4xbf16>, vector<4x8xbf16>, vector<256x8xf32> -> vector<256x8xf32>
    %43 = arith.addf %37, %42 : vector<256x8xf32>
    %c2_60 = arith.constant 2 : index
    %c0_61 = arith.constant 0 : index
    %c0_62 = arith.constant 0 : index
    %44 = vector.load %arg7[%c2_60, %c0_61, %c0_62] : memref<18x18x4xbf16, #tpu.memory_space<vmem>>, vector<16x16x4xbf16>
    %45 = vector.shape_cast %44 : vector<16x16x4xbf16> to vector<256x4xbf16>
    %c2_63 = arith.constant 2 : index
    %c0_64 = arith.constant 0 : index
    %c0_65 = arith.constant 0 : index
    %c0_66 = arith.constant 0 : index
    %46 = vector.load %arg2[%c2_63, %c0_64, %c0_65, %c0_66] : memref<3x3x4x8xbf16, #tpu.memory_space<vmem>>, vector<1x1x4x8xbf16>
    %47 = vector.shape_cast %46 : vector<1x1x4x8xbf16> to vector<4x8xbf16>
    %cst_67 = arith.constant dense<0.000000e+00> : vector<256x8xf32>
    %48 = tpu.matmul %45, %47, %cst_67 {dimension_numbers = #tpu.dot_dimension_numbers<[1], [0], [0], [1], [0, 0, 1, 1], [], []>} : vector<256x4xbf16>, vector<4x8xbf16>, vector<256x8xf32> -> vector<256x8xf32>
    %49 = arith.addf %43, %48 : vector<256x8xf32>
    %c2_68 = arith.constant 2 : index
    %c1_69 = arith.constant 1 : index
    %c0_70 = arith.constant 0 : index
    %50 = vector.load %arg7[%c2_68, %c1_69, %c0_70] : memref<18x18x4xbf16, #tpu.memory_space<vmem>>, vector<16x16x4xbf16>
    %51 = vector.shape_cast %50 : vector<16x16x4xbf16> to vector<256x4xbf16>
    %c2_71 = arith.constant 2 : index
    %c1_72 = arith.constant 1 : index
    %c0_73 = arith.constant 0 : index
    %c0_74 = arith.constant 0 : index
    %52 = vector.load %arg2[%c2_71, %c1_72, %c0_73, %c0_74] : memref<3x3x4x8xbf16, #tpu.memory_space<vmem>>, vector<1x1x4x8xbf16>
    %53 = vector.shape_cast %52 : vector<1x1x4x8xbf16> to vector<4x8xbf16>
    %cst_75 = arith.constant dense<0.000000e+00> : vector<256x8xf32>
    %54 = tpu.matmul %51, %53, %cst_75 {dimension_numbers = #tpu.dot_dimension_numbers<[1], [0], [0], [1], [0, 0, 1, 1], [], []>} : vector<256x4xbf16>, vector<4x8xbf16>, vector<256x8xf32> -> vector<256x8xf32>
    %55 = arith.addf %49, %54 : vector<256x8xf32>
    %c2_76 = arith.constant 2 : index
    %c2_77 = arith.constant 2 : index
    %c0_78 = arith.constant 0 : index
    %56 = vector.load %arg7[%c2_76, %c2_77, %c0_78] : memref<18x18x4xbf16, #tpu.memory_space<vmem>>, vector<16x16x4xbf16>
    %57 = vector.shape_cast %56 : vector<16x16x4xbf16> to vector<256x4xbf16>
    %c2_79 = arith.constant 2 : index
    %c2_80 = arith.constant 2 : index
    %c0_81 = arith.constant 0 : index
    %c0_82 = arith.constant 0 : index
    %58 = vector.load %arg2[%c2_79, %c2_80, %c0_81, %c0_82] : memref<3x3x4x8xbf16, #tpu.memory_space<vmem>>, vector<1x1x4x8xbf16>
    %59 = vector.shape_cast %58 : vector<1x1x4x8xbf16> to vector<4x8xbf16>
    %cst_83 = arith.constant dense<0.000000e+00> : vector<256x8xf32>
    %60 = tpu.matmul %57, %59, %cst_83 {dimension_numbers = #tpu.dot_dimension_numbers<[1], [0], [0], [1], [0, 0, 1, 1], [], []>} : vector<256x4xbf16>, vector<4x8xbf16>, vector<256x8xf32> -> vector<256x8xf32>
    %61 = arith.addf %55, %60 : vector<256x8xf32>
    %c0_84 = arith.constant 0 : index
    %c0_85 = arith.constant 0 : index
    %62 = vector.load %arg3[%c0_84, %c0_85] : memref<1x8xf32, #tpu.memory_space<vmem>>, vector<1x8xf32>
    %63 = vector.broadcast %62 : vector<1x8xf32> to vector<256x8xf32>
    %64 = arith.addf %61, %63 : vector<256x8xf32>
    %cst_86 = arith.constant 0.000000e+00 : f32
    %65 = vector.broadcast %cst_86 : f32 to vector<256x8xf32>
    %66 = arith.maximumf %64, %65 : vector<256x8xf32>
    %67 = vector.shape_cast %66 : vector<256x8xf32> to vector<16x16x8xf32>
    %68 = arith.truncf %67 : vector<16x16x8xf32> to vector<16x16x8xbf16>
    %c1_87 = arith.constant 1 : index
    %c1_88 = arith.constant 1 : index
    %c0_89 = arith.constant 0 : index
    %69 = vector.load %arg8[%c1_87, %c1_88, %c0_89] : memref<18x18x8xbf16, #tpu.memory_space<vmem>>, vector<16x16x8xbf16>
    tpu.vector_store %arg8[%c1_87, %c1_88, %c0_89], %68 {strides = array<i32>} : memref<18x18x8xbf16, #tpu.memory_space<vmem>>, vector<16x16x8xbf16>,
    %cst_90 = arith.constant 0.000000e+00 : f32
    %70 = vector.broadcast %cst_90 : f32 to vector<256x8xf32>
    %c0_91 = arith.constant 0 : index
    %c0_92 = arith.constant 0 : index
    %c0_93 = arith.constant 0 : index
    %71 = vector.load %arg8[%c0_91, %c0_92, %c0_93] : memref<18x18x8xbf16, #tpu.memory_space<vmem>>, vector<16x16x8xbf16>
    %72 = vector.shape_cast %71 : vector<16x16x8xbf16> to vector<256x8xbf16>
    %c0_94 = arith.constant 0 : index
    %c0_95 = arith.constant 0 : index
    %c0_96 = arith.constant 0 : index
    %c0_97 = arith.constant 0 : index
    %73 = vector.load %arg4[%c0_94, %c0_95, %c0_96, %c0_97] : memref<3x3x8x8xbf16, #tpu.memory_space<vmem>>, vector<1x1x8x8xbf16>
    %74 = vector.shape_cast %73 : vector<1x1x8x8xbf16> to vector<8x8xbf16>
    %cst_98 = arith.constant dense<0.000000e+00> : vector<256x8xf32>
    %75 = tpu.matmul %72, %74, %cst_98 {dimension_numbers = #tpu.dot_dimension_numbers<[1], [0], [0], [1], [0, 0, 1, 1], [], []>} : vector<256x8xbf16>, vector<8x8xbf16>, vector<256x8xf32> -> vector<256x8xf32>
    %76 = arith.addf %70, %75 : vector<256x8xf32>
    %c0_99 = arith.constant 0 : index
    %c1_100 = arith.constant 1 : index
    %c0_101 = arith.constant 0 : index
    %77 = vector.load %arg8[%c0_99, %c1_100, %c0_101] : memref<18x18x8xbf16, #tpu.memory_space<vmem>>, vector<16x16x8xbf16>
    %78 = vector.shape_cast %77 : vector<16x16x8xbf16> to vector<256x8xbf16>
    %c0_102 = arith.constant 0 : index
    %c1_103 = arith.constant 1 : index
    %c0_104 = arith.constant 0 : index
    %c0_105 = arith.constant 0 : index
    %79 = vector.load %arg4[%c0_102, %c1_103, %c0_104, %c0_105] : memref<3x3x8x8xbf16, #tpu.memory_space<vmem>>, vector<1x1x8x8xbf16>
    %80 = vector.shape_cast %79 : vector<1x1x8x8xbf16> to vector<8x8xbf16>
    %cst_106 = arith.constant dense<0.000000e+00> : vector<256x8xf32>
    %81 = tpu.matmul %78, %80, %cst_106 {dimension_numbers = #tpu.dot_dimension_numbers<[1], [0], [0], [1], [0, 0, 1, 1], [], []>} : vector<256x8xbf16>, vector<8x8xbf16>, vector<256x8xf32> -> vector<256x8xf32>
    %82 = arith.addf %76, %81 : vector<256x8xf32>
    %c0_107 = arith.constant 0 : index
    %c2_108 = arith.constant 2 : index
    %c0_109 = arith.constant 0 : index
    %83 = vector.load %arg8[%c0_107, %c2_108, %c0_109] : memref<18x18x8xbf16, #tpu.memory_space<vmem>>, vector<16x16x8xbf16>
    %84 = vector.shape_cast %83 : vector<16x16x8xbf16> to vector<256x8xbf16>
    %c0_110 = arith.constant 0 : index
    %c2_111 = arith.constant 2 : index
    %c0_112 = arith.constant 0 : index
    %c0_113 = arith.constant 0 : index
    %85 = vector.load %arg4[%c0_110, %c2_111, %c0_112, %c0_113] : memref<3x3x8x8xbf16, #tpu.memory_space<vmem>>, vector<1x1x8x8xbf16>
    %86 = vector.shape_cast %85 : vector<1x1x8x8xbf16> to vector<8x8xbf16>
    %cst_114 = arith.constant dense<0.000000e+00> : vector<256x8xf32>
    %87 = tpu.matmul %84, %86, %cst_114 {dimension_numbers = #tpu.dot_dimension_numbers<[1], [0], [0], [1], [0, 0, 1, 1], [], []>} : vector<256x8xbf16>, vector<8x8xbf16>, vector<256x8xf32> -> vector<256x8xf32>
    %88 = arith.addf %82, %87 : vector<256x8xf32>
    %c1_115 = arith.constant 1 : index
    %c0_116 = arith.constant 0 : index
    %c0_117 = arith.constant 0 : index
    %89 = vector.load %arg8[%c1_115, %c0_116, %c0_117] : memref<18x18x8xbf16, #tpu.memory_space<vmem>>, vector<16x16x8xbf16>
    %90 = vector.shape_cast %89 : vector<16x16x8xbf16> to vector<256x8xbf16>
    %c1_118 = arith.constant 1 : index
    %c0_119 = arith.constant 0 : index
    %c0_120 = arith.constant 0 : index
    %c0_121 = arith.constant 0 : index
    %91 = vector.load %arg4[%c1_118, %c0_119, %c0_120, %c0_121] : memref<3x3x8x8xbf16, #tpu.memory_space<vmem>>, vector<1x1x8x8xbf16>
    %92 = vector.shape_cast %91 : vector<1x1x8x8xbf16> to vector<8x8xbf16>
    %cst_122 = arith.constant dense<0.000000e+00> : vector<256x8xf32>
    %93 = tpu.matmul %90, %92, %cst_122 {dimension_numbers = #tpu.dot_dimension_numbers<[1], [0], [0], [1], [0, 0, 1, 1], [], []>} : vector<256x8xbf16>, vector<8x8xbf16>, vector<256x8xf32> -> vector<256x8xf32>
    %94 = arith.addf %88, %93 : vector<256x8xf32>
    %c1_123 = arith.constant 1 : index
    %c1_124 = arith.constant 1 : index
    %c0_125 = arith.constant 0 : index
    %95 = vector.load %arg8[%c1_123, %c1_124, %c0_125] : memref<18x18x8xbf16, #tpu.memory_space<vmem>>, vector<16x16x8xbf16>
    %96 = vector.shape_cast %95 : vector<16x16x8xbf16> to vector<256x8xbf16>
    %c1_126 = arith.constant 1 : index
    %c1_127 = arith.constant 1 : index
    %c0_128 = arith.constant 0 : index
    %c0_129 = arith.constant 0 : index
    %97 = vector.load %arg4[%c1_126, %c1_127, %c0_128, %c0_129] : memref<3x3x8x8xbf16, #tpu.memory_space<vmem>>, vector<1x1x8x8xbf16>
    %98 = vector.shape_cast %97 : vector<1x1x8x8xbf16> to vector<8x8xbf16>
    %cst_130 = arith.constant dense<0.000000e+00> : vector<256x8xf32>
    %99 = tpu.matmul %96, %98, %cst_130 {dimension_numbers = #tpu.dot_dimension_numbers<[1], [0], [0], [1], [0, 0, 1, 1], [], []>} : vector<256x8xbf16>, vector<8x8xbf16>, vector<256x8xf32> -> vector<256x8xf32>
    %100 = arith.addf %94, %99 : vector<256x8xf32>
    %c1_131 = arith.constant 1 : index
    %c2_132 = arith.constant 2 : index
    %c0_133 = arith.constant 0 : index
    %101 = vector.load %arg8[%c1_131, %c2_132, %c0_133] : memref<18x18x8xbf16, #tpu.memory_space<vmem>>, vector<16x16x8xbf16>
    %102 = vector.shape_cast %101 : vector<16x16x8xbf16> to vector<256x8xbf16>
    %c1_134 = arith.constant 1 : index
    %c2_135 = arith.constant 2 : index
    %c0_136 = arith.constant 0 : index
    %c0_137 = arith.constant 0 : index
    %103 = vector.load %arg4[%c1_134, %c2_135, %c0_136, %c0_137] : memref<3x3x8x8xbf16, #tpu.memory_space<vmem>>, vector<1x1x8x8xbf16>
    %104 = vector.shape_cast %103 : vector<1x1x8x8xbf16> to vector<8x8xbf16>
    %cst_138 = arith.constant dense<0.000000e+00> : vector<256x8xf32>
    %105 = tpu.matmul %102, %104, %cst_138 {dimension_numbers = #tpu.dot_dimension_numbers<[1], [0], [0], [1], [0, 0, 1, 1], [], []>} : vector<256x8xbf16>, vector<8x8xbf16>, vector<256x8xf32> -> vector<256x8xf32>
    %106 = arith.addf %100, %105 : vector<256x8xf32>
    %c2_139 = arith.constant 2 : index
    %c0_140 = arith.constant 0 : index
    %c0_141 = arith.constant 0 : index
    %107 = vector.load %arg8[%c2_139, %c0_140, %c0_141] : memref<18x18x8xbf16, #tpu.memory_space<vmem>>, vector<16x16x8xbf16>
    %108 = vector.shape_cast %107 : vector<16x16x8xbf16> to vector<256x8xbf16>
    %c2_142 = arith.constant 2 : index
    %c0_143 = arith.constant 0 : index
    %c0_144 = arith.constant 0 : index
    %c0_145 = arith.constant 0 : index
    %109 = vector.load %arg4[%c2_142, %c0_143, %c0_144, %c0_145] : memref<3x3x8x8xbf16, #tpu.memory_space<vmem>>, vector<1x1x8x8xbf16>
    %110 = vector.shape_cast %109 : vector<1x1x8x8xbf16> to vector<8x8xbf16>
    %cst_146 = arith.constant dense<0.000000e+00> : vector<256x8xf32>
    %111 = tpu.matmul %108, %110, %cst_146 {dimension_numbers = #tpu.dot_dimension_numbers<[1], [0], [0], [1], [0, 0, 1, 1], [], []>} : vector<256x8xbf16>, vector<8x8xbf16>, vector<256x8xf32> -> vector<256x8xf32>
    %112 = arith.addf %106, %111 : vector<256x8xf32>
    %c2_147 = arith.constant 2 : index
    %c1_148 = arith.constant 1 : index
    %c0_149 = arith.constant 0 : index
    %113 = vector.load %arg8[%c2_147, %c1_148, %c0_149] : memref<18x18x8xbf16, #tpu.memory_space<vmem>>, vector<16x16x8xbf16>
    %114 = vector.shape_cast %113 : vector<16x16x8xbf16> to vector<256x8xbf16>
    %c2_150 = arith.constant 2 : index
    %c1_151 = arith.constant 1 : index
    %c0_152 = arith.constant 0 : index
    %c0_153 = arith.constant 0 : index
    %115 = vector.load %arg4[%c2_150, %c1_151, %c0_152, %c0_153] : memref<3x3x8x8xbf16, #tpu.memory_space<vmem>>, vector<1x1x8x8xbf16>
    %116 = vector.shape_cast %115 : vector<1x1x8x8xbf16> to vector<8x8xbf16>
    %cst_154 = arith.constant dense<0.000000e+00> : vector<256x8xf32>
    %117 = tpu.matmul %114, %116, %cst_154 {dimension_numbers = #tpu.dot_dimension_numbers<[1], [0], [0], [1], [0, 0, 1, 1], [], []>} : vector<256x8xbf16>, vector<8x8xbf16>, vector<256x8xf32> -> vector<256x8xf32>
    %118 = arith.addf %112, %117 : vector<256x8xf32>
    %c2_155 = arith.constant 2 : index
    %c2_156 = arith.constant 2 : index
    %c0_157 = arith.constant 0 : index
    %119 = vector.load %arg8[%c2_155, %c2_156, %c0_157] : memref<18x18x8xbf16, #tpu.memory_space<vmem>>, vector<16x16x8xbf16>
    %120 = vector.shape_cast %119 : vector<16x16x8xbf16> to vector<256x8xbf16>
    %c2_158 = arith.constant 2 : index
    %c2_159 = arith.constant 2 : index
    %c0_160 = arith.constant 0 : index
    %c0_161 = arith.constant 0 : index
    %121 = vector.load %arg4[%c2_158, %c2_159, %c0_160, %c0_161] : memref<3x3x8x8xbf16, #tpu.memory_space<vmem>>, vector<1x1x8x8xbf16>
    %122 = vector.shape_cast %121 : vector<1x1x8x8xbf16> to vector<8x8xbf16>
    %cst_162 = arith.constant dense<0.000000e+00> : vector<256x8xf32>
    %123 = tpu.matmul %120, %122, %cst_162 {dimension_numbers = #tpu.dot_dimension_numbers<[1], [0], [0], [1], [0, 0, 1, 1], [], []>} : vector<256x8xbf16>, vector<8x8xbf16>, vector<256x8xf32> -> vector<256x8xf32>
    %124 = arith.addf %118, %123 : vector<256x8xf32>
    %c0_163 = arith.constant 0 : index
    %c0_164 = arith.constant 0 : index
    %125 = vector.load %arg5[%c0_163, %c0_164] : memref<1x8xf32, #tpu.memory_space<vmem>>, vector<1x8xf32>
    %126 = vector.broadcast %125 : vector<1x8xf32> to vector<256x8xf32>
    %127 = arith.addf %124, %126 : vector<256x8xf32>
    %cst_165 = arith.constant 0.000000e+00 : f32
    %128 = vector.broadcast %cst_165 : f32 to vector<256x8xf32>
    %129 = arith.maximumf %127, %128 : vector<256x8xf32>
    %130 = vector.shape_cast %129 : vector<256x8xf32> to vector<16x16x8xf32>
    %131 = vector.shape_cast %130 : vector<16x16x8xf32> to vector<8x2x16x8xf32>
    %cst_166 = arith.constant dense<0xFF800000> : vector<8x16x8xf32>
    %132 = vector.multi_reduction <maximumf>, %131, %cst_166 [1] : vector<8x2x16x8xf32> to vector<8x16x8xf32>
    %133 = vector.shape_cast %132 : vector<8x16x8xf32> to vector<8x8x2x8xf32>
    %cst_167 = arith.constant dense<0xFF800000> : vector<8x8x8xf32>
    %134 = vector.multi_reduction <maximumf>, %133, %cst_167 [2] : vector<8x8x2x8xf32> to vector<8x8x8xf32>
    %135 = vector.shape_cast %134 : vector<8x8x8xf32> to vector<1x8x8x8xf32>
    %c0_168 = arith.constant 0 : index
    %c0_169 = arith.constant 0 : index
    %c0_170 = arith.constant 0 : index
    %c0_171 = arith.constant 0 : index
    %136 = vector.load %arg6[%c0_168, %c0_169, %c0_170, %c0_171] : memref<1x8x8x8xf32, #tpu.memory_space<vmem>>, vector<1x8x8x8xf32>
    tpu.vector_store %arg6[%c0_168, %c0_169, %c0_170, %c0_171], %135 {strides = array<i32>} : memref<1x8x8x8xf32, #tpu.memory_space<vmem>>, vector<1x8x8x8xf32>,
    return
  }
  func.func @transform_0(%arg0: i32) -> (i32, i32, i32, i32) {
    %c0_i32 = arith.constant 0 : i32
    %c0_i32_0 = arith.constant 0 : i32
    %c0_i32_1 = arith.constant 0 : i32
    %c0_i32_2 = arith.constant 0 : i32
    return %arg0, %c0_i32, %c0_i32_0, %c0_i32_1 : i32, i32, i32, i32
  }
  func.func @transform_1(%arg0: i32) -> (i32, i32, i32, i32) {
    %c0_i32 = arith.constant 0 : i32
    %c0_i32_0 = arith.constant 0 : i32
    %c0_i32_1 = arith.constant 0 : i32
    %c0_i32_2 = arith.constant 0 : i32
    %c0_i32_3 = arith.constant 0 : i32
    return %c0_i32, %c0_i32_0, %c0_i32_1, %c0_i32_2 : i32, i32, i32, i32
  }
  func.func @transform_2(%arg0: i32) -> (i32, i32) {
    %c0_i32 = arith.constant 0 : i32
    %c0_i32_0 = arith.constant 0 : i32
    %c0_i32_1 = arith.constant 0 : i32
    return %c0_i32, %c0_i32_0 : i32, i32
  }
  func.func @transform_3(%arg0: i32) -> (i32, i32, i32, i32) {
    %c0_i32 = arith.constant 0 : i32
    %c0_i32_0 = arith.constant 0 : i32
    %c0_i32_1 = arith.constant 0 : i32
    %c0_i32_2 = arith.constant 0 : i32
    %c0_i32_3 = arith.constant 0 : i32
    return %c0_i32, %c0_i32_0, %c0_i32_1, %c0_i32_2 : i32, i32, i32, i32
  }
  func.func @transform_4(%arg0: i32) -> (i32, i32) {
    %c0_i32 = arith.constant 0 : i32
    %c0_i32_0 = arith.constant 0 : i32
    %c0_i32_1 = arith.constant 0 : i32
    return %c0_i32, %c0_i32_0 : i32, i32
  }
  func.func @transform_5(%arg0: i32) -> (i32, i32, i32, i32) {
    %c0_i32 = arith.constant 0 : i32
    %c0_i32_0 = arith.constant 0 : i32
    %c0_i32_1 = arith.constant 0 : i32
    %c0_i32_2 = arith.constant 0 : i32
    return %arg0, %c0_i32, %c0_i32_0, %c0_i32_1 : i32, i32, i32, i32
  }
}

</mosaic_0001>

<llo_original>
// kernel: vgg_block_forward.1
$region0: #{vgg_block_forward.1}
  #allocation0 [shape = 'u32[]', space=smem, size = 0x4, offset = 0x4, fixed_abs, tag = 'smem constant byte address 0x4 - core index']
  #allocation1 [shape = 'u32[144,128]{1,0:T(1,128)}', space=vmem, size = 0x12000, scoped, tag = 'internal scratch']
  #allocation2 [shape = 'bf16[18,18,4]{2,1,0:T(8,128)(2,1)}', space=vmem, size = 0x1b000, scoped, tag = 'scratch operand']
  #allocation3 [shape = 'bf16[18,18,8]{2,1,0:T(8,128)(2,1)}', space=vmem, size = 0x1b000, scoped, tag = 'scratch operand']
  %s0 = inlined_call_operand.vmem [shape: bf16[2,16,16,4], index: 0, kind: input, shape index: {}]
  %s1 = inlined_call_operand.vmem [shape: bf16[3,3,4,8], index: 1, kind: input, shape index: {}]
  %s2 = inlined_call_operand.vmem [shape: f32[1,8], index: 2, kind: input, shape index: {}]
  %s3 = inlined_call_operand.vmem [shape: bf16[3,3,8,8], index: 3, kind: input, shape index: {}]
  %s4 = inlined_call_operand.vmem [shape: f32[1,8], index: 4, kind: input, shape index: {}]
  %s5 = inlined_call_operand.vmem [shape: f32[2,8,8,8], index: 5, kind: output, shape index: {}]
  %s6 = sld [smem:[#allocation0]]
  $region53: #{vgg_block_forward.1} parent=0
    _
  %s8 = ssub.s32 1, %s6
  %s9 = scalar_select 0, %s8, %s6
  loop: start=0, step=1, limit=4
  $region2: #{vgg_block_forward.1} parent=0 // loop_pre_header
    _
  $region3: #{vgg_block_forward.1} parent=0 // loop_header
    %s11 = sphi 0, %s15
    %p12 = scmp.ge.s32.totalorder %s11, 4
    %s21 = sphi 0, %s23
    %s24 = sphi 0, %s21
    %s25 = sphi 0, %s24
    %s41 = sphi 0, %s25
    %s45 = sphi 0, %s45
    %s47 = sphi 0, %s45
    %s48 = sphi 0, %s47
    %s62 = sphi 0, %s48
    %s66 = sphi 0, %s66
    %s68 = sphi 0, %s66
    %s69 = sphi 0, %s68
    %s83 = sphi 0, %s69
    %s87 = sphi 0, %s87
    %s89 = sphi 0, %s87
    %s90 = sphi 0, %s89
    %s104 = sphi 0, %s90
    %s108 = sphi 0, %s108
    %s110 = sphi 0, %s108
    %s111 = sphi 0, %s110
    %s125 = sphi 0, %s111
    %s131 = sphi 0, %s133
    %s134 = sphi 0, %s131
    %s135 = sphi 0, %s134
    %s151 = sphi 0, %s135
  $region4: #{vgg_block_forward.1} parent=0 // loop_header_branch
    %14 = sbr.rel (%p12) target = $region8
  $region5: #{vgg_block_forward.1} parent=0 // loop_body
    %s16 = ssub.s32 %s11, 1
    %s17 = ssub.s32 %s11, 2
    %s18 = sadd.s32 %s11, 1
    %s19 = ssub.s32 %s11, %s18
    %p20 = scmp.eq.s32.totalorder %s19, 0
    %s22 = sadd.s32 %s21, 1
    %s23 = scalar_select %p20, %s21, %s22
    %p26 = pneg %p20
    %p27 = scmp.eq.s32.totalorder %s11, 1
    %p28 = por %p26, %p27
    %p29 = scmp.ne.s32.totalorder %s21, %s24
    %p30 = scmp.eq.s32.totalorder %s11, 0
    %p31 = por %p29, %p30
    %p32 = scmp.ne.s32.totalorder %s21, %s24
    %p33 = scmp.eq.s32.totalorder %s16, 1
    %p34 = por %p32, %p33
    %p35 = scmp.ne.s32.totalorder %s24, %s25
    %p36 = scmp.eq.s32.totalorder %s16, 0
    %p37 = por %p35, %p36
    %p38 = scmp.ne.s32.totalorder %s24, %s25
    %p39 = scmp.eq.s32.totalorder %s17, 1
    %p40 = por %p38, %p39
    %p42 = scmp.ne.s32.totalorder %s25, %s41
    %p43 = scmp.eq.s32.totalorder %s17, 0
    %p44 = por %p42, %p43
    %s46 = sadd.s32 %s45, 1
    %p49 = scmp.eq.s32.totalorder %s11, 1
    %p50 = scmp.ne.s32.totalorder %s45, %s47
    %p51 = scmp.eq.s32.totalorder %s11, 0
    %p52 = por %p50, %p51
    %p53 = scmp.ne.s32.totalorder %s45, %s47
    %p54 = scmp.eq.s32.totalorder %s16, 1
    %p55 = por %p53, %p54
    %p56 = scmp.ne.s32.totalorder %s47, %s48
    %p57 = scmp.eq.s32.totalorder %s16, 0
    %p58 = por %p56, %p57
    %p59 = scmp.ne.s32.totalorder %s47, %s48
    %p60 = scmp.eq.s32.totalorder %s17, 1
    %p61 = por %p59, %p60
    %p63 = scmp.ne.s32.totalorder %s48, %s62
    %p64 = scmp.eq.s32.totalorder %s17, 0
    %p65 = por %p63, %p64
    %s67 = sadd.s32 %s66, 1
    %p70 = scmp.eq.s32.totalorder %s11, 1
    %p71 = scmp.ne.s32.totalorder %s66, %s68
    %p72 = scmp.eq.s32.totalorder %s11, 0
    %p73 = por %p71, %p72
    %p74 = scmp.ne.s32.totalorder %s66, %s68
    %p75 = scmp.eq.s32.totalorder %s16, 1
    %p76 = por %p74, %p75
    %p77 = scmp.ne.s32.totalorder %s68, %s69
    %p78 = scmp.eq.s32.totalorder %s16, 0
    %p79 = por %p77, %p78
    %p80 = scmp.ne.s32.totalorder %s68, %s69
    %p81 = scmp.eq.s32.totalorder %s17, 1
    %p82 = por %p80, %p81
    %p84 = scmp.ne.s32.totalorder %s69, %s83
    %p85 = scmp.eq.s32.totalorder %s17, 0
    %p86 = por %p84, %p85
    %s88 = sadd.s32 %s87, 1
    %p91 = scmp.eq.s32.totalorder %s11, 1
    %p92 = scmp.ne.s32.totalorder %s87, %s89
    %p93 = scmp.eq.s32.totalorder %s11, 0
    %p94 = por %p92, %p93
    %p95 = scmp.ne.s32.totalorder %s87, %s89
    %p96 = scmp.eq.s32.totalorder %s16, 1
    %p97 = por %p95, %p96
    %p98 = scmp.ne.s32.totalorder %s89, %s90
    %p99 = scmp.eq.s32.totalorder %s16, 0
    %p100 = por %p98, %p99
    %p101 = scmp.ne.s32.totalorder %s89, %s90
    %p102 = scmp.eq.s32.totalorder %s17, 1
    %p103 = por %p101, %p102
    %p105 = scmp.ne.s32.totalorder %s90, %s104
    %p106 = scmp.eq.s32.totalorder %s17, 0
    %p107 = por %p105, %p106
    %s109 = sadd.s32 %s108, 1
    %p112 = scmp.eq.s32.totalorder %s11, 1
    %p113 = scmp.ne.s32.totalorder %s108, %s110
    %p114 = scmp.eq.s32.totalorder %s11, 0
    %p115 = por %p113, %p114
    %p116 = scmp.ne.s32.totalorder %s108, %s110
    %p117 = scmp.eq.s32.totalorder %s16, 1
    %p118 = por %p116, %p117
    %p119 = scmp.ne.s32.totalorder %s110, %s111
    %p120 = scmp.eq.s32.totalorder %s16, 0
    %p121 = por %p119, %p120
    %p122 = scmp.ne.s32.totalorder %s110, %s111
    %p123 = scmp.eq.s32.totalorder %s17, 1
    %p124 = por %p122, %p123
    %p126 = scmp.ne.s32.totalorder %s111, %s125
    %p127 = scmp.eq.s32.totalorder %s17, 0
    %p128 = por %p126, %p127
    %s129 = ssub.s32 %s11, %s18
    %p130 = scmp.eq.s32.totalorder %s129, 0
    %s132 = sadd.s32 %s131, 1
    %s133 = scalar_select %p130, %s131, %s132
    %p136 = pneg %p130
    %p137 = scmp.eq.s32.totalorder %s11, 1
    %p138 = por %p136, %p137
    %p139 = scmp.ne.s32.totalorder %s131, %s134
    %p140 = scmp.eq.s32.totalorder %s11, 0
    %p141 = por %p139, %p140
    %p142 = scmp.ne.s32.totalorder %s131, %s134
    %p143 = scmp.eq.s32.totalorder %s16, 1
    %p144 = por %p142, %p143
    %p145 = scmp.ne.s32.totalorder %s134, %s135
    %p146 = scmp.eq.s32.totalorder %s16, 0
    %p147 = por %p145, %p146
    %p148 = scmp.ne.s32.totalorder %s134, %s135
    %p149 = scmp.eq.s32.totalorder %s17, 1
    %p150 = por %p148, %p149
    %p152 = scmp.ne.s32.totalorder %s135, %s151
    %p153 = scmp.eq.s32.totalorder %s17, 0
    %p154 = por %p152, %p153
    %p155 = scmp.le.s32.totalorder 1, %s11
    %p156 = scmp.lt.s32.totalorder %s11, 3
    %p157 = pnand %p155, %p156
    %p158 = pneg %p157
    // Predicated region
    $region9: #{vgg_block_forward.1} parent=5 // pred_check
      _
    $region10: #{vgg_block_forward.1} parent=5 // pred_check_branch
      %160 = sbr.rel (%p157) target = $region12
    $region11: #{vgg_block_forward.1} parent=5 // pred_region
      %s161 = ssub.s32 %s11, 1
      // Predicated region
      $region13: #{vgg_block_forward.1} parent=11 // pred_check
        %p162 = pneg %p58
      $region14: #{vgg_block_forward.1} parent=11 // pred_check_branch
        %164 = sbr.rel (%p162) target = $region16
      $region15: #{vgg_block_forward.1} parent=11 // pred_region
        _
      $region16: #{vgg_block_forward.1} parent=11 // pred_fallthru
        _
      // Predicated region
      $region17: #{vgg_block_forward.1} parent=11 // pred_check
        %p165 = pneg %p79
      $region18: #{vgg_block_forward.1} parent=11 // pred_check_branch
        %167 = sbr.rel (%p165) target = $region20
      $region19: #{vgg_block_forward.1} parent=11 // pred_region
        _
      $region20: #{vgg_block_forward.1} parent=11 // pred_fallthru
        _
      // Predicated region
      $region21: #{vgg_block_forward.1} parent=11 // pred_check
        %p168 = pneg %p100
      $region22: #{vgg_block_forward.1} parent=11 // pred_check_branch
        %170 = sbr.rel (%p168) target = $region24
      $region23: #{vgg_block_forward.1} parent=11 // pred_region
        _
      $region24: #{vgg_block_forward.1} parent=11 // pred_fallthru
        _
      // Predicated region
      $region25: #{vgg_block_forward.1} parent=11 // pred_check
        %p171 = pneg %p121
      $region26: #{vgg_block_forward.1} parent=11 // pred_check_branch
        %173 = sbr.rel (%p171) target = $region28
      $region27: #{vgg_block_forward.1} parent=11 // pred_region
        _
      $region28: #{vgg_block_forward.1} parent=11 // pred_fallthru
        _
    $region12: #{vgg_block_forward.1} parent=5 // pred_fallthru
      _
    %p174 = scmp.lt.s32.totalorder %s11, 2
    // Predicated region
    $region29: #{vgg_block_forward.1} parent=5 // pred_check
      %p175 = pneg %p174
    $region30: #{vgg_block_forward.1} parent=5 // pred_check_branch
      %177 = sbr.rel (%p175) target = $region32
    $region31: #{vgg_block_forward.1} parent=5 // pred_region
      // Predicated region
      $region33: #{vgg_block_forward.1} parent=31 // pred_check
        %p178 = pneg %p31
      $region34: #{vgg_block_forward.1} parent=31 // pred_check_branch
        %180 = sbr.rel (%p178) target = $region36
      $region35: #{vgg_block_forward.1} parent=31 // pred_region
        %p181 = scmp.lt.s32.totalorder %s11, 1
        %s182 = scalar_select %p181, %s11, 1
        %s183 = smul.addr %s182, 32
        %s184 = smul.addr %s183, 4
        %s185 = scalar_lea.vmem %s0, %s184
      $region36: #{vgg_block_forward.1} parent=31 // pred_fallthru
        _
    $region32: #{vgg_block_forward.1} parent=5 // pred_fallthru
      _
    %p186 = scmp.le.s32.totalorder 1, %s11
    %p187 = scmp.lt.s32.totalorder %s11, 3
    %p188 = pnand %p186, %p187
    %p189 = pneg %p188
    // Predicated region
    $region37: #{vgg_block_forward.1} parent=5 // pred_check
      _
    $region38: #{vgg_block_forward.1} parent=5 // pred_check_branch
      %191 = sbr.rel (%p188) target = $region40
    $region39: #{vgg_block_forward.1} parent=5 // pred_region
      %s192 = ssub.s32 %s11, 1
      %p193 = scmp.lt.s32.totalorder %s16, 1
      %s194 = scalar_select %p193, %s16, 1
      %s195 = smul.addr %s194, 32
      %s196 = smul.addr %s195, 4
      %s197 = scalar_lea.vmem %s0, %s196
      %p198 = pneg %p37
      %p199 = pneg %p34
      %p200 = pneg %p58
      %p201 = pneg %p55
      %p202 = pneg %p79
      %p203 = pneg %p76
      %p204 = pneg %p100
      %p205 = pneg %p97
      %p206 = pneg %p121
      %p207 = pneg %p118
      %p208 = pneg %p147
      %p209 = pneg %p144
      %p210 = scmp.lt.s32.totalorder %s16, 1
      %s211 = scalar_select %p210, %s16, 1
      %s212 = smul.addr %s211, 8
      %s213 = smul.addr %s212, 8
      %s214 = scalar_lea.vmem %s5, %s213
      %p215 = scmp.lt.s32.totalorder %s16, 1
      %s216 = scalar_select %p215, %s16, 1
      %s217 = smul.addr %s216, 32
      %s218 = smul.addr %s217, 4
      %s219 = scalar_lea.vmem %s0, %s218
      %p220 = scmp.lt.s32.totalorder %s16, 1
      %s221 = scalar_select %p220, %s16, 1
      %s222 = smul.addr %s221, 8
      %s223 = smul.addr %s222, 8
      %s224 = scalar_lea.vmem %s5, %s223
      %vm226 = vcmask 27648
      %227 = vst.msk [vmem:[#allocation2] sm:$0xf] %vm226, 0
      %228 = vst.msk [vmem:[#allocation2 + $0x4] sm:$0xf] %vm226, 0
      %vm229 = vcmask 24576
      %230 = vst.msk [vmem:[#allocation2 + $0x8] sm:$0x1] %vm229, 0
      %231 = vst.msk [vmem:[#allocation2 + $0xc] sm:$0xf] %vm226, 0
      %232 = vst.msk [vmem:[#allocation2 + $0x10] sm:$0xf] %vm226, 0
      %233 = vst.msk [vmem:[#allocation2 + $0x14] sm:$0x1] %vm229, 0
      %234 = vst.msk [vmem:[#allocation2 + $0x18] sm:$0xf] %vm226, 0
      %235 = vst.msk [vmem:[#allocation2 + $0x1c] sm:$0xf] %vm226, 0
      %236 = vst.msk [vmem:[#allocation2 + $0x20] sm:$0x1] %vm229, 0
      %237 = vst.msk [vmem:[#allocation2 + $0x24] sm:$0xf] %vm226, 0
      %238 = vst.msk [vmem:[#allocation2 + $0x28] sm:$0xf] %vm226, 0
      %239 = vst.msk [vmem:[#allocation2 + $0x2c] sm:$0x1] %vm229, 0
      %240 = vst.msk [vmem:[#allocation2 + $0x30] sm:$0xf] %vm226, 0
      %241 = vst.msk [vmem:[#allocation2 + $0x34] sm:$0xf] %vm226, 0
      %242 = vst.msk [vmem:[#allocation2 + $0x38] sm:$0x1] %vm229, 0
      %243 = vst.msk [vmem:[#allocation2 + $0x3c] sm:$0xf] %vm226, 0
      %244 = vst.msk [vmem:[#allocation2 + $0x40] sm:$0xf] %vm226, 0
      %245 = vst.msk [vmem:[#allocation2 + $0x44] sm:$0x1] %vm229, 0
      %246 = vst.msk [vmem:[#allocation2 + $0x48] sm:$0xf] %vm226, 0
      %247 = vst.msk [vmem:[#allocation2 + $0x4c] sm:$0xf] %vm226, 0
      %248 = vst.msk [vmem:[#allocation2 + $0x50] sm:$0x1] %vm229, 0
      %249 = vst.msk [vmem:[#allocation2 + $0x54] sm:$0xf] %vm226, 0
      %250 = vst.msk [vmem:[#allocation2 + $0x58] sm:$0xf] %vm226, 0
      %251 = vst.msk [vmem:[#allocation2 + $0x5c] sm:$0x1] %vm229, 0
      %252 = vst.msk [vmem:[#allocation2 + $0x60] sm:$0xf] %vm226, 0
      %253 = vst.msk [vmem:[#allocation2 + $0x64] sm:$0xf] %vm226, 0
      %254 = vst.msk [vmem:[#allocation2 + $0x68] sm:$0x1] %vm229, 0
      %255 = vst.msk [vmem:[#allocation2 + $0x6c] sm:$0xf] %vm226, 0
      %256 = vst.msk [vmem:[#allocation2 + $0x70] sm:$0xf] %vm226, 0
      %257 = vst.msk [vmem:[#allocation2 + $0x74] sm:$0x1] %vm229, 0
      %258 = vst.msk [vmem:[#allocation2 + $0x78] sm:$0xf] %vm226, 0
      %259 = vst.msk [vmem:[#allocation2 + $0x7c] sm:$0xf] %vm226, 0
      %260 = vst.msk [vmem:[#allocation2 + $0x80] sm:$0x1] %vm229, 0
      %261 = vst.msk [vmem:[#allocation2 + $0x84] sm:$0xf] %vm226, 0
      %262 = vst.msk [vmem:[#allocation2 + $0x88] sm:$0xf] %vm226, 0
      %263 = vst.msk [vmem:[#allocation2 + $0x8c] sm:$0x1] %vm229, 0
      %264 = vst.msk [vmem:[#allocation2 + $0x90] sm:$0xf] %vm226, 0
      %265 = vst.msk [vmem:[#allocation2 + $0x94] sm:$0xf] %vm226, 0
      %266 = vst.msk [vmem:[#allocation2 + $0x98] sm:$0x1] %vm229, 0
      %267 = vst.msk [vmem:[#allocation2 + $0x9c] sm:$0xf] %vm226, 0
      %268 = vst.msk [vmem:[#allocation2 + $0xa0] sm:$0xf] %vm226, 0
      %269 = vst.msk [vmem:[#allocation2 + $0xa4] sm:$0x1] %vm229, 0
      %270 = vst.msk [vmem:[#allocation2 + $0xa8] sm:$0xf] %vm226, 0
      %271 = vst.msk [vmem:[#allocation2 + $0xac] sm:$0xf] %vm226, 0
      %272 = vst.msk [vmem:[#allocation2 + $0xb0] sm:$0x1] %vm229, 0
      %273 = vst.msk [vmem:[#allocation2 + $0xb4] sm:$0xf] %vm226, 0
      %274 = vst.msk [vmem:[#allocation2 + $0xb8] sm:$0xf] %vm226, 0
      %275 = vst.msk [vmem:[#allocation2 + $0xbc] sm:$0x1] %vm229, 0
      %276 = vst.msk [vmem:[#allocation2 + $0xc0] sm:$0xf] %vm226, 0
      %277 = vst.msk [vmem:[#allocation2 + $0xc4] sm:$0xf] %vm226, 0
      %278 = vst.msk [vmem:[#allocation2 + $0xc8] sm:$0x1] %vm229, 0
      %279 = vst.msk [vmem:[#allocation2 + $0xcc] sm:$0xf] %vm226, 0
      %280 = vst.msk [vmem:[#allocation2 + $0xd0] sm:$0xf] %vm226, 0
      %281 = vst.msk [vmem:[#allocation2 + $0xd4] sm:$0x1] %vm229, 0
      %vm282 = vcmask 60416
      %283 = vst.msk [vmem:[#allocation3] sm:$0xf] %vm282, 0
      %284 = vst.msk [vmem:[#allocation3 + $0x4] sm:$0xf] %vm282, 0
      %vm285 = vcmask 57344
      %286 = vst.msk [vmem:[#allocation3 + $0x8] sm:$0x1] %vm285, 0
      %287 = vst.msk [vmem:[#allocation3 + $0xc] sm:$0xf] %vm282, 0
      %288 = vst.msk [vmem:[#allocation3 + $0x10] sm:$0xf] %vm282, 0
      %289 = vst.msk [vmem:[#allocation3 + $0x14] sm:$0x1] %vm285, 0
      %290 = vst.msk [vmem:[#allocation3 + $0x18] sm:$0xf] %vm282, 0
      %291 = vst.msk [vmem:[#allocation3 + $0x1c] sm:$0xf] %vm282, 0
      %292 = vst.msk [vmem:[#allocation3 + $0x20] sm:$0x1] %vm285, 0
      %293 = vst.msk [vmem:[#allocation3 + $0x24] sm:$0xf] %vm282, 0
      %294 = vst.msk [vmem:[#allocation3 + $0x28] sm:$0xf] %vm282, 0
      %295 = vst.msk [vmem:[#allocation3 + $0x2c] sm:$0x1] %vm285, 0
      %296 = vst.msk [vmem:[#allocation3 + $0x30] sm:$0xf] %vm282, 0
      %297 = vst.msk [vmem:[#allocation3 + $0x34] sm:$0xf] %vm282, 0
      %298 = vst.msk [vmem:[#allocation3 + $0x38] sm:$0x1] %vm285, 0
      %299 = vst.msk [vmem:[#allocation3 + $0x3c] sm:$0xf] %vm282, 0
      %300 = vst.msk [vmem:[#allocation3 + $0x40] sm:$0xf] %vm282, 0
      %301 = vst.msk [vmem:[#allocation3 + $0x44] sm:$0x1] %vm285, 0
      %302 = vst.msk [vmem:[#allocation3 + $0x48] sm:$0xf] %vm282, 0
      %303 = vst.msk [vmem:[#allocation3 + $0x4c] sm:$0xf] %vm282, 0
      %304 = vst.msk [vmem:[#allocation3 + $0x50] sm:$0x1] %vm285, 0
      %305 = vst.msk [vmem:[#allocation3 + $0x54] sm:$0xf] %vm282, 0
      %306 = vst.msk [vmem:[#allocation3 + $0x58] sm:$0xf] %vm282, 0
      %307 = vst.msk [vmem:[#allocation3 + $0x5c] sm:$0x1] %vm285, 0
      %308 = vst.msk [vmem:[#allocation3 + $0x60] sm:$0xf] %vm282, 0
      %309 = vst.msk [vmem:[#allocation3 + $0x64] sm:$0xf] %vm282, 0
      %310 = vst.msk [vmem:[#allocation3 + $0x68] sm:$0x1] %vm285, 0
      %311 = vst.msk [vmem:[#allocation3 + $0x6c] sm:$0xf] %vm282, 0
      %312 = vst.msk [vmem:[#allocation3 + $0x70] sm:$0xf] %vm282, 0
      %313 = vst.msk [vmem:[#allocation3 + $0x74] sm:$0x1] %vm285, 0
      %314 = vst.msk [vmem:[#allocation3 + $0x78] sm:$0xf] %vm282, 0
      %315 = vst.msk [vmem:[#allocation3 + $0x7c] sm:$0xf] %vm282, 0
      %316 = vst.msk [vmem:[#allocation3 + $0x80] sm:$0x1] %vm285, 0
      %317 = vst.msk [vmem:[#allocation3 + $0x84] sm:$0xf] %vm282, 0
      %318 = vst.msk [vmem:[#allocation3 + $0x88] sm:$0xf] %vm282, 0
      %319 = vst.msk [vmem:[#allocation3 + $0x8c] sm:$0x1] %vm285, 0
      %320 = vst.msk [vmem:[#allocation3 + $0x90] sm:$0xf] %vm282, 0
      %321 = vst.msk [vmem:[#allocation3 + $0x94] sm:$0xf] %vm282, 0
      %322 = vst.msk [vmem:[#allocation3 + $0x98] sm:$0x1] %vm285, 0
      %323 = vst.msk [vmem:[#allocation3 + $0x9c] sm:$0xf] %vm282, 0
      %324 = vst.msk [vmem:[#allocation3 + $0xa0] sm:$0xf] %vm282, 0
      %325 = vst.msk [vmem:[#allocation3 + $0xa4] sm:$0x1] %vm285, 0
      %326 = vst.msk [vmem:[#allocation3 + $0xa8] sm:$0xf] %vm282, 0
      %327 = vst.msk [vmem:[#allocation3 + $0xac] sm:$0xf] %vm282, 0
      %328 = vst.msk [vmem:[#allocation3 + $0xb0] sm:$0x1] %vm285, 0
      %329 = vst.msk [vmem:[#allocation3 + $0xb4] sm:$0xf] %vm282, 0
      %330 = vst.msk [vmem:[#allocation3 + $0xb8] sm:$0xf] %vm282, 0
      %331 = vst.msk [vmem:[#allocation3 + $0xbc] sm:$0x1] %vm285, 0
      %332 = vst.msk [vmem:[#allocation3 + $0xc0] sm:$0xf] %vm282, 0
      %333 = vst.msk [vmem:[#allocation3 + $0xc4] sm:$0xf] %vm282, 0
      %334 = vst.msk [vmem:[#allocation3 + $0xc8] sm:$0x1] %vm285, 0
      %335 = vst.msk [vmem:[#allocation3 + $0xcc] sm:$0xf] %vm282, 0
      %336 = vst.msk [vmem:[#allocation3 + $0xd0] sm:$0xf] %vm282, 0
      %337 = vst.msk [vmem:[#allocation3 + $0xd4] sm:$0x1] %vm285, 0
      %v338 = vld [vmem:[%s219] sm:$0xf]
      %v339 = vld [vmem:[%s219 + $0x4] sm:$0xf]
      %v340 = vld [vmem:[%s219 + $0x8] sm:$0xf]
      %v341 = vld [vmem:[%s219 + $0xc] sm:$0xf]
      %v342 = vld [vmem:[%s219 + $0x10] sm:$0xf]
      %v343 = vld [vmem:[%s219 + $0x14] sm:$0xf]
      %v344 = vld [vmem:[%s219 + $0x18] sm:$0xf]
      %v345 = vld [vmem:[%s219 + $0x1c] sm:$0xf]
      %v346 = vld [vmem:[%s219 + $0x20] sm:$0xf]
      %v347 = vld [vmem:[%s219 + $0x24] sm:$0xf]
      %v348 = vld [vmem:[%s219 + $0x28] sm:$0xf]
      %v349 = vld [vmem:[%s219 + $0x2c] sm:$0xf]
      %v350 = vld [vmem:[%s219 + $0x30] sm:$0xf]
      %v351 = vld [vmem:[%s219 + $0x34] sm:$0xf]
      %v352 = vld [vmem:[%s219 + $0x38] sm:$0xf]
      %v353 = vld [vmem:[%s219 + $0x3c] sm:$0xf]
      %v354 = vld [vmem:[%s219 + $0x40] sm:$0xf]
      %v355 = vld [vmem:[%s219 + $0x44] sm:$0xf]
      %v356 = vld [vmem:[%s219 + $0x48] sm:$0xf]
      %v357 = vld [vmem:[%s219 + $0x4c] sm:$0xf]
      %v358 = vld [vmem:[%s219 + $0x50] sm:$0xf]
      %v359 = vld [vmem:[%s219 + $0x54] sm:$0xf]
      %v360 = vld [vmem:[%s219 + $0x58] sm:$0xf]
      %v361 = vld [vmem:[%s219 + $0x5c] sm:$0xf]
      %v362 = vld [vmem:[%s219 + $0x60] sm:$0xf]
      %v363 = vld [vmem:[%s219 + $0x64] sm:$0xf]
      %v364 = vld [vmem:[%s219 + $0x68] sm:$0xf]
      %v365 = vld [vmem:[%s219 + $0x6c] sm:$0xf]
      %v366 = vld [vmem:[%s219 + $0x70] sm:$0xf]
      %v367 = vld [vmem:[%s219 + $0x74] sm:$0xf]
      %v368 = vld [vmem:[%s219 + $0x78] sm:$0xf]
      %v369 = vld [vmem:[%s219 + $0x7c] sm:$0xf]
      %vm370 = vsmask.f32 256
      %vm371 = vsmask.f32 4368
      %vm372 = vmor %vm370, %vm371
      %v374 = vshrl.u32 %v338, 16
      %v376 = vrot.slane %v374, 7
      %v377 = vshll.u32 %v338, 16
      %v379 = vor.u32 %v376, %v377
      %v380 = vrot.slane %v376, 4
      %v382 = vshrl.u32 %v339, 16
      %v384 = vrot.slane %v382, 7
      %v385 = vshll.u32 %v339, 16
      %v387 = vor.u32 %v384, %v385
      %v388 = vsel %vm372, %v380, %v387
      %v389 = vrot.slane %v384, 4
      %v391 = vshrl.u32 %v340, 16
      %v393 = vrot.slane %v391, 7
      %v394 = vshll.u32 %v340, 16
      %v396 = vor.u32 %v393, %v394
      %v397 = vrot.slane %v393, 4
      %v399 = vshrl.u32 %v341, 16
      %v401 = vrot.slane %v399, 7
      %v402 = vshll.u32 %v341, 16
      %v404 = vor.u32 %v401, %v402
      %v405 = vsel %vm372, %v397, %v404
      %v406 = vrot.slane %v401, 4
      %v408 = vshrl.u32 %v342, 16
      %v410 = vrot.slane %v408, 7
      %v411 = vshll.u32 %v342, 16
      %v413 = vor.u32 %v410, %v411
      %v414 = vrot.slane %v410, 4
      %v416 = vshrl.u32 %v343, 16
      %v418 = vrot.slane %v416, 7
      %v419 = vshll.u32 %v343, 16
      %v421 = vor.u32 %v418, %v419
      %v422 = vsel %vm372, %v414, %v421
      %v423 = vrot.slane %v418, 4
      %v425 = vshrl.u32 %v344, 16
      %v427 = vrot.slane %v425, 7
      %v428 = vshll.u32 %v344, 16
      %v430 = vor.u32 %v427, %v428
      %v431 = vrot.slane %v427, 4
      %v433 = vshrl.u32 %v345, 16
      %v435 = vrot.slane %v433, 7
      %v436 = vshll.u32 %v345, 16
      %v438 = vor.u32 %v435, %v436
      %v439 = vsel %vm372, %v431, %v438
      %v440 = vrot.slane %v435, 4
      %v442 = vshrl.u32 %v346, 16
      %v444 = vrot.slane %v442, 7
      %v445 = vshll.u32 %v346, 16
      %v447 = vor.u32 %v444, %v445
      %v448 = vrot.slane %v444, 4
      %v450 = vshrl.u32 %v347, 16
      %v452 = vrot.slane %v450, 7
      %v453 = vshll.u32 %v347, 16
      %v455 = vor.u32 %v452, %v453
      %v456 = vsel %vm372, %v448, %v455
      %v457 = vrot.slane %v452, 4
      %v459 = vshrl.u32 %v348, 16
      %v461 = vrot.slane %v459, 7
      %v462 = vshll.u32 %v348, 16
      %v464 = vor.u32 %v461, %v462
      %v465 = vrot.slane %v461, 4
      %v467 = vshrl.u32 %v349, 16
      %v469 = vrot.slane %v467, 7
      %v470 = vshll.u32 %v349, 16
      %v472 = vor.u32 %v469, %v470
      %v473 = vsel %vm372, %v465, %v472
      %v474 = vrot.slane %v469, 4
      %v476 = vshrl.u32 %v350, 16
      %v478 = vrot.slane %v476, 7
      %v479 = vshll.u32 %v350, 16
      %v481 = vor.u32 %v478, %v479
      %v482 = vrot.slane %v478, 4
      %v484 = vshrl.u32 %v351, 16
      %v486 = vrot.slane %v484, 7
      %v487 = vshll.u32 %v351, 16
      %v489 = vor.u32 %v486, %v487
      %v490 = vsel %vm372, %v482, %v489
      %v491 = vrot.slane %v486, 4
      %v493 = vshrl.u32 %v352, 16
      %v495 = vrot.slane %v493, 7
      %v496 = vshll.u32 %v352, 16
      %v498 = vor.u32 %v495, %v496
      %v499 = vrot.slane %v495, 4
      %v501 = vshrl.u32 %v353, 16
      %v503 = vrot.slane %v501, 7
      %v504 = vshll.u32 %v353, 16
      %v506 = vor.u32 %v503, %v504
      %v507 = vsel %vm372, %v499, %v506
      %v508 = vrot.slane %v503, 4
      %v510 = vshrl.u32 %v354, 16
      %v512 = vrot.slane %v510, 7
      %v513 = vshll.u32 %v354, 16
      %v515 = vor.u32 %v512, %v513
      %v516 = vrot.slane %v512, 4
      %v518 = vshrl.u32 %v355, 16
      %v520 = vrot.slane %v518, 7
      %v521 = vshll.u32 %v355, 16
      %v523 = vor.u32 %v520, %v521
      %v524 = vsel %vm372, %v516, %v523
      %v525 = vrot.slane %v520, 4
      %v527 = vshrl.u32 %v356, 16
      %v529 = vrot.slane %v527, 7
      %v530 = vshll.u32 %v356, 16
      %v532 = vor.u32 %v529, %v530
      %v533 = vrot.slane %v529, 4
      %v535 = vshrl.u32 %v357, 16
      %v537 = vrot.slane %v535, 7
      %v538 = vshll.u32 %v357, 16
      %v540 = vor.u32 %v537, %v538
      %v541 = vsel %vm372, %v533, %v540
      %v542 = vrot.slane %v537, 4
      %v544 = vshrl.u32 %v358, 16
      %v546 = vrot.slane %v544, 7
      %v547 = vshll.u32 %v358, 16
      %v549 = vor.u32 %v546, %v547
      %v550 = vrot.slane %v546, 4
      %v552 = vshrl.u32 %v359, 16
      %v554 = vrot.slane %v552, 7
      %v555 = vshll.u32 %v359, 16
      %v557 = vor.u32 %v554, %v555
      %v558 = vsel %vm372, %v550, %v557
      %v559 = vrot.slane %v554, 4
      %v561 = vshrl.u32 %v360, 16
      %v563 = vrot.slane %v561, 7
      %v564 = vshll.u32 %v360, 16
      %v566 = vor.u32 %v563, %v564
      %v567 = vrot.slane %v563, 4
      %v569 = vshrl.u32 %v361, 16
      %v571 = vrot.slane %v569, 7
      %v572 = vshll.u32 %v361, 16
      %v574 = vor.u32 %v571, %v572
      %v575 = vsel %vm372, %v567, %v574
      %v576 = vrot.slane %v571, 4
      %v578 = vshrl.u32 %v362, 16
      %v580 = vrot.slane %v578, 7
      %v581 = vshll.u32 %v362, 16
      %v583 = vor.u32 %v580, %v581
      %v584 = vrot.slane %v580, 4
      %v586 = vshrl.u32 %v363, 16
      %v588 = vrot.slane %v586, 7
      %v589 = vshll.u32 %v363, 16
      %v591 = vor.u32 %v588, %v589
      %v592 = vsel %vm372, %v584, %v591
      %v593 = vrot.slane %v588, 4
      %v595 = vshrl.u32 %v364, 16
      %v597 = vrot.slane %v595, 7
      %v598 = vshll.u32 %v364, 16
      %v600 = vor.u32 %v597, %v598
      %v601 = vrot.slane %v597, 4
      %v603 = vshrl.u32 %v365, 16
      %v605 = vrot.slane %v603, 7
      %v606 = vshll.u32 %v365, 16
      %v608 = vor.u32 %v605, %v606
      %v609 = vsel %vm372, %v601, %v608
      %v610 = vrot.slane %v605, 4
      %v612 = vshrl.u32 %v366, 16
      %v614 = vrot.slane %v612, 7
      %v615 = vshll.u32 %v366, 16
      %v617 = vor.u32 %v614, %v615
      %v618 = vrot.slane %v614, 4
      %v620 = vshrl.u32 %v367, 16
      %v622 = vrot.slane %v620, 7
      %v623 = vshll.u32 %v367, 16
      %v625 = vor.u32 %v622, %v623
      %v626 = vsel %vm372, %v618, %v625
      %v627 = vrot.slane %v622, 4
      %v629 = vshrl.u32 %v368, 16
      %v631 = vrot.slane %v629, 7
      %v632 = vshll.u32 %v368, 16
      %v634 = vor.u32 %v631, %v632
      %v635 = vrot.slane %v631, 4
      %v637 = vshrl.u32 %v369, 16
      %v639 = vrot.slane %v637, 7
      %v640 = vshll.u32 %v369, 16
      %v642 = vor.u32 %v639, %v640
      %v643 = vsel %vm372, %v635, %v642
      %v644 = vrot.slane %v639, 4
      %s693 = scalar_lea.vmem [#allocation2], 12
      %vm694 = vcmask 27648
      %vm695 = vsmask.f32 7938
      %vm696 = vmand %vm694, %vm695
      %v697 = vld [vmem:[%s693] sm:$0xf]
      %v698 = vsel %vm696, %v379, %v697
      %699 = vst [vmem:[%s693] sm:$0xf] %v698
      %700 = vst.msk [vmem:[%s693 + $0x4] sm:$0xf] %vm226, %v388
      %vm701 = vcmask 24576
      %vm702 = vmand %vm701, %vm370
      %v703 = vld [vmem:[%s693 + $0x8] sm:$0x1]
      %v704 = vsel %vm702, %v389, %v703
      %705 = vst [vmem:[%s693 + $0x8] sm:$0x1] %v704
      %v706 = vld [vmem:[%s693 + $0xc] sm:$0xf]
      %v707 = vsel %vm696, %v396, %v706
      %708 = vst [vmem:[%s693 + $0xc] sm:$0xf] %v707
      %709 = vst.msk [vmem:[%s693 + $0x10] sm:$0xf] %vm226, %v405
      %v710 = vld [vmem:[%s693 + $0x14] sm:$0x1]
      %v711 = vsel %vm702, %v406, %v710
      %712 = vst [vmem:[%s693 + $0x14] sm:$0x1] %v711
      %v713 = vld [vmem:[%s693 + $0x18] sm:$0xf]
      %v714 = vsel %vm696, %v413, %v713
      %715 = vst [vmem:[%s693 + $0x18] sm:$0xf] %v714
      %716 = vst.msk [vmem:[%s693 + $0x1c] sm:$0xf] %vm226, %v422
      %v717 = vld [vmem:[%s693 + $0x20] sm:$0x1]
      %v718 = vsel %vm702, %v423, %v717
      %719 = vst [vmem:[%s693 + $0x20] sm:$0x1] %v718
      %v720 = vld [vmem:[%s693 + $0x24] sm:$0xf]
      %v721 = vsel %vm696, %v430, %v720
      %722 = vst [vmem:[%s693 + $0x24] sm:$0xf] %v721
      %723 = vst.msk [vmem:[%s693 + $0x28] sm:$0xf] %vm226, %v439
      %v724 = vld [vmem:[%s693 + $0x2c] sm:$0x1]
      %v725 = vsel %vm702, %v440, %v724
      %726 = vst [vmem:[%s693 + $0x2c] sm:$0x1] %v725
      %v727 = vld [vmem:[%s693 + $0x30] sm:$0xf]
      %v728 = vsel %vm696, %v447, %v727
      %729 = vst [vmem:[%s693 + $0x30] sm:$0xf] %v728
      %730 = vst.msk [vmem:[%s693 + $0x34] sm:$0xf] %vm226, %v456
      %v731 = vld [vmem:[%s693 + $0x38] sm:$0x1]
      %v732 = vsel %vm702, %v457, %v731
      %733 = vst [vmem:[%s693 + $0x38] sm:$0x1] %v732
      %v734 = vld [vmem:[%s693 + $0x3c] sm:$0xf]
      %v735 = vsel %vm696, %v464, %v734
      %736 = vst [vmem:[%s693 + $0x3c] sm:$0xf] %v735
      %737 = vst.msk [vmem:[%s693 + $0x40] sm:$0xf] %vm226, %v473
      %v738 = vld [vmem:[%s693 + $0x44] sm:$0x1]
      %v739 = vsel %vm702, %v474, %v738
      %740 = vst [vmem:[%s693 + $0x44] sm:$0x1] %v739
      %v741 = vld [vmem:[%s693 + $0x48] sm:$0xf]
      %v742 = vsel %vm696, %v481, %v741
      %743 = vst [vmem:[%s693 + $0x48] sm:$0xf] %v742
      %744 = vst.msk [vmem:[%s693 + $0x4c] sm:$0xf] %vm226, %v490
      %v745 = vld [vmem:[%s693 + $0x50] sm:$0x1]
      %v746 = vsel %vm702, %v491, %v745
      %747 = vst [vmem:[%s693 + $0x50] sm:$0x1] %v746
      %v748 = vld [vmem:[%s693 + $0x54] sm:$0xf]
      %v749 = vsel %vm696, %v498, %v748
      %750 = vst [vmem:[%s693 + $0x54] sm:$0xf] %v749
      %751 = vst.msk [vmem:[%s693 + $0x58] sm:$0xf] %vm226, %v507
      %v752 = vld [vmem:[%s693 + $0x5c] sm:$0x1]
      %v753 = vsel %vm702, %v508, %v752
      %754 = vst [vmem:[%s693 + $0x5c] sm:$0x1] %v753
      %v755 = vld [vmem:[%s693 + $0x60] sm:$0xf]
      %v756 = vsel %vm696, %v515, %v755
      %757 = vst [vmem:[%s693 + $0x60] sm:$0xf] %v756
      %758 = vst.msk [vmem:[%s693 + $0x64] sm:$0xf] %vm226, %v524
      %v759 = vld [vmem:[%s693 + $0x68] sm:$0x1]
      %v760 = vsel %vm702, %v525, %v759
      %761 = vst [vmem:[%s693 + $0x68] sm:$0x1] %v760
      %v762 = vld [vmem:[%s693 + $0x6c] sm:$0xf]
      %v763 = vsel %vm696, %v532, %v762
      %764 = vst [vmem:[%s693 + $0x6c] sm:$0xf] %v763
      %765 = vst.msk [vmem:[%s693 + $0x70] sm:$0xf] %vm226, %v541
      %v766 = vld [vmem:[%s693 + $0x74] sm:$0x1]
      %v767 = vsel %vm702, %v542, %v766
      %768 = vst [vmem:[%s693 + $0x74] sm:$0x1] %v767
      %v769 = vld [vmem:[%s693 + $0x78] sm:$0xf]
      %v770 = vsel %vm696, %v549, %v769
      %771 = vst [vmem:[%s693 + $0x78] sm:$0xf] %v770
      %772 = vst.msk [vmem:[%s693 + $0x7c] sm:$0xf] %vm226, %v558
      %v773 = vld [vmem:[%s693 + $0x80] sm:$0x1]
      %v774 = vsel %vm702, %v559, %v773
      %775 = vst [vmem:[%s693 + $0x80] sm:$0x1] %v774
      %v776 = vld [vmem:[%s693 + $0x84] sm:$0xf]
      %v777 = vsel %vm696, %v566, %v776
      %778 = vst [vmem:[%s693 + $0x84] sm:$0xf] %v777
      %779 = vst.msk [vmem:[%s693 + $0x88] sm:$0xf] %vm226, %v575
      %v780 = vld [vmem:[%s693 + $0x8c] sm:$0x1]
      %v781 = vsel %vm702, %v576, %v780
      %782 = vst [vmem:[%s693 + $0x8c] sm:$0x1] %v781
      %v783 = vld [vmem:[%s693 + $0x90] sm:$0xf]
      %v784 = vsel %vm696, %v583, %v783
      %785 = vst [vmem:[%s693 + $0x90] sm:$0xf] %v784
      %786 = vst.msk [vmem:[%s693 + $0x94] sm:$0xf] %vm226, %v592
      %v787 = vld [vmem:[%s693 + $0x98] sm:$0x1]
      %v788 = vsel %vm702, %v593, %v787
      %789 = vst [vmem:[%s693 + $0x98] sm:$0x1] %v788
      %v790 = vld [vmem:[%s693 + $0x9c] sm:$0xf]
      %v791 = vsel %vm696, %v600, %v790
      %792 = vst [vmem:[%s693 + $0x9c] sm:$0xf] %v791
      %793 = vst.msk [vmem:[%s693 + $0xa0] sm:$0xf] %vm226, %v609
      %v794 = vld [vmem:[%s693 + $0xa4] sm:$0x1]
      %v795 = vsel %vm702, %v610, %v794
      %796 = vst [vmem:[%s693 + $0xa4] sm:$0x1] %v795
      %v797 = vld [vmem:[%s693 + $0xa8] sm:$0xf]
      %v798 = vsel %vm696, %v617, %v797
      %799 = vst [vmem:[%s693 + $0xa8] sm:$0xf] %v798
      %800 = vst.msk [vmem:[%s693 + $0xac] sm:$0xf] %vm226, %v626
      %v801 = vld [vmem:[%s693 + $0xb0] sm:$0x1]
      %v802 = vsel %vm702, %v627, %v801
      %803 = vst [vmem:[%s693 + $0xb0] sm:$0x1] %v802
      %v804 = vld [vmem:[%s693 + $0xb4] sm:$0xf]
      %v805 = vsel %vm696, %v634, %v804
      %806 = vst [vmem:[%s693 + $0xb4] sm:$0xf] %v805
      %807 = vst.msk [vmem:[%s693 + $0xb8] sm:$0xf] %vm226, %v643
      %v808 = vld [vmem:[%s693 + $0xbc] sm:$0x1]
      %v809 = vsel %vm702, %v644, %v808
      %810 = vst [vmem:[%s693 + $0xbc] sm:$0x1] %v809
      %v811 = vld [vmem:[#allocation2] sm:$0xf]
      %v812 = vld [vmem:[#allocation2 + $0x4] sm:$0xf]
      %v813 = vld [vmem:[#allocation2 + $0xc] sm:$0xf]
      %v814 = vld [vmem:[#allocation2 + $0x10] sm:$0xf]
      %v815 = vld [vmem:[#allocation2 + $0x18] sm:$0xf]
      %v816 = vld [vmem:[#allocation2 + $0x1c] sm:$0xf]
      %v817 = vld [vmem:[#allocation2 + $0x24] sm:$0xf]
      %v818 = vld [vmem:[#allocation2 + $0x28] sm:$0xf]
      %v819 = vld [vmem:[#allocation2 + $0x30] sm:$0xf]
      %v820 = vld [vmem:[#allocation2 + $0x34] sm:$0xf]
      %v821 = vld [vmem:[#allocation2 + $0x3c] sm:$0xf]
      %v822 = vld [vmem:[#allocation2 + $0x40] sm:$0xf]
      %v823 = vld [vmem:[#allocation2 + $0x48] sm:$0xf]
      %v824 = vld [vmem:[#allocation2 + $0x4c] sm:$0xf]
      %v825 = vld [vmem:[#allocation2 + $0x54] sm:$0xf]
      %v826 = vld [vmem:[#allocation2 + $0x58] sm:$0xf]
      %v827 = vld [vmem:[#allocation2 + $0x60] sm:$0xf]
      %v828 = vld [vmem:[#allocation2 + $0x64] sm:$0xf]
      %v829 = vld [vmem:[#allocation2 + $0x6c] sm:$0xf]
      %v830 = vld [vmem:[#allocation2 + $0x70] sm:$0xf]
      %v831 = vld [vmem:[#allocation2 + $0x78] sm:$0xf]
      %v832 = vld [vmem:[#allocation2 + $0x7c] sm:$0xf]
      %v833 = vld [vmem:[#allocation2 + $0x84] sm:$0xf]
      %v834 = vld [vmem:[#allocation2 + $0x88] sm:$0xf]
      %v835 = vld [vmem:[#allocation2 + $0x90] sm:$0xf]
      %v836 = vld [vmem:[#allocation2 + $0x94] sm:$0xf]
      %v837 = vld [vmem:[#allocation2 + $0x9c] sm:$0xf]
      %v838 = vld [vmem:[#allocation2 + $0xa0] sm:$0xf]
      %v839 = vld [vmem:[#allocation2 + $0xa8] sm:$0xf]
      %v840 = vld [vmem:[#allocation2 + $0xac] sm:$0xf]
      %v841 = vld [vmem:[#allocation2 + $0xb4] sm:$0xf]
      %v842 = vld [vmem:[#allocation2 + $0xb8] sm:$0xf]
      %v843 = vld [vmem:[%s1] sm:$0x3]
      %v844 = vld [vmem:[#allocation2 + $0x8] sm:$0x1]
      %v845 = vld [vmem:[#allocation2 + $0x14] sm:$0x1]
      %v846 = vld [vmem:[#allocation2 + $0x20] sm:$0x1]
      %v847 = vld [vmem:[#allocation2 + $0x2c] sm:$0x1]
      %v848 = vld [vmem:[#allocation2 + $0x38] sm:$0x1]
      %v849 = vld [vmem:[#allocation2 + $0x44] sm:$0x1]
      %v850 = vld [vmem:[#allocation2 + $0x50] sm:$0x1]
      %v851 = vld [vmem:[#allocation2 + $0x5c] sm:$0x1]
      %v852 = vld [vmem:[#allocation2 + $0x68] sm:$0x1]
      %v853 = vld [vmem:[#allocation2 + $0x74] sm:$0x1]
      %v854 = vld [vmem:[#allocation2 + $0x80] sm:$0x1]
      %v855 = vld [vmem:[#allocation2 + $0x8c] sm:$0x1]
      %v856 = vld [vmem:[#allocation2 + $0x98] sm:$0x1]
      %v857 = vld [vmem:[#allocation2 + $0xa4] sm:$0x1]
      %v858 = vld [vmem:[#allocation2 + $0xb0] sm:$0x1]
      %v859 = vld [vmem:[#allocation2 + $0xbc] sm:$0x1]
      %vm860 = vsmask.f32 3328
      %vm861 = vsmask.f32 7440
      %vm862 = vmor %vm860, %vm861
      %v864 = vshrl.u32 %v811, 16
      %v866 = vrot.slane %v864, 4
      %v867 = vshll.u32 %v811, 16
      %v869 = vrot.slane %v867, 5
      %v870 = vor.u32 %v866, %v869
      %v871 = vrot.slane %v870, 4
      %v873 = vshll.u32 %v812, 16
      %v875 = vrot.slane %v873, 5
      %v876 = vsel %vm862, %v871, %v875
      %v877 = vshrl.u32 %v812, 16
      %v879 = vrot.slane %v877, 4
      %v880 = vor.u32 %v879, %v875
      %v881 = vrot.slane %v880, 4
      %v883 = vshll.u32 %v844, 16
      %v885 = vrot.slane %v883, 5
      %v886 = vsel %vm862, %v881, %v885
      %v888 = vshrl.u32 %v813, 16
      %v890 = vrot.slane %v888, 4
      %v891 = vshll.u32 %v813, 16
      %v893 = vrot.slane %v891, 5
      %v894 = vor.u32 %v890, %v893
      %v895 = vrot.slane %v894, 4
      %v897 = vshll.u32 %v814, 16
      %v899 = vrot.slane %v897, 5
      %v900 = vsel %vm862, %v895, %v899
      %v901 = vshrl.u32 %v814, 16
      %v903 = vrot.slane %v901, 4
      %v904 = vor.u32 %v903, %v899
      %v905 = vrot.slane %v904, 4
      %v907 = vshll.u32 %v845, 16
      %v909 = vrot.slane %v907, 5
      %v910 = vsel %vm862, %v905, %v909
      %v912 = vshrl.u32 %v815, 16
      %v914 = vrot.slane %v912, 4
      %v915 = vshll.u32 %v815, 16
      %v917 = vrot.slane %v915, 5
      %v918 = vor.u32 %v914, %v917
      %v919 = vrot.slane %v918, 4
      %v921 = vshll.u32 %v816, 16
      %v923 = vrot.slane %v921, 5
      %v924 = vsel %vm862, %v919, %v923
      %v925 = vshrl.u32 %v816, 16
      %v927 = vrot.slane %v925, 4
      %v928 = vor.u32 %v927, %v923
      %v929 = vrot.slane %v928, 4
      %v931 = vshll.u32 %v846, 16
      %v933 = vrot.slane %v931, 5
      %v934 = vsel %vm862, %v929, %v933
      %v936 = vshrl.u32 %v817, 16
      %v938 = vrot.slane %v936, 4
      %v939 = vshll.u32 %v817, 16
      %v941 = vrot.slane %v939, 5
      %v942 = vor.u32 %v938, %v941
      %v943 = vrot.slane %v942, 4
      %v945 = vshll.u32 %v818, 16
      %v947 = vrot.slane %v945, 5
      %v948 = vsel %vm862, %v943, %v947
      %v949 = vshrl.u32 %v818, 16
      %v951 = vrot.slane %v949, 4
      %v952 = vor.u32 %v951, %v947
      %v953 = vrot.slane %v952, 4
      %v955 = vshll.u32 %v847, 16
      %v957 = vrot.slane %v955, 5
      %v958 = vsel %vm862, %v953, %v957
      %v960 = vshrl.u32 %v819, 16
      %v962 = vrot.slane %v960, 4
      %v963 = vshll.u32 %v819, 16
      %v965 = vrot.slane %v963, 5
      %v966 = vor.u32 %v962, %v965
      %v967 = vrot.slane %v966, 4
      %v969 = vshll.u32 %v820, 16
      %v971 = vrot.slane %v969, 5
      %v972 = vsel %vm862, %v967, %v971
      %v973 = vshrl.u32 %v820, 16
      %v975 = vrot.slane %v973, 4
      %v976 = vor.u32 %v975, %v971
      %v977 = vrot.slane %v976, 4
      %v979 = vshll.u32 %v848, 16
      %v981 = vrot.slane %v979, 5
      %v982 = vsel %vm862, %v977, %v981
      %v984 = vshrl.u32 %v821, 16
      %v986 = vrot.slane %v984, 4
      %v987 = vshll.u32 %v821, 16
      %v989 = vrot.slane %v987, 5
      %v990 = vor.u32 %v986, %v989
      %v991 = vrot.slane %v990, 4
      %v993 = vshll.u32 %v822, 16
      %v995 = vrot.slane %v993, 5
      %v996 = vsel %vm862, %v991, %v995
      %v997 = vshrl.u32 %v822, 16
      %v999 = vrot.slane %v997, 4
      %v1000 = vor.u32 %v999, %v995
      %v1001 = vrot.slane %v1000, 4
      %v1003 = vshll.u32 %v849, 16
      %v1005 = vrot.slane %v1003, 5
      %v1006 = vsel %vm862, %v1001, %v1005
      %v1008 = vshrl.u32 %v823, 16
      %v1010 = vrot.slane %v1008, 4
      %v1011 = vshll.u32 %v823, 16
      %v1013 = vrot.slane %v1011, 5
      %v1014 = vor.u32 %v1010, %v1013
      %v1015 = vrot.slane %v1014, 4
      %v1017 = vshll.u32 %v824, 16
      %v1019 = vrot.slane %v1017, 5
      %v1020 = vsel %vm862, %v1015, %v1019
      %v1021 = vshrl.u32 %v824, 16
      %v1023 = vrot.slane %v1021, 4
      %v1024 = vor.u32 %v1023, %v1019
      %v1025 = vrot.slane %v1024, 4
      %v1027 = vshll.u32 %v850, 16
      %v1029 = vrot.slane %v1027, 5
      %v1030 = vsel %vm862, %v1025, %v1029
      %v1032 = vshrl.u32 %v825, 16
      %v1034 = vrot.slane %v1032, 4
      %v1035 = vshll.u32 %v825, 16
      %v1037 = vrot.slane %v1035, 5
      %v1038 = vor.u32 %v1034, %v1037
      %v1039 = vrot.slane %v1038, 4
      %v1041 = vshll.u32 %v826, 16
      %v1043 = vrot.slane %v1041, 5
      %v1044 = vsel %vm862, %v1039, %v1043
      %v1045 = vshrl.u32 %v826, 16
      %v1047 = vrot.slane %v1045, 4
      %v1048 = vor.u32 %v1047, %v1043
      %v1049 = vrot.slane %v1048, 4
      %v1051 = vshll.u32 %v851, 16
      %v1053 = vrot.slane %v1051, 5
      %v1054 = vsel %vm862, %v1049, %v1053
      %v1056 = vshrl.u32 %v827, 16
      %v1058 = vrot.slane %v1056, 4
      %v1059 = vshll.u32 %v827, 16
      %v1061 = vrot.slane %v1059, 5
      %v1062 = vor.u32 %v1058, %v1061
      %v1063 = vrot.slane %v1062, 4
      %v1065 = vshll.u32 %v828, 16
      %v1067 = vrot.slane %v1065, 5
      %v1068 = vsel %vm862, %v1063, %v1067
      %v1069 = vshrl.u32 %v828, 16
      %v1071 = vrot.slane %v1069, 4
      %v1072 = vor.u32 %v1071, %v1067
      %v1073 = vrot.slane %v1072, 4
      %v1075 = vshll.u32 %v852, 16
      %v1077 = vrot.slane %v1075, 5
      %v1078 = vsel %vm862, %v1073, %v1077
      %v1080 = vshrl.u32 %v829, 16
      %v1082 = vrot.slane %v1080, 4
      %v1083 = vshll.u32 %v829, 16
      %v1085 = vrot.slane %v1083, 5
      %v1086 = vor.u32 %v1082, %v1085
      %v1087 = vrot.slane %v1086, 4
      %v1089 = vshll.u32 %v830, 16
      %v1091 = vrot.slane %v1089, 5
      %v1092 = vsel %vm862, %v1087, %v1091
      %v1093 = vshrl.u32 %v830, 16
      %v1095 = vrot.slane %v1093, 4
      %v1096 = vor.u32 %v1095, %v1091
      %v1097 = vrot.slane %v1096, 4
      %v1099 = vshll.u32 %v853, 16
      %v1101 = vrot.slane %v1099, 5
      %v1102 = vsel %vm862, %v1097, %v1101
      %v1104 = vshrl.u32 %v831, 16
      %v1106 = vrot.slane %v1104, 4
      %v1107 = vshll.u32 %v831, 16
      %v1109 = vrot.slane %v1107, 5
      %v1110 = vor.u32 %v1106, %v1109
      %v1111 = vrot.slane %v1110, 4
      %v1113 = vshll.u32 %v832, 16
      %v1115 = vrot.slane %v1113, 5
      %v1116 = vsel %vm862, %v1111, %v1115
      %v1117 = vshrl.u32 %v832, 16
      %v1119 = vrot.slane %v1117, 4
      %v1120 = vor.u32 %v1119, %v1115
      %v1121 = vrot.slane %v1120, 4
      %v1123 = vshll.u32 %v854, 16
      %v1125 = vrot.slane %v1123, 5
      %v1126 = vsel %vm862, %v1121, %v1125
      %v1128 = vshrl.u32 %v833, 16
      %v1130 = vrot.slane %v1128, 4
      %v1131 = vshll.u32 %v833, 16
      %v1133 = vrot.slane %v1131, 5
      %v1134 = vor.u32 %v1130, %v1133
      %v1135 = vrot.slane %v1134, 4
      %v1137 = vshll.u32 %v834, 16
      %v1139 = vrot.slane %v1137, 5
      %v1140 = vsel %vm862, %v1135, %v1139
      %v1141 = vshrl.u32 %v834, 16
      %v1143 = vrot.slane %v1141, 4
      %v1144 = vor.u32 %v1143, %v1139
      %v1145 = vrot.slane %v1144, 4
      %v1147 = vshll.u32 %v855, 16
      %v1149 = vrot.slane %v1147, 5
      %v1150 = vsel %vm862, %v1145, %v1149
      %v1152 = vshrl.u32 %v835, 16
      %v1154 = vrot.slane %v1152, 4
      %v1155 = vshll.u32 %v835, 16
      %v1157 = vrot.slane %v1155, 5
      %v1158 = vor.u32 %v1154, %v1157
      %v1159 = vrot.slane %v1158, 4
      %v1161 = vshll.u32 %v836, 16
      %v1163 = vrot.slane %v1161, 5
      %v1164 = vsel %vm862, %v1159, %v1163
      %v1165 = vshrl.u32 %v836, 16
      %v1167 = vrot.slane %v1165, 4
      %v1168 = vor.u32 %v1167, %v1163
      %v1169 = vrot.slane %v1168, 4
      %v1171 = vshll.u32 %v856, 16
      %v1173 = vrot.slane %v1171, 5
      %v1174 = vsel %vm862, %v1169, %v1173
      %v1176 = vshrl.u32 %v837, 16
      %v1178 = vrot.slane %v1176, 4
      %v1179 = vshll.u32 %v837, 16
      %v1181 = vrot.slane %v1179, 5
      %v1182 = vor.u32 %v1178, %v1181
      %v1183 = vrot.slane %v1182, 4
      %v1185 = vshll.u32 %v838, 16
      %v1187 = vrot.slane %v1185, 5
      %v1188 = vsel %vm862, %v1183, %v1187
      %v1189 = vshrl.u32 %v838, 16
      %v1191 = vrot.slane %v1189, 4
      %v1192 = vor.u32 %v1191, %v1187
      %v1193 = vrot.slane %v1192, 4
      %v1195 = vshll.u32 %v857, 16
      %v1197 = vrot.slane %v1195, 5
      %v1198 = vsel %vm862, %v1193, %v1197
      %v1200 = vshrl.u32 %v839, 16
      %v1202 = vrot.slane %v1200, 4
      %v1203 = vshll.u32 %v839, 16
      %v1205 = vrot.slane %v1203, 5
      %v1206 = vor.u32 %v1202, %v1205
      %v1207 = vrot.slane %v1206, 4
      %v1209 = vshll.u32 %v840, 16
      %v1211 = vrot.slane %v1209, 5
      %v1212 = vsel %vm862, %v1207, %v1211
      %v1213 = vshrl.u32 %v840, 16
      %v1215 = vrot.slane %v1213, 4
      %v1216 = vor.u32 %v1215, %v1211
      %v1217 = vrot.slane %v1216, 4
      %v1219 = vshll.u32 %v858, 16
      %v1221 = vrot.slane %v1219, 5
      %v1222 = vsel %vm862, %v1217, %v1221
      %v1224 = vshrl.u32 %v841, 16
      %v1226 = vrot.slane %v1224, 4
      %v1227 = vshll.u32 %v841, 16
      %v1229 = vrot.slane %v1227, 5
      %v1230 = vor.u32 %v1226, %v1229
      %v1231 = vrot.slane %v1230, 4
      %v1233 = vshll.u32 %v842, 16
      %v1235 = vrot.slane %v1233, 5
      %v1236 = vsel %vm862, %v1231, %v1235
      %v1237 = vshrl.u32 %v842, 16
      %v1239 = vrot.slane %v1237, 4
      %v1240 = vor.u32 %v1239, %v1235
      %v1241 = vrot.slane %v1240, 4
      %v1243 = vshll.u32 %v859, 16
      %v1245 = vrot.slane %v1243, 5
      %v1246 = vsel %vm862, %v1241, %v1245
      %s1247 = scalar_lea.vmem %s1, 2
      %v1248 = vld [vmem:[%s1247] sm:$0x3]
      %v1249 = vunpack.c.l.b16 %v876
      %v1250 = vunpack.c.l.b16 %v886
      %v1251 = vunpack.c.l.b16 %v900
      %v1252 = vunpack.c.l.b16 %v910
      %v1253 = vunpack.c.l.b16 %v924
      %v1254 = vunpack.c.l.b16 %v934
      %v1255 = vunpack.c.l.b16 %v948
      %v1256 = vunpack.c.l.b16 %v958
      %v1257 = vunpack.c.l.b16 %v972
      %v1258 = vunpack.c.l.b16 %v982
      %v1259 = vunpack.c.l.b16 %v996
      %v1260 = vunpack.c.l.b16 %v1006
      %v1261 = vunpack.c.l.b16 %v1020
      %v1262 = vunpack.c.l.b16 %v1030
      %v1263 = vunpack.c.l.b16 %v1044
      %v1264 = vunpack.c.l.b16 %v1054
      %v1265 = vunpack.c.l.b16 %v1068
      %v1266 = vunpack.c.l.b16 %v1078
      %v1267 = vunpack.c.l.b16 %v1092
      %v1268 = vunpack.c.l.b16 %v1102
      %v1269 = vunpack.c.l.b16 %v1116
      %v1270 = vunpack.c.l.b16 %v1126
      %v1271 = vunpack.c.l.b16 %v1140
      %v1272 = vunpack.c.l.b16 %v1150
      %v1273 = vunpack.c.l.b16 %v1164
      %v1274 = vunpack.c.l.b16 %v1174
      %v1275 = vunpack.c.l.b16 %v1188
      %v1276 = vunpack.c.l.b16 %v1198
      %v1277 = vunpack.c.l.b16 %v1212
      %v1278 = vunpack.c.l.b16 %v1222
      %v1279 = vunpack.c.l.b16 %v1236
      %v1280 = vunpack.c.l.b16 %v1246
      %v1281 = vpack.c.b16 %v1250, %v1249
      %v1282 = vpack.c.b16 %v1252, %v1251
      %v1283 = vpack.c.b16 %v1254, %v1253
      %v1284 = vpack.c.b16 %v1256, %v1255
      %v1285 = vpack.c.b16 %v1258, %v1257
      %v1286 = vpack.c.b16 %v1260, %v1259
      %v1287 = vpack.c.b16 %v1262, %v1261
      %v1288 = vpack.c.b16 %v1264, %v1263
      %v1289 = vpack.c.b16 %v1266, %v1265
      %v1290 = vpack.c.b16 %v1268, %v1267
      %v1291 = vpack.c.b16 %v1270, %v1269
      %v1292 = vpack.c.b16 %v1272, %v1271
      %v1293 = vpack.c.b16 %v1274, %v1273
      %v1294 = vpack.c.b16 %v1276, %v1275
      %v1295 = vpack.c.b16 %v1278, %v1277
      %v1296 = vpack.c.b16 %v1280, %v1279
      %vm1297 = vcmask 31744
      %v1299 = vsel %vm1297, %v1281, 0
      %v1302 = vsel %vm1297, %v1282, 0
      %v1305 = vsel %vm1297, %v1283, 0
      %v1308 = vsel %vm1297, %v1284, 0
      %v1311 = vsel %vm1297, %v1285, 0
      %v1314 = vsel %vm1297, %v1286, 0
      %v1317 = vsel %vm1297, %v1287, 0
      %v1320 = vsel %vm1297, %v1288, 0
      %v1323 = vsel %vm1297, %v1289, 0
      %v1326 = vsel %vm1297, %v1290, 0
      %v1329 = vsel %vm1297, %v1291, 0
      %v1332 = vsel %vm1297, %v1292, 0
      %v1335 = vsel %vm1297, %v1293, 0
      %v1338 = vsel %vm1297, %v1294, 0
      %v1341 = vsel %vm1297, %v1295, 0
      %v1344 = vsel %vm1297, %v1296, 0
      %vm1346 = vcmask 1041408
      %v1348 = vsel %vm1346, %v1248, 0
      %1350 = vmatprep.subr.bf16.mxu0 0
      %1351 = vmatpush1.bf16.msra.mxu0 %v1348
      %1352 = vmatprep.subr.bf16.mxu0 0
      %1353 = vmatpush1.bf16.msra.mxu0 0
      %1354 = vmatprep.subr.bf16.mxu0 0
      %1355 = vmatpush1.bf16.msra.mxu0 0
      %1356 = vmatprep.subr.bf16.mxu0 0
      %1357 = vmatpush1.bf16.msra.mxu0 0
      %1358 = vmatprep.subr.bf16.mxu0 0
      %1359 = vmatpush1.bf16.msra.mxu0 0
      %1360 = vmatprep.subr.bf16.mxu0 0
      %1361 = vmatpush1.bf16.msra.mxu0 0
      %1362 = vmatprep.subr.bf16.mxu0 0
      %1363 = vmatpush1.bf16.msra.mxu0 0
      %1364 = vmatprep.subr.bf16.mxu0 0
      %1365 = vmatpush1.bf16.msra.mxu0 0
      %1366 = vmatprep.subr.bf16.mxu0 0
      %1367 = vmatpush1.bf16.msra.mxu0 0
      %1368 = vmatprep.subr.bf16.mxu0 0
      %1369 = vmatpush1.bf16.msra.mxu0 0
      %1370 = vmatprep.subr.bf16.mxu0 0
      %1371 = vmatpush1.bf16.msra.mxu0 0
      %1372 = vmatprep.subr.bf16.mxu0 0
      %1373 = vmatpush1.bf16.msra.mxu0 0
      %1374 = vmatprep.subr.bf16.mxu0 0
      %1375 = vmatpush1.bf16.msra.mxu0 0
      %1376 = vmatprep.subr.bf16.mxu0 0
      %1377 = vmatpush1.bf16.msra.mxu0 0
      %1378 = vmatprep.subr.bf16.mxu0 0
      %1379 = vmatpush1.bf16.msra.mxu0 0
      %1380 = vmatprep.subr.bf16.mxu0 0
      %1381 = vmatpush1.bf16.msra.mxu0 0
      %1382 = vmatprep.mubr.bf16.mxu0 0
      %1383 = vmatmul.mubr.bf16.gmra.mrb[0].mxu0 %v1299
      %v1384 = vpop.f32.mrb[0].mxu0
      %v1385 = vadd.f32 0.0, %v1384
      %v1386 = vpop.f32.mrb[0].mxu0
      %v1387 = vpop.f32.mrb[0].mxu0
      %v1388 = vadd.f32 0.0, %v1387
      %v1389 = vpop.f32.mrb[0].mxu0
      %1390 = vmatprep.mubr.bf16.mxu0 0
      %1391 = vmatmul.mubr.bf16.gmra.mrb[0].mxu0 %v1302
      %v1392 = vpop.f32.mrb[0].mxu0
      %v1393 = vadd.f32 0.0, %v1392
      %v1394 = vpop.f32.mrb[0].mxu0
      %v1395 = vpop.f32.mrb[0].mxu0
      %v1396 = vadd.f32 0.0, %v1395
      %v1397 = vpop.f32.mrb[0].mxu0
      %1398 = vmatprep.mubr.bf16.mxu0 0
      %1399 = vmatmul.mubr.bf16.gmra.mrb[0].mxu0 %v1305
      %v1400 = vpop.f32.mrb[0].mxu0
      %v1401 = vadd.f32 0.0, %v1400
      %v1402 = vpop.f32.mrb[0].mxu0
      %v1403 = vpop.f32.mrb[0].mxu0
      %v1404 = vadd.f32 0.0, %v1403
      %v1405 = vpop.f32.mrb[0].mxu0
      %1406 = vmatprep.mubr.bf16.mxu0 0
      %1407 = vmatmul.mubr.bf16.gmra.mrb[0].mxu0 %v1308
      %v1408 = vpop.f32.mrb[0].mxu0
      %v1409 = vadd.f32 0.0, %v1408
      %v1410 = vpop.f32.mrb[0].mxu0
      %v1411 = vpop.f32.mrb[0].mxu0
      %v1412 = vadd.f32 0.0, %v1411
      %v1413 = vpop.f32.mrb[0].mxu0
      %1414 = vmatprep.mubr.bf16.mxu0 0
      %1415 = vmatmul.mubr.bf16.gmra.mrb[0].mxu0 %v1311
      %v1416 = vpop.f32.mrb[0].mxu0
      %v1417 = vadd.f32 0.0, %v1416
      %v1418 = vpop.f32.mrb[0].mxu0
      %v1419 = vpop.f32.mrb[0].mxu0
      %v1420 = vadd.f32 0.0, %v1419
      %v1421 = vpop.f32.mrb[0].mxu0
      %1422 = vmatprep.mubr.bf16.mxu0 0
      %1423 = vmatmul.mubr.bf16.gmra.mrb[0].mxu0 %v1314
      %v1424 = vpop.f32.mrb[0].mxu0
      %v1425 = vadd.f32 0.0, %v1424
      %v1426 = vpop.f32.mrb[0].mxu0
      %v1427 = vpop.f32.mrb[0].mxu0
      %v1428 = vadd.f32 0.0, %v1427
      %v1429 = vpop.f32.mrb[0].mxu0
      %1430 = vmatprep.mubr.bf16.mxu0 0
      %1431 = vmatmul.mubr.bf16.gmra.mrb[0].mxu0 %v1317
      %v1432 = vpop.f32.mrb[0].mxu0
      %v1433 = vadd.f32 0.0, %v1432
      %v1434 = vpop.f32.mrb[0].mxu0
      %v1435 = vpop.f32.mrb[0].mxu0
      %v1436 = vadd.f32 0.0, %v1435
      %v1437 = vpop.f32.mrb[0].mxu0
      %1438 = vmatprep.mubr.bf16.mxu0 0
      %1439 = vmatmul.mubr.bf16.gmra.mrb[0].mxu0 %v1320
      %v1440 = vpop.f32.mrb[0].mxu0
      %v1441 = vadd.f32 0.0, %v1440
      %v1442 = vpop.f32.mrb[0].mxu0
      %v1443 = vpop.f32.mrb[0].mxu0
      %v1444 = vadd.f32 0.0, %v1443
      %v1445 = vpop.f32.mrb[0].mxu0
      %1446 = vmatprep.mubr.bf16.mxu0 0
      %1447 = vmatmul.mubr.bf16.gmra.mrb[0].mxu0 %v1323
      %v1448 = vpop.f32.mrb[0].mxu0
      %v1449 = vadd.f32 0.0, %v1448
      %v1450 = vpop.f32.mrb[0].mxu0
      %v1451 = vpop.f32.mrb[0].mxu0
      %v1452 = vadd.f32 0.0, %v1451
      %v1453 = vpop.f32.mrb[0].mxu0
      %1454 = vmatprep.mubr.bf16.mxu0 0
      %1455 = vmatmul.mubr.bf16.gmra.mrb[0].mxu0 %v1326
      %v1456 = vpop.f32.mrb[0].mxu0
      %v1457 = vadd.f32 0.0, %v1456
      %v1458 = vpop.f32.mrb[0].mxu0
      %v1459 = vpop.f32.mrb[0].mxu0
      %v1460 = vadd.f32 0.0, %v1459
      %v1461 = vpop.f32.mrb[0].mxu0
      %1462 = vmatprep.mubr.bf16.mxu0 0
      %1463 = vmatmul.mubr.bf16.gmra.mrb[0].mxu0 %v1329
      %v1464 = vpop.f32.mrb[0].mxu0
      %v1465 = vadd.f32 0.0, %v1464
      %v1466 = vpop.f32.mrb[0].mxu0
      %v1467 = vpop.f32.mrb[0].mxu0
      %v1468 = vadd.f32 0.0, %v1467
      %v1469 = vpop.f32.mrb[0].mxu0
      %1470 = vmatprep.mubr.bf16.mxu0 0
      %1471 = vmatmul.mubr.bf16.gmra.mrb[0].mxu0 %v1332
      %v1472 = vpop.f32.mrb[0].mxu0
      %v1473 = vadd.f32 0.0, %v1472
      %v1474 = vpop.f32.mrb[0].mxu0
      %v1475 = vpop.f32.mrb[0].mxu0
      %v1476 = vadd.f32 0.0, %v1475
      %v1477 = vpop.f32.mrb[0].mxu0
      %1478 = vmatprep.mubr.bf16.mxu0 0
      %1479 = vmatmul.mubr.bf16.gmra.mrb[0].mxu0 %v1335
      %v1480 = vpop.f32.mrb[0].mxu0
      %v1481 = vadd.f32 0.0, %v1480
      %v1482 = vpop.f32.mrb[0].mxu0
      %v1483 = vpop.f32.mrb[0].mxu0
      %v1484 = vadd.f32 0.0, %v1483
      %v1485 = vpop.f32.mrb[0].mxu0
      %1486 = vmatprep.mubr.bf16.mxu0 0
      %1487 = vmatmul.mubr.bf16.gmra.mrb[0].mxu0 %v1338
      %v1488 = vpop.f32.mrb[0].mxu0
      %v1489 = vadd.f32 0.0, %v1488
      %v1490 = vpop.f32.mrb[0].mxu0
      %v1491 = vpop.f32.mrb[0].mxu0
      %v1492 = vadd.f32 0.0, %v1491
      %v1493 = vpop.f32.mrb[0].mxu0
      %1494 = vmatprep.mubr.bf16.mxu0 0
      %1495 = vmatmul.mubr.bf16.gmra.mrb[0].mxu0 %v1341
      %v1496 = vpop.f32.mrb[0].mxu0
      %v1497 = vadd.f32 0.0, %v1496
      %v1498 = vpop.f32.mrb[0].mxu0
      %v1499 = vpop.f32.mrb[0].mxu0
      %v1500 = vadd.f32 0.0, %v1499
      %v1501 = vpop.f32.mrb[0].mxu0
      %1502 = vmatprep.mubr.bf16.mxu0 0
      %1503 = vmatmul.mubr.bf16.gmra.mrb[0].mxu0 %v1344
      %v1504 = vpop.f32.mrb[0].mxu0
      %v1505 = vadd.f32 0.0, %v1504
      %v1506 = vpop.f32.mrb[0].mxu0
      %v1507 = vpop.f32.mrb[0].mxu0
      %v1508 = vadd.f32 0.0, %v1507
      %v1509 = vpop.f32.mrb[0].mxu0
      %1510 = vdwg.mxu0
      %v1543 = vunpack.c.l.b16 %v811
      %v1544 = vunpack.c.l.b16 %v812
      %v1545 = vunpack.c.l.b16 %v813
      %v1546 = vunpack.c.l.b16 %v814
      %v1547 = vunpack.c.l.b16 %v815
      %v1548 = vunpack.c.l.b16 %v816
      %v1549 = vunpack.c.l.b16 %v817
      %v1550 = vunpack.c.l.b16 %v818
      %v1551 = vunpack.c.l.b16 %v819
      %v1552 = vunpack.c.l.b16 %v820
      %v1553 = vunpack.c.l.b16 %v821
      %v1554 = vunpack.c.l.b16 %v822
      %v1555 = vunpack.c.l.b16 %v823
      %v1556 = vunpack.c.l.b16 %v824
      %v1557 = vunpack.c.l.b16 %v825
      %v1558 = vunpack.c.l.b16 %v826
      %v1559 = vunpack.c.l.b16 %v827
      %v1560 = vunpack.c.l.b16 %v828
      %v1561 = vunpack.c.l.b16 %v829
      %v1562 = vunpack.c.l.b16 %v830
      %v1563 = vunpack.c.l.b16 %v831
      %v1564 = vunpack.c.l.b16 %v832
      %v1565 = vunpack.c.l.b16 %v833
      %v1566 = vunpack.c.l.b16 %v834
      %v1567 = vunpack.c.l.b16 %v835
      %v1568 = vunpack.c.l.b16 %v836
      %v1569 = vunpack.c.l.b16 %v837
      %v1570 = vunpack.c.l.b16 %v838
      %v1571 = vunpack.c.l.b16 %v839
      %v1572 = vunpack.c.l.b16 %v840
      %v1573 = vunpack.c.l.b16 %v841
      %v1574 = vunpack.c.l.b16 %v842
      %v1575 = vpack.c.b16 %v1544, %v1543
      %v1576 = vpack.c.b16 %v1546, %v1545
      %v1577 = vpack.c.b16 %v1548, %v1547
      %v1578 = vpack.c.b16 %v1550, %v1549
      %v1579 = vpack.c.b16 %v1552, %v1551
      %v1580 = vpack.c.b16 %v1554, %v1553
      %v1581 = vpack.c.b16 %v1556, %v1555
      %v1582 = vpack.c.b16 %v1558, %v1557
      %v1583 = vpack.c.b16 %v1560, %v1559
      %v1584 = vpack.c.b16 %v1562, %v1561
      %v1585 = vpack.c.b16 %v1564, %v1563
      %v1586 = vpack.c.b16 %v1566, %v1565
      %v1587 = vpack.c.b16 %v1568, %v1567
      %v1588 = vpack.c.b16 %v1570, %v1569
      %v1589 = vpack.c.b16 %v1572, %v1571
      %v1590 = vpack.c.b16 %v1574, %v1573
      %v1592 = vsel %vm1297, %v1575, 0
      %v1595 = vsel %vm1297, %v1576, 0
      %v1598 = vsel %vm1297, %v1577, 0
      %v1601 = vsel %vm1297, %v1578, 0
      %v1604 = vsel %vm1297, %v1579, 0
      %v1607 = vsel %vm1297, %v1580, 0
      %v1610 = vsel %vm1297, %v1581, 0
      %v1613 = vsel %vm1297, %v1582, 0
      %v1616 = vsel %vm1297, %v1583, 0
      %v1619 = vsel %vm1297, %v1584, 0
      %v1622 = vsel %vm1297, %v1585, 0
      %v1625 = vsel %vm1297, %v1586, 0
      %v1628 = vsel %vm1297, %v1587, 0
      %v1631 = vsel %vm1297, %v1588, 0
      %v1634 = vsel %vm1297, %v1589, 0
      %v1637 = vsel %vm1297, %v1590, 0
      %v1640 = vsel %vm1346, %v843, 0
      %1642 = vmatprep.subr.bf16.mxu0 0
      %1643 = vmatpush1.bf16.msra.mxu0 %v1640
      %1644 = vmatprep.subr.bf16.mxu0 0
      %1645 = vmatpush1.bf16.msra.mxu0 0
      %1646 = vmatprep.subr.bf16.mxu0 0
      %1647 = vmatpush1.bf16.msra.mxu0 0
      %1648 = vmatprep.subr.bf16.mxu0 0
      %1649 = vmatpush1.bf16.msra.mxu0 0
      %1650 = vmatprep.subr.bf16.mxu0 0
      %1651 = vmatpush1.bf16.msra.mxu0 0
      %1652 = vmatprep.subr.bf16.mxu0 0
      %1653 = vmatpush1.bf16.msra.mxu0 0
      %1654 = vmatprep.subr.bf16.mxu0 0
      %1655 = vmatpush1.bf16.msra.mxu0 0
      %1656 = vmatprep.subr.bf16.mxu0 0
      %1657 = vmatpush1.bf16.msra.mxu0 0
      %1658 = vmatprep.subr.bf16.mxu0 0
      %1659 = vmatpush1.bf16.msra.mxu0 0
      %1660 = vmatprep.subr.bf16.mxu0 0
      %1661 = vmatpush1.bf16.msra.mxu0 0
      %1662 = vmatprep.subr.bf16.mxu0 0
      %1663 = vmatpush1.bf16.msra.mxu0 0
      %1664 = vmatprep.subr.bf16.mxu0 0
      %1665 = vmatpush1.bf16.msra.mxu0 0
      %1666 = vmatprep.subr.bf16.mxu0 0
      %1667 = vmatpush1.bf16.msra.mxu0 0
      %1668 = vmatprep.subr.bf16.mxu0 0
      %1669 = vmatpush1.bf16.msra.mxu0 0
      %1670 = vmatprep.subr.bf16.mxu0 0
      %1671 = vmatpush1.bf16.msra.mxu0 0
      %1672 = vmatprep.subr.bf16.mxu0 0
      %1673 = vmatpush1.bf16.msra.mxu0 0
      %1674 = vmatprep.mubr.bf16.mxu0 0
      %1675 = vmatmul.mubr.bf16.gmra.mrb[0].mxu0 %v1592
      %v1676 = vpop.f32.mrb[0].mxu0
      %v1677 = vadd.f32 %v1385, %v1676
      %v1678 = vpop.f32.mrb[0].mxu0
      %v1679 = vpop.f32.mrb[0].mxu0
      %v1680 = vadd.f32 %v1388, %v1679
      %v1681 = vpop.f32.mrb[0].mxu0
      %1682 = vmatprep.mubr.bf16.mxu0 0
      %1683 = vmatmul.mubr.bf16.gmra.mrb[0].mxu0 %v1595
      %v1684 = vpop.f32.mrb[0].mxu0
      %v1685 = vadd.f32 %v1393, %v1684
      %v1686 = vpop.f32.mrb[0].mxu0
      %v1687 = vpop.f32.mrb[0].mxu0
      %v1688 = vadd.f32 %v1396, %v1687
      %v1689 = vpop.f32.mrb[0].mxu0
      %1690 = vmatprep.mubr.bf16.mxu0 0
      %1691 = vmatmul.mubr.bf16.gmra.mrb[0].mxu0 %v1598
      %v1692 = vpop.f32.mrb[0].mxu0
      %v1693 = vadd.f32 %v1401, %v1692
      %v1694 = vpop.f32.mrb[0].mxu0
      %v1695 = vpop.f32.mrb[0].mxu0
      %v1696 = vadd.f32 %v1404, %v1695
      %v1697 = vpop.f32.mrb[0].mxu0
      %1698 = vmatprep.mubr.bf16.mxu0 0
      %1699 = vmatmul.mubr.bf16.gmra.mrb[0].mxu0 %v1601
      %v1700 = vpop.f32.mrb[0].mxu0
      %v1701 = vadd.f32 %v1409, %v1700
      %v1702 = vpop.f32.mrb[0].mxu0
      %v1703 = vpop.f32.mrb[0].mxu0
      %v1704 = vadd.f32 %v1412, %v1703
      %v1705 = vpop.f32.mrb[0].mxu0
      %1706 = vmatprep.mubr.bf16.mxu0 0
      %1707 = vmatmul.mubr.bf16.gmra.mrb[0].mxu0 %v1604
      %v1708 = vpop.f32.mrb[0].mxu0
      %v1709 = vadd.f32 %v1417, %v1708
      %v1710 = vpop.f32.mrb[0].mxu0
      %v1711 = vpop.f32.mrb[0].mxu0
      %v1712 = vadd.f32 %v1420, %v1711
      %v1713 = vpop.f32.mrb[0].mxu0
      %1714 = vmatprep.mubr.bf16.mxu0 0
      %1715 = vmatmul.mubr.bf16.gmra.mrb[0].mxu0 %v1607
      %v1716 = vpop.f32.mrb[0].mxu0
      %v1717 = vadd.f32 %v1425, %v1716
      %v1718 = vpop.f32.mrb[0].mxu0
      %v1719 = vpop.f32.mrb[0].mxu0
      %v1720 = vadd.f32 %v1428, %v1719
      %v1721 = vpop.f32.mrb[0].mxu0
      %1722 = vmatprep.mubr.bf16.mxu0 0
      %1723 = vmatmul.mubr.bf16.gmra.mrb[0].mxu0 %v1610
      %v1724 = vpop.f32.mrb[0].mxu0
      %v1725 = vadd.f32 %v1433, %v1724
      %v1726 = vpop.f32.mrb[0].mxu0
      %v1727 = vpop.f32.mrb[0].mxu0
      %v1728 = vadd.f32 %v1436, %v1727
      %v1729 = vpop.f32.mrb[0].mxu0
      %1730 = vmatprep.mubr.bf16.mxu0 0
      %1731 = vmatmul.mubr.bf16.gmra.mrb[0].mxu0 %v1613
      %v1732 = vpop.f32.mrb[0].mxu0
      %v1733 = vadd.f32 %v1441, %v1732
      %v1734 = vpop.f32.mrb[0].mxu0
      %v1735 = vpop.f32.mrb[0].mxu0
      %v1736 = vadd.f32 %v1444, %v1735
      %v1737 = vpop.f32.mrb[0].mxu0
      %1738 = vmatprep.mubr.bf16.mxu0 0
      %1739 = vmatmul.mubr.bf16.gmra.mrb[0].mxu0 %v1616
      %v1740 = vpop.f32.mrb[0].mxu0
      %v1741 = vadd.f32 %v1449, %v1740
      %v1742 = vpop.f32.mrb[0].mxu0
      %v1743 = vpop.f32.mrb[0].mxu0
      %v1744 = vadd.f32 %v1452, %v1743
      %v1745 = vpop.f32.mrb[0].mxu0
      %1746 = vmatprep.mubr.bf16.mxu0 0
      %1747 = vmatmul.mubr.bf16.gmra.mrb[0].mxu0 %v1619
      %v1748 = vpop.f32.mrb[0].mxu0
      %v1749 = vadd.f32 %v1457, %v1748
      %v1750 = vpop.f32.mrb[0].mxu0
      %v1751 = vpop.f32.mrb[0].mxu0
      %v1752 = vadd.f32 %v1460, %v1751
      %v1753 = vpop.f32.mrb[0].mxu0
      %1754 = vmatprep.mubr.bf16.mxu0 0
      %1755 = vmatmul.mubr.bf16.gmra.mrb[0].mxu0 %v1622
      %v1756 = vpop.f32.mrb[0].mxu0
      %v1757 = vadd.f32 %v1465, %v1756
      %v1758 = vpop.f32.mrb[0].mxu0
      %v1759 = vpop.f32.mrb[0].mxu0
      %v1760 = vadd.f32 %v1468, %v1759
      %v1761 = vpop.f32.mrb[0].mxu0
      %1762 = vmatprep.mubr.bf16.mxu0 0
      %1763 = vmatmul.mubr.bf16.gmra.mrb[0].mxu0 %v1625
      %v1764 = vpop.f32.mrb[0].mxu0
      %v1765 = vadd.f32 %v1473, %v1764
      %v1766 = vpop.f32.mrb[0].mxu0
      %v1767 = vpop.f32.mrb[0].mxu0
      %v1768 = vadd.f32 %v1476, %v1767
      %v1769 = vpop.f32.mrb[0].mxu0
      %1770 = vmatprep.mubr.bf16.mxu0 0
      %1771 = vmatmul.mubr.bf16.gmra.mrb[0].mxu0 %v1628
      %v1772 = vpop.f32.mrb[0].mxu0
      %v1773 = vadd.f32 %v1481, %v1772
      %v1774 = vpop.f32.mrb[0].mxu0
      %v1775 = vpop.f32.mrb[0].mxu0
      %v1776 = vadd.f32 %v1484, %v1775
      %v1777 = vpop.f32.mrb[0].mxu0
      %1778 = vmatprep.mubr.bf16.mxu0 0
      %1779 = vmatmul.mubr.bf16.gmra.mrb[0].mxu0 %v1631
      %v1780 = vpop.f32.mrb[0].mxu0
      %v1781 = vadd.f32 %v1489, %v1780
      %v1782 = vpop.f32.mrb[0].mxu0
      %v1783 = vpop.f32.mrb[0].mxu0
      %v1784 = vadd.f32 %v1492, %v1783
      %v1785 = vpop.f32.mrb[0].mxu0
      %1786 = vmatprep.mubr.bf16.mxu0 0
      %1787 = vmatmul.mubr.bf16.gmra.mrb[0].mxu0 %v1634
      %v1788 = vpop.f32.mrb[0].mxu0
      %v1789 = vadd.f32 %v1497, %v1788
      %v1790 = vpop.f32.mrb[0].mxu0
      %v1791 = vpop.f32.mrb[0].mxu0
      %v1792 = vadd.f32 %v1500, %v1791
      %v1793 = vpop.f32.mrb[0].mxu0
      %1794 = vmatprep.mubr.bf16.mxu0 0
      %1795 = vmatmul.mubr.bf16.gmra.mrb[0].mxu0 %v1637
      %v1796 = vpop.f32.mrb[0].mxu0
      %v1797 = vadd.f32 %v1505, %v1796
      %v1798 = vpop.f32.mrb[0].mxu0
      %v1799 = vpop.f32.mrb[0].mxu0
      %v1800 = vadd.f32 %v1508, %v1799
      %v1801 = vpop.f32.mrb[0].mxu0
      %1802 = vdwg.mxu0
      %v1803 = vld [vmem:[#allocation2] sm:$0xe]
      %v1804 = vld [vmem:[#allocation2 + $0xc] sm:$0xe]
      %v1805 = vld [vmem:[#allocation2 + $0x18] sm:$0xe]
      %v1806 = vld [vmem:[#allocation2 + $0x24] sm:$0xe]
      %v1807 = vld [vmem:[#allocation2 + $0x30] sm:$0xe]
      %v1808 = vld [vmem:[#allocation2 + $0x3c] sm:$0xe]
      %v1809 = vld [vmem:[#allocation2 + $0x48] sm:$0xe]
      %v1810 = vld [vmem:[#allocation2 + $0x54] sm:$0xe]
      %v1811 = vld [vmem:[#allocation2 + $0x60] sm:$0xe]
      %v1812 = vld [vmem:[#allocation2 + $0x6c] sm:$0xe]
      %v1813 = vld [vmem:[#allocation2 + $0x78] sm:$0xe]
      %v1814 = vld [vmem:[#allocation2 + $0x84] sm:$0xe]
      %v1815 = vld [vmem:[#allocation2 + $0x90] sm:$0xe]
      %v1816 = vld [vmem:[#allocation2 + $0x9c] sm:$0xe]
      %v1817 = vld [vmem:[#allocation2 + $0xa8] sm:$0xe]
      %v1818 = vld [vmem:[#allocation2 + $0xb4] sm:$0xe]
      %vm1851 = vcmask 1042432
      %vm1852 = vcmask 1046532
      %vm1853 = vmor %vm1851, %vm1852
      %v1854 = vrot.slane %v1803, 5
      %v1855 = vrot.slane %v1854, 4
      %v1856 = vrot.slane %v812, 5
      %v1857 = vsel %vm1853, %v1855, %v1856
      %v1858 = vrot.slane %v1856, 4
      %v1859 = vrot.slane %v844, 5
      %v1860 = vsel %vm1853, %v1858, %v1859
      %v1861 = vrot.slane %v1804, 5
      %v1862 = vrot.slane %v1861, 4
      %v1863 = vrot.slane %v814, 5
      %v1864 = vsel %vm1853, %v1862, %v1863
      %v1865 = vrot.slane %v1863, 4
      %v1866 = vrot.slane %v845, 5
      %v1867 = vsel %vm1853, %v1865, %v1866
      %v1868 = vrot.slane %v1805, 5
      %v1869 = vrot.slane %v1868, 4
      %v1870 = vrot.slane %v816, 5
      %v1871 = vsel %vm1853, %v1869, %v1870
      %v1872 = vrot.slane %v1870, 4
      %v1873 = vrot.slane %v846, 5
      %v1874 = vsel %vm1853, %v1872, %v1873
      %v1875 = vrot.slane %v1806, 5
      %v1876 = vrot.slane %v1875, 4
      %v1877 = vrot.slane %v818, 5
      %v1878 = vsel %vm1853, %v1876, %v1877
      %v1879 = vrot.slane %v1877, 4
      %v1880 = vrot.slane %v847, 5
      %v1881 = vsel %vm1853, %v1879, %v1880
      %v1882 = vrot.slane %v1807, 5
      %v1883 = vrot.slane %v1882, 4
      %v1884 = vrot.slane %v820, 5
      %v1885 = vsel %vm1853, %v1883, %v1884
      %v1886 = vrot.slane %v1884, 4
      %v1887 = vrot.slane %v848, 5
      %v1888 = vsel %vm1853, %v1886, %v1887
      %v1889 = vrot.slane %v1808, 5
      %v1890 = vrot.slane %v1889, 4
      %v1891 = vrot.slane %v822, 5
      %v1892 = vsel %vm1853, %v1890, %v1891
      %v1893 = vrot.slane %v1891, 4
      %v1894 = vrot.slane %v849, 5
      %v1895 = vsel %vm1853, %v1893, %v1894
      %v1896 = vrot.slane %v1809, 5
      %v1897 = vrot.slane %v1896, 4
      %v1898 = vrot.slane %v824, 5
      %v1899 = vsel %vm1853, %v1897, %v1898
      %v1900 = vrot.slane %v1898, 4
      %v1901 = vrot.slane %v850, 5
      %v1902 = vsel %vm1853, %v1900, %v1901
      %v1903 = vrot.slane %v1810, 5
      %v1904 = vrot.slane %v1903, 4
      %v1905 = vrot.slane %v826, 5
      %v1906 = vsel %vm1853, %v1904, %v1905
      %v1907 = vrot.slane %v1905, 4
      %v1908 = vrot.slane %v851, 5
      %v1909 = vsel %vm1853, %v1907, %v1908
      %v1910 = vrot.slane %v1811, 5
      %v1911 = vrot.slane %v1910, 4
      %v1912 = vrot.slane %v828, 5
      %v1913 = vsel %vm1853, %v1911, %v1912
      %v1914 = vrot.slane %v1912, 4
      %v1915 = vrot.slane %v852, 5
      %v1916 = vsel %vm1853, %v1914, %v1915
      %v1917 = vrot.slane %v1812, 5
      %v1918 = vrot.slane %v1917, 4
      %v1919 = vrot.slane %v830, 5
      %v1920 = vsel %vm1853, %v1918, %v1919
      %v1921 = vrot.slane %v1919, 4
      %v1922 = vrot.slane %v853, 5
      %v1923 = vsel %vm1853, %v1921, %v1922
      %v1924 = vrot.slane %v1813, 5
      %v1925 = vrot.slane %v1924, 4
      %v1926 = vrot.slane %v832, 5
      %v1927 = vsel %vm1853, %v1925, %v1926
      %v1928 = vrot.slane %v1926, 4
      %v1929 = vrot.slane %v854, 5
      %v1930 = vsel %vm1853, %v1928, %v1929
      %v1931 = vrot.slane %v1814, 5
      %v1932 = vrot.slane %v1931, 4
      %v1933 = vrot.slane %v834, 5
      %v1934 = vsel %vm1853, %v1932, %v1933
      %v1935 = vrot.slane %v1933, 4
      %v1936 = vrot.slane %v855, 5
      %v1937 = vsel %vm1853, %v1935, %v1936
      %v1938 = vrot.slane %v1815, 5
      %v1939 = vrot.slane %v1938, 4
      %v1940 = vrot.slane %v836, 5
      %v1941 = vsel %vm1853, %v1939, %v1940
      %v1942 = vrot.slane %v1940, 4
      %v1943 = vrot.slane %v856, 5
      %v1944 = vsel %vm1853, %v1942, %v1943
      %v1945 = vrot.slane %v1816, 5
      %v1946 = vrot.slane %v1945, 4
      %v1947 = vrot.slane %v838, 5
      %v1948 = vsel %vm1853, %v1946, %v1947
      %v1949 = vrot.slane %v1947, 4
      %v1950 = vrot.slane %v857, 5
      %v1951 = vsel %vm1853, %v1949, %v1950
      %v1952 = vrot.slane %v1817, 5
      %v1953 = vrot.slane %v1952, 4
      %v1954 = vrot.slane %v840, 5
      %v1955 = vsel %vm1853, %v1953, %v1954
      %v1956 = vrot.slane %v1954, 4
      %v1957 = vrot.slane %v858, 5
      %v1958 = vsel %vm1853, %v1956, %v1957
      %v1959 = vrot.slane %v1818, 5
      %v1960 = vrot.slane %v1959, 4
      %v1961 = vrot.slane %v842, 5
      %v1962 = vsel %vm1853, %v1960, %v1961
      %v1963 = vrot.slane %v1961, 4
      %v1964 = vrot.slane %v859, 5
      %v1965 = vsel %vm1853, %v1963, %v1964
      %s1966 = scalar_lea.vmem %s1, 4
      %v1967 = vld [vmem:[%s1966] sm:$0x3]
      %v1968 = vunpack.c.l.b16 %v1857
      %v1969 = vunpack.c.l.b16 %v1860
      %v1970 = vunpack.c.l.b16 %v1864
      %v1971 = vunpack.c.l.b16 %v1867
      %v1972 = vunpack.c.l.b16 %v1871
      %v1973 = vunpack.c.l.b16 %v1874
      %v1974 = vunpack.c.l.b16 %v1878
      %v1975 = vunpack.c.l.b16 %v1881
      %v1976 = vunpack.c.l.b16 %v1885
      %v1977 = vunpack.c.l.b16 %v1888
      %v1978 = vunpack.c.l.b16 %v1892
      %v1979 = vunpack.c.l.b16 %v1895
      %v1980 = vunpack.c.l.b16 %v1899
      %v1981 = vunpack.c.l.b16 %v1902
      %v1982 = vunpack.c.l.b16 %v1906
      %v1983 = vunpack.c.l.b16 %v1909
      %v1984 = vunpack.c.l.b16 %v1913
      %v1985 = vunpack.c.l.b16 %v1916
      %v1986 = vunpack.c.l.b16 %v1920
      %v1987 = vunpack.c.l.b16 %v1923
      %v1988 = vunpack.c.l.b16 %v1927
      %v1989 = vunpack.c.l.b16 %v1930
      %v1990 = vunpack.c.l.b16 %v1934
      %v1991 = vunpack.c.l.b16 %v1937
      %v1992 = vunpack.c.l.b16 %v1941
      %v1993 = vunpack.c.l.b16 %v1944
      %v1994 = vunpack.c.l.b16 %v1948
      %v1995 = vunpack.c.l.b16 %v1951
      %v1996 = vunpack.c.l.b16 %v1955
      %v1997 = vunpack.c.l.b16 %v1958
      %v1998 = vunpack.c.l.b16 %v1962
      %v1999 = vunpack.c.l.b16 %v1965
      %v2000 = vpack.c.b16 %v1969, %v1968
      %v2001 = vpack.c.b16 %v1971, %v1970
      %v2002 = vpack.c.b16 %v1973, %v1972
      %v2003 = vpack.c.b16 %v1975, %v1974
      %v2004 = vpack.c.b16 %v1977, %v1976
      %v2005 = vpack.c.b16 %v1979, %v1978
      %v2006 = vpack.c.b16 %v1981, %v1980
      %v2007 = vpack.c.b16 %v1983, %v1982
      %v2008 = vpack.c.b16 %v1985, %v1984
      %v2009 = vpack.c.b16 %v1987, %v1986
      %v2010 = vpack.c.b16 %v1989, %v1988
      %v2011 = vpack.c.b16 %v1991, %v1990
      %v2012 = vpack.c.b16 %v1993, %v1992
      %v2013 = vpack.c.b16 %v1995, %v1994
      %v2014 = vpack.c.b16 %v1997, %v1996
      %v2015 = vpack.c.b16 %v1999, %v1998
      %v2017 = vsel %vm1297, %v2000, 0
      %v2020 = vsel %vm1297, %v2001, 0
      %v2023 = vsel %vm1297, %v2002, 0
      %v2026 = vsel %vm1297, %v2003, 0
      %v2029 = vsel %vm1297, %v2004, 0
      %v2032 = vsel %vm1297, %v2005, 0
      %v2035 = vsel %vm1297, %v2006, 0
      %v2038 = vsel %vm1297, %v2007, 0
      %v2041 = vsel %vm1297, %v2008, 0
      %v2044 = vsel %vm1297, %v2009, 0
      %v2047 = vsel %vm1297, %v2010, 0
      %v2050 = vsel %vm1297, %v2011, 0
      %v2053 = vsel %vm1297, %v2012, 0
      %v2056 = vsel %vm1297, %v2013, 0
      %v2059 = vsel %vm1297, %v2014, 0
      %v2062 = vsel %vm1297, %v2015, 0
      %v2065 = vsel %vm1346, %v1967, 0
      %2067 = vmatprep.subr.bf16.mxu0 0
      %2068 = vmatpush1.bf16.msra.mxu0 %v2065
      %2069 = vmatprep.subr.bf16.mxu0 0
      %2070 = vmatpush1.bf16.msra.mxu0 0
      %2071 = vmatprep.subr.bf16.mxu0 0
      %2072 = vmatpush1.bf16.msra.mxu0 0
      %2073 = vmatprep.subr.bf16.mxu0 0
      %2074 = vmatpush1.bf16.msra.mxu0 0
      %2075 = vmatprep.subr.bf16.mxu0 0
      %2076 = vmatpush1.bf16.msra.mxu0 0
      %2077 = vmatprep.subr.bf16.mxu0 0
      %2078 = vmatpush1.bf16.msra.mxu0 0
      %2079 = vmatprep.subr.bf16.mxu0 0
      %2080 = vmatpush1.bf16.msra.mxu0 0
      %2081 = vmatprep.subr.bf16.mxu0 0
      %2082 = vmatpush1.bf16.msra.mxu0 0
      %2083 = vmatprep.subr.bf16.mxu0 0
      %2084 = vmatpush1.bf16.msra.mxu0 0
      %2085 = vmatprep.subr.bf16.mxu0 0
      %2086 = vmatpush1.bf16.msra.mxu0 0
      %2087 = vmatprep.subr.bf16.mxu0 0
      %2088 = vmatpush1.bf16.msra.mxu0 0
      %2089 = vmatprep.subr.bf16.mxu0 0
      %2090 = vmatpush1.bf16.msra.mxu0 0
      %2091 = vmatprep.subr.bf16.mxu0 0
      %2092 = vmatpush1.bf16.msra.mxu0 0
      %2093 = vmatprep.subr.bf16.mxu0 0
      %2094 = vmatpush1.bf16.msra.mxu0 0
      %2095 = vmatprep.subr.bf16.mxu0 0
      %2096 = vmatpush1.bf16.msra.mxu0 0
      %2097 = vmatprep.subr.bf16.mxu0 0
      %2098 = vmatpush1.bf16.msra.mxu0 0
      %2099 = vmatprep.mubr.bf16.mxu0 0
      %2100 = vmatmul.mubr.bf16.gmra.mrb[0].mxu0 %v2017
      %v2101 = vpop.f32.mrb[0].mxu0
      %v2102 = vadd.f32 0.0, %v2101
      %v2103 = vpop.f32.mrb[0].mxu0
      %v2104 = vpop.f32.mrb[0].mxu0
      %v2105 = vadd.f32 0.0, %v2104
      %v2106 = vpop.f32.mrb[0].mxu0
      %2107 = vmatprep.mubr.bf16.mxu0 0
      %2108 = vmatmul.mubr.bf16.gmra.mrb[0].mxu0 %v2020
      %v2109 = vpop.f32.mrb[0].mxu0
      %v2110 = vadd.f32 0.0, %v2109
      %v2111 = vpop.f32.mrb[0].mxu0
      %v2112 = vpop.f32.mrb[0].mxu0
      %v2113 = vadd.f32 0.0, %v2112
      %v2114 = vpop.f32.mrb[0].mxu0
      %2115 = vmatprep.mubr.bf16.mxu0 0
      %2116 = vmatmul.mubr.bf16.gmra.mrb[0].mxu0 %v2023
      %v2117 = vpop.f32.mrb[0].mxu0
      %v2118 = vadd.f32 0.0, %v2117
      %v2119 = vpop.f32.mrb[0].mxu0
      %v2120 = vpop.f32.mrb[0].mxu0
      %v2121 = vadd.f32 0.0, %v2120
      %v2122 = vpop.f32.mrb[0].mxu0
      %2123 = vmatprep.mubr.bf16.mxu0 0
      %2124 = vmatmul.mubr.bf16.gmra.mrb[0].mxu0 %v2026
      %v2125 = vpop.f32.mrb[0].mxu0
      %v2126 = vadd.f32 0.0, %v2125
      %v2127 = vpop.f32.mrb[0].mxu0
      %v2128 = vpop.f32.mrb[0].mxu0
      %v2129 = vadd.f32 0.0, %v2128
      %v2130 = vpop.f32.mrb[0].mxu0
      %2131 = vmatprep.mubr.bf16.mxu0 0
      %2132 = vmatmul.mubr.bf16.gmra.mrb[0].mxu0 %v2029
      %v2133 = vpop.f32.mrb[0].mxu0
      %v2134 = vadd.f32 0.0, %v2133
      %v2135 = vpop.f32.mrb[0].mxu0
      %v2136 = vpop.f32.mrb[0].mxu0
      %v2137 = vadd.f32 0.0, %v2136
      %v2138 = vpop.f32.mrb[0].mxu0
      %2139 = vmatprep.mubr.bf16.mxu0 0
      %2140 = vmatmul.mubr.bf16.gmra.mrb[0].mxu0 %v2032
      %v2141 = vpop.f32.mrb[0].mxu0
      %v2142 = vadd.f32 0.0, %v2141
      %v2143 = vpop.f32.mrb[0].mxu0
      %v2144 = vpop.f32.mrb[0].mxu0
      %v2145 = vadd.f32 0.0, %v2144
      %v2146 = vpop.f32.mrb[0].mxu0
      %2147 = vmatprep.mubr.bf16.mxu0 0
      %2148 = vmatmul.mubr.bf16.gmra.mrb[0].mxu0 %v2035
      %v2149 = vpop.f32.mrb[0].mxu0
      %v2150 = vadd.f32 0.0, %v2149
      %v2151 = vpop.f32.mrb[0].mxu0
      %v2152 = vpop.f32.mrb[0].mxu0
      %v2153 = vadd.f32 0.0, %v2152
      %v2154 = vpop.f32.mrb[0].mxu0
      %2155 = vmatprep.mubr.bf16.mxu0 0
      %2156 = vmatmul.mubr.bf16.gmra.mrb[0].mxu0 %v2038
      %v2157 = vpop.f32.mrb[0].mxu0
      %v2158 = vadd.f32 0.0, %v2157
      %v2159 = vpop.f32.mrb[0].mxu0
      %v2160 = vpop.f32.mrb[0].mxu0
      %v2161 = vadd.f32 0.0, %v2160
      %v2162 = vpop.f32.mrb[0].mxu0
      %2163 = vmatprep.mubr.bf16.mxu0 0
      %2164 = vmatmul.mubr.bf16.gmra.mrb[0].mxu0 %v2041
      %v2165 = vpop.f32.mrb[0].mxu0
      %v2166 = vadd.f32 0.0, %v2165
      %v2167 = vpop.f32.mrb[0].mxu0
      %v2168 = vpop.f32.mrb[0].mxu0
      %v2169 = vadd.f32 0.0, %v2168
      %v2170 = vpop.f32.mrb[0].mxu0
      %2171 = vmatprep.mubr.bf16.mxu0 0
      %2172 = vmatmul.mubr.bf16.gmra.mrb[0].mxu0 %v2044
      %v2173 = vpop.f32.mrb[0].mxu0
      %v2174 = vadd.f32 0.0, %v2173
      %v2175 = vpop.f32.mrb[0].mxu0
      %v2176 = vpop.f32.mrb[0].mxu0
      %v2177 = vadd.f32 0.0, %v2176
      %v2178 = vpop.f32.mrb[0].mxu0
      %2179 = vmatprep.mubr.bf16.mxu0 0
      %2180 = vmatmul.mubr.bf16.gmra.mrb[0].mxu0 %v2047
      %v2181 = vpop.f32.mrb[0].mxu0
      %v2182 = vadd.f32 0.0, %v2181
      %v2183 = vpop.f32.mrb[0].mxu0
      %v2184 = vpop.f32.mrb[0].mxu0
      %v2185 = vadd.f32 0.0, %v2184
      %v2186 = vpop.f32.mrb[0].mxu0
      %2187 = vmatprep.mubr.bf16.mxu0 0
      %2188 = vmatmul.mubr.bf16.gmra.mrb[0].mxu0 %v2050
      %v2189 = vpop.f32.mrb[0].mxu0
      %v2190 = vadd.f32 0.0, %v2189
      %v2191 = vpop.f32.mrb[0].mxu0
      %v2192 = vpop.f32.mrb[0].mxu0
      %v2193 = vadd.f32 0.0, %v2192
      %v2194 = vpop.f32.mrb[0].mxu0
      %2195 = vmatprep.mubr.bf16.mxu0 0
      %2196 = vmatmul.mubr.bf16.gmra.mrb[0].mxu0 %v2053
      %v2197 = vpop.f32.mrb[0].mxu0
      %v2198 = vadd.f32 0.0, %v2197
      %v2199 = vpop.f32.mrb[0].mxu0
      %v2200 = vpop.f32.mrb[0].mxu0
      %v2201 = vadd.f32 0.0, %v2200
      %v2202 = vpop.f32.mrb[0].mxu0
      %2203 = vmatprep.mubr.bf16.mxu0 0
      %2204 = vmatmul.mubr.bf16.gmra.mrb[0].mxu0 %v2056
      %v2205 = vpop.f32.mrb[0].mxu0
      %v2206 = vadd.f32 0.0, %v2205
      %v2207 = vpop.f32.mrb[0].mxu0
      %v2208 = vpop.f32.mrb[0].mxu0
      %v2209 = vadd.f32 0.0, %v2208
      %v2210 = vpop.f32.mrb[0].mxu0
      %2211 = vmatprep.mubr.bf16.mxu0 0
      %2212 = vmatmul.mubr.bf16.gmra.mrb[0].mxu0 %v2059
      %v2213 = vpop.f32.mrb[0].mxu0
      %v2214 = vadd.f32 0.0, %v2213
      %v2215 = vpop.f32.mrb[0].mxu0
      %v2216 = vpop.f32.mrb[0].mxu0
      %v2217 = vadd.f32 0.0, %v2216
      %v2218 = vpop.f32.mrb[0].mxu0
      %2219 = vmatprep.mubr.bf16.mxu0 0
      %2220 = vmatmul.mubr.bf16.gmra.mrb[0].mxu0 %v2062
      %v2221 = vpop.f32.mrb[0].mxu0
      %v2222 = vadd.f32 0.0, %v2221
      %v2223 = vpop.f32.mrb[0].mxu0
      %v2224 = vpop.f32.mrb[0].mxu0
      %v2225 = vadd.f32 0.0, %v2224
      %v2226 = vpop.f32.mrb[0].mxu0
      %2227 = vdwg.mxu0
      %v2228 = vadd.f32 %v1677, %v2102
      %v2229 = vadd.f32 %v1680, %v2105
      %v2230 = vadd.f32 %v1685, %v2110
      %v2231 = vadd.f32 %v1688, %v2113
      %v2232 = vadd.f32 %v1693, %v2118
      %v2233 = vadd.f32 %v1696, %v2121
      %v2234 = vadd.f32 %v1701, %v2126
      %v2235 = vadd.f32 %v1704, %v2129
      %v2236 = vadd.f32 %v1709, %v2134
      %v2237 = vadd.f32 %v1712, %v2137
      %v2238 = vadd.f32 %v1717, %v2142
      %v2239 = vadd.f32 %v1720, %v2145
      %v2240 = vadd.f32 %v1725, %v2150
      %v2241 = vadd.f32 %v1728, %v2153
      %v2242 = vadd.f32 %v1733, %v2158
      %v2243 = vadd.f32 %v1736, %v2161
      %v2244 = vadd.f32 %v1741, %v2166
      %v2245 = vadd.f32 %v1744, %v2169
      %v2246 = vadd.f32 %v1749, %v2174
      %v2247 = vadd.f32 %v1752, %v2177
      %v2248 = vadd.f32 %v1757, %v2182
      %v2249 = vadd.f32 %v1760, %v2185
      %v2250 = vadd.f32 %v1765, %v2190
      %v2251 = vadd.f32 %v1768, %v2193
      %v2252 = vadd.f32 %v1773, %v2198
      %v2253 = vadd.f32 %v1776, %v2201
      %v2254 = vadd.f32 %v1781, %v2206
      %v2255 = vadd.f32 %v1784, %v2209
      %v2256 = vadd.f32 %v1789, %v2214
      %v2257 = vadd.f32 %v1792, %v2217
      %v2258 = vadd.f32 %v1797, %v2222
      %v2259 = vadd.f32 %v1800, %v2225
      %v2260 = vld [vmem:[%s693] sm:$0xf]
      %v2261 = vld [vmem:[%s693 + $0x4] sm:$0xf]
      %v2262 = vld [vmem:[%s693 + $0xc] sm:$0xf]
      %v2263 = vld [vmem:[%s693 + $0x10] sm:$0xf]
      %v2264 = vld [vmem:[%s693 + $0x18] sm:$0xf]
      %v2265 = vld [vmem:[%s693 + $0x1c] sm:$0xf]
      %v2266 = vld [vmem:[%s693 + $0x24] sm:$0xf]
      %v2267 = vld [vmem:[%s693 + $0x28] sm:$0xf]
      %v2268 = vld [vmem:[%s693 + $0x30] sm:$0xf]
      %v2269 = vld [vmem:[%s693 + $0x34] sm:$0xf]
      %v2270 = vld [vmem:[%s693 + $0x3c] sm:$0xf]
      %v2271 = vld [vmem:[%s693 + $0x40] sm:$0xf]
      %v2272 = vld [vmem:[%s693 + $0x48] sm:$0xf]
      %v2273 = vld [vmem:[%s693 + $0x4c] sm:$0xf]
      %v2274 = vld [vmem:[%s693 + $0x54] sm:$0xf]
      %v2275 = vld [vmem:[%s693 + $0x58] sm:$0xf]
      %v2276 = vld [vmem:[%s693 + $0x60] sm:$0xf]
      %v2277 = vld [vmem:[%s693 + $0x64] sm:$0xf]
      %v2278 = vld [vmem:[%s693 + $0x6c] sm:$0xf]
      %v2279 = vld [vmem:[%s693 + $0x70] sm:$0xf]
      %v2280 = vld [vmem:[%s693 + $0x78] sm:$0xf]
      %v2281 = vld [vmem:[%s693 + $0x7c] sm:$0xf]
      %v2282 = vld [vmem:[%s693 + $0x84] sm:$0xf]
      %v2283 = vld [vmem:[%s693 + $0x88] sm:$0xf]
      %v2284 = vld [vmem:[%s693 + $0x90] sm:$0xf]
      %v2285 = vld [vmem:[%s693 + $0x94] sm:$0xf]
      %v2286 = vld [vmem:[%s693 + $0x9c] sm:$0xf]
      %v2287 = vld [vmem:[%s693 + $0xa0] sm:$0xf]
      %v2288 = vld [vmem:[%s693 + $0xa8] sm:$0xf]
      %v2289 = vld [vmem:[%s693 + $0xac] sm:$0xf]
      %v2290 = vld [vmem:[%s693 + $0xb4] sm:$0xf]
      %v2291 = vld [vmem:[%s693 + $0xb8] sm:$0xf]
      %s2292 = scalar_lea.vmem %s1, 6
      %v2293 = vld [vmem:[%s2292] sm:$0x3]
      %v2326 = vunpack.c.l.b16 %v2260
      %v2327 = vunpack.c.l.b16 %v2261
      %v2328 = vunpack.c.l.b16 %v2262
      %v2329 = vunpack.c.l.b16 %v2263
      %v2330 = vunpack.c.l.b16 %v2264
      %v2331 = vunpack.c.l.b16 %v2265
      %v2332 = vunpack.c.l.b16 %v2266
      %v2333 = vunpack.c.l.b16 %v2267
      %v2334 = vunpack.c.l.b16 %v2268
      %v2335 = vunpack.c.l.b16 %v2269
      %v2336 = vunpack.c.l.b16 %v2270
      %v2337 = vunpack.c.l.b16 %v2271
      %v2338 = vunpack.c.l.b16 %v2272
      %v2339 = vunpack.c.l.b16 %v2273
      %v2340 = vunpack.c.l.b16 %v2274
      %v2341 = vunpack.c.l.b16 %v2275
      %v2342 = vunpack.c.l.b16 %v2276
      %v2343 = vunpack.c.l.b16 %v2277
      %v2344 = vunpack.c.l.b16 %v2278
      %v2345 = vunpack.c.l.b16 %v2279
      %v2346 = vunpack.c.l.b16 %v2280
      %v2347 = vunpack.c.l.b16 %v2281
      %v2348 = vunpack.c.l.b16 %v2282
      %v2349 = vunpack.c.l.b16 %v2283
      %v2350 = vunpack.c.l.b16 %v2284
      %v2351 = vunpack.c.l.b16 %v2285
      %v2352 = vunpack.c.l.b16 %v2286
      %v2353 = vunpack.c.l.b16 %v2287
      %v2354 = vunpack.c.l.b16 %v2288
      %v2355 = vunpack.c.l.b16 %v2289
      %v2356 = vunpack.c.l.b16 %v2290
      %v2357 = vunpack.c.l.b16 %v2291
      %v2358 = vpack.c.b16 %v2327, %v2326
      %v2359 = vpack.c.b16 %v2329, %v2328
      %v2360 = vpack.c.b16 %v2331, %v2330
      %v2361 = vpack.c.b16 %v2333, %v2332
      %v2362 = vpack.c.b16 %v2335, %v2334
      %v2363 = vpack.c.b16 %v2337, %v2336
      %v2364 = vpack.c.b16 %v2339, %v2338
      %v2365 = vpack.c.b16 %v2341, %v2340
      %v2366 = vpack.c.b16 %v2343, %v2342
      %v2367 = vpack.c.b16 %v2345, %v2344
      %v2368 = vpack.c.b16 %v2347, %v2346
      %v2369 = vpack.c.b16 %v2349, %v2348
      %v2370 = vpack.c.b16 %v2351, %v2350
      %v2371 = vpack.c.b16 %v2353, %v2352
      %v2372 = vpack.c.b16 %v2355, %v2354
      %v2373 = vpack.c.b16 %v2357, %v2356
      %v2375 = vsel %vm1297, %v2358, 0
      %v2378 = vsel %vm1297, %v2359, 0
      %v2381 = vsel %vm1297, %v2360, 0
      %v2384 = vsel %vm1297, %v2361, 0
      %v2387 = vsel %vm1297, %v2362, 0
      %v2390 = vsel %vm1297, %v2363, 0
      %v2393 = vsel %vm1297, %v2364, 0
      %v2396 = vsel %vm1297, %v2365, 0
      %v2399 = vsel %vm1297, %v2366, 0
      %v2402 = vsel %vm1297, %v2367, 0
      %v2405 = vsel %vm1297, %v2368, 0
      %v2408 = vsel %vm1297, %v2369, 0
      %v2411 = vsel %vm1297, %v2370, 0
      %v2414 = vsel %vm1297, %v2371, 0
      %v2417 = vsel %vm1297, %v2372, 0
      %v2420 = vsel %vm1297, %v2373, 0
      %v2423 = vsel %vm1346, %v2293, 0
      %2425 = vmatprep.subr.bf16.mxu0 0
      %2426 = vmatpush1.bf16.msra.mxu0 %v2423
      %2427 = vmatprep.subr.bf16.mxu0 0
      %2428 = vmatpush1.bf16.msra.mxu0 0
      %2429 = vmatprep.subr.bf16.mxu0 0
      %2430 = vmatpush1.bf16.msra.mxu0 0
      %2431 = vmatprep.subr.bf16.mxu0 0
      %2432 = vmatpush1.bf16.msra.mxu0 0
      %2433 = vmatprep.subr.bf16.mxu0 0
      %2434 = vmatpush1.bf16.msra.mxu0 0
      %2435 = vmatprep.subr.bf16.mxu0 0
      %2436 = vmatpush1.bf16.msra.mxu0 0
      %2437 = vmatprep.subr.bf16.mxu0 0
      %2438 = vmatpush1.bf16.msra.mxu0 0
      %2439 = vmatprep.subr.bf16.mxu0 0
      %2440 = vmatpush1.bf16.msra.mxu0 0
      %2441 = vmatprep.subr.bf16.mxu0 0
      %2442 = vmatpush1.bf16.msra.mxu0 0
      %2443 = vmatprep.subr.bf16.mxu0 0
      %2444 = vmatpush1.bf16.msra.mxu0 0
      %2445 = vmatprep.subr.bf16.mxu0 0
      %2446 = vmatpush1.bf16.msra.mxu0 0
      %2447 = vmatprep.subr.bf16.mxu0 0
      %2448 = vmatpush1.bf16.msra.mxu0 0
      %2449 = vmatprep.subr.bf16.mxu0 0
      %2450 = vmatpush1.bf16.msra.mxu0 0
      %2451 = vmatprep.subr.bf16.mxu0 0
      %2452 = vmatpush1.bf16.msra.mxu0 0
      %2453 = vmatprep.subr.bf16.mxu0 0
      %2454 = vmatpush1.bf16.msra.mxu0 0
      %2455 = vmatprep.subr.bf16.mxu0 0
      %2456 = vmatpush1.bf16.msra.mxu0 0
      %2457 = vmatprep.mubr.bf16.mxu0 0
      %2458 = vmatmul.mubr.bf16.gmra.mrb[0].mxu0 %v2375
      %v2459 = vpop.f32.mrb[0].mxu0
      %v2460 = vadd.f32 0.0, %v2459
      %v2461 = vpop.f32.mrb[0].mxu0
      %v2462 = vpop.f32.mrb[0].mxu0
      %v2463 = vadd.f32 0.0, %v2462
      %v2464 = vpop.f32.mrb[0].mxu0
      %2465 = vmatprep.mubr.bf16.mxu0 0
      %2466 = vmatmul.mubr.bf16.gmra.mrb[0].mxu0 %v2378
      %v2467 = vpop.f32.mrb[0].mxu0
      %v2468 = vadd.f32 0.0, %v2467
      %v2469 = vpop.f32.mrb[0].mxu0
      %v2470 = vpop.f32.mrb[0].mxu0
      %v2471 = vadd.f32 0.0, %v2470
      %v2472 = vpop.f32.mrb[0].mxu0
      %2473 = vmatprep.mubr.bf16.mxu0 0
      %2474 = vmatmul.mubr.bf16.gmra.mrb[0].mxu0 %v2381
      %v2475 = vpop.f32.mrb[0].mxu0
      %v2476 = vadd.f32 0.0, %v2475
      %v2477 = vpop.f32.mrb[0].mxu0
      %v2478 = vpop.f32.mrb[0].mxu0
      %v2479 = vadd.f32 0.0, %v2478
      %v2480 = vpop.f32.mrb[0].mxu0
      %2481 = vmatprep.mubr.bf16.mxu0 0
      %2482 = vmatmul.mubr.bf16.gmra.mrb[0].mxu0 %v2384
      %v2483 = vpop.f32.mrb[0].mxu0
      %v2484 = vadd.f32 0.0, %v2483
      %v2485 = vpop.f32.mrb[0].mxu0
      %v2486 = vpop.f32.mrb[0].mxu0
      %v2487 = vadd.f32 0.0, %v2486
      %v2488 = vpop.f32.mrb[0].mxu0
      %2489 = vmatprep.mubr.bf16.mxu0 0
      %2490 = vmatmul.mubr.bf16.gmra.mrb[0].mxu0 %v2387
      %v2491 = vpop.f32.mrb[0].mxu0
      %v2492 = vadd.f32 0.0, %v2491
      %v2493 = vpop.f32.mrb[0].mxu0
      %v2494 = vpop.f32.mrb[0].mxu0
      %v2495 = vadd.f32 0.0, %v2494
      %v2496 = vpop.f32.mrb[0].mxu0
      %2497 = vmatprep.mubr.bf16.mxu0 0
      %2498 = vmatmul.mubr.bf16.gmra.mrb[0].mxu0 %v2390
      %v2499 = vpop.f32.mrb[0].mxu0
      %v2500 = vadd.f32 0.0, %v2499
      %v2501 = vpop.f32.mrb[0].mxu0
      %v2502 = vpop.f32.mrb[0].mxu0
      %v2503 = vadd.f32 0.0, %v2502
      %v2504 = vpop.f32.mrb[0].mxu0
      %2505 = vmatprep.mubr.bf16.mxu0 0
      %2506 = vmatmul.mubr.bf16.gmra.mrb[0].mxu0 %v2393
      %v2507 = vpop.f32.mrb[0].mxu0
      %v2508 = vadd.f32 0.0, %v2507
      %v2509 = vpop.f32.mrb[0].mxu0
      %v2510 = vpop.f32.mrb[0].mxu0
      %v2511 = vadd.f32 0.0, %v2510
      %v2512 = vpop.f32.mrb[0].mxu0
      %2513 = vmatprep.mubr.bf16.mxu0 0
      %2514 = vmatmul.mubr.bf16.gmra.mrb[0].mxu0 %v2396
      %v2515 = vpop.f32.mrb[0].mxu0
      %v2516 = vadd.f32 0.0, %v2515
      %v2517 = vpop.f32.mrb[0].mxu0
      %v2518 = vpop.f32.mrb[0].mxu0
      %v2519 = vadd.f32 0.0, %v2518
      %v2520 = vpop.f32.mrb[0].mxu0
      %2521 = vmatprep.mubr.bf16.mxu0 0
      %2522 = vmatmul.mubr.bf16.gmra.mrb[0].mxu0 %v2399
      %v2523 = vpop.f32.mrb[0].mxu0
      %v2524 = vadd.f32 0.0, %v2523
      %v2525 = vpop.f32.mrb[0].mxu0
      %v2526 = vpop.f32.mrb[0].mxu0
      %v2527 = vadd.f32 0.0, %v2526
      %v2528 = vpop.f32.mrb[0].mxu0
      %2529 = vmatprep.mubr.bf16.mxu0 0
      %2530 = vmatmul.mubr.bf16.gmra.mrb[0].mxu0 %v2402
      %v2531 = vpop.f32.mrb[0].mxu0
      %v2532 = vadd.f32 0.0, %v2531
      %v2533 = vpop.f32.mrb[0].mxu0
      %v2534 = vpop.f32.mrb[0].mxu0
      %v2535 = vadd.f32 0.0, %v2534
      %v2536 = vpop.f32.mrb[0].mxu0
      %2537 = vmatprep.mubr.bf16.mxu0 0
      %2538 = vmatmul.mubr.bf16.gmra.mrb[0].mxu0 %v2405
      %v2539 = vpop.f32.mrb[0].mxu0
      %v2540 = vadd.f32 0.0, %v2539
      %v2541 = vpop.f32.mrb[0].mxu0
      %v2542 = vpop.f32.mrb[0].mxu0
      %v2543 = vadd.f32 0.0, %v2542
      %v2544 = vpop.f32.mrb[0].mxu0
      %2545 = vmatprep.mubr.bf16.mxu0 0
      %2546 = vmatmul.mubr.bf16.gmra.mrb[0].mxu0 %v2408
      %v2547 = vpop.f32.mrb[0].mxu0
      %v2548 = vadd.f32 0.0, %v2547
      %v2549 = vpop.f32.mrb[0].mxu0
      %v2550 = vpop.f32.mrb[0].mxu0
      %v2551 = vadd.f32 0.0, %v2550
      %v2552 = vpop.f32.mrb[0].mxu0
      %2553 = vmatprep.mubr.bf16.mxu0 0
      %2554 = vmatmul.mubr.bf16.gmra.mrb[0].mxu0 %v2411
      %v2555 = vpop.f32.mrb[0].mxu0
      %v2556 = vadd.f32 0.0, %v2555
      %v2557 = vpop.f32.mrb[0].mxu0
      %v2558 = vpop.f32.mrb[0].mxu0
      %v2559 = vadd.f32 0.0, %v2558
      %v2560 = vpop.f32.mrb[0].mxu0
      %2561 = vmatprep.mubr.bf16.mxu0 0
      %2562 = vmatmul.mubr.bf16.gmra.mrb[0].mxu0 %v2414
      %v2563 = vpop.f32.mrb[0].mxu0
      %v2564 = vadd.f32 0.0, %v2563
      %v2565 = vpop.f32.mrb[0].mxu0
      %v2566 = vpop.f32.mrb[0].mxu0
      %v2567 = vadd.f32 0.0, %v2566
      %v2568 = vpop.f32.mrb[0].mxu0
      %2569 = vmatprep.mubr.bf16.mxu0 0
      %2570 = vmatmul.mubr.bf16.gmra.mrb[0].mxu0 %v2417
      %v2571 = vpop.f32.mrb[0].mxu0
      %v2572 = vadd.f32 0.0, %v2571
      %v2573 = vpop.f32.mrb[0].mxu0
      %v2574 = vpop.f32.mrb[0].mxu0
      %v2575 = vadd.f32 0.0, %v2574
      %v2576 = vpop.f32.mrb[0].mxu0
      %2577 = vmatprep.mubr.bf16.mxu0 0
      %2578 = vmatmul.mubr.bf16.gmra.mrb[0].mxu0 %v2420
      %v2579 = vpop.f32.mrb[0].mxu0
      %v2580 = vadd.f32 0.0, %v2579
      %v2581 = vpop.f32.mrb[0].mxu0
      %v2582 = vpop.f32.mrb[0].mxu0
      %v2583 = vadd.f32 0.0, %v2582
      %v2584 = vpop.f32.mrb[0].mxu0
      %2585 = vdwg.mxu0
      %v2586 = vadd.f32 %v2228, %v2460
      %v2587 = vadd.f32 %v2229, %v2463
      %v2588 = vadd.f32 %v2230, %v2468
      %v2589 = vadd.f32 %v2231, %v2471
      %v2590 = vadd.f32 %v2232, %v2476
      %v2591 = vadd.f32 %v2233, %v2479
      %v2592 = vadd.f32 %v2234, %v2484
      %v2593 = vadd.f32 %v2235, %v2487
      %v2594 = vadd.f32 %v2236, %v2492
      %v2595 = vadd.f32 %v2237, %v2495
      %v2596 = vadd.f32 %v2238, %v2500
      %v2597 = vadd.f32 %v2239, %v2503
      %v2598 = vadd.f32 %v2240, %v2508
      %v2599 = vadd.f32 %v2241, %v2511
      %v2600 = vadd.f32 %v2242, %v2516
      %v2601 = vadd.f32 %v2243, %v2519
      %v2602 = vadd.f32 %v2244, %v2524
      %v2603 = vadd.f32 %v2245, %v2527
      %v2604 = vadd.f32 %v2246, %v2532
      %v2605 = vadd.f32 %v2247, %v2535
      %v2606 = vadd.f32 %v2248, %v2540
      %v2607 = vadd.f32 %v2249, %v2543
      %v2608 = vadd.f32 %v2250, %v2548
      %v2609 = vadd.f32 %v2251, %v2551
      %v2610 = vadd.f32 %v2252, %v2556
      %v2611 = vadd.f32 %v2253, %v2559
      %v2612 = vadd.f32 %v2254, %v2564
      %v2613 = vadd.f32 %v2255, %v2567
      %v2614 = vadd.f32 %v2256, %v2572
      %v2615 = vadd.f32 %v2257, %v2575
      %v2616 = vadd.f32 %v2258, %v2580
      %v2617 = vadd.f32 %v2259, %v2583
      %v2618 = vld [vmem:[%s693] sm:$0xf]
      %v2619 = vld [vmem:[%s693 + $0x4] sm:$0xf]
      %v2620 = vld [vmem:[%s693 + $0x8] sm:$0x1]
      %v2621 = vld [vmem:[%s693 + $0xc] sm:$0xf]
      %v2622 = vld [vmem:[%s693 + $0x10] sm:$0xf]
      %v2623 = vld [vmem:[%s693 + $0x14] sm:$0x1]
      %v2624 = vld [vmem:[%s693 + $0x18] sm:$0xf]
      %v2625 = vld [vmem:[%s693 + $0x1c] sm:$0xf]
      %v2626 = vld [vmem:[%s693 + $0x20] sm:$0x1]
      %v2627 = vld [vmem:[%s693 + $0x24] sm:$0xf]
      %v2628 = vld [vmem:[%s693 + $0x28] sm:$0xf]
      %v2629 = vld [vmem:[%s693 + $0x2c] sm:$0x1]
      %v2630 = vld [vmem:[%s693 + $0x30] sm:$0xf]
      %v2631 = vld [vmem:[%s693 + $0x34] sm:$0xf]
      %v2632 = vld [vmem:[%s693 + $0x38] sm:$0x1]
      %v2633 = vld [vmem:[%s693 + $0x3c] sm:$0xf]
      %v2634 = vld [vmem:[%s693 + $0x40] sm:$0xf]
      %v2635 = vld [vmem:[%s693 + $0x44] sm:$0x1]
      %v2636 = vld [vmem:[%s693 + $0x48] sm:$0xf]
      %v2637 = vld [vmem:[%s693 + $0x4c] sm:$0xf]
      %v2638 = vld [vmem:[%s693 + $0x50] sm:$0x1]
      %v2639 = vld [vmem:[%s693 + $0x54] sm:$0xf]
      %v2640 = vld [vmem:[%s693 + $0x58] sm:$0xf]
      %v2641 = vld [vmem:[%s693 + $0x5c] sm:$0x1]
      %v2642 = vld [vmem:[%s693 + $0x60] sm:$0xf]
      %v2643 = vld [vmem:[%s693 + $0x64] sm:$0xf]
      %v2644 = vld [vmem:[%s693 + $0x68] sm:$0x1]
      %v2645 = vld [vmem:[%s693 + $0x6c] sm:$0xf]
      %v2646 = vld [vmem:[%s693 + $0x70] sm:$0xf]
      %v2647 = vld [vmem:[%s693 + $0x74] sm:$0x1]
      %v2648 = vld [vmem:[%s693 + $0x78] sm:$0xf]
      %v2649 = vld [vmem:[%s693 + $0x7c] sm:$0xf]
      %v2650 = vld [vmem:[%s693 + $0x80] sm:$0x1]
      %v2651 = vld [vmem:[%s693 + $0x84] sm:$0xf]
      %v2652 = vld [vmem:[%s693 + $0x88] sm:$0xf]
      %v2653 = vld [vmem:[%s693 + $0x8c] sm:$0x1]
      %v2654 = vld [vmem:[%s693 + $0x90] sm:$0xf]
      %v2655 = vld [vmem:[%s693 + $0x94] sm:$0xf]
      %v2656 = vld [vmem:[%s693 + $0x98] sm:$0x1]
      %v2657 = vld [vmem:[%s693 + $0x9c] sm:$0xf]
      %v2658 = vld [vmem:[%s693 + $0xa0] sm:$0xf]
      %v2659 = vld [vmem:[%s693 + $0xa4] sm:$0x1]
      %v2660 = vld [vmem:[%s693 + $0xa8] sm:$0xf]
      %v2661 = vld [vmem:[%s693 + $0xac] sm:$0xf]
      %v2662 = vld [vmem:[%s693 + $0xb0] sm:$0x1]
      %v2663 = vld [vmem:[%s693 + $0xb4] sm:$0xf]
      %v2664 = vld [vmem:[%s693 + $0xb8] sm:$0xf]
      %v2665 = vld [vmem:[%s693 + $0xbc] sm:$0x1]
      %v2667 = vshrl.u32 %v2618, 16
      %v2669 = vrot.slane %v2667, 4
      %v2670 = vshll.u32 %v2618, 16
      %v2672 = vrot.slane %v2670, 5
      %v2673 = vor.u32 %v2669, %v2672
      %v2674 = vrot.slane %v2673, 4
      %v2676 = vshll.u32 %v2619, 16
      %v2678 = vrot.slane %v2676, 5
      %v2679 = vsel %vm862, %v2674, %v2678
      %v2680 = vshrl.u32 %v2619, 16
      %v2682 = vrot.slane %v2680, 4
      %v2683 = vor.u32 %v2682, %v2678
      %v2684 = vrot.slane %v2683, 4
      %v2686 = vshll.u32 %v2620, 16
      %v2688 = vrot.slane %v2686, 5
      %v2689 = vsel %vm862, %v2684, %v2688
      %v2691 = vshrl.u32 %v2621, 16
      %v2693 = vrot.slane %v2691, 4
      %v2694 = vshll.u32 %v2621, 16
      %v2696 = vrot.slane %v2694, 5
      %v2697 = vor.u32 %v2693, %v2696
      %v2698 = vrot.slane %v2697, 4
      %v2700 = vshll.u32 %v2622, 16
      %v2702 = vrot.slane %v2700, 5
      %v2703 = vsel %vm862, %v2698, %v2702
      %v2704 = vshrl.u32 %v2622, 16
      %v2706 = vrot.slane %v2704, 4
      %v2707 = vor.u32 %v2706, %v2702
      %v2708 = vrot.slane %v2707, 4
      %v2710 = vshll.u32 %v2623, 16
      %v2712 = vrot.slane %v2710, 5
      %v2713 = vsel %vm862, %v2708, %v2712
      %v2715 = vshrl.u32 %v2624, 16
      %v2717 = vrot.slane %v2715, 4
      %v2718 = vshll.u32 %v2624, 16
      %v2720 = vrot.slane %v2718, 5
      %v2721 = vor.u32 %v2717, %v2720
      %v2722 = vrot.slane %v2721, 4
      %v2724 = vshll.u32 %v2625, 16
      %v2726 = vrot.slane %v2724, 5
      %v2727 = vsel %vm862, %v2722, %v2726
      %v2728 = vshrl.u32 %v2625, 16
      %v2730 = vrot.slane %v2728, 4
      %v2731 = vor.u32 %v2730, %v2726
      %v2732 = vrot.slane %v2731, 4
      %v2734 = vshll.u32 %v2626, 16
      %v2736 = vrot.slane %v2734, 5
      %v2737 = vsel %vm862, %v2732, %v2736
      %v2739 = vshrl.u32 %v2627, 16
      %v2741 = vrot.slane %v2739, 4
      %v2742 = vshll.u32 %v2627, 16
      %v2744 = vrot.slane %v2742, 5
      %v2745 = vor.u32 %v2741, %v2744
      %v2746 = vrot.slane %v2745, 4
      %v2748 = vshll.u32 %v2628, 16
      %v2750 = vrot.slane %v2748, 5
      %v2751 = vsel %vm862, %v2746, %v2750
      %v2752 = vshrl.u32 %v2628, 16
      %v2754 = vrot.slane %v2752, 4
      %v2755 = vor.u32 %v2754, %v2750
      %v2756 = vrot.slane %v2755, 4
      %v2758 = vshll.u32 %v2629, 16
      %v2760 = vrot.slane %v2758, 5
      %v2761 = vsel %vm862, %v2756, %v2760
      %v2763 = vshrl.u32 %v2630, 16
      %v2765 = vrot.slane %v2763, 4
      %v2766 = vshll.u32 %v2630, 16
      %v2768 = vrot.slane %v2766, 5
      %v2769 = vor.u32 %v2765, %v2768
      %v2770 = vrot.slane %v2769, 4
      %v2772 = vshll.u32 %v2631, 16
      %v2774 = vrot.slane %v2772, 5
      %v2775 = vsel %vm862, %v2770, %v2774
      %v2776 = vshrl.u32 %v2631, 16
      %v2778 = vrot.slane %v2776, 4
      %v2779 = vor.u32 %v2778, %v2774
      %v2780 = vrot.slane %v2779, 4
      %v2782 = vshll.u32 %v2632, 16
      %v2784 = vrot.slane %v2782, 5
      %v2785 = vsel %vm862, %v2780, %v2784
      %v2787 = vshrl.u32 %v2633, 16
      %v2789 = vrot.slane %v2787, 4
      %v2790 = vshll.u32 %v2633, 16
      %v2792 = vrot.slane %v2790, 5
      %v2793 = vor.u32 %v2789, %v2792
      %v2794 = vrot.slane %v2793, 4
      %v2796 = vshll.u32 %v2634, 16
      %v2798 = vrot.slane %v2796, 5
      %v2799 = vsel %vm862, %v2794, %v2798
      %v2800 = vshrl.u32 %v2634, 16
      %v2802 = vrot.slane %v2800, 4
      %v2803 = vor.u32 %v2802, %v2798
      %v2804 = vrot.slane %v2803, 4
      %v2806 = vshll.u32 %v2635, 16
      %v2808 = vrot.slane %v2806, 5
      %v2809 = vsel %vm862, %v2804, %v2808
      %v2811 = vshrl.u32 %v2636, 16
      %v2813 = vrot.slane %v2811, 4
      %v2814 = vshll.u32 %v2636, 16
      %v2816 = vrot.slane %v2814, 5
      %v2817 = vor.u32 %v2813, %v2816
      %v2818 = vrot.slane %v2817, 4
      %v2820 = vshll.u32 %v2637, 16
      %v2822 = vrot.slane %v2820, 5
      %v2823 = vsel %vm862, %v2818, %v2822
      %v2824 = vshrl.u32 %v2637, 16
      %v2826 = vrot.slane %v2824, 4
      %v2827 = vor.u32 %v2826, %v2822
      %v2828 = vrot.slane %v2827, 4
      %v2830 = vshll.u32 %v2638, 16
      %v2832 = vrot.slane %v2830, 5
      %v2833 = vsel %vm862, %v2828, %v2832
      %v2835 = vshrl.u32 %v2639, 16
      %v2837 = vrot.slane %v2835, 4
      %v2838 = vshll.u32 %v2639, 16
      %v2840 = vrot.slane %v2838, 5
      %v2841 = vor.u32 %v2837, %v2840
      %v2842 = vrot.slane %v2841, 4
      %v2844 = vshll.u32 %v2640, 16
      %v2846 = vrot.slane %v2844, 5
      %v2847 = vsel %vm862, %v2842, %v2846
      %v2848 = vshrl.u32 %v2640, 16
      %v2850 = vrot.slane %v2848, 4
      %v2851 = vor.u32 %v2850, %v2846
      %v2852 = vrot.slane %v2851, 4
      %v2854 = vshll.u32 %v2641, 16
      %v2856 = vrot.slane %v2854, 5
      %v2857 = vsel %vm862, %v2852, %v2856
      %v2859 = vshrl.u32 %v2642, 16
      %v2861 = vrot.slane %v2859, 4
      %v2862 = vshll.u32 %v2642, 16
      %v2864 = vrot.slane %v2862, 5
      %v2865 = vor.u32 %v2861, %v2864
      %v2866 = vrot.slane %v2865, 4
      %v2868 = vshll.u32 %v2643, 16
      %v2870 = vrot.slane %v2868, 5
      %v2871 = vsel %vm862, %v2866, %v2870
      %v2872 = vshrl.u32 %v2643, 16
      %v2874 = vrot.slane %v2872, 4
      %v2875 = vor.u32 %v2874, %v2870
      %v2876 = vrot.slane %v2875, 4
      %v2878 = vshll.u32 %v2644, 16
      %v2880 = vrot.slane %v2878, 5
      %v2881 = vsel %vm862, %v2876, %v2880
      %v2883 = vshrl.u32 %v2645, 16
      %v2885 = vrot.slane %v2883, 4
      %v2886 = vshll.u32 %v2645, 16
      %v2888 = vrot.slane %v2886, 5
      %v2889 = vor.u32 %v2885, %v2888
      %v2890 = vrot.slane %v2889, 4
      %v2892 = vshll.u32 %v2646, 16
      %v2894 = vrot.slane %v2892, 5
      %v2895 = vsel %vm862, %v2890, %v2894
      %v2896 = vshrl.u32 %v2646, 16
      %v2898 = vrot.slane %v2896, 4
      %v2899 = vor.u32 %v2898, %v2894
      %v2900 = vrot.slane %v2899, 4
      %v2902 = vshll.u32 %v2647, 16
      %v2904 = vrot.slane %v2902, 5
      %v2905 = vsel %vm862, %v2900, %v2904
      %v2907 = vshrl.u32 %v2648, 16
      %v2909 = vrot.slane %v2907, 4
      %v2910 = vshll.u32 %v2648, 16
      %v2912 = vrot.slane %v2910, 5
      %v2913 = vor.u32 %v2909, %v2912
      %v2914 = vrot.slane %v2913, 4
      %v2916 = vshll.u32 %v2649, 16
      %v2918 = vrot.slane %v2916, 5
      %v2919 = vsel %vm862, %v2914, %v2918
      %v2920 = vshrl.u32 %v2649, 16
      %v2922 = vrot.slane %v2920, 4
      %v2923 = vor.u32 %v2922, %v2918
      %v2924 = vrot.slane %v2923, 4
      %v2926 = vshll.u32 %v2650, 16
      %v2928 = vrot.slane %v2926, 5
      %v2929 = vsel %vm862, %v2924, %v2928
      %v2931 = vshrl.u32 %v2651, 16
      %v2933 = vrot.slane %v2931, 4
      %v2934 = vshll.u32 %v2651, 16
      %v2936 = vrot.slane %v2934, 5
      %v2937 = vor.u32 %v2933, %v2936
      %v2938 = vrot.slane %v2937, 4
      %v2940 = vshll.u32 %v2652, 16
      %v2942 = vrot.slane %v2940, 5
      %v2943 = vsel %vm862, %v2938, %v2942
      %v2944 = vshrl.u32 %v2652, 16
      %v2946 = vrot.slane %v2944, 4
      %v2947 = vor.u32 %v2946, %v2942
      %v2948 = vrot.slane %v2947, 4
      %v2950 = vshll.u32 %v2653, 16
      %v2952 = vrot.slane %v2950, 5
      %v2953 = vsel %vm862, %v2948, %v2952
      %v2955 = vshrl.u32 %v2654, 16
      %v2957 = vrot.slane %v2955, 4
      %v2958 = vshll.u32 %v2654, 16
      %v2960 = vrot.slane %v2958, 5
      %v2961 = vor.u32 %v2957, %v2960
      %v2962 = vrot.slane %v2961, 4
      %v2964 = vshll.u32 %v2655, 16
      %v2966 = vrot.slane %v2964, 5
      %v2967 = vsel %vm862, %v2962, %v2966
      %v2968 = vshrl.u32 %v2655, 16
      %v2970 = vrot.slane %v2968, 4
      %v2971 = vor.u32 %v2970, %v2966
      %v2972 = vrot.slane %v2971, 4
      %v2974 = vshll.u32 %v2656, 16
      %v2976 = vrot.slane %v2974, 5
      %v2977 = vsel %vm862, %v2972, %v2976
      %v2979 = vshrl.u32 %v2657, 16
      %v2981 = vrot.slane %v2979, 4
      %v2982 = vshll.u32 %v2657, 16
      %v2984 = vrot.slane %v2982, 5
      %v2985 = vor.u32 %v2981, %v2984
      %v2986 = vrot.slane %v2985, 4
      %v2988 = vshll.u32 %v2658, 16
      %v2990 = vrot.slane %v2988, 5
      %v2991 = vsel %vm862, %v2986, %v2990
      %v2992 = vshrl.u32 %v2658, 16
      %v2994 = vrot.slane %v2992, 4
      %v2995 = vor.u32 %v2994, %v2990
      %v2996 = vrot.slane %v2995, 4
      %v2998 = vshll.u32 %v2659, 16
      %v3000 = vrot.slane %v2998, 5
      %v3001 = vsel %vm862, %v2996, %v3000
      %v3003 = vshrl.u32 %v2660, 16
      %v3005 = vrot.slane %v3003, 4
      %v3006 = vshll.u32 %v2660, 16
      %v3008 = vrot.slane %v3006, 5
      %v3009 = vor.u32 %v3005, %v3008
      %v3010 = vrot.slane %v3009, 4
      %v3012 = vshll.u32 %v2661, 16
      %v3014 = vrot.slane %v3012, 5
      %v3015 = vsel %vm862, %v3010, %v3014
      %v3016 = vshrl.u32 %v2661, 16
      %v3018 = vrot.slane %v3016, 4
      %v3019 = vor.u32 %v3018, %v3014
      %v3020 = vrot.slane %v3019, 4
      %v3022 = vshll.u32 %v2662, 16
      %v3024 = vrot.slane %v3022, 5
      %v3025 = vsel %vm862, %v3020, %v3024
      %v3027 = vshrl.u32 %v2663, 16
      %v3029 = vrot.slane %v3027, 4
      %v3030 = vshll.u32 %v2663, 16
      %v3032 = vrot.slane %v3030, 5
      %v3033 = vor.u32 %v3029, %v3032
      %v3034 = vrot.slane %v3033, 4
      %v3036 = vshll.u32 %v2664, 16
      %v3038 = vrot.slane %v3036, 5
      %v3039 = vsel %vm862, %v3034, %v3038
      %v3040 = vshrl.u32 %v2664, 16
      %v3042 = vrot.slane %v3040, 4
      %v3043 = vor.u32 %v3042, %v3038
      %v3044 = vrot.slane %v3043, 4
      %v3046 = vshll.u32 %v2665, 16
      %v3048 = vrot.slane %v3046, 5
      %v3049 = vsel %vm862, %v3044, %v3048
      %s3050 = scalar_lea.vmem %s1, 8
      %v3051 = vld [vmem:[%s3050] sm:$0x3]
      %v3052 = vunpack.c.l.b16 %v2679
      %v3053 = vunpack.c.l.b16 %v2689
      %v3054 = vunpack.c.l.b16 %v2703
      %v3055 = vunpack.c.l.b16 %v2713
      %v3056 = vunpack.c.l.b16 %v2727
      %v3057 = vunpack.c.l.b16 %v2737
      %v3058 = vunpack.c.l.b16 %v2751
      %v3059 = vunpack.c.l.b16 %v2761
      %v3060 = vunpack.c.l.b16 %v2775
      %v3061 = vunpack.c.l.b16 %v2785
      %v3062 = vunpack.c.l.b16 %v2799
      %v3063 = vunpack.c.l.b16 %v2809
      %v3064 = vunpack.c.l.b16 %v2823
      %v3065 = vunpack.c.l.b16 %v2833
      %v3066 = vunpack.c.l.b16 %v2847
      %v3067 = vunpack.c.l.b16 %v2857
      %v3068 = vunpack.c.l.b16 %v2871
      %v3069 = vunpack.c.l.b16 %v2881
      %v3070 = vunpack.c.l.b16 %v2895
      %v3071 = vunpack.c.l.b16 %v2905
      %v3072 = vunpack.c.l.b16 %v2919
      %v3073 = vunpack.c.l.b16 %v2929
      %v3074 = vunpack.c.l.b16 %v2943
      %v3075 = vunpack.c.l.b16 %v2953
      %v3076 = vunpack.c.l.b16 %v2967
      %v3077 = vunpack.c.l.b16 %v2977
      %v3078 = vunpack.c.l.b16 %v2991
      %v3079 = vunpack.c.l.b16 %v3001
      %v3080 = vunpack.c.l.b16 %v3015
      %v3081 = vunpack.c.l.b16 %v3025
      %v3082 = vunpack.c.l.b16 %v3039
      %v3083 = vunpack.c.l.b16 %v3049
      %v3084 = vpack.c.b16 %v3053, %v3052
      %v3085 = vpack.c.b16 %v3055, %v3054
      %v3086 = vpack.c.b16 %v3057, %v3056
      %v3087 = vpack.c.b16 %v3059, %v3058
      %v3088 = vpack.c.b16 %v3061, %v3060
      %v3089 = vpack.c.b16 %v3063, %v3062
      %v3090 = vpack.c.b16 %v3065, %v3064
      %v3091 = vpack.c.b16 %v3067, %v3066
      %v3092 = vpack.c.b16 %v3069, %v3068
      %v3093 = vpack.c.b16 %v3071, %v3070
      %v3094 = vpack.c.b16 %v3073, %v3072
      %v3095 = vpack.c.b16 %v3075, %v3074
      %v3096 = vpack.c.b16 %v3077, %v3076
      %v3097 = vpack.c.b16 %v3079, %v3078
      %v3098 = vpack.c.b16 %v3081, %v3080
      %v3099 = vpack.c.b16 %v3083, %v3082
      %v3101 = vsel %vm1297, %v3084, 0
      %v3104 = vsel %vm1297, %v3085, 0
      %v3107 = vsel %vm1297, %v3086, 0
      %v3110 = vsel %vm1297, %v3087, 0
      %v3113 = vsel %vm1297, %v3088, 0
      %v3116 = vsel %vm1297, %v3089, 0
      %v3119 = vsel %vm1297, %v3090, 0
      %v3122 = vsel %vm1297, %v3091, 0
      %v3125 = vsel %vm1297, %v3092, 0
      %v3128 = vsel %vm1297, %v3093, 0
      %v3131 = vsel %vm1297, %v3094, 0
      %v3134 = vsel %vm1297, %v3095, 0
      %v3137 = vsel %vm1297, %v3096, 0
      %v3140 = vsel %vm1297, %v3097, 0
      %v3143 = vsel %vm1297, %v3098, 0
      %v3146 = vsel %vm1297, %v3099, 0
      %v3149 = vsel %vm1346, %v3051, 0
      %3151 = vmatprep.subr.bf16.mxu0 0
      %3152 = vmatpush1.bf16.msra.mxu0 %v3149
      %3153 = vmatprep.subr.bf16.mxu0 0
      %3154 = vmatpush1.bf16.msra.mxu0 0
      %3155 = vmatprep.subr.bf16.mxu0 0
      %3156 = vmatpush1.bf16.msra.mxu0 0
      %3157 = vmatprep.subr.bf16.mxu0 0
      %3158 = vmatpush1.bf16.msra.mxu0 0
      %3159 = vmatprep.subr.bf16.mxu0 0
      %3160 = vmatpush1.bf16.msra.mxu0 0
      %3161 = vmatprep.subr.bf16.mxu0 0
      %3162 = vmatpush1.bf16.msra.mxu0 0
      %3163 = vmatprep.subr.bf16.mxu0 0
      %3164 = vmatpush1.bf16.msra.mxu0 0
      %3165 = vmatprep.subr.bf16.mxu0 0
      %3166 = vmatpush1.bf16.msra.mxu0 0
      %3167 = vmatprep.subr.bf16.mxu0 0
      %3168 = vmatpush1.bf16.msra.mxu0 0
      %3169 = vmatprep.subr.bf16.mxu0 0
      %3170 = vmatpush1.bf16.msra.mxu0 0
      %3171 = vmatprep.subr.bf16.mxu0 0
      %3172 = vmatpush1.bf16.msra.mxu0 0
      %3173 = vmatprep.subr.bf16.mxu0 0
      %3174 = vmatpush1.bf16.msra.mxu0 0
      %3175 = vmatprep.subr.bf16.mxu0 0
      %3176 = vmatpush1.bf16.msra.mxu0 0
      %3177 = vmatprep.subr.bf16.mxu0 0
      %3178 = vmatpush1.bf16.msra.mxu0 0
      %3179 = vmatprep.subr.bf16.mxu0 0
      %3180 = vmatpush1.bf16.msra.mxu0 0
      %3181 = vmatprep.subr.bf16.mxu0 0
      %3182 = vmatpush1.bf16.msra.mxu0 0
      %3183 = vmatprep.mubr.bf16.mxu0 0
      %3184 = vmatmul.mubr.bf16.gmra.mrb[0].mxu0 %v3101
      %v3185 = vpop.f32.mrb[0].mxu0
      %v3186 = vadd.f32 0.0, %v3185
      %v3187 = vpop.f32.mrb[0].mxu0
      %v3188 = vpop.f32.mrb[0].mxu0
      %v3189 = vadd.f32 0.0, %v3188
      %v3190 = vpop.f32.mrb[0].mxu0
      %3191 = vmatprep.mubr.bf16.mxu0 0
      %3192 = vmatmul.mubr.bf16.gmra.mrb[0].mxu0 %v3104
      %v3193 = vpop.f32.mrb[0].mxu0
      %v3194 = vadd.f32 0.0, %v3193
      %v3195 = vpop.f32.mrb[0].mxu0
      %v3196 = vpop.f32.mrb[0].mxu0
      %v3197 = vadd.f32 0.0, %v3196
      %v3198 = vpop.f32.mrb[0].mxu0
      %3199 = vmatprep.mubr.bf16.mxu0 0
      %3200 = vmatmul.mubr.bf16.gmra.mrb[0].mxu0 %v3107
      %v3201 = vpop.f32.mrb[0].mxu0
      %v3202 = vadd.f32 0.0, %v3201
      %v3203 = vpop.f32.mrb[0].mxu0
      %v3204 = vpop.f32.mrb[0].mxu0
      %v3205 = vadd.f32 0.0, %v3204
      %v3206 = vpop.f32.mrb[0].mxu0
      %3207 = vmatprep.mubr.bf16.mxu0 0
      %3208 = vmatmul.mubr.bf16.gmra.mrb[0].mxu0 %v3110
      %v3209 = vpop.f32.mrb[0].mxu0
      %v3210 = vadd.f32 0.0, %v3209
      %v3211 = vpop.f32.mrb[0].mxu0
      %v3212 = vpop.f32.mrb[0].mxu0
      %v3213 = vadd.f32 0.0, %v3212
      %v3214 = vpop.f32.mrb[0].mxu0
      %3215 = vmatprep.mubr.bf16.mxu0 0
      %3216 = vmatmul.mubr.bf16.gmra.mrb[0].mxu0 %v3113
      %v3217 = vpop.f32.mrb[0].mxu0
      %v3218 = vadd.f32 0.0, %v3217
      %v3219 = vpop.f32.mrb[0].mxu0
      %v3220 = vpop.f32.mrb[0].mxu0
      %v3221 = vadd.f32 0.0, %v3220
      %v3222 = vpop.f32.mrb[0].mxu0
      %3223 = vmatprep.mubr.bf16.mxu0 0
      %3224 = vmatmul.mubr.bf16.gmra.mrb[0].mxu0 %v3116
      %v3225 = vpop.f32.mrb[0].mxu0
      %v3226 = vadd.f32 0.0, %v3225
      %v3227 = vpop.f32.mrb[0].mxu0
      %v3228 = vpop.f32.mrb[0].mxu0
      %v3229 = vadd.f32 0.0, %v3228
      %v3230 = vpop.f32.mrb[0].mxu0
      %3231 = vmatprep.mubr.bf16.mxu0 0
      %3232 = vmatmul.mubr.bf16.gmra.mrb[0].mxu0 %v3119
      %v3233 = vpop.f32.mrb[0].mxu0
      %v3234 = vadd.f32 0.0, %v3233
      %v3235 = vpop.f32.mrb[0].mxu0
      %v3236 = vpop.f32.mrb[0].mxu0
      %v3237 = vadd.f32 0.0, %v3236
      %v3238 = vpop.f32.mrb[0].mxu0
      %3239 = vmatprep.mubr.bf16.mxu0 0
      %3240 = vmatmul.mubr.bf16.gmra.mrb[0].mxu0 %v3122
      %v3241 = vpop.f32.mrb[0].mxu0
      %v3242 = vadd.f32 0.0, %v3241
      %v3243 = vpop.f32.mrb[0].mxu0
      %v3244 = vpop.f32.mrb[0].mxu0
      %v3245 = vadd.f32 0.0, %v3244
      %v3246 = vpop.f32.mrb[0].mxu0
      %3247 = vmatprep.mubr.bf16.mxu0 0
      %3248 = vmatmul.mubr.bf16.gmra.mrb[0].mxu0 %v3125
      %v3249 = vpop.f32.mrb[0].mxu0
      %v3250 = vadd.f32 0.0, %v3249
      %v3251 = vpop.f32.mrb[0].mxu0
      %v3252 = vpop.f32.mrb[0].mxu0
      %v3253 = vadd.f32 0.0, %v3252
      %v3254 = vpop.f32.mrb[0].mxu0
      %3255 = vmatprep.mubr.bf16.mxu0 0
      %3256 = vmatmul.mubr.bf16.gmra.mrb[0].mxu0 %v3128
      %v3257 = vpop.f32.mrb[0].mxu0
      %v3258 = vadd.f32 0.0, %v3257
      %v3259 = vpop.f32.mrb[0].mxu0
      %v3260 = vpop.f32.mrb[0].mxu0
      %v3261 = vadd.f32 0.0, %v3260
      %v3262 = vpop.f32.mrb[0].mxu0
      %3263 = vmatprep.mubr.bf16.mxu0 0
      %3264 = vmatmul.mubr.bf16.gmra.mrb[0].mxu0 %v3131
      %v3265 = vpop.f32.mrb[0].mxu0
      %v3266 = vadd.f32 0.0, %v3265
      %v3267 = vpop.f32.mrb[0].mxu0
      %v3268 = vpop.f32.mrb[0].mxu0
      %v3269 = vadd.f32 0.0, %v3268
      %v3270 = vpop.f32.mrb[0].mxu0
      %3271 = vmatprep.mubr.bf16.mxu0 0
      %3272 = vmatmul.mubr.bf16.gmra.mrb[0].mxu0 %v3134
      %v3273 = vpop.f32.mrb[0].mxu0
      %v3274 = vadd.f32 0.0, %v3273
      %v3275 = vpop.f32.mrb[0].mxu0
      %v3276 = vpop.f32.mrb[0].mxu0
      %v3277 = vadd.f32 0.0, %v3276
      %v3278 = vpop.f32.mrb[0].mxu0
      %3279 = vmatprep.mubr.bf16.mxu0 0
      %3280 = vmatmul.mubr.bf16.gmra.mrb[0].mxu0 %v3137
      %v3281 = vpop.f32.mrb[0].mxu0
      %v3282 = vadd.f32 0.0, %v3281
      %v3283 = vpop.f32.mrb[0].mxu0
      %v3284 = vpop.f32.mrb[0].mxu0
      %v3285 = vadd.f32 0.0, %v3284
      %v3286 = vpop.f32.mrb[0].mxu0
      %3287 = vmatprep.mubr.bf16.mxu0 0
      %3288 = vmatmul.mubr.bf16.gmra.mrb[0].mxu0 %v3140
      %v3289 = vpop.f32.mrb[0].mxu0
      %v3290 = vadd.f32 0.0, %v3289
      %v3291 = vpop.f32.mrb[0].mxu0
      %v3292 = vpop.f32.mrb[0].mxu0
      %v3293 = vadd.f32 0.0, %v3292
      %v3294 = vpop.f32.mrb[0].mxu0
      %3295 = vmatprep.mubr.bf16.mxu0 0
      %3296 = vmatmul.mubr.bf16.gmra.mrb[0].mxu0 %v3143
      %v3297 = vpop.f32.mrb[0].mxu0
      %v3298 = vadd.f32 0.0, %v3297
      %v3299 = vpop.f32.mrb[0].mxu0
      %v3300 = vpop.f32.mrb[0].mxu0
      %v3301 = vadd.f32 0.0, %v3300
      %v3302 = vpop.f32.mrb[0].mxu0
      %3303 = vmatprep.mubr.bf16.mxu0 0
      %3304 = vmatmul.mubr.bf16.gmra.mrb[0].mxu0 %v3146
      %v3305 = vpop.f32.mrb[0].mxu0
      %v3306 = vadd.f32 0.0, %v3305
      %v3307 = vpop.f32.mrb[0].mxu0
      %v3308 = vpop.f32.mrb[0].mxu0
      %v3309 = vadd.f32 0.0, %v3308
      %v3310 = vpop.f32.mrb[0].mxu0
      %3311 = vdwg.mxu0
      %v3312 = vadd.f32 %v2586, %v3186
      %v3313 = vadd.f32 %v2587, %v3189
      %v3314 = vadd.f32 %v2588, %v3194
      %v3315 = vadd.f32 %v2589, %v3197
      %v3316 = vadd.f32 %v2590, %v3202
      %v3317 = vadd.f32 %v2591, %v3205
      %v3318 = vadd.f32 %v2592, %v3210
      %v3319 = vadd.f32 %v2593, %v3213
      %v3320 = vadd.f32 %v2594, %v3218
      %v3321 = vadd.f32 %v2595, %v3221
      %v3322 = vadd.f32 %v2596, %v3226
      %v3323 = vadd.f32 %v2597, %v3229
      %v3324 = vadd.f32 %v2598, %v3234
      %v3325 = vadd.f32 %v2599, %v3237
      %v3326 = vadd.f32 %v2600, %v3242
      %v3327 = vadd.f32 %v2601, %v3245
      %v3328 = vadd.f32 %v2602, %v3250
      %v3329 = vadd.f32 %v2603, %v3253
      %v3330 = vadd.f32 %v2604, %v3258
      %v3331 = vadd.f32 %v2605, %v3261
      %v3332 = vadd.f32 %v2606, %v3266
      %v3333 = vadd.f32 %v2607, %v3269
      %v3334 = vadd.f32 %v2608, %v3274
      %v3335 = vadd.f32 %v2609, %v3277
      %v3336 = vadd.f32 %v2610, %v3282
      %v3337 = vadd.f32 %v2611, %v3285
      %v3338 = vadd.f32 %v2612, %v3290
      %v3339 = vadd.f32 %v2613, %v3293
      %v3340 = vadd.f32 %v2614, %v3298
      %v3341 = vadd.f32 %v2615, %v3301
      %v3342 = vadd.f32 %v2616, %v3306
      %v3343 = vadd.f32 %v2617, %v3309
      %v3344 = vld [vmem:[%s693] sm:$0xe]
      %v3345 = vld [vmem:[%s693 + $0xc] sm:$0xe]
      %v3346 = vld [vmem:[%s693 + $0x18] sm:$0xe]
      %v3347 = vld [vmem:[%s693 + $0x24] sm:$0xe]
      %v3348 = vld [vmem:[%s693 + $0x30] sm:$0xe]
      %v3349 = vld [vmem:[%s693 + $0x3c] sm:$0xe]
      %v3350 = vld [vmem:[%s693 + $0x48] sm:$0xe]
      %v3351 = vld [vmem:[%s693 + $0x54] sm:$0xe]
      %v3352 = vld [vmem:[%s693 + $0x60] sm:$0xe]
      %v3353 = vld [vmem:[%s693 + $0x6c] sm:$0xe]
      %v3354 = vld [vmem:[%s693 + $0x78] sm:$0xe]
      %v3355 = vld [vmem:[%s693 + $0x84] sm:$0xe]
      %v3356 = vld [vmem:[%s693 + $0x90] sm:$0xe]
      %v3357 = vld [vmem:[%s693 + $0x9c] sm:$0xe]
      %v3358 = vld [vmem:[%s693 + $0xa8] sm:$0xe]
      %v3359 = vld [vmem:[%s693 + $0xb4] sm:$0xe]
      %v3408 = vrot.slane %v3344, 5
      %v3409 = vrot.slane %v3408, 4
      %v3410 = vrot.slane %v2619, 5
      %v3411 = vsel %vm1853, %v3409, %v3410
      %v3412 = vrot.slane %v3410, 4
      %v3413 = vrot.slane %v2620, 5
      %v3414 = vsel %vm1853, %v3412, %v3413
      %v3415 = vrot.slane %v3345, 5
      %v3416 = vrot.slane %v3415, 4
      %v3417 = vrot.slane %v2622, 5
      %v3418 = vsel %vm1853, %v3416, %v3417
      %v3419 = vrot.slane %v3417, 4
      %v3420 = vrot.slane %v2623, 5
      %v3421 = vsel %vm1853, %v3419, %v3420
      %v3422 = vrot.slane %v3346, 5
      %v3423 = vrot.slane %v3422, 4
      %v3424 = vrot.slane %v2625, 5
      %v3425 = vsel %vm1853, %v3423, %v3424
      %v3426 = vrot.slane %v3424, 4
      %v3427 = vrot.slane %v2626, 5
      %v3428 = vsel %vm1853, %v3426, %v3427
      %v3429 = vrot.slane %v3347, 5
      %v3430 = vrot.slane %v3429, 4
      %v3431 = vrot.slane %v2628, 5
      %v3432 = vsel %vm1853, %v3430, %v3431
      %v3433 = vrot.slane %v3431, 4
      %v3434 = vrot.slane %v2629, 5
      %v3435 = vsel %vm1853, %v3433, %v3434
      %v3436 = vrot.slane %v3348, 5
      %v3437 = vrot.slane %v3436, 4
      %v3438 = vrot.slane %v2631, 5
      %v3439 = vsel %vm1853, %v3437, %v3438
      %v3440 = vrot.slane %v3438, 4
      %v3441 = vrot.slane %v2632, 5
      %v3442 = vsel %vm1853, %v3440, %v3441
      %v3443 = vrot.slane %v3349, 5
      %v3444 = vrot.slane %v3443, 4
      %v3445 = vrot.slane %v2634, 5
      %v3446 = vsel %vm1853, %v3444, %v3445
      %v3447 = vrot.slane %v3445, 4
      %v3448 = vrot.slane %v2635, 5
      %v3449 = vsel %vm1853, %v3447, %v3448
      %v3450 = vrot.slane %v3350, 5
      %v3451 = vrot.slane %v3450, 4
      %v3452 = vrot.slane %v2637, 5
      %v3453 = vsel %vm1853, %v3451, %v3452
      %v3454 = vrot.slane %v3452, 4
      %v3455 = vrot.slane %v2638, 5
      %v3456 = vsel %vm1853, %v3454, %v3455
      %v3457 = vrot.slane %v3351, 5
      %v3458 = vrot.slane %v3457, 4
      %v3459 = vrot.slane %v2640, 5
      %v3460 = vsel %vm1853, %v3458, %v3459
      %v3461 = vrot.slane %v3459, 4
      %v3462 = vrot.slane %v2641, 5
      %v3463 = vsel %vm1853, %v3461, %v3462
      %v3464 = vrot.slane %v3352, 5
      %v3465 = vrot.slane %v3464, 4
      %v3466 = vrot.slane %v2643, 5
      %v3467 = vsel %vm1853, %v3465, %v3466
      %v3468 = vrot.slane %v3466, 4
      %v3469 = vrot.slane %v2644, 5
      %v3470 = vsel %vm1853, %v3468, %v3469
      %v3471 = vrot.slane %v3353, 5
      %v3472 = vrot.slane %v3471, 4
      %v3473 = vrot.slane %v2646, 5
      %v3474 = vsel %vm1853, %v3472, %v3473
      %v3475 = vrot.slane %v3473, 4
      %v3476 = vrot.slane %v2647, 5
      %v3477 = vsel %vm1853, %v3475, %v3476
      %v3478 = vrot.slane %v3354, 5
      %v3479 = vrot.slane %v3478, 4
      %v3480 = vrot.slane %v2649, 5
      %v3481 = vsel %vm1853, %v3479, %v3480
      %v3482 = vrot.slane %v3480, 4
      %v3483 = vrot.slane %v2650, 5
      %v3484 = vsel %vm1853, %v3482, %v3483
      %v3485 = vrot.slane %v3355, 5
      %v3486 = vrot.slane %v3485, 4
      %v3487 = vrot.slane %v2652, 5
      %v3488 = vsel %vm1853, %v3486, %v3487
      %v3489 = vrot.slane %v3487, 4
      %v3490 = vrot.slane %v2653, 5
      %v3491 = vsel %vm1853, %v3489, %v3490
      %v3492 = vrot.slane %v3356, 5
      %v3493 = vrot.slane %v3492, 4
      %v3494 = vrot.slane %v2655, 5
      %v3495 = vsel %vm1853, %v3493, %v3494
      %v3496 = vrot.slane %v3494, 4
      %v3497 = vrot.slane %v2656, 5
      %v3498 = vsel %vm1853, %v3496, %v3497
      %v3499 = vrot.slane %v3357, 5
      %v3500 = vrot.slane %v3499, 4
      %v3501 = vrot.slane %v2658, 5
      %v3502 = vsel %vm1853, %v3500, %v3501
      %v3503 = vrot.slane %v3501, 4
      %v3504 = vrot.slane %v2659, 5
      %v3505 = vsel %vm1853, %v3503, %v3504
      %v3506 = vrot.slane %v3358, 5
      %v3507 = vrot.slane %v3506, 4
      %v3508 = vrot.slane %v2661, 5
      %v3509 = vsel %vm1853, %v3507, %v3508
      %v3510 = vrot.slane %v3508, 4
      %v3511 = vrot.slane %v2662, 5
      %v3512 = vsel %vm1853, %v3510, %v3511
      %v3513 = vrot.slane %v3359, 5
      %v3514 = vrot.slane %v3513, 4
      %v3515 = vrot.slane %v2664, 5
      %v3516 = vsel %vm1853, %v3514, %v3515
      %v3517 = vrot.slane %v3515, 4
      %v3518 = vrot.slane %v2665, 5
      %v3519 = vsel %vm1853, %v3517, %v3518
      %s3520 = scalar_lea.vmem %s1, 10
      %v3521 = vld [vmem:[%s3520] sm:$0x3]
      %v3522 = vunpack.c.l.b16 %v3411
      %v3523 = vunpack.c.l.b16 %v3414
      %v3524 = vunpack.c.l.b16 %v3418
      %v3525 = vunpack.c.l.b16 %v3421
      %v3526 = vunpack.c.l.b16 %v3425
      %v3527 = vunpack.c.l.b16 %v3428
      %v3528 = vunpack.c.l.b16 %v3432
      %v3529 = vunpack.c.l.b16 %v3435
      %v3530 = vunpack.c.l.b16 %v3439
      %v3531 = vunpack.c.l.b16 %v3442
      %v3532 = vunpack.c.l.b16 %v3446
      %v3533 = vunpack.c.l.b16 %v3449
      %v3534 = vunpack.c.l.b16 %v3453
      %v3535 = vunpack.c.l.b16 %v3456
      %v3536 = vunpack.c.l.b16 %v3460
      %v3537 = vunpack.c.l.b16 %v3463
      %v3538 = vunpack.c.l.b16 %v3467
      %v3539 = vunpack.c.l.b16 %v3470
      %v3540 = vunpack.c.l.b16 %v3474
      %v3541 = vunpack.c.l.b16 %v3477
      %v3542 = vunpack.c.l.b16 %v3481
      %v3543 = vunpack.c.l.b16 %v3484
      %v3544 = vunpack.c.l.b16 %v3488
      %v3545 = vunpack.c.l.b16 %v3491
      %v3546 = vunpack.c.l.b16 %v3495
      %v3547 = vunpack.c.l.b16 %v3498
      %v3548 = vunpack.c.l.b16 %v3502
      %v3549 = vunpack.c.l.b16 %v3505
      %v3550 = vunpack.c.l.b16 %v3509
      %v3551 = vunpack.c.l.b16 %v3512
      %v3552 = vunpack.c.l.b16 %v3516
      %v3553 = vunpack.c.l.b16 %v3519
      %v3554 = vpack.c.b16 %v3523, %v3522
      %v3555 = vpack.c.b16 %v3525, %v3524
      %v3556 = vpack.c.b16 %v3527, %v3526
      %v3557 = vpack.c.b16 %v3529, %v3528
      %v3558 = vpack.c.b16 %v3531, %v3530
      %v3559 = vpack.c.b16 %v3533, %v3532
      %v3560 = vpack.c.b16 %v3535, %v3534
      %v3561 = vpack.c.b16 %v3537, %v3536
      %v3562 = vpack.c.b16 %v3539, %v3538
      %v3563 = vpack.c.b16 %v3541, %v3540
      %v3564 = vpack.c.b16 %v3543, %v3542
      %v3565 = vpack.c.b16 %v3545, %v3544
      %v3566 = vpack.c.b16 %v3547, %v3546
      %v3567 = vpack.c.b16 %v3549, %v3548
      %v3568 = vpack.c.b16 %v3551, %v3550
      %v3569 = vpack.c.b16 %v3553, %v3552
      %v3571 = vsel %vm1297, %v3554, 0
      %v3574 = vsel %vm1297, %v3555, 0
      %v3577 = vsel %vm1297, %v3556, 0
      %v3580 = vsel %vm1297, %v3557, 0
      %v3583 = vsel %vm1297, %v3558, 0
      %v3586 = vsel %vm1297, %v3559, 0
      %v3589 = vsel %vm1297, %v3560, 0
      %v3592 = vsel %vm1297, %v3561, 0
      %v3595 = vsel %vm1297, %v3562, 0
      %v3598 = vsel %vm1297, %v3563, 0
      %v3601 = vsel %vm1297, %v3564, 0
      %v3604 = vsel %vm1297, %v3565, 0
      %v3607 = vsel %vm1297, %v3566, 0
      %v3610 = vsel %vm1297, %v3567, 0
      %v3613 = vsel %vm1297, %v3568, 0
      %v3616 = vsel %vm1297, %v3569, 0
      %v3619 = vsel %vm1346, %v3521, 0
      %3621 = vmatprep.subr.bf16.mxu0 0
      %3622 = vmatpush1.bf16.msra.mxu0 %v3619
      %3623 = vmatprep.subr.bf16.mxu0 0
      %3624 = vmatpush1.bf16.msra.mxu0 0
      %3625 = vmatprep.subr.bf16.mxu0 0
      %3626 = vmatpush1.bf16.msra.mxu0 0
      %3627 = vmatprep.subr.bf16.mxu0 0
      %3628 = vmatpush1.bf16.msra.mxu0 0
      %3629 = vmatprep.subr.bf16.mxu0 0
      %3630 = vmatpush1.bf16.msra.mxu0 0
      %3631 = vmatprep.subr.bf16.mxu0 0
      %3632 = vmatpush1.bf16.msra.mxu0 0
      %3633 = vmatprep.subr.bf16.mxu0 0
      %3634 = vmatpush1.bf16.msra.mxu0 0
      %3635 = vmatprep.subr.bf16.mxu0 0
      %3636 = vmatpush1.bf16.msra.mxu0 0
      %3637 = vmatprep.subr.bf16.mxu0 0
      %3638 = vmatpush1.bf16.msra.mxu0 0
      %3639 = vmatprep.subr.bf16.mxu0 0
      %3640 = vmatpush1.bf16.msra.mxu0 0
      %3641 = vmatprep.subr.bf16.mxu0 0
      %3642 = vmatpush1.bf16.msra.mxu0 0
      %3643 = vmatprep.subr.bf16.mxu0 0
      %3644 = vmatpush1.bf16.msra.mxu0 0
      %3645 = vmatprep.subr.bf16.mxu0 0
      %3646 = vmatpush1.bf16.msra.mxu0 0
      %3647 = vmatprep.subr.bf16.mxu0 0
      %3648 = vmatpush1.bf16.msra.mxu0 0
      %3649 = vmatprep.subr.bf16.mxu0 0
      %3650 = vmatpush1.bf16.msra.mxu0 0
      %3651 = vmatprep.subr.bf16.mxu0 0
      %3652 = vmatpush1.bf16.msra.mxu0 0
      %3653 = vmatprep.mubr.bf16.mxu0 0
      %3654 = vmatmul.mubr.bf16.gmra.mrb[0].mxu0 %v3571
      %v3655 = vpop.f32.mrb[0].mxu0
      %v3656 = vadd.f32 0.0, %v3655
      %v3657 = vpop.f32.mrb[0].mxu0
      %v3658 = vpop.f32.mrb[0].mxu0
      %v3659 = vadd.f32 0.0, %v3658
      %v3660 = vpop.f32.mrb[0].mxu0
      %3661 = vmatprep.mubr.bf16.mxu0 0
      %3662 = vmatmul.mubr.bf16.gmra.mrb[0].mxu0 %v3574
      %v3663 = vpop.f32.mrb[0].mxu0
      %v3664 = vadd.f32 0.0, %v3663
      %v3665 = vpop.f32.mrb[0].mxu0
      %v3666 = vpop.f32.mrb[0].mxu0
      %v3667 = vadd.f32 0.0, %v3666
      %v3668 = vpop.f32.mrb[0].mxu0
      %3669 = vmatprep.mubr.bf16.mxu0 0
      %3670 = vmatmul.mubr.bf16.gmra.mrb[0].mxu0 %v3577
      %v3671 = vpop.f32.mrb[0].mxu0
      %v3672 = vadd.f32 0.0, %v3671
      %v3673 = vpop.f32.mrb[0].mxu0
      %v3674 = vpop.f32.mrb[0].mxu0
      %v3675 = vadd.f32 0.0, %v3674
      %v3676 = vpop.f32.mrb[0].mxu0
      %3677 = vmatprep.mubr.bf16.mxu0 0
      %3678 = vmatmul.mubr.bf16.gmra.mrb[0].mxu0 %v3580
      %v3679 = vpop.f32.mrb[0].mxu0
      %v3680 = vadd.f32 0.0, %v3679
      %v3681 = vpop.f32.mrb[0].mxu0
      %v3682 = vpop.f32.mrb[0].mxu0
      %v3683 = vadd.f32 0.0, %v3682
      %v3684 = vpop.f32.mrb[0].mxu0
      %3685 = vmatprep.mubr.bf16.mxu0 0
      %3686 = vmatmul.mubr.bf16.gmra.mrb[0].mxu0 %v3583
      %v3687 = vpop.f32.mrb[0].mxu0
      %v3688 = vadd.f32 0.0, %v3687
      %v3689 = vpop.f32.mrb[0].mxu0
      %v3690 = vpop.f32.mrb[0].mxu0
      %v3691 = vadd.f32 0.0, %v3690
      %v3692 = vpop.f32.mrb[0].mxu0
      %3693 = vmatprep.mubr.bf16.mxu0 0
      %3694 = vmatmul.mubr.bf16.gmra.mrb[0].mxu0 %v3586
      %v3695 = vpop.f32.mrb[0].mxu0
      %v3696 = vadd.f32 0.0, %v3695
      %v3697 = vpop.f32.mrb[0].mxu0
      %v3698 = vpop.f32.mrb[0].mxu0
      %v3699 = vadd.f32 0.0, %v3698
      %v3700 = vpop.f32.mrb[0].mxu0
      %3701 = vmatprep.mubr.bf16.mxu0 0
      %3702 = vmatmul.mubr.bf16.gmra.mrb[0].mxu0 %v3589
      %v3703 = vpop.f32.mrb[0].mxu0
      %v3704 = vadd.f32 0.0, %v3703
      %v3705 = vpop.f32.mrb[0].mxu0
      %v3706 = vpop.f32.mrb[0].mxu0
      %v3707 = vadd.f32 0.0, %v3706
      %v3708 = vpop.f32.mrb[0].mxu0
      %3709 = vmatprep.mubr.bf16.mxu0 0
      %3710 = vmatmul.mubr.bf16.gmra.mrb[0].mxu0 %v3592
      %v3711 = vpop.f32.mrb[0].mxu0
      %v3712 = vadd.f32 0.0, %v3711
      %v3713 = vpop.f32.mrb[0].mxu0
      %v3714 = vpop.f32.mrb[0].mxu0
      %v3715 = vadd.f32 0.0, %v3714
      %v3716 = vpop.f32.mrb[0].mxu0
      %3717 = vmatprep.mubr.bf16.mxu0 0
      %3718 = vmatmul.mubr.bf16.gmra.mrb[0].mxu0 %v3595
      %v3719 = vpop.f32.mrb[0].mxu0
      %v3720 = vadd.f32 0.0, %v3719
      %v3721 = vpop.f32.mrb[0].mxu0
      %v3722 = vpop.f32.mrb[0].mxu0
      %v3723 = vadd.f32 0.0, %v3722
      %v3724 = vpop.f32.mrb[0].mxu0
      %3725 = vmatprep.mubr.bf16.mxu0 0
      %3726 = vmatmul.mubr.bf16.gmra.mrb[0].mxu0 %v3598
      %v3727 = vpop.f32.mrb[0].mxu0
      %v3728 = vadd.f32 0.0, %v3727
      %v3729 = vpop.f32.mrb[0].mxu0
      %v3730 = vpop.f32.mrb[0].mxu0
      %v3731 = vadd.f32 0.0, %v3730
      %v3732 = vpop.f32.mrb[0].mxu0
      %3733 = vmatprep.mubr.bf16.mxu0 0
      %3734 = vmatmul.mubr.bf16.gmra.mrb[0].mxu0 %v3601
      %v3735 = vpop.f32.mrb[0].mxu0
      %v3736 = vadd.f32 0.0, %v3735
      %v3737 = vpop.f32.mrb[0].mxu0
      %v3738 = vpop.f32.mrb[0].mxu0
      %v3739 = vadd.f32 0.0, %v3738
      %v3740 = vpop.f32.mrb[0].mxu0
      %3741 = vmatprep.mubr.bf16.mxu0 0
      %3742 = vmatmul.mubr.bf16.gmra.mrb[0].mxu0 %v3604
      %v3743 = vpop.f32.mrb[0].mxu0
      %v3744 = vadd.f32 0.0, %v3743
      %v3745 = vpop.f32.mrb[0].mxu0
      %v3746 = vpop.f32.mrb[0].mxu0
      %v3747 = vadd.f32 0.0, %v3746
      %v3748 = vpop.f32.mrb[0].mxu0
      %3749 = vmatprep.mubr.bf16.mxu0 0
      %3750 = vmatmul.mubr.bf16.gmra.mrb[0].mxu0 %v3607
      %v3751 = vpop.f32.mrb[0].mxu0
      %v3752 = vadd.f32 0.0, %v3751
      %v3753 = vpop.f32.mrb[0].mxu0
      %v3754 = vpop.f32.mrb[0].mxu0
      %v3755 = vadd.f32 0.0, %v3754
      %v3756 = vpop.f32.mrb[0].mxu0
      %3757 = vmatprep.mubr.bf16.mxu0 0
      %3758 = vmatmul.mubr.bf16.gmra.mrb[0].mxu0 %v3610
      %v3759 = vpop.f32.mrb[0].mxu0
      %v3760 = vadd.f32 0.0, %v3759
      %v3761 = vpop.f32.mrb[0].mxu0
      %v3762 = vpop.f32.mrb[0].mxu0
      %v3763 = vadd.f32 0.0, %v3762
      %v3764 = vpop.f32.mrb[0].mxu0
      %3765 = vmatprep.mubr.bf16.mxu0 0
      %3766 = vmatmul.mubr.bf16.gmra.mrb[0].mxu0 %v3613
      %v3767 = vpop.f32.mrb[0].mxu0
      %v3768 = vadd.f32 0.0, %v3767
      %v3769 = vpop.f32.mrb[0].mxu0
      %v3770 = vpop.f32.mrb[0].mxu0
      %v3771 = vadd.f32 0.0, %v3770
      %v3772 = vpop.f32.mrb[0].mxu0
      %3773 = vmatprep.mubr.bf16.mxu0 0
      %3774 = vmatmul.mubr.bf16.gmra.mrb[0].mxu0 %v3616
      %v3775 = vpop.f32.mrb[0].mxu0
      %v3776 = vadd.f32 0.0, %v3775
      %v3777 = vpop.f32.mrb[0].mxu0
      %v3778 = vpop.f32.mrb[0].mxu0
      %v3779 = vadd.f32 0.0, %v3778
      %v3780 = vpop.f32.mrb[0].mxu0
      %3781 = vdwg.mxu0
      %v3782 = vadd.f32 %v3312, %v3656
      %v3783 = vadd.f32 %v3313, %v3659
      %v3784 = vadd.f32 %v3314, %v3664
      %v3785 = vadd.f32 %v3315, %v3667
      %v3786 = vadd.f32 %v3316, %v3672
      %v3787 = vadd.f32 %v3317, %v3675
      %v3788 = vadd.f32 %v3318, %v3680
      %v3789 = vadd.f32 %v3319, %v3683
      %v3790 = vadd.f32 %v3320, %v3688
      %v3791 = vadd.f32 %v3321, %v3691
      %v3792 = vadd.f32 %v3322, %v3696
      %v3793 = vadd.f32 %v3323, %v3699
      %v3794 = vadd.f32 %v3324, %v3704
      %v3795 = vadd.f32 %v3325, %v3707
      %v3796 = vadd.f32 %v3326, %v3712
      %v3797 = vadd.f32 %v3327, %v3715
      %v3798 = vadd.f32 %v3328, %v3720
      %v3799 = vadd.f32 %v3329, %v3723
      %v3800 = vadd.f32 %v3330, %v3728
      %v3801 = vadd.f32 %v3331, %v3731
      %v3802 = vadd.f32 %v3332, %v3736
      %v3803 = vadd.f32 %v3333, %v3739
      %v3804 = vadd.f32 %v3334, %v3744
      %v3805 = vadd.f32 %v3335, %v3747
      %v3806 = vadd.f32 %v3336, %v3752
      %v3807 = vadd.f32 %v3337, %v3755
      %v3808 = vadd.f32 %v3338, %v3760
      %v3809 = vadd.f32 %v3339, %v3763
      %v3810 = vadd.f32 %v3340, %v3768
      %v3811 = vadd.f32 %v3341, %v3771
      %v3812 = vadd.f32 %v3342, %v3776
      %v3813 = vadd.f32 %v3343, %v3779
      %s3814 = scalar_lea.vmem [#allocation2], 24
      %v3815 = vld [vmem:[%s3814] sm:$0xf]
      %v3816 = vld [vmem:[%s3814 + $0x4] sm:$0xf]
      %v3817 = vld [vmem:[%s3814 + $0xc] sm:$0xf]
      %v3818 = vld [vmem:[%s3814 + $0x10] sm:$0xf]
      %v3819 = vld [vmem:[%s3814 + $0x18] sm:$0xf]
      %v3820 = vld [vmem:[%s3814 + $0x1c] sm:$0xf]
      %v3821 = vld [vmem:[%s3814 + $0x24] sm:$0xf]
      %v3822 = vld [vmem:[%s3814 + $0x28] sm:$0xf]
      %v3823 = vld [vmem:[%s3814 + $0x30] sm:$0xf]
      %v3824 = vld [vmem:[%s3814 + $0x34] sm:$0xf]
      %v3825 = vld [vmem:[%s3814 + $0x3c] sm:$0xf]
      %v3826 = vld [vmem:[%s3814 + $0x40] sm:$0xf]
      %v3827 = vld [vmem:[%s3814 + $0x48] sm:$0xf]
      %v3828 = vld [vmem:[%s3814 + $0x4c] sm:$0xf]
      %v3829 = vld [vmem:[%s3814 + $0x54] sm:$0xf]
      %v3830 = vld [vmem:[%s3814 + $0x58] sm:$0xf]
      %v3831 = vld [vmem:[%s3814 + $0x60] sm:$0xf]
      %v3832 = vld [vmem:[%s3814 + $0x64] sm:$0xf]
      %v3833 = vld [vmem:[%s3814 + $0x6c] sm:$0xf]
      %v3834 = vld [vmem:[%s3814 + $0x70] sm:$0xf]
      %v3835 = vld [vmem:[%s3814 + $0x78] sm:$0xf]
      %v3836 = vld [vmem:[%s3814 + $0x7c] sm:$0xf]
      %v3837 = vld [vmem:[%s3814 + $0x84] sm:$0xf]
      %v3838 = vld [vmem:[%s3814 + $0x88] sm:$0xf]
      %v3839 = vld [vmem:[%s3814 + $0x90] sm:$0xf]
      %v3840 = vld [vmem:[%s3814 + $0x94] sm:$0xf]
      %v3841 = vld [vmem:[%s3814 + $0x9c] sm:$0xf]
      %v3842 = vld [vmem:[%s3814 + $0xa0] sm:$0xf]
      %v3843 = vld [vmem:[%s3814 + $0xa8] sm:$0xf]
      %v3844 = vld [vmem:[%s3814 + $0xac] sm:$0xf]
      %v3845 = vld [vmem:[%s3814 + $0xb4] sm:$0xf]
      %v3846 = vld [vmem:[%s3814 + $0xb8] sm:$0xf]
      %s3847 = scalar_lea.vmem %s1, 12
      %v3848 = vld [vmem:[%s3847] sm:$0x3]
      %v3881 = vunpack.c.l.b16 %v3815
      %v3882 = vunpack.c.l.b16 %v3816
      %v3883 = vunpack.c.l.b16 %v3817
      %v3884 = vunpack.c.l.b16 %v3818
      %v3885 = vunpack.c.l.b16 %v3819
      %v3886 = vunpack.c.l.b16 %v3820
      %v3887 = vunpack.c.l.b16 %v3821
      %v3888 = vunpack.c.l.b16 %v3822
      %v3889 = vunpack.c.l.b16 %v3823
      %v3890 = vunpack.c.l.b16 %v3824
      %v3891 = vunpack.c.l.b16 %v3825
      %v3892 = vunpack.c.l.b16 %v3826
      %v3893 = vunpack.c.l.b16 %v3827
      %v3894 = vunpack.c.l.b16 %v3828
      %v3895 = vunpack.c.l.b16 %v3829
      %v3896 = vunpack.c.l.b16 %v3830
      %v3897 = vunpack.c.l.b16 %v3831
      %v3898 = vunpack.c.l.b16 %v3832
      %v3899 = vunpack.c.l.b16 %v3833
      %v3900 = vunpack.c.l.b16 %v3834
      %v3901 = vunpack.c.l.b16 %v3835
      %v3902 = vunpack.c.l.b16 %v3836
      %v3903 = vunpack.c.l.b16 %v3837
      %v3904 = vunpack.c.l.b16 %v3838
      %v3905 = vunpack.c.l.b16 %v3839
      %v3906 = vunpack.c.l.b16 %v3840
      %v3907 = vunpack.c.l.b16 %v3841
      %v3908 = vunpack.c.l.b16 %v3842
      %v3909 = vunpack.c.l.b16 %v3843
      %v3910 = vunpack.c.l.b16 %v3844
      %v3911 = vunpack.c.l.b16 %v3845
      %v3912 = vunpack.c.l.b16 %v3846
      %v3913 = vpack.c.b16 %v3882, %v3881
      %v3914 = vpack.c.b16 %v3884, %v3883
      %v3915 = vpack.c.b16 %v3886, %v3885
      %v3916 = vpack.c.b16 %v3888, %v3887
      %v3917 = vpack.c.b16 %v3890, %v3889
      %v3918 = vpack.c.b16 %v3892, %v3891
      %v3919 = vpack.c.b16 %v3894, %v3893
      %v3920 = vpack.c.b16 %v3896, %v3895
      %v3921 = vpack.c.b16 %v3898, %v3897
      %v3922 = vpack.c.b16 %v3900, %v3899
      %v3923 = vpack.c.b16 %v3902, %v3901
      %v3924 = vpack.c.b16 %v3904, %v3903
      %v3925 = vpack.c.b16 %v3906, %v3905
      %v3926 = vpack.c.b16 %v3908, %v3907
      %v3927 = vpack.c.b16 %v3910, %v3909
      %v3928 = vpack.c.b16 %v3912, %v3911
      %v3930 = vsel %vm1297, %v3913, 0
      %v3933 = vsel %vm1297, %v3914, 0
      %v3936 = vsel %vm1297, %v3915, 0
      %v3939 = vsel %vm1297, %v3916, 0
      %v3942 = vsel %vm1297, %v3917, 0
      %v3945 = vsel %vm1297, %v3918, 0
      %v3948 = vsel %vm1297, %v3919, 0
      %v3951 = vsel %vm1297, %v3920, 0
      %v3954 = vsel %vm1297, %v3921, 0
      %v3957 = vsel %vm1297, %v3922, 0
      %v3960 = vsel %vm1297, %v3923, 0
      %v3963 = vsel %vm1297, %v3924, 0
      %v3966 = vsel %vm1297, %v3925, 0
      %v3969 = vsel %vm1297, %v3926, 0
      %v3972 = vsel %vm1297, %v3927, 0
      %v3975 = vsel %vm1297, %v3928, 0
      %v3978 = vsel %vm1346, %v3848, 0
      %3980 = vmatprep.subr.bf16.mxu0 0
      %3981 = vmatpush1.bf16.msra.mxu0 %v3978
      %3982 = vmatprep.subr.bf16.mxu0 0
      %3983 = vmatpush1.bf16.msra.mxu0 0
      %3984 = vmatprep.subr.bf16.mxu0 0
      %3985 = vmatpush1.bf16.msra.mxu0 0
      %3986 = vmatprep.subr.bf16.mxu0 0
      %3987 = vmatpush1.bf16.msra.mxu0 0
      %3988 = vmatprep.subr.bf16.mxu0 0
      %3989 = vmatpush1.bf16.msra.mxu0 0
      %3990 = vmatprep.subr.bf16.mxu0 0
      %3991 = vmatpush1.bf16.msra.mxu0 0
      %3992 = vmatprep.subr.bf16.mxu0 0
      %3993 = vmatpush1.bf16.msra.mxu0 0
      %3994 = vmatprep.subr.bf16.mxu0 0
      %3995 = vmatpush1.bf16.msra.mxu0 0
      %3996 = vmatprep.subr.bf16.mxu0 0
      %3997 = vmatpush1.bf16.msra.mxu0 0
      %3998 = vmatprep.subr.bf16.mxu0 0
      %3999 = vmatpush1.bf16.msra.mxu0 0
      %4000 = vmatprep.subr.bf16.mxu0 0
      %4001 = vmatpush1.bf16.msra.mxu0 0
      %4002 = vmatprep.subr.bf16.mxu0 0
      %4003 = vmatpush1.bf16.msra.mxu0 0
      %4004 = vmatprep.subr.bf16.mxu0 0
      %4005 = vmatpush1.bf16.msra.mxu0 0
      %4006 = vmatprep.subr.bf16.mxu0 0
      %4007 = vmatpush1.bf16.msra.mxu0 0
      %4008 = vmatprep.subr.bf16.mxu0 0
      %4009 = vmatpush1.bf16.msra.mxu0 0
      %4010 = vmatprep.subr.bf16.mxu0 0
      %4011 = vmatpush1.bf16.msra.mxu0 0
      %4012 = vmatprep.mubr.bf16.mxu0 0
      %4013 = vmatmul.mubr.bf16.gmra.mrb[0].mxu0 %v3930
      %v4014 = vpop.f32.mrb[0].mxu0
      %v4015 = vadd.f32 0.0, %v4014
      %v4016 = vpop.f32.mrb[0].mxu0
      %v4017 = vpop.f32.mrb[0].mxu0
      %v4018 = vadd.f32 0.0, %v4017
      %v4019 = vpop.f32.mrb[0].mxu0
      %4020 = vmatprep.mubr.bf16.mxu0 0
      %4021 = vmatmul.mubr.bf16.gmra.mrb[0].mxu0 %v3933
      %v4022 = vpop.f32.mrb[0].mxu0
      %v4023 = vadd.f32 0.0, %v4022
      %v4024 = vpop.f32.mrb[0].mxu0
      %v4025 = vpop.f32.mrb[0].mxu0
      %v4026 = vadd.f32 0.0, %v4025
      %v4027 = vpop.f32.mrb[0].mxu0
      %4028 = vmatprep.mubr.bf16.mxu0 0
      %4029 = vmatmul.mubr.bf16.gmra.mrb[0].mxu0 %v3936
      %v4030 = vpop.f32.mrb[0].mxu0
      %v4031 = vadd.f32 0.0, %v4030
      %v4032 = vpop.f32.mrb[0].mxu0
      %v4033 = vpop.f32.mrb[0].mxu0
      %v4034 = vadd.f32 0.0, %v4033
      %v4035 = vpop.f32.mrb[0].mxu0
      %4036 = vmatprep.mubr.bf16.mxu0 0
      %4037 = vmatmul.mubr.bf16.gmra.mrb[0].mxu0 %v3939
      %v4038 = vpop.f32.mrb[0].mxu0
      %v4039 = vadd.f32 0.0, %v4038
      %v4040 = vpop.f32.mrb[0].mxu0
      %v4041 = vpop.f32.mrb[0].mxu0
      %v4042 = vadd.f32 0.0, %v4041
      %v4043 = vpop.f32.mrb[0].mxu0
      %4044 = vmatprep.mubr.bf16.mxu0 0
      %4045 = vmatmul.mubr.bf16.gmra.mrb[0].mxu0 %v3942
      %v4046 = vpop.f32.mrb[0].mxu0
      %v4047 = vadd.f32 0.0, %v4046
      %v4048 = vpop.f32.mrb[0].mxu0
      %v4049 = vpop.f32.mrb[0].mxu0
      %v4050 = vadd.f32 0.0, %v4049
      %v4051 = vpop.f32.mrb[0].mxu0
      %4052 = vmatprep.mubr.bf16.mxu0 0
      %4053 = vmatmul.mubr.bf16.gmra.mrb[0].mxu0 %v3945
      %v4054 = vpop.f32.mrb[0].mxu0
      %v4055 = vadd.f32 0.0, %v4054
      %v4056 = vpop.f32.mrb[0].mxu0
      %v4057 = vpop.f32.mrb[0].mxu0
      %v4058 = vadd.f32 0.0, %v4057
      %v4059 = vpop.f32.mrb[0].mxu0
      %4060 = vmatprep.mubr.bf16.mxu0 0
      %4061 = vmatmul.mubr.bf16.gmra.mrb[0].mxu0 %v3948
      %v4062 = vpop.f32.mrb[0].mxu0
      %v4063 = vadd.f32 0.0, %v4062
      %v4064 = vpop.f32.mrb[0].mxu0
      %v4065 = vpop.f32.mrb[0].mxu0
      %v4066 = vadd.f32 0.0, %v4065
      %v4067 = vpop.f32.mrb[0].mxu0
      %4068 = vmatprep.mubr.bf16.mxu0 0
      %4069 = vmatmul.mubr.bf16.gmra.mrb[0].mxu0 %v3951
      %v4070 = vpop.f32.mrb[0].mxu0
      %v4071 = vadd.f32 0.0, %v4070
      %v4072 = vpop.f32.mrb[0].mxu0
      %v4073 = vpop.f32.mrb[0].mxu0
      %v4074 = vadd.f32 0.0, %v4073
      %v4075 = vpop.f32.mrb[0].mxu0
      %4076 = vmatprep.mubr.bf16.mxu0 0
      %4077 = vmatmul.mubr.bf16.gmra.mrb[0].mxu0 %v3954
      %v4078 = vpop.f32.mrb[0].mxu0
      %v4079 = vadd.f32 0.0, %v4078
      %v4080 = vpop.f32.mrb[0].mxu0
      %v4081 = vpop.f32.mrb[0].mxu0
      %v4082 = vadd.f32 0.0, %v4081
      %v4083 = vpop.f32.mrb[0].mxu0
      %4084 = vmatprep.mubr.bf16.mxu0 0
      %4085 = vmatmul.mubr.bf16.gmra.mrb[0].mxu0 %v3957
      %v4086 = vpop.f32.mrb[0].mxu0
      %v4087 = vadd.f32 0.0, %v4086
      %v4088 = vpop.f32.mrb[0].mxu0
      %v4089 = vpop.f32.mrb[0].mxu0
      %v4090 = vadd.f32 0.0, %v4089
      %v4091 = vpop.f32.mrb[0].mxu0
      %4092 = vmatprep.mubr.bf16.mxu0 0
      %4093 = vmatmul.mubr.bf16.gmra.mrb[0].mxu0 %v3960
      %v4094 = vpop.f32.mrb[0].mxu0
      %v4095 = vadd.f32 0.0, %v4094
      %v4096 = vpop.f32.mrb[0].mxu0
      %v4097 = vpop.f32.mrb[0].mxu0
      %v4098 = vadd.f32 0.0, %v4097
      %v4099 = vpop.f32.mrb[0].mxu0
      %4100 = vmatprep.mubr.bf16.mxu0 0
      %4101 = vmatmul.mubr.bf16.gmra.mrb[0].mxu0 %v3963
      %v4102 = vpop.f32.mrb[0].mxu0
      %v4103 = vadd.f32 0.0, %v4102
      %v4104 = vpop.f32.mrb[0].mxu0
      %v4105 = vpop.f32.mrb[0].mxu0
      %v4106 = vadd.f32 0.0, %v4105
      %v4107 = vpop.f32.mrb[0].mxu0
      %4108 = vmatprep.mubr.bf16.mxu0 0
      %4109 = vmatmul.mubr.bf16.gmra.mrb[0].mxu0 %v3966
      %v4110 = vpop.f32.mrb[0].mxu0
      %v4111 = vadd.f32 0.0, %v4110
      %v4112 = vpop.f32.mrb[0].mxu0
      %v4113 = vpop.f32.mrb[0].mxu0
      %v4114 = vadd.f32 0.0, %v4113
      %v4115 = vpop.f32.mrb[0].mxu0
      %4116 = vmatprep.mubr.bf16.mxu0 0
      %4117 = vmatmul.mubr.bf16.gmra.mrb[0].mxu0 %v3969
      %v4118 = vpop.f32.mrb[0].mxu0
      %v4119 = vadd.f32 0.0, %v4118
      %v4120 = vpop.f32.mrb[0].mxu0
      %v4121 = vpop.f32.mrb[0].mxu0
      %v4122 = vadd.f32 0.0, %v4121
      %v4123 = vpop.f32.mrb[0].mxu0
      %4124 = vmatprep.mubr.bf16.mxu0 0
      %4125 = vmatmul.mubr.bf16.gmra.mrb[0].mxu0 %v3972
      %v4126 = vpop.f32.mrb[0].mxu0
      %v4127 = vadd.f32 0.0, %v4126
      %v4128 = vpop.f32.mrb[0].mxu0
      %v4129 = vpop.f32.mrb[0].mxu0
      %v4130 = vadd.f32 0.0, %v4129
      %v4131 = vpop.f32.mrb[0].mxu0
      %4132 = vmatprep.mubr.bf16.mxu0 0
      %4133 = vmatmul.mubr.bf16.gmra.mrb[0].mxu0 %v3975
      %v4134 = vpop.f32.mrb[0].mxu0
      %v4135 = vadd.f32 0.0, %v4134
      %v4136 = vpop.f32.mrb[0].mxu0
      %v4137 = vpop.f32.mrb[0].mxu0
      %v4138 = vadd.f32 0.0, %v4137
      %v4139 = vpop.f32.mrb[0].mxu0
      %4140 = vdwg.mxu0
      %v4141 = vadd.f32 %v3782, %v4015
      %v4142 = vadd.f32 %v3783, %v4018
      %v4143 = vadd.f32 %v3784, %v4023
      %v4144 = vadd.f32 %v3785, %v4026
      %v4145 = vadd.f32 %v3786, %v4031
      %v4146 = vadd.f32 %v3787, %v4034
      %v4147 = vadd.f32 %v3788, %v4039
      %v4148 = vadd.f32 %v3789, %v4042
      %v4149 = vadd.f32 %v3790, %v4047
      %v4150 = vadd.f32 %v3791, %v4050
      %v4151 = vadd.f32 %v3792, %v4055
      %v4152 = vadd.f32 %v3793, %v4058
      %v4153 = vadd.f32 %v3794, %v4063
      %v4154 = vadd.f32 %v3795, %v4066
      %v4155 = vadd.f32 %v3796, %v4071
      %v4156 = vadd.f32 %v3797, %v4074
      %v4157 = vadd.f32 %v3798, %v4079
      %v4158 = vadd.f32 %v3799, %v4082
      %v4159 = vadd.f32 %v3800, %v4087
      %v4160 = vadd.f32 %v3801, %v4090
      %v4161 = vadd.f32 %v3802, %v4095
      %v4162 = vadd.f32 %v3803, %v4098
      %v4163 = vadd.f32 %v3804, %v4103
      %v4164 = vadd.f32 %v3805, %v4106
      %v4165 = vadd.f32 %v3806, %v4111
      %v4166 = vadd.f32 %v3807, %v4114
      %v4167 = vadd.f32 %v3808, %v4119
      %v4168 = vadd.f32 %v3809, %v4122
      %v4169 = vadd.f32 %v3810, %v4127
      %v4170 = vadd.f32 %v3811, %v4130
      %v4171 = vadd.f32 %v3812, %v4135
      %v4172 = vadd.f32 %v3813, %v4138
      %v4173 = vld [vmem:[%s3814] sm:$0xf]
      %v4174 = vld [vmem:[%s3814 + $0x4] sm:$0xf]
      %v4175 = vld [vmem:[%s3814 + $0x8] sm:$0x1]
      %v4176 = vld [vmem:[%s3814 + $0xc] sm:$0xf]
      %v4177 = vld [vmem:[%s3814 + $0x10] sm:$0xf]
      %v4178 = vld [vmem:[%s3814 + $0x14] sm:$0x1]
      %v4179 = vld [vmem:[%s3814 + $0x18] sm:$0xf]
      %v4180 = vld [vmem:[%s3814 + $0x1c] sm:$0xf]
      %v4181 = vld [vmem:[%s3814 + $0x20] sm:$0x1]
      %v4182 = vld [vmem:[%s3814 + $0x24] sm:$0xf]
      %v4183 = vld [vmem:[%s3814 + $0x28] sm:$0xf]
      %v4184 = vld [vmem:[%s3814 + $0x2c] sm:$0x1]
      %v4185 = vld [vmem:[%s3814 + $0x30] sm:$0xf]
      %v4186 = vld [vmem:[%s3814 + $0x34] sm:$0xf]
      %v4187 = vld [vmem:[%s3814 + $0x38] sm:$0x1]
      %v4188 = vld [vmem:[%s3814 + $0x3c] sm:$0xf]
      %v4189 = vld [vmem:[%s3814 + $0x40] sm:$0xf]
      %v4190 = vld [vmem:[%s3814 + $0x44] sm:$0x1]
      %v4191 = vld [vmem:[%s3814 + $0x48] sm:$0xf]
      %v4192 = vld [vmem:[%s3814 + $0x4c] sm:$0xf]
      %v4193 = vld [vmem:[%s3814 + $0x50] sm:$0x1]
      %v4194 = vld [vmem:[%s3814 + $0x54] sm:$0xf]
      %v4195 = vld [vmem:[%s3814 + $0x58] sm:$0xf]
      %v4196 = vld [vmem:[%s3814 + $0x5c] sm:$0x1]
      %v4197 = vld [vmem:[%s3814 + $0x60] sm:$0xf]
      %v4198 = vld [vmem:[%s3814 + $0x64] sm:$0xf]
      %v4199 = vld [vmem:[%s3814 + $0x68] sm:$0x1]
      %v4200 = vld [vmem:[%s3814 + $0x6c] sm:$0xf]
      %v4201 = vld [vmem:[%s3814 + $0x70] sm:$0xf]
      %v4202 = vld [vmem:[%s3814 + $0x74] sm:$0x1]
      %v4203 = vld [vmem:[%s3814 + $0x78] sm:$0xf]
      %v4204 = vld [vmem:[%s3814 + $0x7c] sm:$0xf]
      %v4205 = vld [vmem:[%s3814 + $0x80] sm:$0x1]
      %v4206 = vld [vmem:[%s3814 + $0x84] sm:$0xf]
      %v4207 = vld [vmem:[%s3814 + $0x88] sm:$0xf]
      %v4208 = vld [vmem:[%s3814 + $0x8c] sm:$0x1]
      %v4209 = vld [vmem:[%s3814 + $0x90] sm:$0xf]
      %v4210 = vld [vmem:[%s3814 + $0x94] sm:$0xf]
      %v4211 = vld [vmem:[%s3814 + $0x98] sm:$0x1]
      %v4212 = vld [vmem:[%s3814 + $0x9c] sm:$0xf]
      %v4213 = vld [vmem:[%s3814 + $0xa0] sm:$0xf]
      %v4214 = vld [vmem:[%s3814 + $0xa4] sm:$0x1]
      %v4215 = vld [vmem:[%s3814 + $0xa8] sm:$0xf]
      %v4216 = vld [vmem:[%s3814 + $0xac] sm:$0xf]
      %v4217 = vld [vmem:[%s3814 + $0xb0] sm:$0x1]
      %v4218 = vld [vmem:[%s3814 + $0xb4] sm:$0xf]
      %v4219 = vld [vmem:[%s3814 + $0xb8] sm:$0xf]
      %v4220 = vld [vmem:[%s3814 + $0xbc] sm:$0x1]
      %v4222 = vshrl.u32 %v4173, 16
      %v4224 = vrot.slane %v4222, 4
      %v4225 = vshll.u32 %v4173, 16
      %v4227 = vrot.slane %v4225, 5
      %v4228 = vor.u32 %v4224, %v4227
      %v4229 = vrot.slane %v4228, 4
      %v4231 = vshll.u32 %v4174, 16
      %v4233 = vrot.slane %v4231, 5
      %v4234 = vsel %vm862, %v4229, %v4233
      %v4235 = vshrl.u32 %v4174, 16
      %v4237 = vrot.slane %v4235, 4
      %v4238 = vor.u32 %v4237, %v4233
      %v4239 = vrot.slane %v4238, 4
      %v4241 = vshll.u32 %v4175, 16
      %v4243 = vrot.slane %v4241, 5
      %v4244 = vsel %vm862, %v4239, %v4243
      %v4246 = vshrl.u32 %v4176, 16
      %v4248 = vrot.slane %v4246, 4
      %v4249 = vshll.u32 %v4176, 16
      %v4251 = vrot.slane %v4249, 5
      %v4252 = vor.u32 %v4248, %v4251
      %v4253 = vrot.slane %v4252, 4
      %v4255 = vshll.u32 %v4177, 16
      %v4257 = vrot.slane %v4255, 5
      %v4258 = vsel %vm862, %v4253, %v4257
      %v4259 = vshrl.u32 %v4177, 16
      %v4261 = vrot.slane %v4259, 4
      %v4262 = vor.u32 %v4261, %v4257
      %v4263 = vrot.slane %v4262, 4
      %v4265 = vshll.u32 %v4178, 16
      %v4267 = vrot.slane %v4265, 5
      %v4268 = vsel %vm862, %v4263, %v4267
      %v4270 = vshrl.u32 %v4179, 16
      %v4272 = vrot.slane %v4270, 4
      %v4273 = vshll.u32 %v4179, 16
      %v4275 = vrot.slane %v4273, 5
      %v4276 = vor.u32 %v4272, %v4275
      %v4277 = vrot.slane %v4276, 4
      %v4279 = vshll.u32 %v4180, 16
      %v4281 = vrot.slane %v4279, 5
      %v4282 = vsel %vm862, %v4277, %v4281
      %v4283 = vshrl.u32 %v4180, 16
      %v4285 = vrot.slane %v4283, 4
      %v4286 = vor.u32 %v4285, %v4281
      %v4287 = vrot.slane %v4286, 4
      %v4289 = vshll.u32 %v4181, 16
      %v4291 = vrot.slane %v4289, 5
      %v4292 = vsel %vm862, %v4287, %v4291
      %v4294 = vshrl.u32 %v4182, 16
      %v4296 = vrot.slane %v4294, 4
      %v4297 = vshll.u32 %v4182, 16
      %v4299 = vrot.slane %v4297, 5
      %v4300 = vor.u32 %v4296, %v4299
      %v4301 = vrot.slane %v4300, 4
      %v4303 = vshll.u32 %v4183, 16
      %v4305 = vrot.slane %v4303, 5
      %v4306 = vsel %vm862, %v4301, %v4305
      %v4307 = vshrl.u32 %v4183, 16
      %v4309 = vrot.slane %v4307, 4
      %v4310 = vor.u32 %v4309, %v4305
      %v4311 = vrot.slane %v4310, 4
      %v4313 = vshll.u32 %v4184, 16
      %v4315 = vrot.slane %v4313, 5
      %v4316 = vsel %vm862, %v4311, %v4315
      %v4318 = vshrl.u32 %v4185, 16
      %v4320 = vrot.slane %v4318, 4
      %v4321 = vshll.u32 %v4185, 16
      %v4323 = vrot.slane %v4321, 5
      %v4324 = vor.u32 %v4320, %v4323
      %v4325 = vrot.slane %v4324, 4
      %v4327 = vshll.u32 %v4186, 16
      %v4329 = vrot.slane %v4327, 5
      %v4330 = vsel %vm862, %v4325, %v4329
      %v4331 = vshrl.u32 %v4186, 16
      %v4333 = vrot.slane %v4331, 4
      %v4334 = vor.u32 %v4333, %v4329
      %v4335 = vrot.slane %v4334, 4
      %v4337 = vshll.u32 %v4187, 16
      %v4339 = vrot.slane %v4337, 5
      %v4340 = vsel %vm862, %v4335, %v4339
      %v4342 = vshrl.u32 %v4188, 16
      %v4344 = vrot.slane %v4342, 4
      %v4345 = vshll.u32 %v4188, 16
      %v4347 = vrot.slane %v4345, 5
      %v4348 = vor.u32 %v4344, %v4347
      %v4349 = vrot.slane %v4348, 4
      %v4351 = vshll.u32 %v4189, 16
      %v4353 = vrot.slane %v4351, 5
      %v4354 = vsel %vm862, %v4349, %v4353
      %v4355 = vshrl.u32 %v4189, 16
      %v4357 = vrot.slane %v4355, 4
      %v4358 = vor.u32 %v4357, %v4353
      %v4359 = vrot.slane %v4358, 4
      %v4361 = vshll.u32 %v4190, 16
      %v4363 = vrot.slane %v4361, 5
      %v4364 = vsel %vm862, %v4359, %v4363
      %v4366 = vshrl.u32 %v4191, 16
      %v4368 = vrot.slane %v4366, 4
      %v4369 = vshll.u32 %v4191, 16
      %v4371 = vrot.slane %v4369, 5
      %v4372 = vor.u32 %v4368, %v4371
      %v4373 = vrot.slane %v4372, 4
      %v4375 = vshll.u32 %v4192, 16
      %v4377 = vrot.slane %v4375, 5
      %v4378 = vsel %vm862, %v4373, %v4377
      %v4379 = vshrl.u32 %v4192, 16
      %v4381 = vrot.slane %v4379, 4
      %v4382 = vor.u32 %v4381, %v4377
      %v4383 = vrot.slane %v4382, 4
      %v4385 = vshll.u32 %v4193, 16
      %v4387 = vrot.slane %v4385, 5
      %v4388 = vsel %vm862, %v4383, %v4387
      %v4390 = vshrl.u32 %v4194, 16
      %v4392 = vrot.slane %v4390, 4
      %v4393 = vshll.u32 %v4194, 16
      %v4395 = vrot.slane %v4393, 5
      %v4396 = vor.u32 %v4392, %v4395
      %v4397 = vrot.slane %v4396, 4
      %v4399 = vshll.u32 %v4195, 16
      %v4401 = vrot.slane %v4399, 5
      %v4402 = vsel %vm862, %v4397, %v4401
      %v4403 = vshrl.u32 %v4195, 16
      %v4405 = vrot.slane %v4403, 4
      %v4406 = vor.u32 %v4405, %v4401
      %v4407 = vrot.slane %v4406, 4
      %v4409 = vshll.u32 %v4196, 16
      %v4411 = vrot.slane %v4409, 5
      %v4412 = vsel %vm862, %v4407, %v4411
      %v4414 = vshrl.u32 %v4197, 16
      %v4416 = vrot.slane %v4414, 4
      %v4417 = vshll.u32 %v4197, 16
      %v4419 = vrot.slane %v4417, 5
      %v4420 = vor.u32 %v4416, %v4419
      %v4421 = vrot.slane %v4420, 4
      %v4423 = vshll.u32 %v4198, 16
      %v4425 = vrot.slane %v4423, 5
      %v4426 = vsel %vm862, %v4421, %v4425
      %v4427 = vshrl.u32 %v4198, 16
      %v4429 = vrot.slane %v4427, 4
      %v4430 = vor.u32 %v4429, %v4425
      %v4431 = vrot.slane %v4430, 4
      %v4433 = vshll.u32 %v4199, 16
      %v4435 = vrot.slane %v4433, 5
      %v4436 = vsel %vm862, %v4431, %v4435
      %v4438 = vshrl.u32 %v4200, 16
      %v4440 = vrot.slane %v4438, 4
      %v4441 = vshll.u32 %v4200, 16
      %v4443 = vrot.slane %v4441, 5
      %v4444 = vor.u32 %v4440, %v4443
      %v4445 = vrot.slane %v4444, 4
      %v4447 = vshll.u32 %v4201, 16
      %v4449 = vrot.slane %v4447, 5
      %v4450 = vsel %vm862, %v4445, %v4449
      %v4451 = vshrl.u32 %v4201, 16
      %v4453 = vrot.slane %v4451, 4
      %v4454 = vor.u32 %v4453, %v4449
      %v4455 = vrot.slane %v4454, 4
      %v4457 = vshll.u32 %v4202, 16
      %v4459 = vrot.slane %v4457, 5
      %v4460 = vsel %vm862, %v4455, %v4459
      %v4462 = vshrl.u32 %v4203, 16
      %v4464 = vrot.slane %v4462, 4
      %v4465 = vshll.u32 %v4203, 16
      %v4467 = vrot.slane %v4465, 5
      %v4468 = vor.u32 %v4464, %v4467
      %v4469 = vrot.slane %v4468, 4
      %v4471 = vshll.u32 %v4204, 16
      %v4473 = vrot.slane %v4471, 5
      %v4474 = vsel %vm862, %v4469, %v4473
      %v4475 = vshrl.u32 %v4204, 16
      %v4477 = vrot.slane %v4475, 4
      %v4478 = vor.u32 %v4477, %v4473
      %v4479 = vrot.slane %v4478, 4
      %v4481 = vshll.u32 %v4205, 16
      %v4483 = vrot.slane %v4481, 5
      %v4484 = vsel %vm862, %v4479, %v4483
      %v4486 = vshrl.u32 %v4206, 16
      %v4488 = vrot.slane %v4486, 4
      %v4489 = vshll.u32 %v4206, 16
      %v4491 = vrot.slane %v4489, 5
      %v4492 = vor.u32 %v4488, %v4491
      %v4493 = vrot.slane %v4492, 4
      %v4495 = vshll.u32 %v4207, 16
      %v4497 = vrot.slane %v4495, 5
      %v4498 = vsel %vm862, %v4493, %v4497
      %v4499 = vshrl.u32 %v4207, 16
      %v4501 = vrot.slane %v4499, 4
      %v4502 = vor.u32 %v4501, %v4497
      %v4503 = vrot.slane %v4502, 4
      %v4505 = vshll.u32 %v4208, 16
      %v4507 = vrot.slane %v4505, 5
      %v4508 = vsel %vm862, %v4503, %v4507
      %v4510 = vshrl.u32 %v4209, 16
      %v4512 = vrot.slane %v4510, 4
      %v4513 = vshll.u32 %v4209, 16
      %v4515 = vrot.slane %v4513, 5
      %v4516 = vor.u32 %v4512, %v4515
      %v4517 = vrot.slane %v4516, 4
      %v4519 = vshll.u32 %v4210, 16
      %v4521 = vrot.slane %v4519, 5
      %v4522 = vsel %vm862, %v4517, %v4521
      %v4523 = vshrl.u32 %v4210, 16
      %v4525 = vrot.slane %v4523, 4
      %v4526 = vor.u32 %v4525, %v4521
      %v4527 = vrot.slane %v4526, 4
      %v4529 = vshll.u32 %v4211, 16
      %v4531 = vrot.slane %v4529, 5
      %v4532 = vsel %vm862, %v4527, %v4531
      %v4534 = vshrl.u32 %v4212, 16
      %v4536 = vrot.slane %v4534, 4
      %v4537 = vshll.u32 %v4212, 16
      %v4539 = vrot.slane %v4537, 5
      %v4540 = vor.u32 %v4536, %v4539
      %v4541 = vrot.slane %v4540, 4
      %v4543 = vshll.u32 %v4213, 16
      %v4545 = vrot.slane %v4543, 5
      %v4546 = vsel %vm862, %v4541, %v4545
      %v4547 = vshrl.u32 %v4213, 16
      %v4549 = vrot.slane %v4547, 4
      %v4550 = vor.u32 %v4549, %v4545
      %v4551 = vrot.slane %v4550, 4
      %v4553 = vshll.u32 %v4214, 16
      %v4555 = vrot.slane %v4553, 5
      %v4556 = vsel %vm862, %v4551, %v4555
      %v4558 = vshrl.u32 %v4215, 16
      %v4560 = vrot.slane %v4558, 4
      %v4561 = vshll.u32 %v4215, 16
      %v4563 = vrot.slane %v4561, 5
      %v4564 = vor.u32 %v4560, %v4563
      %v4565 = vrot.slane %v4564, 4
      %v4567 = vshll.u32 %v4216, 16
      %v4569 = vrot.slane %v4567, 5
      %v4570 = vsel %vm862, %v4565, %v4569
      %v4571 = vshrl.u32 %v4216, 16
      %v4573 = vrot.slane %v4571, 4
      %v4574 = vor.u32 %v4573, %v4569
      %v4575 = vrot.slane %v4574, 4
      %v4577 = vshll.u32 %v4217, 16
      %v4579 = vrot.slane %v4577, 5
      %v4580 = vsel %vm862, %v4575, %v4579
      %v4582 = vshrl.u32 %v4218, 16
      %v4584 = vrot.slane %v4582, 4
      %v4585 = vshll.u32 %v4218, 16
      %v4587 = vrot.slane %v4585, 5
      %v4588 = vor.u32 %v4584, %v4587
      %v4589 = vrot.slane %v4588, 4
      %v4591 = vshll.u32 %v4219, 16
      %v4593 = vrot.slane %v4591, 5
      %v4594 = vsel %vm862, %v4589, %v4593
      %v4595 = vshrl.u32 %v4219, 16
      %v4597 = vrot.slane %v4595, 4
      %v4598 = vor.u32 %v4597, %v4593
      %v4599 = vrot.slane %v4598, 4
      %v4601 = vshll.u32 %v4220, 16
      %v4603 = vrot.slane %v4601, 5
      %v4604 = vsel %vm862, %v4599, %v4603
      %s4605 = scalar_lea.vmem %s1, 14
      %v4606 = vld [vmem:[%s4605] sm:$0x3]
      %v4607 = vunpack.c.l.b16 %v4234
      %v4608 = vunpack.c.l.b16 %v4244
      %v4609 = vunpack.c.l.b16 %v4258
      %v4610 = vunpack.c.l.b16 %v4268
      %v4611 = vunpack.c.l.b16 %v4282
      %v4612 = vunpack.c.l.b16 %v4292
      %v4613 = vunpack.c.l.b16 %v4306
      %v4614 = vunpack.c.l.b16 %v4316
      %v4615 = vunpack.c.l.b16 %v4330
      %v4616 = vunpack.c.l.b16 %v4340
      %v4617 = vunpack.c.l.b16 %v4354
      %v4618 = vunpack.c.l.b16 %v4364
      %v4619 = vunpack.c.l.b16 %v4378
      %v4620 = vunpack.c.l.b16 %v4388
      %v4621 = vunpack.c.l.b16 %v4402
      %v4622 = vunpack.c.l.b16 %v4412
      %v4623 = vunpack.c.l.b16 %v4426
      %v4624 = vunpack.c.l.b16 %v4436
      %v4625 = vunpack.c.l.b16 %v4450
      %v4626 = vunpack.c.l.b16 %v4460
      %v4627 = vunpack.c.l.b16 %v4474
      %v4628 = vunpack.c.l.b16 %v4484
      %v4629 = vunpack.c.l.b16 %v4498
      %v4630 = vunpack.c.l.b16 %v4508
      %v4631 = vunpack.c.l.b16 %v4522
      %v4632 = vunpack.c.l.b16 %v4532
      %v4633 = vunpack.c.l.b16 %v4546
      %v4634 = vunpack.c.l.b16 %v4556
      %v4635 = vunpack.c.l.b16 %v4570
      %v4636 = vunpack.c.l.b16 %v4580
      %v4637 = vunpack.c.l.b16 %v4594
      %v4638 = vunpack.c.l.b16 %v4604
      %v4639 = vpack.c.b16 %v4608, %v4607
      %v4640 = vpack.c.b16 %v4610, %v4609
      %v4641 = vpack.c.b16 %v4612, %v4611
      %v4642 = vpack.c.b16 %v4614, %v4613
      %v4643 = vpack.c.b16 %v4616, %v4615
      %v4644 = vpack.c.b16 %v4618, %v4617
      %v4645 = vpack.c.b16 %v4620, %v4619
      %v4646 = vpack.c.b16 %v4622, %v4621
      %v4647 = vpack.c.b16 %v4624, %v4623
      %v4648 = vpack.c.b16 %v4626, %v4625
      %v4649 = vpack.c.b16 %v4628, %v4627
      %v4650 = vpack.c.b16 %v4630, %v4629
      %v4651 = vpack.c.b16 %v4632, %v4631
      %v4652 = vpack.c.b16 %v4634, %v4633
      %v4653 = vpack.c.b16 %v4636, %v4635
      %v4654 = vpack.c.b16 %v4638, %v4637
      %v4656 = vsel %vm1297, %v4639, 0
      %v4659 = vsel %vm1297, %v4640, 0
      %v4662 = vsel %vm1297, %v4641, 0
      %v4665 = vsel %vm1297, %v4642, 0
      %v4668 = vsel %vm1297, %v4643, 0
      %v4671 = vsel %vm1297, %v4644, 0
      %v4674 = vsel %vm1297, %v4645, 0
      %v4677 = vsel %vm1297, %v4646, 0
      %v4680 = vsel %vm1297, %v4647, 0
      %v4683 = vsel %vm1297, %v4648, 0
      %v4686 = vsel %vm1297, %v4649, 0
      %v4689 = vsel %vm1297, %v4650, 0
      %v4692 = vsel %vm1297, %v4651, 0
      %v4695 = vsel %vm1297, %v4652, 0
      %v4698 = vsel %vm1297, %v4653, 0
      %v4701 = vsel %vm1297, %v4654, 0
      %v4704 = vsel %vm1346, %v4606, 0
      %4706 = vmatprep.subr.bf16.mxu0 0
      %4707 = vmatpush1.bf16.msra.mxu0 %v4704
      %4708 = vmatprep.subr.bf16.mxu0 0
      %4709 = vmatpush1.bf16.msra.mxu0 0
      %4710 = vmatprep.subr.bf16.mxu0 0
      %4711 = vmatpush1.bf16.msra.mxu0 0
      %4712 = vmatprep.subr.bf16.mxu0 0
      %4713 = vmatpush1.bf16.msra.mxu0 0
      %4714 = vmatprep.subr.bf16.mxu0 0
      %4715 = vmatpush1.bf16.msra.mxu0 0
      %4716 = vmatprep.subr.bf16.mxu0 0
      %4717 = vmatpush1.bf16.msra.mxu0 0
      %4718 = vmatprep.subr.bf16.mxu0 0
      %4719 = vmatpush1.bf16.msra.mxu0 0
      %4720 = vmatprep.subr.bf16.mxu0 0
      %4721 = vmatpush1.bf16.msra.mxu0 0
      %4722 = vmatprep.subr.bf16.mxu0 0
      %4723 = vmatpush1.bf16.msra.mxu0 0
      %4724 = vmatprep.subr.bf16.mxu0 0
      %4725 = vmatpush1.bf16.msra.mxu0 0
      %4726 = vmatprep.subr.bf16.mxu0 0
      %4727 = vmatpush1.bf16.msra.mxu0 0
      %4728 = vmatprep.subr.bf16.mxu0 0
      %4729 = vmatpush1.bf16.msra.mxu0 0
      %4730 = vmatprep.subr.bf16.mxu0 0
      %4731 = vmatpush1.bf16.msra.mxu0 0
      %4732 = vmatprep.subr.bf16.mxu0 0
      %4733 = vmatpush1.bf16.msra.mxu0 0
      %4734 = vmatprep.subr.bf16.mxu0 0
      %4735 = vmatpush1.bf16.msra.mxu0 0
      %4736 = vmatprep.subr.bf16.mxu0 0
      %4737 = vmatpush1.bf16.msra.mxu0 0
      %4738 = vmatprep.mubr.bf16.mxu0 0
      %4739 = vmatmul.mubr.bf16.gmra.mrb[0].mxu0 %v4656
      %v4740 = vpop.f32.mrb[0].mxu0
      %v4741 = vadd.f32 0.0, %v4740
      %v4742 = vpop.f32.mrb[0].mxu0
      %v4743 = vpop.f32.mrb[0].mxu0
      %v4744 = vadd.f32 0.0, %v4743
      %v4745 = vpop.f32.mrb[0].mxu0
      %4746 = vmatprep.mubr.bf16.mxu0 0
      %4747 = vmatmul.mubr.bf16.gmra.mrb[0].mxu0 %v4659
      %v4748 = vpop.f32.mrb[0].mxu0
      %v4749 = vadd.f32 0.0, %v4748
      %v4750 = vpop.f32.mrb[0].mxu0
      %v4751 = vpop.f32.mrb[0].mxu0
      %v4752 = vadd.f32 0.0, %v4751
      %v4753 = vpop.f32.mrb[0].mxu0
      %4754 = vmatprep.mubr.bf16.mxu0 0
      %4755 = vmatmul.mubr.bf16.gmra.mrb[0].mxu0 %v4662
      %v4756 = vpop.f32.mrb[0].mxu0
      %v4757 = vadd.f32 0.0, %v4756
      %v4758 = vpop.f32.mrb[0].mxu0
      %v4759 = vpop.f32.mrb[0].mxu0
      %v4760 = vadd.f32 0.0, %v4759
      %v4761 = vpop.f32.mrb[0].mxu0
      %4762 = vmatprep.mubr.bf16.mxu0 0
      %4763 = vmatmul.mubr.bf16.gmra.mrb[0].mxu0 %v4665
      %v4764 = vpop.f32.mrb[0].mxu0
      %v4765 = vadd.f32 0.0, %v4764
      %v4766 = vpop.f32.mrb[0].mxu0
      %v4767 = vpop.f32.mrb[0].mxu0
      %v4768 = vadd.f32 0.0, %v4767
      %v4769 = vpop.f32.mrb[0].mxu0
      %4770 = vmatprep.mubr.bf16.mxu0 0
      %4771 = vmatmul.mubr.bf16.gmra.mrb[0].mxu0 %v4668
      %v4772 = vpop.f32.mrb[0].mxu0
      %v4773 = vadd.f32 0.0, %v4772
      %v4774 = vpop.f32.mrb[0].mxu0
      %v4775 = vpop.f32.mrb[0].mxu0
      %v4776 = vadd.f32 0.0, %v4775
      %v4777 = vpop.f32.mrb[0].mxu0
      %4778 = vmatprep.mubr.bf16.mxu0 0
      %4779 = vmatmul.mubr.bf16.gmra.mrb[0].mxu0 %v4671
      %v4780 = vpop.f32.mrb[0].mxu0
      %v4781 = vadd.f32 0.0, %v4780
      %v4782 = vpop.f32.mrb[0].mxu0
      %v4783 = vpop.f32.mrb[0].mxu0
      %v4784 = vadd.f32 0.0, %v4783
      %v4785 = vpop.f32.mrb[0].mxu0
      %4786 = vmatprep.mubr.bf16.mxu0 0
      %4787 = vmatmul.mubr.bf16.gmra.mrb[0].mxu0 %v4674
      %v4788 = vpop.f32.mrb[0].mxu0
      %v4789 = vadd.f32 0.0, %v4788
      %v4790 = vpop.f32.mrb[0].mxu0
      %v4791 = vpop.f32.mrb[0].mxu0
      %v4792 = vadd.f32 0.0, %v4791
      %v4793 = vpop.f32.mrb[0].mxu0
      %4794 = vmatprep.mubr.bf16.mxu0 0
      %4795 = vmatmul.mubr.bf16.gmra.mrb[0].mxu0 %v4677
      %v4796 = vpop.f32.mrb[0].mxu0
      %v4797 = vadd.f32 0.0, %v4796
      %v4798 = vpop.f32.mrb[0].mxu0
      %v4799 = vpop.f32.mrb[0].mxu0
      %v4800 = vadd.f32 0.0, %v4799
      %v4801 = vpop.f32.mrb[0].mxu0
      %4802 = vmatprep.mubr.bf16.mxu0 0
      %4803 = vmatmul.mubr.bf16.gmra.mrb[0].mxu0 %v4680
      %v4804 = vpop.f32.mrb[0].mxu0
      %v4805 = vadd.f32 0.0, %v4804
      %v4806 = vpop.f32.mrb[0].mxu0
      %v4807 = vpop.f32.mrb[0].mxu0
      %v4808 = vadd.f32 0.0, %v4807
      %v4809 = vpop.f32.mrb[0].mxu0
      %4810 = vmatprep.mubr.bf16.mxu0 0
      %4811 = vmatmul.mubr.bf16.gmra.mrb[0].mxu0 %v4683
      %v4812 = vpop.f32.mrb[0].mxu0
      %v4813 = vadd.f32 0.0, %v4812
      %v4814 = vpop.f32.mrb[0].mxu0
      %v4815 = vpop.f32.mrb[0].mxu0
      %v4816 = vadd.f32 0.0, %v4815
      %v4817 = vpop.f32.mrb[0].mxu0
      %4818 = vmatprep.mubr.bf16.mxu0 0
      %4819 = vmatmul.mubr.bf16.gmra.mrb[0].mxu0 %v4686
      %v4820 = vpop.f32.mrb[0].mxu0
      %v4821 = vadd.f32 0.0, %v4820
      %v4822 = vpop.f32.mrb[0].mxu0
      %v4823 = vpop.f32.mrb[0].mxu0
      %v4824 = vadd.f32 0.0, %v4823
      %v4825 = vpop.f32.mrb[0].mxu0
      %4826 = vmatprep.mubr.bf16.mxu0 0
      %4827 = vmatmul.mubr.bf16.gmra.mrb[0].mxu0 %v4689
      %v4828 = vpop.f32.mrb[0].mxu0
      %v4829 = vadd.f32 0.0, %v4828
      %v4830 = vpop.f32.mrb[0].mxu0
      %v4831 = vpop.f32.mrb[0].mxu0
      %v4832 = vadd.f32 0.0, %v4831
      %v4833 = vpop.f32.mrb[0].mxu0
      %4834 = vmatprep.mubr.bf16.mxu0 0
      %4835 = vmatmul.mubr.bf16.gmra.mrb[0].mxu0 %v4692
      %v4836 = vpop.f32.mrb[0].mxu0
      %v4837 = vadd.f32 0.0, %v4836
      %v4838 = vpop.f32.mrb[0].mxu0
      %v4839 = vpop.f32.mrb[0].mxu0
      %v4840 = vadd.f32 0.0, %v4839
      %v4841 = vpop.f32.mrb[0].mxu0
      %4842 = vmatprep.mubr.bf16.mxu0 0
      %4843 = vmatmul.mubr.bf16.gmra.mrb[0].mxu0 %v4695
      %v4844 = vpop.f32.mrb[0].mxu0
      %v4845 = vadd.f32 0.0, %v4844
      %v4846 = vpop.f32.mrb[0].mxu0
      %v4847 = vpop.f32.mrb[0].mxu0
      %v4848 = vadd.f32 0.0, %v4847
      %v4849 = vpop.f32.mrb[0].mxu0
      %4850 = vmatprep.mubr.bf16.mxu0 0
      %4851 = vmatmul.mubr.bf16.gmra.mrb[0].mxu0 %v4698
      %v4852 = vpop.f32.mrb[0].mxu0
      %v4853 = vadd.f32 0.0, %v4852
      %v4854 = vpop.f32.mrb[0].mxu0
      %v4855 = vpop.f32.mrb[0].mxu0
      %v4856 = vadd.f32 0.0, %v4855
      %v4857 = vpop.f32.mrb[0].mxu0
      %4858 = vmatprep.mubr.bf16.mxu0 0
      %4859 = vmatmul.mubr.bf16.gmra.mrb[0].mxu0 %v4701
      %v4860 = vpop.f32.mrb[0].mxu0
      %v4861 = vadd.f32 0.0, %v4860
      %v4862 = vpop.f32.mrb[0].mxu0
      %v4863 = vpop.f32.mrb[0].mxu0
      %v4864 = vadd.f32 0.0, %v4863
      %v4865 = vpop.f32.mrb[0].mxu0
      %4866 = vdwg.mxu0
      %v4867 = vadd.f32 %v4141, %v4741
      %v4868 = vadd.f32 %v4142, %v4744
      %v4869 = vadd.f32 %v4143, %v4749
      %v4870 = vadd.f32 %v4144, %v4752
      %v4871 = vadd.f32 %v4145, %v4757
      %v4872 = vadd.f32 %v4146, %v4760
      %v4873 = vadd.f32 %v4147, %v4765
      %v4874 = vadd.f32 %v4148, %v4768
      %v4875 = vadd.f32 %v4149, %v4773
      %v4876 = vadd.f32 %v4150, %v4776
      %v4877 = vadd.f32 %v4151, %v4781
      %v4878 = vadd.f32 %v4152, %v4784
      %v4879 = vadd.f32 %v4153, %v4789
      %v4880 = vadd.f32 %v4154, %v4792
      %v4881 = vadd.f32 %v4155, %v4797
      %v4882 = vadd.f32 %v4156, %v4800
      %v4883 = vadd.f32 %v4157, %v4805
      %v4884 = vadd.f32 %v4158, %v4808
      %v4885 = vadd.f32 %v4159, %v4813
      %v4886 = vadd.f32 %v4160, %v4816
      %v4887 = vadd.f32 %v4161, %v4821
      %v4888 = vadd.f32 %v4162, %v4824
      %v4889 = vadd.f32 %v4163, %v4829
      %v4890 = vadd.f32 %v4164, %v4832
      %v4891 = vadd.f32 %v4165, %v4837
      %v4892 = vadd.f32 %v4166, %v4840
      %v4893 = vadd.f32 %v4167, %v4845
      %v4894 = vadd.f32 %v4168, %v4848
      %v4895 = vadd.f32 %v4169, %v4853
      %v4896 = vadd.f32 %v4170, %v4856
      %v4897 = vadd.f32 %v4171, %v4861
      %v4898 = vadd.f32 %v4172, %v4864
      %v4899 = vld [vmem:[%s3814] sm:$0xe]
      %v4900 = vld [vmem:[%s3814 + $0xc] sm:$0xe]
      %v4901 = vld [vmem:[%s3814 + $0x18] sm:$0xe]
      %v4902 = vld [vmem:[%s3814 + $0x24] sm:$0xe]
      %v4903 = vld [vmem:[%s3814 + $0x30] sm:$0xe]
      %v4904 = vld [vmem:[%s3814 + $0x3c] sm:$0xe]
      %v4905 = vld [vmem:[%s3814 + $0x48] sm:$0xe]
      %v4906 = vld [vmem:[%s3814 + $0x54] sm:$0xe]
      %v4907 = vld [vmem:[%s3814 + $0x60] sm:$0xe]
      %v4908 = vld [vmem:[%s3814 + $0x6c] sm:$0xe]
      %v4909 = vld [vmem:[%s3814 + $0x78] sm:$0xe]
      %v4910 = vld [vmem:[%s3814 + $0x84] sm:$0xe]
      %v4911 = vld [vmem:[%s3814 + $0x90] sm:$0xe]
      %v4912 = vld [vmem:[%s3814 + $0x9c] sm:$0xe]
      %v4913 = vld [vmem:[%s3814 + $0xa8] sm:$0xe]
      %v4914 = vld [vmem:[%s3814 + $0xb4] sm:$0xe]
      %v4963 = vrot.slane %v4899, 5
      %v4964 = vrot.slane %v4963, 4
      %v4965 = vrot.slane %v4174, 5
      %v4966 = vsel %vm1853, %v4964, %v4965
      %v4967 = vrot.slane %v4965, 4
      %v4968 = vrot.slane %v4175, 5
      %v4969 = vsel %vm1853, %v4967, %v4968
      %v4970 = vrot.slane %v4900, 5
      %v4971 = vrot.slane %v4970, 4
      %v4972 = vrot.slane %v4177, 5
      %v4973 = vsel %vm1853, %v4971, %v4972
      %v4974 = vrot.slane %v4972, 4
      %v4975 = vrot.slane %v4178, 5
      %v4976 = vsel %vm1853, %v4974, %v4975
      %v4977 = vrot.slane %v4901, 5
      %v4978 = vrot.slane %v4977, 4
      %v4979 = vrot.slane %v4180, 5
      %v4980 = vsel %vm1853, %v4978, %v4979
      %v4981 = vrot.slane %v4979, 4
      %v4982 = vrot.slane %v4181, 5
      %v4983 = vsel %vm1853, %v4981, %v4982
      %v4984 = vrot.slane %v4902, 5
      %v4985 = vrot.slane %v4984, 4
      %v4986 = vrot.slane %v4183, 5
      %v4987 = vsel %vm1853, %v4985, %v4986
      %v4988 = vrot.slane %v4986, 4
      %v4989 = vrot.slane %v4184, 5
      %v4990 = vsel %vm1853, %v4988, %v4989
      %v4991 = vrot.slane %v4903, 5
      %v4992 = vrot.slane %v4991, 4
      %v4993 = vrot.slane %v4186, 5
      %v4994 = vsel %vm1853, %v4992, %v4993
      %v4995 = vrot.slane %v4993, 4
      %v4996 = vrot.slane %v4187, 5
      %v4997 = vsel %vm1853, %v4995, %v4996
      %v4998 = vrot.slane %v4904, 5
      %v4999 = vrot.slane %v4998, 4
      %v5000 = vrot.slane %v4189, 5
      %v5001 = vsel %vm1853, %v4999, %v5000
      %v5002 = vrot.slane %v5000, 4
      %v5003 = vrot.slane %v4190, 5
      %v5004 = vsel %vm1853, %v5002, %v5003
      %v5005 = vrot.slane %v4905, 5
      %v5006 = vrot.slane %v5005, 4
      %v5007 = vrot.slane %v4192, 5
      %v5008 = vsel %vm1853, %v5006, %v5007
      %v5009 = vrot.slane %v5007, 4
      %v5010 = vrot.slane %v4193, 5
      %v5011 = vsel %vm1853, %v5009, %v5010
      %v5012 = vrot.slane %v4906, 5
      %v5013 = vrot.slane %v5012, 4
      %v5014 = vrot.slane %v4195, 5
      %v5015 = vsel %vm1853, %v5013, %v5014
      %v5016 = vrot.slane %v5014, 4
      %v5017 = vrot.slane %v4196, 5
      %v5018 = vsel %vm1853, %v5016, %v5017
      %v5019 = vrot.slane %v4907, 5
      %v5020 = vrot.slane %v5019, 4
      %v5021 = vrot.slane %v4198, 5
      %v5022 = vsel %vm1853, %v5020, %v5021
      %v5023 = vrot.slane %v5021, 4
      %v5024 = vrot.slane %v4199, 5
      %v5025 = vsel %vm1853, %v5023, %v5024
      %v5026 = vrot.slane %v4908, 5
      %v5027 = vrot.slane %v5026, 4
      %v5028 = vrot.slane %v4201, 5
      %v5029 = vsel %vm1853, %v5027, %v5028
      %v5030 = vrot.slane %v5028, 4
      %v5031 = vrot.slane %v4202, 5
      %v5032 = vsel %vm1853, %v5030, %v5031
      %v5033 = vrot.slane %v4909, 5
      %v5034 = vrot.slane %v5033, 4
      %v5035 = vrot.slane %v4204, 5
      %v5036 = vsel %vm1853, %v5034, %v5035
      %v5037 = vrot.slane %v5035, 4
      %v5038 = vrot.slane %v4205, 5
      %v5039 = vsel %vm1853, %v5037, %v5038
      %v5040 = vrot.slane %v4910, 5
      %v5041 = vrot.slane %v5040, 4
      %v5042 = vrot.slane %v4207, 5
      %v5043 = vsel %vm1853, %v5041, %v5042
      %v5044 = vrot.slane %v5042, 4
      %v5045 = vrot.slane %v4208, 5
      %v5046 = vsel %vm1853, %v5044, %v5045
      %v5047 = vrot.slane %v4911, 5
      %v5048 = vrot.slane %v5047, 4
      %v5049 = vrot.slane %v4210, 5
      %v5050 = vsel %vm1853, %v5048, %v5049
      %v5051 = vrot.slane %v5049, 4
      %v5052 = vrot.slane %v4211, 5
      %v5053 = vsel %vm1853, %v5051, %v5052
      %v5054 = vrot.slane %v4912, 5
      %v5055 = vrot.slane %v5054, 4
      %v5056 = vrot.slane %v4213, 5
      %v5057 = vsel %vm1853, %v5055, %v5056
      %v5058 = vrot.slane %v5056, 4
      %v5059 = vrot.slane %v4214, 5
      %v5060 = vsel %vm1853, %v5058, %v5059
      %v5061 = vrot.slane %v4913, 5
      %v5062 = vrot.slane %v5061, 4
      %v5063 = vrot.slane %v4216, 5
      %v5064 = vsel %vm1853, %v5062, %v5063
      %v5065 = vrot.slane %v5063, 4
      %v5066 = vrot.slane %v4217, 5
      %v5067 = vsel %vm1853, %v5065, %v5066
      %v5068 = vrot.slane %v4914, 5
      %v5069 = vrot.slane %v5068, 4
      %v5070 = vrot.slane %v4219, 5
      %v5071 = vsel %vm1853, %v5069, %v5070
      %v5072 = vrot.slane %v5070, 4
      %v5073 = vrot.slane %v4220, 5
      %v5074 = vsel %vm1853, %v5072, %v5073
      %s5075 = scalar_lea.vmem %s1, 16
      %v5076 = vld [vmem:[%s5075] sm:$0x3]
      %v5077 = vunpack.c.l.b16 %v4966
      %v5078 = vunpack.c.l.b16 %v4969
      %v5079 = vunpack.c.l.b16 %v4973
      %v5080 = vunpack.c.l.b16 %v4976
      %v5081 = vunpack.c.l.b16 %v4980
      %v5082 = vunpack.c.l.b16 %v4983
      %v5083 = vunpack.c.l.b16 %v4987
      %v5084 = vunpack.c.l.b16 %v4990
      %v5085 = vunpack.c.l.b16 %v4994
      %v5086 = vunpack.c.l.b16 %v4997
      %v5087 = vunpack.c.l.b16 %v5001
      %v5088 = vunpack.c.l.b16 %v5004
      %v5089 = vunpack.c.l.b16 %v5008
      %v5090 = vunpack.c.l.b16 %v5011
      %v5091 = vunpack.c.l.b16 %v5015
      %v5092 = vunpack.c.l.b16 %v5018
      %v5093 = vunpack.c.l.b16 %v5022
      %v5094 = vunpack.c.l.b16 %v5025
      %v5095 = vunpack.c.l.b16 %v5029
      %v5096 = vunpack.c.l.b16 %v5032
      %v5097 = vunpack.c.l.b16 %v5036
      %v5098 = vunpack.c.l.b16 %v5039
      %v5099 = vunpack.c.l.b16 %v5043
      %v5100 = vunpack.c.l.b16 %v5046
      %v5101 = vunpack.c.l.b16 %v5050
      %v5102 = vunpack.c.l.b16 %v5053
      %v5103 = vunpack.c.l.b16 %v5057
      %v5104 = vunpack.c.l.b16 %v5060
      %v5105 = vunpack.c.l.b16 %v5064
      %v5106 = vunpack.c.l.b16 %v5067
      %v5107 = vunpack.c.l.b16 %v5071
      %v5108 = vunpack.c.l.b16 %v5074
      %v5109 = vpack.c.b16 %v5078, %v5077
      %v5110 = vpack.c.b16 %v5080, %v5079
      %v5111 = vpack.c.b16 %v5082, %v5081
      %v5112 = vpack.c.b16 %v5084, %v5083
      %v5113 = vpack.c.b16 %v5086, %v5085
      %v5114 = vpack.c.b16 %v5088, %v5087
      %v5115 = vpack.c.b16 %v5090, %v5089
      %v5116 = vpack.c.b16 %v5092, %v5091
      %v5117 = vpack.c.b16 %v5094, %v5093
      %v5118 = vpack.c.b16 %v5096, %v5095
      %v5119 = vpack.c.b16 %v5098, %v5097
      %v5120 = vpack.c.b16 %v5100, %v5099
      %v5121 = vpack.c.b16 %v5102, %v5101
      %v5122 = vpack.c.b16 %v5104, %v5103
      %v5123 = vpack.c.b16 %v5106, %v5105
      %v5124 = vpack.c.b16 %v5108, %v5107
      %v5126 = vsel %vm1297, %v5109, 0
      %v5129 = vsel %vm1297, %v5110, 0
      %v5132 = vsel %vm1297, %v5111, 0
      %v5135 = vsel %vm1297, %v5112, 0
      %v5138 = vsel %vm1297, %v5113, 0
      %v5141 = vsel %vm1297, %v5114, 0
      %v5144 = vsel %vm1297, %v5115, 0
      %v5147 = vsel %vm1297, %v5116, 0
      %v5150 = vsel %vm1297, %v5117, 0
      %v5153 = vsel %vm1297, %v5118, 0
      %v5156 = vsel %vm1297, %v5119, 0
      %v5159 = vsel %vm1297, %v5120, 0
      %v5162 = vsel %vm1297, %v5121, 0
      %v5165 = vsel %vm1297, %v5122, 0
      %v5168 = vsel %vm1297, %v5123, 0
      %v5171 = vsel %vm1297, %v5124, 0
      %v5174 = vsel %vm1346, %v5076, 0
      %5176 = vmatprep.subr.bf16.mxu0 0
      %5177 = vmatpush1.bf16.msra.mxu0 %v5174
      %5178 = vmatprep.subr.bf16.mxu0 0
      %5179 = vmatpush1.bf16.msra.mxu0 0
      %5180 = vmatprep.subr.bf16.mxu0 0
      %5181 = vmatpush1.bf16.msra.mxu0 0
      %5182 = vmatprep.subr.bf16.mxu0 0
      %5183 = vmatpush1.bf16.msra.mxu0 0
      %5184 = vmatprep.subr.bf16.mxu0 0
      %5185 = vmatpush1.bf16.msra.mxu0 0
      %5186 = vmatprep.subr.bf16.mxu0 0
      %5187 = vmatpush1.bf16.msra.mxu0 0
      %5188 = vmatprep.subr.bf16.mxu0 0
      %5189 = vmatpush1.bf16.msra.mxu0 0
      %5190 = vmatprep.subr.bf16.mxu0 0
      %5191 = vmatpush1.bf16.msra.mxu0 0
      %5192 = vmatprep.subr.bf16.mxu0 0
      %5193 = vmatpush1.bf16.msra.mxu0 0
      %5194 = vmatprep.subr.bf16.mxu0 0
      %5195 = vmatpush1.bf16.msra.mxu0 0
      %5196 = vmatprep.subr.bf16.mxu0 0
      %5197 = vmatpush1.bf16.msra.mxu0 0
      %5198 = vmatprep.subr.bf16.mxu0 0
      %5199 = vmatpush1.bf16.msra.mxu0 0
      %5200 = vmatprep.subr.bf16.mxu0 0
      %5201 = vmatpush1.bf16.msra.mxu0 0
      %5202 = vmatprep.subr.bf16.mxu0 0
      %5203 = vmatpush1.bf16.msra.mxu0 0
      %5204 = vmatprep.subr.bf16.mxu0 0
      %5205 = vmatpush1.bf16.msra.mxu0 0
      %5206 = vmatprep.subr.bf16.mxu0 0
      %5207 = vmatpush1.bf16.msra.mxu0 0
      %5208 = vmatprep.mubr.bf16.mxu0 0
      %5209 = vmatmul.mubr.bf16.gmra.mrb[0].mxu0 %v5126
      %v5210 = vpop.f32.mrb[0].mxu0
      %v5211 = vadd.f32 0.0, %v5210
      %v5212 = vpop.f32.mrb[0].mxu0
      %v5213 = vpop.f32.mrb[0].mxu0
      %v5214 = vadd.f32 0.0, %v5213
      %v5215 = vpop.f32.mrb[0].mxu0
      %5216 = vmatprep.mubr.bf16.mxu0 0
      %5217 = vmatmul.mubr.bf16.gmra.mrb[0].mxu0 %v5129
      %v5218 = vpop.f32.mrb[0].mxu0
      %v5219 = vadd.f32 0.0, %v5218
      %v5220 = vpop.f32.mrb[0].mxu0
      %v5221 = vpop.f32.mrb[0].mxu0
      %v5222 = vadd.f32 0.0, %v5221
      %v5223 = vpop.f32.mrb[0].mxu0
      %5224 = vmatprep.mubr.bf16.mxu0 0
      %5225 = vmatmul.mubr.bf16.gmra.mrb[0].mxu0 %v5132
      %v5226 = vpop.f32.mrb[0].mxu0
      %v5227 = vadd.f32 0.0, %v5226
      %v5228 = vpop.f32.mrb[0].mxu0
      %v5229 = vpop.f32.mrb[0].mxu0
      %v5230 = vadd.f32 0.0, %v5229
      %v5231 = vpop.f32.mrb[0].mxu0
      %5232 = vmatprep.mubr.bf16.mxu0 0
      %5233 = vmatmul.mubr.bf16.gmra.mrb[0].mxu0 %v5135
      %v5234 = vpop.f32.mrb[0].mxu0
      %v5235 = vadd.f32 0.0, %v5234
      %v5236 = vpop.f32.mrb[0].mxu0
      %v5237 = vpop.f32.mrb[0].mxu0
      %v5238 = vadd.f32 0.0, %v5237
      %v5239 = vpop.f32.mrb[0].mxu0
      %5240 = vmatprep.mubr.bf16.mxu0 0
      %5241 = vmatmul.mubr.bf16.gmra.mrb[0].mxu0 %v5138
      %v5242 = vpop.f32.mrb[0].mxu0
      %v5243 = vadd.f32 0.0, %v5242
      %v5244 = vpop.f32.mrb[0].mxu0
      %v5245 = vpop.f32.mrb[0].mxu0
      %v5246 = vadd.f32 0.0, %v5245
      %v5247 = vpop.f32.mrb[0].mxu0
      %5248 = vmatprep.mubr.bf16.mxu0 0
      %5249 = vmatmul.mubr.bf16.gmra.mrb[0].mxu0 %v5141
      %v5250 = vpop.f32.mrb[0].mxu0
      %v5251 = vadd.f32 0.0, %v5250
      %v5252 = vpop.f32.mrb[0].mxu0
      %v5253 = vpop.f32.mrb[0].mxu0
      %v5254 = vadd.f32 0.0, %v5253
      %v5255 = vpop.f32.mrb[0].mxu0
      %5256 = vmatprep.mubr.bf16.mxu0 0
      %5257 = vmatmul.mubr.bf16.gmra.mrb[0].mxu0 %v5144
      %v5258 = vpop.f32.mrb[0].mxu0
      %v5259 = vadd.f32 0.0, %v5258
      %v5260 = vpop.f32.mrb[0].mxu0
      %v5261 = vpop.f32.mrb[0].mxu0
      %v5262 = vadd.f32 0.0, %v5261
      %v5263 = vpop.f32.mrb[0].mxu0
      %5264 = vmatprep.mubr.bf16.mxu0 0
      %5265 = vmatmul.mubr.bf16.gmra.mrb[0].mxu0 %v5147
      %v5266 = vpop.f32.mrb[0].mxu0
      %v5267 = vadd.f32 0.0, %v5266
      %v5268 = vpop.f32.mrb[0].mxu0
      %v5269 = vpop.f32.mrb[0].mxu0
      %v5270 = vadd.f32 0.0, %v5269
      %v5271 = vpop.f32.mrb[0].mxu0
      %5272 = vmatprep.mubr.bf16.mxu0 0
      %5273 = vmatmul.mubr.bf16.gmra.mrb[0].mxu0 %v5150
      %v5274 = vpop.f32.mrb[0].mxu0
      %v5275 = vadd.f32 0.0, %v5274
      %v5276 = vpop.f32.mrb[0].mxu0
      %v5277 = vpop.f32.mrb[0].mxu0
      %v5278 = vadd.f32 0.0, %v5277
      %v5279 = vpop.f32.mrb[0].mxu0
      %5280 = vmatprep.mubr.bf16.mxu0 0
      %5281 = vmatmul.mubr.bf16.gmra.mrb[0].mxu0 %v5153
      %v5282 = vpop.f32.mrb[0].mxu0
      %v5283 = vadd.f32 0.0, %v5282
      %v5284 = vpop.f32.mrb[0].mxu0
      %v5285 = vpop.f32.mrb[0].mxu0
      %v5286 = vadd.f32 0.0, %v5285
      %v5287 = vpop.f32.mrb[0].mxu0
      %5288 = vmatprep.mubr.bf16.mxu0 0
      %5289 = vmatmul.mubr.bf16.gmra.mrb[0].mxu0 %v5156
      %v5290 = vpop.f32.mrb[0].mxu0
      %v5291 = vadd.f32 0.0, %v5290
      %v5292 = vpop.f32.mrb[0].mxu0
      %v5293 = vpop.f32.mrb[0].mxu0
      %v5294 = vadd.f32 0.0, %v5293
      %v5295 = vpop.f32.mrb[0].mxu0
      %5296 = vmatprep.mubr.bf16.mxu0 0
      %5297 = vmatmul.mubr.bf16.gmra.mrb[0].mxu0 %v5159
      %v5298 = vpop.f32.mrb[0].mxu0
      %v5299 = vadd.f32 0.0, %v5298
      %v5300 = vpop.f32.mrb[0].mxu0
      %v5301 = vpop.f32.mrb[0].mxu0
      %v5302 = vadd.f32 0.0, %v5301
      %v5303 = vpop.f32.mrb[0].mxu0
      %5304 = vmatprep.mubr.bf16.mxu0 0
      %5305 = vmatmul.mubr.bf16.gmra.mrb[0].mxu0 %v5162
      %v5306 = vpop.f32.mrb[0].mxu0
      %v5307 = vadd.f32 0.0, %v5306
      %v5308 = vpop.f32.mrb[0].mxu0
      %v5309 = vpop.f32.mrb[0].mxu0
      %v5310 = vadd.f32 0.0, %v5309
      %v5311 = vpop.f32.mrb[0].mxu0
      %5312 = vmatprep.mubr.bf16.mxu0 0
      %5313 = vmatmul.mubr.bf16.gmra.mrb[0].mxu0 %v5165
      %v5314 = vpop.f32.mrb[0].mxu0
      %v5315 = vadd.f32 0.0, %v5314
      %v5316 = vpop.f32.mrb[0].mxu0
      %v5317 = vpop.f32.mrb[0].mxu0
      %v5318 = vadd.f32 0.0, %v5317
      %v5319 = vpop.f32.mrb[0].mxu0
      %5320 = vmatprep.mubr.bf16.mxu0 0
      %5321 = vmatmul.mubr.bf16.gmra.mrb[0].mxu0 %v5168
      %v5322 = vpop.f32.mrb[0].mxu0
      %v5323 = vadd.f32 0.0, %v5322
      %v5324 = vpop.f32.mrb[0].mxu0
      %v5325 = vpop.f32.mrb[0].mxu0
      %v5326 = vadd.f32 0.0, %v5325
      %v5327 = vpop.f32.mrb[0].mxu0
      %5328 = vmatprep.mubr.bf16.mxu0 0
      %5329 = vmatmul.mubr.bf16.gmra.mrb[0].mxu0 %v5171
      %v5330 = vpop.f32.mrb[0].mxu0
      %v5331 = vadd.f32 0.0, %v5330
      %v5332 = vpop.f32.mrb[0].mxu0
      %v5333 = vpop.f32.mrb[0].mxu0
      %v5334 = vadd.f32 0.0, %v5333
      %v5335 = vpop.f32.mrb[0].mxu0
      %5336 = vdwg.mxu0
      %v5337 = vadd.f32 %v4867, %v5211
      %v5338 = vadd.f32 %v4868, %v5214
      %v5339 = vadd.f32 %v4869, %v5219
      %v5340 = vadd.f32 %v4870, %v5222
      %v5341 = vadd.f32 %v4871, %v5227
      %v5342 = vadd.f32 %v4872, %v5230
      %v5343 = vadd.f32 %v4873, %v5235
      %v5344 = vadd.f32 %v4874, %v5238
      %v5345 = vadd.f32 %v4875, %v5243
      %v5346 = vadd.f32 %v4876, %v5246
      %v5347 = vadd.f32 %v4877, %v5251
      %v5348 = vadd.f32 %v4878, %v5254
      %v5349 = vadd.f32 %v4879, %v5259
      %v5350 = vadd.f32 %v4880, %v5262
      %v5351 = vadd.f32 %v4881, %v5267
      %v5352 = vadd.f32 %v4882, %v5270
      %v5353 = vadd.f32 %v4883, %v5275
      %v5354 = vadd.f32 %v4884, %v5278
      %v5355 = vadd.f32 %v4885, %v5283
      %v5356 = vadd.f32 %v4886, %v5286
      %v5357 = vadd.f32 %v4887, %v5291
      %v5358 = vadd.f32 %v4888, %v5294
      %v5359 = vadd.f32 %v4889, %v5299
      %v5360 = vadd.f32 %v4890, %v5302
      %v5361 = vadd.f32 %v4891, %v5307
      %v5362 = vadd.f32 %v4892, %v5310
      %v5363 = vadd.f32 %v4893, %v5315
      %v5364 = vadd.f32 %v4894, %v5318
      %v5365 = vadd.f32 %v4895, %v5323
      %v5366 = vadd.f32 %v4896, %v5326
      %v5367 = vadd.f32 %v4897, %v5331
      %v5368 = vadd.f32 %v4898, %v5334
      %v5369 = vld [vmem:[%s2] sm:$0x1]
      %v5371 = vlaneseq
      %v5372 = vshrl.u32 %v5371, 7
      %v5373 = vsub.s32 0, %v5372
      %v5374 = vrot.slane %v5369, %v5373
      %v5376 = vadd.f32 %v5337, %v5374
      %v5377 = vadd.f32 %v5338, %v5374
      %v5378 = vadd.f32 %v5339, %v5374
      %v5379 = vadd.f32 %v5340, %v5374
      %v5380 = vadd.f32 %v5341, %v5374
      %v5381 = vadd.f32 %v5342, %v5374
      %v5382 = vadd.f32 %v5343, %v5374
      %v5383 = vadd.f32 %v5344, %v5374
      %v5384 = vadd.f32 %v5345, %v5374
      %v5385 = vadd.f32 %v5346, %v5374
      %v5386 = vadd.f32 %v5347, %v5374
      %v5387 = vadd.f32 %v5348, %v5374
      %v5388 = vadd.f32 %v5349, %v5374
      %v5389 = vadd.f32 %v5350, %v5374
      %v5390 = vadd.f32 %v5351, %v5374
      %v5391 = vadd.f32 %v5352, %v5374
      %v5392 = vadd.f32 %v5353, %v5374
      %v5393 = vadd.f32 %v5354, %v5374
      %v5394 = vadd.f32 %v5355, %v5374
      %v5395 = vadd.f32 %v5356, %v5374
      %v5396 = vadd.f32 %v5357, %v5374
      %v5397 = vadd.f32 %v5358, %v5374
      %v5398 = vadd.f32 %v5359, %v5374
      %v5399 = vadd.f32 %v5360, %v5374
      %v5400 = vadd.f32 %v5361, %v5374
      %v5401 = vadd.f32 %v5362, %v5374
      %v5402 = vadd.f32 %v5363, %v5374
      %v5403 = vadd.f32 %v5364, %v5374
      %v5404 = vadd.f32 %v5365, %v5374
      %v5405 = vadd.f32 %v5366, %v5374
      %v5406 = vadd.f32 %v5367, %v5374
      %v5407 = vadd.f32 %v5368, %v5374
      %v5408 = vmax.f32 %v5376, 0.0
      %v5409 = vmax.f32 %v5377, 0.0
      %v5410 = vmax.f32 %v5378, 0.0
      %v5411 = vmax.f32 %v5379, 0.0
      %v5412 = vmax.f32 %v5380, 0.0
      %v5413 = vmax.f32 %v5381, 0.0
      %v5414 = vmax.f32 %v5382, 0.0
      %v5415 = vmax.f32 %v5383, 0.0
      %v5416 = vmax.f32 %v5384, 0.0
      %v5417 = vmax.f32 %v5385, 0.0
      %v5418 = vmax.f32 %v5386, 0.0
      %v5419 = vmax.f32 %v5387, 0.0
      %v5420 = vmax.f32 %v5388, 0.0
      %v5421 = vmax.f32 %v5389, 0.0
      %v5422 = vmax.f32 %v5390, 0.0
      %v5423 = vmax.f32 %v5391, 0.0
      %v5424 = vmax.f32 %v5392, 0.0
      %v5425 = vmax.f32 %v5393, 0.0
      %v5426 = vmax.f32 %v5394, 0.0
      %v5427 = vmax.f32 %v5395, 0.0
      %v5428 = vmax.f32 %v5396, 0.0
      %v5429 = vmax.f32 %v5397, 0.0
      %v5430 = vmax.f32 %v5398, 0.0
      %v5431 = vmax.f32 %v5399, 0.0
      %v5432 = vmax.f32 %v5400, 0.0
      %v5433 = vmax.f32 %v5401, 0.0
      %v5434 = vmax.f32 %v5402, 0.0
      %v5435 = vmax.f32 %v5403, 0.0
      %v5436 = vmax.f32 %v5404, 0.0
      %v5437 = vmax.f32 %v5405, 0.0
      %v5438 = vmax.f32 %v5406, 0.0
      %v5439 = vmax.f32 %v5407, 0.0
      %v5440 = vpack.c.bf16 %v5409, %v5408
      %v5441 = vpack.c.bf16 %v5411, %v5410
      %v5442 = vpack.c.bf16 %v5413, %v5412
      %v5443 = vpack.c.bf16 %v5415, %v5414
      %v5444 = vpack.c.bf16 %v5417, %v5416
      %v5445 = vpack.c.bf16 %v5419, %v5418
      %v5446 = vpack.c.bf16 %v5421, %v5420
      %v5447 = vpack.c.bf16 %v5423, %v5422
      %v5448 = vpack.c.bf16 %v5425, %v5424
      %v5449 = vpack.c.bf16 %v5427, %v5426
      %v5450 = vpack.c.bf16 %v5429, %v5428
      %v5451 = vpack.c.bf16 %v5431, %v5430
      %v5452 = vpack.c.bf16 %v5433, %v5432
      %v5453 = vpack.c.bf16 %v5435, %v5434
      %v5454 = vpack.c.bf16 %v5437, %v5436
      %v5455 = vpack.c.bf16 %v5439, %v5438
      %v5472 = vunpack.c.l.b16 %v5440
      %v5473 = vunpack.c.h.b16 %v5440
      %v5474 = vunpack.c.l.b16 %v5441
      %v5475 = vunpack.c.h.b16 %v5441
      %v5476 = vunpack.c.l.b16 %v5442
      %v5477 = vunpack.c.h.b16 %v5442
      %v5478 = vunpack.c.l.b16 %v5443
      %v5479 = vunpack.c.h.b16 %v5443
      %v5480 = vunpack.c.l.b16 %v5444
      %v5481 = vunpack.c.h.b16 %v5444
      %v5482 = vunpack.c.l.b16 %v5445
      %v5483 = vunpack.c.h.b16 %v5445
      %v5484 = vunpack.c.l.b16 %v5446
      %v5485 = vunpack.c.h.b16 %v5446
      %v5486 = vunpack.c.l.b16 %v5447
      %v5487 = vunpack.c.h.b16 %v5447
      %v5488 = vunpack.c.l.b16 %v5448
      %v5489 = vunpack.c.h.b16 %v5448
      %v5490 = vunpack.c.l.b16 %v5449
      %v5491 = vunpack.c.h.b16 %v5449
      %v5492 = vunpack.c.l.b16 %v5450
      %v5493 = vunpack.c.h.b16 %v5450
      %v5494 = vunpack.c.l.b16 %v5451
      %v5495 = vunpack.c.h.b16 %v5451
      %v5496 = vunpack.c.l.b16 %v5452
      %v5497 = vunpack.c.h.b16 %v5452
      %v5498 = vunpack.c.l.b16 %v5453
      %v5499 = vunpack.c.h.b16 %v5453
      %v5500 = vunpack.c.l.b16 %v5454
      %v5501 = vunpack.c.h.b16 %v5454
      %v5502 = vunpack.c.l.b16 %v5455
      %v5503 = vunpack.c.h.b16 %v5455
      %v5504 = vpack.c.b16 %v5472, %v5472
      %v5505 = vpack.c.b16 %v5473, %v5473
      %v5506 = vpack.c.b16 %v5474, %v5474
      %v5507 = vpack.c.b16 %v5475, %v5475
      %v5508 = vpack.c.b16 %v5476, %v5476
      %v5509 = vpack.c.b16 %v5477, %v5477
      %v5510 = vpack.c.b16 %v5478, %v5478
      %v5511 = vpack.c.b16 %v5479, %v5479
      %v5512 = vpack.c.b16 %v5480, %v5480
      %v5513 = vpack.c.b16 %v5481, %v5481
      %v5514 = vpack.c.b16 %v5482, %v5482
      %v5515 = vpack.c.b16 %v5483, %v5483
      %v5516 = vpack.c.b16 %v5484, %v5484
      %v5517 = vpack.c.b16 %v5485, %v5485
      %v5518 = vpack.c.b16 %v5486, %v5486
      %v5519 = vpack.c.b16 %v5487, %v5487
      %v5520 = vpack.c.b16 %v5488, %v5488
      %v5521 = vpack.c.b16 %v5489, %v5489
      %v5522 = vpack.c.b16 %v5490, %v5490
      %v5523 = vpack.c.b16 %v5491, %v5491
      %v5524 = vpack.c.b16 %v5492, %v5492
      %v5525 = vpack.c.b16 %v5493, %v5493
      %v5526 = vpack.c.b16 %v5494, %v5494
      %v5527 = vpack.c.b16 %v5495, %v5495
      %v5528 = vpack.c.b16 %v5496, %v5496
      %v5529 = vpack.c.b16 %v5497, %v5497
      %v5530 = vpack.c.b16 %v5498, %v5498
      %v5531 = vpack.c.b16 %v5499, %v5499
      %v5532 = vpack.c.b16 %v5500, %v5500
      %v5533 = vpack.c.b16 %v5501, %v5501
      %v5534 = vpack.c.b16 %v5502, %v5502
      %v5535 = vpack.c.b16 %v5503, %v5503
      %v5537 = vshrl.u32 %v5504, 16
      %v5539 = vrot.slane %v5537, 7
      %v5540 = vshll.u32 %v5504, 16
      %v5542 = vor.u32 %v5539, %v5540
      %v5543 = vrot.slane %v5539, 4
      %v5545 = vshrl.u32 %v5505, 16
      %v5547 = vrot.slane %v5545, 7
      %v5548 = vshll.u32 %v5505, 16
      %v5550 = vor.u32 %v5547, %v5548
      %v5551 = vsel %vm372, %v5543, %v5550
      %v5552 = vrot.slane %v5547, 4
      %v5554 = vshrl.u32 %v5506, 16
      %v5556 = vrot.slane %v5554, 7
      %v5557 = vshll.u32 %v5506, 16
      %v5559 = vor.u32 %v5556, %v5557
      %v5560 = vrot.slane %v5556, 4
      %v5562 = vshrl.u32 %v5507, 16
      %v5564 = vrot.slane %v5562, 7
      %v5565 = vshll.u32 %v5507, 16
      %v5567 = vor.u32 %v5564, %v5565
      %v5568 = vsel %vm372, %v5560, %v5567
      %v5569 = vrot.slane %v5564, 4
      %v5571 = vshrl.u32 %v5508, 16
      %v5573 = vrot.slane %v5571, 7
      %v5574 = vshll.u32 %v5508, 16
      %v5576 = vor.u32 %v5573, %v5574
      %v5577 = vrot.slane %v5573, 4
      %v5579 = vshrl.u32 %v5509, 16
      %v5581 = vrot.slane %v5579, 7
      %v5582 = vshll.u32 %v5509, 16
      %v5584 = vor.u32 %v5581, %v5582
      %v5585 = vsel %vm372, %v5577, %v5584
      %v5586 = vrot.slane %v5581, 4
      %v5588 = vshrl.u32 %v5510, 16
      %v5590 = vrot.slane %v5588, 7
      %v5591 = vshll.u32 %v5510, 16
      %v5593 = vor.u32 %v5590, %v5591
      %v5594 = vrot.slane %v5590, 4
      %v5596 = vshrl.u32 %v5511, 16
      %v5598 = vrot.slane %v5596, 7
      %v5599 = vshll.u32 %v5511, 16
      %v5601 = vor.u32 %v5598, %v5599
      %v5602 = vsel %vm372, %v5594, %v5601
      %v5603 = vrot.slane %v5598, 4
      %v5605 = vshrl.u32 %v5512, 16
      %v5607 = vrot.slane %v5605, 7
      %v5608 = vshll.u32 %v5512, 16
      %v5610 = vor.u32 %v5607, %v5608
      %v5611 = vrot.slane %v5607, 4
      %v5613 = vshrl.u32 %v5513, 16
      %v5615 = vrot.slane %v5613, 7
      %v5616 = vshll.u32 %v5513, 16
      %v5618 = vor.u32 %v5615, %v5616
      %v5619 = vsel %vm372, %v5611, %v5618
      %v5620 = vrot.slane %v5615, 4
      %v5622 = vshrl.u32 %v5514, 16
      %v5624 = vrot.slane %v5622, 7
      %v5625 = vshll.u32 %v5514, 16
      %v5627 = vor.u32 %v5624, %v5625
      %v5628 = vrot.slane %v5624, 4
      %v5630 = vshrl.u32 %v5515, 16
      %v5632 = vrot.slane %v5630, 7
      %v5633 = vshll.u32 %v5515, 16
      %v5635 = vor.u32 %v5632, %v5633
      %v5636 = vsel %vm372, %v5628, %v5635
      %v5637 = vrot.slane %v5632, 4
      %v5639 = vshrl.u32 %v5516, 16
      %v5641 = vrot.slane %v5639, 7
      %v5642 = vshll.u32 %v5516, 16
      %v5644 = vor.u32 %v5641, %v5642
      %v5645 = vrot.slane %v5641, 4
      %v5647 = vshrl.u32 %v5517, 16
      %v5649 = vrot.slane %v5647, 7
      %v5650 = vshll.u32 %v5517, 16
      %v5652 = vor.u32 %v5649, %v5650
      %v5653 = vsel %vm372, %v5645, %v5652
      %v5654 = vrot.slane %v5649, 4
      %v5656 = vshrl.u32 %v5518, 16
      %v5658 = vrot.slane %v5656, 7
      %v5659 = vshll.u32 %v5518, 16
      %v5661 = vor.u32 %v5658, %v5659
      %v5662 = vrot.slane %v5658, 4
      %v5664 = vshrl.u32 %v5519, 16
      %v5666 = vrot.slane %v5664, 7
      %v5667 = vshll.u32 %v5519, 16
      %v5669 = vor.u32 %v5666, %v5667
      %v5670 = vsel %vm372, %v5662, %v5669
      %v5671 = vrot.slane %v5666, 4
      %v5673 = vshrl.u32 %v5520, 16
      %v5675 = vrot.slane %v5673, 7
      %v5676 = vshll.u32 %v5520, 16
      %v5678 = vor.u32 %v5675, %v5676
      %v5679 = vrot.slane %v5675, 4
      %v5681 = vshrl.u32 %v5521, 16
      %v5683 = vrot.slane %v5681, 7
      %v5684 = vshll.u32 %v5521, 16
      %v5686 = vor.u32 %v5683, %v5684
      %v5687 = vsel %vm372, %v5679, %v5686
      %v5688 = vrot.slane %v5683, 4
      %v5690 = vshrl.u32 %v5522, 16
      %v5692 = vrot.slane %v5690, 7
      %v5693 = vshll.u32 %v5522, 16
      %v5695 = vor.u32 %v5692, %v5693
      %v5696 = vrot.slane %v5692, 4
      %v5698 = vshrl.u32 %v5523, 16
      %v5700 = vrot.slane %v5698, 7
      %v5701 = vshll.u32 %v5523, 16
      %v5703 = vor.u32 %v5700, %v5701
      %v5704 = vsel %vm372, %v5696, %v5703
      %v5705 = vrot.slane %v5700, 4
      %v5707 = vshrl.u32 %v5524, 16
      %v5709 = vrot.slane %v5707, 7
      %v5710 = vshll.u32 %v5524, 16
      %v5712 = vor.u32 %v5709, %v5710
      %v5713 = vrot.slane %v5709, 4
      %v5715 = vshrl.u32 %v5525, 16
      %v5717 = vrot.slane %v5715, 7
      %v5718 = vshll.u32 %v5525, 16
      %v5720 = vor.u32 %v5717, %v5718
      %v5721 = vsel %vm372, %v5713, %v5720
      %v5722 = vrot.slane %v5717, 4
      %v5724 = vshrl.u32 %v5526, 16
      %v5726 = vrot.slane %v5724, 7
      %v5727 = vshll.u32 %v5526, 16
      %v5729 = vor.u32 %v5726, %v5727
      %v5730 = vrot.slane %v5726, 4
      %v5732 = vshrl.u32 %v5527, 16
      %v5734 = vrot.slane %v5732, 7
      %v5735 = vshll.u32 %v5527, 16
      %v5737 = vor.u32 %v5734, %v5735
      %v5738 = vsel %vm372, %v5730, %v5737
      %v5739 = vrot.slane %v5734, 4
      %v5741 = vshrl.u32 %v5528, 16
      %v5743 = vrot.slane %v5741, 7
      %v5744 = vshll.u32 %v5528, 16
      %v5746 = vor.u32 %v5743, %v5744
      %v5747 = vrot.slane %v5743, 4
      %v5749 = vshrl.u32 %v5529, 16
      %v5751 = vrot.slane %v5749, 7
      %v5752 = vshll.u32 %v5529, 16
      %v5754 = vor.u32 %v5751, %v5752
      %v5755 = vsel %vm372, %v5747, %v5754
      %v5756 = vrot.slane %v5751, 4
      %v5758 = vshrl.u32 %v5530, 16
      %v5760 = vrot.slane %v5758, 7
      %v5761 = vshll.u32 %v5530, 16
      %v5763 = vor.u32 %v5760, %v5761
      %v5764 = vrot.slane %v5760, 4
      %v5766 = vshrl.u32 %v5531, 16
      %v5768 = vrot.slane %v5766, 7
      %v5769 = vshll.u32 %v5531, 16
      %v5771 = vor.u32 %v5768, %v5769
      %v5772 = vsel %vm372, %v5764, %v5771
      %v5773 = vrot.slane %v5768, 4
      %v5775 = vshrl.u32 %v5532, 16
      %v5777 = vrot.slane %v5775, 7
      %v5778 = vshll.u32 %v5532, 16
      %v5780 = vor.u32 %v5777, %v5778
      %v5781 = vrot.slane %v5777, 4
      %v5783 = vshrl.u32 %v5533, 16
      %v5785 = vrot.slane %v5783, 7
      %v5786 = vshll.u32 %v5533, 16
      %v5788 = vor.u32 %v5785, %v5786
      %v5789 = vsel %vm372, %v5781, %v5788
      %v5790 = vrot.slane %v5785, 4
      %v5792 = vshrl.u32 %v5534, 16
      %v5794 = vrot.slane %v5792, 7
      %v5795 = vshll.u32 %v5534, 16
      %v5797 = vor.u32 %v5794, %v5795
      %v5798 = vrot.slane %v5794, 4
      %v5800 = vshrl.u32 %v5535, 16
      %v5802 = vrot.slane %v5800, 7
      %v5803 = vshll.u32 %v5535, 16
      %v5805 = vor.u32 %v5802, %v5803
      %v5806 = vsel %vm372, %v5798, %v5805
      %v5807 = vrot.slane %v5802, 4
      %s5856 = scalar_lea.vmem [#allocation3], 12
      %vm5857 = vcmask 60416
      %vm5858 = vmand %vm5857, %vm695
      %v5859 = vld [vmem:[%s5856] sm:$0xf]
      %v5860 = vsel %vm5858, %v5542, %v5859
      %5861 = vst [vmem:[%s5856] sm:$0xf] %v5860
      %5862 = vst.msk [vmem:[%s5856 + $0x4] sm:$0xf] %vm282, %v5551
      %vm5863 = vcmask 57344
      %vm5864 = vmand %vm5863, %vm370
      %v5865 = vld [vmem:[%s5856 + $0x8] sm:$0x1]
      %v5866 = vsel %vm5864, %v5552, %v5865
      %5867 = vst [vmem:[%s5856 + $0x8] sm:$0x1] %v5866
      %v5868 = vld [vmem:[%s5856 + $0xc] sm:$0xf]
      %v5869 = vsel %vm5858, %v5559, %v5868
      %5870 = vst [vmem:[%s5856 + $0xc] sm:$0xf] %v5869
      %5871 = vst.msk [vmem:[%s5856 + $0x10] sm:$0xf] %vm282, %v5568
      %v5872 = vld [vmem:[%s5856 + $0x14] sm:$0x1]
      %v5873 = vsel %vm5864, %v5569, %v5872
      %5874 = vst [vmem:[%s5856 + $0x14] sm:$0x1] %v5873
      %v5875 = vld [vmem:[%s5856 + $0x18] sm:$0xf]
      %v5876 = vsel %vm5858, %v5576, %v5875
      %5877 = vst [vmem:[%s5856 + $0x18] sm:$0xf] %v5876
      %5878 = vst.msk [vmem:[%s5856 + $0x1c] sm:$0xf] %vm282, %v5585
      %v5879 = vld [vmem:[%s5856 + $0x20] sm:$0x1]
      %v5880 = vsel %vm5864, %v5586, %v5879
      %5881 = vst [vmem:[%s5856 + $0x20] sm:$0x1] %v5880
      %v5882 = vld [vmem:[%s5856 + $0x24] sm:$0xf]
      %v5883 = vsel %vm5858, %v5593, %v5882
      %5884 = vst [vmem:[%s5856 + $0x24] sm:$0xf] %v5883
      %5885 = vst.msk [vmem:[%s5856 + $0x28] sm:$0xf] %vm282, %v5602
      %v5886 = vld [vmem:[%s5856 + $0x2c] sm:$0x1]
      %v5887 = vsel %vm5864, %v5603, %v5886
      %5888 = vst [vmem:[%s5856 + $0x2c] sm:$0x1] %v5887
      %v5889 = vld [vmem:[%s5856 + $0x30] sm:$0xf]
      %v5890 = vsel %vm5858, %v5610, %v5889
      %5891 = vst [vmem:[%s5856 + $0x30] sm:$0xf] %v5890
      %5892 = vst.msk [vmem:[%s5856 + $0x34] sm:$0xf] %vm282, %v5619
      %v5893 = vld [vmem:[%s5856 + $0x38] sm:$0x1]
      %v5894 = vsel %vm5864, %v5620, %v5893
      %5895 = vst [vmem:[%s5856 + $0x38] sm:$0x1] %v5894
      %v5896 = vld [vmem:[%s5856 + $0x3c] sm:$0xf]
      %v5897 = vsel %vm5858, %v5627, %v5896
      %5898 = vst [vmem:[%s5856 + $0x3c] sm:$0xf] %v5897
      %5899 = vst.msk [vmem:[%s5856 + $0x40] sm:$0xf] %vm282, %v5636
      %v5900 = vld [vmem:[%s5856 + $0x44] sm:$0x1]
      %v5901 = vsel %vm5864, %v5637, %v5900
      %5902 = vst [vmem:[%s5856 + $0x44] sm:$0x1] %v5901
      %v5903 = vld [vmem:[%s5856 + $0x48] sm:$0xf]
      %v5904 = vsel %vm5858, %v5644, %v5903
      %5905 = vst [vmem:[%s5856 + $0x48] sm:$0xf] %v5904
      %5906 = vst.msk [vmem:[%s5856 + $0x4c] sm:$0xf] %vm282, %v5653
      %v5907 = vld [vmem:[%s5856 + $0x50] sm:$0x1]
      %v5908 = vsel %vm5864, %v5654, %v5907
      %5909 = vst [vmem:[%s5856 + $0x50] sm:$0x1] %v5908
      %v5910 = vld [vmem:[%s5856 + $0x54] sm:$0xf]
      %v5911 = vsel %vm5858, %v5661, %v5910
      %5912 = vst [vmem:[%s5856 + $0x54] sm:$0xf] %v5911
      %5913 = vst.msk [vmem:[%s5856 + $0x58] sm:$0xf] %vm282, %v5670
      %v5914 = vld [vmem:[%s5856 + $0x5c] sm:$0x1]
      %v5915 = vsel %vm5864, %v5671, %v5914
      %5916 = vst [vmem:[%s5856 + $0x5c] sm:$0x1] %v5915
      %v5917 = vld [vmem:[%s5856 + $0x60] sm:$0xf]
      %v5918 = vsel %vm5858, %v5678, %v5917
      %5919 = vst [vmem:[%s5856 + $0x60] sm:$0xf] %v5918
      %5920 = vst.msk [vmem:[%s5856 + $0x64] sm:$0xf] %vm282, %v5687
      %v5921 = vld [vmem:[%s5856 + $0x68] sm:$0x1]
      %v5922 = vsel %vm5864, %v5688, %v5921
      %5923 = vst [vmem:[%s5856 + $0x68] sm:$0x1] %v5922
      %v5924 = vld [vmem:[%s5856 + $0x6c] sm:$0xf]
      %v5925 = vsel %vm5858, %v5695, %v5924
      %5926 = vst [vmem:[%s5856 + $0x6c] sm:$0xf] %v5925
      %5927 = vst.msk [vmem:[%s5856 + $0x70] sm:$0xf] %vm282, %v5704
      %v5928 = vld [vmem:[%s5856 + $0x74] sm:$0x1]
      %v5929 = vsel %vm5864, %v5705, %v5928
      %5930 = vst [vmem:[%s5856 + $0x74] sm:$0x1] %v5929
      %v5931 = vld [vmem:[%s5856 + $0x78] sm:$0xf]
      %v5932 = vsel %vm5858, %v5712, %v5931
      %5933 = vst [vmem:[%s5856 + $0x78] sm:$0xf] %v5932
      %5934 = vst.msk [vmem:[%s5856 + $0x7c] sm:$0xf] %vm282, %v5721
      %v5935 = vld [vmem:[%s5856 + $0x80] sm:$0x1]
      %v5936 = vsel %vm5864, %v5722, %v5935
      %5937 = vst [vmem:[%s5856 + $0x80] sm:$0x1] %v5936
      %v5938 = vld [vmem:[%s5856 + $0x84] sm:$0xf]
      %v5939 = vsel %vm5858, %v5729, %v5938
      %5940 = vst [vmem:[%s5856 + $0x84] sm:$0xf] %v5939
      %5941 = vst.msk [vmem:[%s5856 + $0x88] sm:$0xf] %vm282, %v5738
      %v5942 = vld [vmem:[%s5856 + $0x8c] sm:$0x1]
      %v5943 = vsel %vm5864, %v5739, %v5942
      %5944 = vst [vmem:[%s5856 + $0x8c] sm:$0x1] %v5943
      %v5945 = vld [vmem:[%s5856 + $0x90] sm:$0xf]
      %v5946 = vsel %vm5858, %v5746, %v5945
      %5947 = vst [vmem:[%s5856 + $0x90] sm:$0xf] %v5946
      %5948 = vst.msk [vmem:[%s5856 + $0x94] sm:$0xf] %vm282, %v5755
      %v5949 = vld [vmem:[%s5856 + $0x98] sm:$0x1]
      %v5950 = vsel %vm5864, %v5756, %v5949
      %5951 = vst [vmem:[%s5856 + $0x98] sm:$0x1] %v5950
      %v5952 = vld [vmem:[%s5856 + $0x9c] sm:$0xf]
      %v5953 = vsel %vm5858, %v5763, %v5952
      %5954 = vst [vmem:[%s5856 + $0x9c] sm:$0xf] %v5953
      %5955 = vst.msk [vmem:[%s5856 + $0xa0] sm:$0xf] %vm282, %v5772
      %v5956 = vld [vmem:[%s5856 + $0xa4] sm:$0x1]
      %v5957 = vsel %vm5864, %v5773, %v5956
      %5958 = vst [vmem:[%s5856 + $0xa4] sm:$0x1] %v5957
      %v5959 = vld [vmem:[%s5856 + $0xa8] sm:$0xf]
      %v5960 = vsel %vm5858, %v5780, %v5959
      %5961 = vst [vmem:[%s5856 + $0xa8] sm:$0xf] %v5960
      %5962 = vst.msk [vmem:[%s5856 + $0xac] sm:$0xf] %vm282, %v5789
      %v5963 = vld [vmem:[%s5856 + $0xb0] sm:$0x1]
      %v5964 = vsel %vm5864, %v5790, %v5963
      %5965 = vst [vmem:[%s5856 + $0xb0] sm:$0x1] %v5964
      %v5966 = vld [vmem:[%s5856 + $0xb4] sm:$0xf]
      %v5967 = vsel %vm5858, %v5797, %v5966
      %5968 = vst [vmem:[%s5856 + $0xb4] sm:$0xf] %v5967
      %5969 = vst.msk [vmem:[%s5856 + $0xb8] sm:$0xf] %vm282, %v5806
      %v5970 = vld [vmem:[%s5856 + $0xbc] sm:$0x1]
      %v5971 = vsel %vm5864, %v5807, %v5970
      %5972 = vst [vmem:[%s5856 + $0xbc] sm:$0x1] %v5971
      %v5973 = vld [vmem:[#allocation3] sm:$0xf]
      %v5974 = vld [vmem:[#allocation3 + $0x4] sm:$0xf]
      %v5975 = vld [vmem:[#allocation3 + $0xc] sm:$0xf]
      %v5976 = vld [vmem:[#allocation3 + $0x10] sm:$0xf]
      %v5977 = vld [vmem:[#allocation3 + $0x18] sm:$0xf]
      %v5978 = vld [vmem:[#allocation3 + $0x1c] sm:$0xf]
      %v5979 = vld [vmem:[#allocation3 + $0x24] sm:$0xf]
      %v5980 = vld [vmem:[#allocation3 + $0x28] sm:$0xf]
      %v5981 = vld [vmem:[#allocation3 + $0x30] sm:$0xf]
      %v5982 = vld [vmem:[#allocation3 + $0x34] sm:$0xf]
      %v5983 = vld [vmem:[#allocation3 + $0x3c] sm:$0xf]
      %v5984 = vld [vmem:[#allocation3 + $0x40] sm:$0xf]
      %v5985 = vld [vmem:[#allocation3 + $0x48] sm:$0xf]
      %v5986 = vld [vmem:[#allocation3 + $0x4c] sm:$0xf]
      %v5987 = vld [vmem:[#allocation3 + $0x54] sm:$0xf]
      %v5988 = vld [vmem:[#allocation3 + $0x58] sm:$0xf]
      %v5989 = vld [vmem:[#allocation3 + $0x60] sm:$0xf]
      %v5990 = vld [vmem:[#allocation3 + $0x64] sm:$0xf]
      %v5991 = vld [vmem:[#allocation3 + $0x6c] sm:$0xf]
      %v5992 = vld [vmem:[#allocation3 + $0x70] sm:$0xf]
      %v5993 = vld [vmem:[#allocation3 + $0x78] sm:$0xf]
      %v5994 = vld [vmem:[#allocation3 + $0x7c] sm:$0xf]
      %v5995 = vld [vmem:[#allocation3 + $0x84] sm:$0xf]
      %v5996 = vld [vmem:[#allocation3 + $0x88] sm:$0xf]
      %v5997 = vld [vmem:[#allocation3 + $0x90] sm:$0xf]
      %v5998 = vld [vmem:[#allocation3 + $0x94] sm:$0xf]
      %v5999 = vld [vmem:[#allocation3 + $0x9c] sm:$0xf]
      %v6000 = vld [vmem:[#allocation3 + $0xa0] sm:$0xf]
      %v6001 = vld [vmem:[#allocation3 + $0xa8] sm:$0xf]
      %v6002 = vld [vmem:[#allocation3 + $0xac] sm:$0xf]
      %v6003 = vld [vmem:[#allocation3 + $0xb4] sm:$0xf]
      %v6004 = vld [vmem:[#allocation3 + $0xb8] sm:$0xf]
      %v6005 = vld [vmem:[%s3] sm:$0xf]
      %v6006 = vld [vmem:[#allocation3 + $0x8] sm:$0x1]
      %v6007 = vld [vmem:[#allocation3 + $0x14] sm:$0x1]
      %v6008 = vld [vmem:[#allocation3 + $0x20] sm:$0x1]
      %v6009 = vld [vmem:[#allocation3 + $0x2c] sm:$0x1]
      %v6010 = vld [vmem:[#allocation3 + $0x38] sm:$0x1]
      %v6011 = vld [vmem:[#allocation3 + $0x44] sm:$0x1]
      %v6012 = vld [vmem:[#allocation3 + $0x50] sm:$0x1]
      %v6013 = vld [vmem:[#allocation3 + $0x5c] sm:$0x1]
      %v6014 = vld [vmem:[#allocation3 + $0x68] sm:$0x1]
      %v6015 = vld [vmem:[#allocation3 + $0x74] sm:$0x1]
      %v6016 = vld [vmem:[#allocation3 + $0x80] sm:$0x1]
      %v6017 = vld [vmem:[#allocation3 + $0x8c] sm:$0x1]
      %v6018 = vld [vmem:[#allocation3 + $0x98] sm:$0x1]
      %v6019 = vld [vmem:[#allocation3 + $0xa4] sm:$0x1]
      %v6020 = vld [vmem:[#allocation3 + $0xb0] sm:$0x1]
      %v6021 = vld [vmem:[#allocation3 + $0xbc] sm:$0x1]
      %v6023 = vshrl.u32 %v5973, 16
      %v6025 = vrot.slane %v6023, 4
      %v6026 = vshll.u32 %v5973, 16
      %v6028 = vrot.slane %v6026, 5
      %v6029 = vor.u32 %v6025, %v6028
      %v6030 = vrot.slane %v6029, 4
      %v6032 = vshll.u32 %v5974, 16
      %v6034 = vrot.slane %v6032, 5
      %v6035 = vsel %vm862, %v6030, %v6034
      %v6036 = vshrl.u32 %v5974, 16
      %v6038 = vrot.slane %v6036, 4
      %v6039 = vor.u32 %v6038, %v6034
      %v6040 = vrot.slane %v6039, 4
      %v6042 = vshll.u32 %v6006, 16
      %v6044 = vrot.slane %v6042, 5
      %v6045 = vsel %vm862, %v6040, %v6044
      %v6047 = vshrl.u32 %v5975, 16
      %v6049 = vrot.slane %v6047, 4
      %v6050 = vshll.u32 %v5975, 16
      %v6052 = vrot.slane %v6050, 5
      %v6053 = vor.u32 %v6049, %v6052
      %v6054 = vrot.slane %v6053, 4
      %v6056 = vshll.u32 %v5976, 16
      %v6058 = vrot.slane %v6056, 5
      %v6059 = vsel %vm862, %v6054, %v6058
      %v6060 = vshrl.u32 %v5976, 16
      %v6062 = vrot.slane %v6060, 4
      %v6063 = vor.u32 %v6062, %v6058
      %v6064 = vrot.slane %v6063, 4
      %v6066 = vshll.u32 %v6007, 16
      %v6068 = vrot.slane %v6066, 5
      %v6069 = vsel %vm862, %v6064, %v6068
      %v6071 = vshrl.u32 %v5977, 16
      %v6073 = vrot.slane %v6071, 4
      %v6074 = vshll.u32 %v5977, 16
      %v6076 = vrot.slane %v6074, 5
      %v6077 = vor.u32 %v6073, %v6076
      %v6078 = vrot.slane %v6077, 4
      %v6080 = vshll.u32 %v5978, 16
      %v6082 = vrot.slane %v6080, 5
      %v6083 = vsel %vm862, %v6078, %v6082
      %v6084 = vshrl.u32 %v5978, 16
      %v6086 = vrot.slane %v6084, 4
      %v6087 = vor.u32 %v6086, %v6082
      %v6088 = vrot.slane %v6087, 4
      %v6090 = vshll.u32 %v6008, 16
      %v6092 = vrot.slane %v6090, 5
      %v6093 = vsel %vm862, %v6088, %v6092
      %v6095 = vshrl.u32 %v5979, 16
      %v6097 = vrot.slane %v6095, 4
      %v6098 = vshll.u32 %v5979, 16
      %v6100 = vrot.slane %v6098, 5
      %v6101 = vor.u32 %v6097, %v6100
      %v6102 = vrot.slane %v6101, 4
      %v6104 = vshll.u32 %v5980, 16
      %v6106 = vrot.slane %v6104, 5
      %v6107 = vsel %vm862, %v6102, %v6106
      %v6108 = vshrl.u32 %v5980, 16
      %v6110 = vrot.slane %v6108, 4
      %v6111 = vor.u32 %v6110, %v6106
      %v6112 = vrot.slane %v6111, 4
      %v6114 = vshll.u32 %v6009, 16
      %v6116 = vrot.slane %v6114, 5
      %v6117 = vsel %vm862, %v6112, %v6116
      %v6119 = vshrl.u32 %v5981, 16
      %v6121 = vrot.slane %v6119, 4
      %v6122 = vshll.u32 %v5981, 16
      %v6124 = vrot.slane %v6122, 5
      %v6125 = vor.u32 %v6121, %v6124
      %v6126 = vrot.slane %v6125, 4
      %v6128 = vshll.u32 %v5982, 16
      %v6130 = vrot.slane %v6128, 5
      %v6131 = vsel %vm862, %v6126, %v6130
      %v6132 = vshrl.u32 %v5982, 16
      %v6134 = vrot.slane %v6132, 4
      %v6135 = vor.u32 %v6134, %v6130
      %v6136 = vrot.slane %v6135, 4
      %v6138 = vshll.u32 %v6010, 16
      %v6140 = vrot.slane %v6138, 5
      %v6141 = vsel %vm862, %v6136, %v6140
      %v6143 = vshrl.u32 %v5983, 16
      %v6145 = vrot.slane %v6143, 4
      %v6146 = vshll.u32 %v5983, 16
      %v6148 = vrot.slane %v6146, 5
      %v6149 = vor.u32 %v6145, %v6148
      %v6150 = vrot.slane %v6149, 4
      %v6152 = vshll.u32 %v5984, 16
      %v6154 = vrot.slane %v6152, 5
      %v6155 = vsel %vm862, %v6150, %v6154
      %v6156 = vshrl.u32 %v5984, 16
      %v6158 = vrot.slane %v6156, 4
      %v6159 = vor.u32 %v6158, %v6154
      %v6160 = vrot.slane %v6159, 4
      %v6162 = vshll.u32 %v6011, 16
      %v6164 = vrot.slane %v6162, 5
      %v6165 = vsel %vm862, %v6160, %v6164
      %v6167 = vshrl.u32 %v5985, 16
      %v6169 = vrot.slane %v6167, 4
      %v6170 = vshll.u32 %v5985, 16
      %v6172 = vrot.slane %v6170, 5
      %v6173 = vor.u32 %v6169, %v6172
      %v6174 = vrot.slane %v6173, 4
      %v6176 = vshll.u32 %v5986, 16
      %v6178 = vrot.slane %v6176, 5
      %v6179 = vsel %vm862, %v6174, %v6178
      %v6180 = vshrl.u32 %v5986, 16
      %v6182 = vrot.slane %v6180, 4
      %v6183 = vor.u32 %v6182, %v6178
      %v6184 = vrot.slane %v6183, 4
      %v6186 = vshll.u32 %v6012, 16
      %v6188 = vrot.slane %v6186, 5
      %v6189 = vsel %vm862, %v6184, %v6188
      %v6191 = vshrl.u32 %v5987, 16
      %v6193 = vrot.slane %v6191, 4
      %v6194 = vshll.u32 %v5987, 16
      %v6196 = vrot.slane %v6194, 5
      %v6197 = vor.u32 %v6193, %v6196
      %v6198 = vrot.slane %v6197, 4
      %v6200 = vshll.u32 %v5988, 16
      %v6202 = vrot.slane %v6200, 5
      %v6203 = vsel %vm862, %v6198, %v6202
      %v6204 = vshrl.u32 %v5988, 16
      %v6206 = vrot.slane %v6204, 4
      %v6207 = vor.u32 %v6206, %v6202
      %v6208 = vrot.slane %v6207, 4
      %v6210 = vshll.u32 %v6013, 16
      %v6212 = vrot.slane %v6210, 5
      %v6213 = vsel %vm862, %v6208, %v6212
      %v6215 = vshrl.u32 %v5989, 16
      %v6217 = vrot.slane %v6215, 4
      %v6218 = vshll.u32 %v5989, 16
      %v6220 = vrot.slane %v6218, 5
      %v6221 = vor.u32 %v6217, %v6220
      %v6222 = vrot.slane %v6221, 4
      %v6224 = vshll.u32 %v5990, 16
      %v6226 = vrot.slane %v6224, 5
      %v6227 = vsel %vm862, %v6222, %v6226
      %v6228 = vshrl.u32 %v5990, 16
      %v6230 = vrot.slane %v6228, 4
      %v6231 = vor.u32 %v6230, %v6226
      %v6232 = vrot.slane %v6231, 4
      %v6234 = vshll.u32 %v6014, 16
      %v6236 = vrot.slane %v6234, 5
      %v6237 = vsel %vm862, %v6232, %v6236
      %v6239 = vshrl.u32 %v5991, 16
      %v6241 = vrot.slane %v6239, 4
      %v6242 = vshll.u32 %v5991, 16
      %v6244 = vrot.slane %v6242, 5
      %v6245 = vor.u32 %v6241, %v6244
      %v6246 = vrot.slane %v6245, 4
      %v6248 = vshll.u32 %v5992, 16
      %v6250 = vrot.slane %v6248, 5
      %v6251 = vsel %vm862, %v6246, %v6250
      %v6252 = vshrl.u32 %v5992, 16
      %v6254 = vrot.slane %v6252, 4
      %v6255 = vor.u32 %v6254, %v6250
      %v6256 = vrot.slane %v6255, 4
      %v6258 = vshll.u32 %v6015, 16
      %v6260 = vrot.slane %v6258, 5
      %v6261 = vsel %vm862, %v6256, %v6260
      %v6263 = vshrl.u32 %v5993, 16
      %v6265 = vrot.slane %v6263, 4
      %v6266 = vshll.u32 %v5993, 16
      %v6268 = vrot.slane %v6266, 5
      %v6269 = vor.u32 %v6265, %v6268
      %v6270 = vrot.slane %v6269, 4
      %v6272 = vshll.u32 %v5994, 16
      %v6274 = vrot.slane %v6272, 5
      %v6275 = vsel %vm862, %v6270, %v6274
      %v6276 = vshrl.u32 %v5994, 16
      %v6278 = vrot.slane %v6276, 4
      %v6279 = vor.u32 %v6278, %v6274
      %v6280 = vrot.slane %v6279, 4
      %v6282 = vshll.u32 %v6016, 16
      %v6284 = vrot.slane %v6282, 5
      %v6285 = vsel %vm862, %v6280, %v6284
      %v6287 = vshrl.u32 %v5995, 16
      %v6289 = vrot.slane %v6287, 4
      %v6290 = vshll.u32 %v5995, 16
      %v6292 = vrot.slane %v6290, 5
      %v6293 = vor.u32 %v6289, %v6292
      %v6294 = vrot.slane %v6293, 4
      %v6296 = vshll.u32 %v5996, 16
      %v6298 = vrot.slane %v6296, 5
      %v6299 = vsel %vm862, %v6294, %v6298
      %v6300 = vshrl.u32 %v5996, 16
      %v6302 = vrot.slane %v6300, 4
      %v6303 = vor.u32 %v6302, %v6298
      %v6304 = vrot.slane %v6303, 4
      %v6306 = vshll.u32 %v6017, 16
      %v6308 = vrot.slane %v6306, 5
      %v6309 = vsel %vm862, %v6304, %v6308
      %v6311 = vshrl.u32 %v5997, 16
      %v6313 = vrot.slane %v6311, 4
      %v6314 = vshll.u32 %v5997, 16
      %v6316 = vrot.slane %v6314, 5
      %v6317 = vor.u32 %v6313, %v6316
      %v6318 = vrot.slane %v6317, 4
      %v6320 = vshll.u32 %v5998, 16
      %v6322 = vrot.slane %v6320, 5
      %v6323 = vsel %vm862, %v6318, %v6322
      %v6324 = vshrl.u32 %v5998, 16
      %v6326 = vrot.slane %v6324, 4
      %v6327 = vor.u32 %v6326, %v6322
      %v6328 = vrot.slane %v6327, 4
      %v6330 = vshll.u32 %v6018, 16
      %v6332 = vrot.slane %v6330, 5
      %v6333 = vsel %vm862, %v6328, %v6332
      %v6335 = vshrl.u32 %v5999, 16
      %v6337 = vrot.slane %v6335, 4
      %v6338 = vshll.u32 %v5999, 16
      %v6340 = vrot.slane %v6338, 5
      %v6341 = vor.u32 %v6337, %v6340
      %v6342 = vrot.slane %v6341, 4
      %v6344 = vshll.u32 %v6000, 16
      %v6346 = vrot.slane %v6344, 5
      %v6347 = vsel %vm862, %v6342, %v6346
      %v6348 = vshrl.u32 %v6000, 16
      %v6350 = vrot.slane %v6348, 4
      %v6351 = vor.u32 %v6350, %v6346
      %v6352 = vrot.slane %v6351, 4
      %v6354 = vshll.u32 %v6019, 16
      %v6356 = vrot.slane %v6354, 5
      %v6357 = vsel %vm862, %v6352, %v6356
      %v6359 = vshrl.u32 %v6001, 16
      %v6361 = vrot.slane %v6359, 4
      %v6362 = vshll.u32 %v6001, 16
      %v6364 = vrot.slane %v6362, 5
      %v6365 = vor.u32 %v6361, %v6364
      %v6366 = vrot.slane %v6365, 4
      %v6368 = vshll.u32 %v6002, 16
      %v6370 = vrot.slane %v6368, 5
      %v6371 = vsel %vm862, %v6366, %v6370
      %v6372 = vshrl.u32 %v6002, 16
      %v6374 = vrot.slane %v6372, 4
      %v6375 = vor.u32 %v6374, %v6370
      %v6376 = vrot.slane %v6375, 4
      %v6378 = vshll.u32 %v6020, 16
      %v6380 = vrot.slane %v6378, 5
      %v6381 = vsel %vm862, %v6376, %v6380
      %v6383 = vshrl.u32 %v6003, 16
      %v6385 = vrot.slane %v6383, 4
      %v6386 = vshll.u32 %v6003, 16
      %v6388 = vrot.slane %v6386, 5
      %v6389 = vor.u32 %v6385, %v6388
      %v6390 = vrot.slane %v6389, 4
      %v6392 = vshll.u32 %v6004, 16
      %v6394 = vrot.slane %v6392, 5
      %v6395 = vsel %vm862, %v6390, %v6394
      %v6396 = vshrl.u32 %v6004, 16
      %v6398 = vrot.slane %v6396, 4
      %v6399 = vor.u32 %v6398, %v6394
      %v6400 = vrot.slane %v6399, 4
      %v6402 = vshll.u32 %v6021, 16
      %v6404 = vrot.slane %v6402, 5
      %v6405 = vsel %vm862, %v6400, %v6404
      %s6406 = scalar_lea.vmem %s3, 4
      %v6407 = vld [vmem:[%s6406] sm:$0xf]
      %v6408 = vunpack.c.l.b16 %v6035
      %v6409 = vunpack.c.l.b16 %v6045
      %v6410 = vunpack.c.l.b16 %v6059
      %v6411 = vunpack.c.l.b16 %v6069
      %v6412 = vunpack.c.l.b16 %v6083
      %v6413 = vunpack.c.l.b16 %v6093
      %v6414 = vunpack.c.l.b16 %v6107
      %v6415 = vunpack.c.l.b16 %v6117
      %v6416 = vunpack.c.l.b16 %v6131
      %v6417 = vunpack.c.l.b16 %v6141
      %v6418 = vunpack.c.l.b16 %v6155
      %v6419 = vunpack.c.l.b16 %v6165
      %v6420 = vunpack.c.l.b16 %v6179
      %v6421 = vunpack.c.l.b16 %v6189
      %v6422 = vunpack.c.l.b16 %v6203
      %v6423 = vunpack.c.l.b16 %v6213
      %v6424 = vunpack.c.l.b16 %v6227
      %v6425 = vunpack.c.l.b16 %v6237
      %v6426 = vunpack.c.l.b16 %v6251
      %v6427 = vunpack.c.l.b16 %v6261
      %v6428 = vunpack.c.l.b16 %v6275
      %v6429 = vunpack.c.l.b16 %v6285
      %v6430 = vunpack.c.l.b16 %v6299
      %v6431 = vunpack.c.l.b16 %v6309
      %v6432 = vunpack.c.l.b16 %v6323
      %v6433 = vunpack.c.l.b16 %v6333
      %v6434 = vunpack.c.l.b16 %v6347
      %v6435 = vunpack.c.l.b16 %v6357
      %v6436 = vunpack.c.l.b16 %v6371
      %v6437 = vunpack.c.l.b16 %v6381
      %v6438 = vunpack.c.l.b16 %v6395
      %v6439 = vunpack.c.l.b16 %v6405
      %v6440 = vpack.c.b16 %v6409, %v6408
      %v6441 = vpack.c.b16 %v6411, %v6410
      %v6442 = vpack.c.b16 %v6413, %v6412
      %v6443 = vpack.c.b16 %v6415, %v6414
      %v6444 = vpack.c.b16 %v6417, %v6416
      %v6445 = vpack.c.b16 %v6419, %v6418
      %v6446 = vpack.c.b16 %v6421, %v6420
      %v6447 = vpack.c.b16 %v6423, %v6422
      %v6448 = vpack.c.b16 %v6425, %v6424
      %v6449 = vpack.c.b16 %v6427, %v6426
      %v6450 = vpack.c.b16 %v6429, %v6428
      %v6451 = vpack.c.b16 %v6431, %v6430
      %v6452 = vpack.c.b16 %v6433, %v6432
      %v6453 = vpack.c.b16 %v6435, %v6434
      %v6454 = vpack.c.b16 %v6437, %v6436
      %v6455 = vpack.c.b16 %v6439, %v6438
      %vm6456 = vcmask 64512
      %v6458 = vsel %vm6456, %v6440, 0
      %v6461 = vsel %vm6456, %v6441, 0
      %v6464 = vsel %vm6456, %v6442, 0
      %v6467 = vsel %vm6456, %v6443, 0
      %v6470 = vsel %vm6456, %v6444, 0
      %v6473 = vsel %vm6456, %v6445, 0
      %v6476 = vsel %vm6456, %v6446, 0
      %v6479 = vsel %vm6456, %v6447, 0
      %v6482 = vsel %vm6456, %v6448, 0
      %v6485 = vsel %vm6456, %v6449, 0
      %v6488 = vsel %vm6456, %v6450, 0
      %v6491 = vsel %vm6456, %v6451, 0
      %v6494 = vsel %vm6456, %v6452, 0
      %v6497 = vsel %vm6456, %v6453, 0
      %v6500 = vsel %vm6456, %v6454, 0
      %v6503 = vsel %vm6456, %v6455, 0
      %vm6505 = vcmask 1043456
      %v6507 = vsel %vm6505, %v6407, 0
      %6509 = vmatprep.subr.bf16.mxu0 0
      %6510 = vmatpush1.bf16.msra.mxu0 %v6507
      %6511 = vmatprep.subr.bf16.mxu0 0
      %6512 = vmatpush1.bf16.msra.mxu0 0
      %6513 = vmatprep.subr.bf16.mxu0 0
      %6514 = vmatpush1.bf16.msra.mxu0 0
      %6515 = vmatprep.subr.bf16.mxu0 0
      %6516 = vmatpush1.bf16.msra.mxu0 0
      %6517 = vmatprep.subr.bf16.mxu0 0
      %6518 = vmatpush1.bf16.msra.mxu0 0
      %6519 = vmatprep.subr.bf16.mxu0 0
      %6520 = vmatpush1.bf16.msra.mxu0 0
      %6521 = vmatprep.subr.bf16.mxu0 0
      %6522 = vmatpush1.bf16.msra.mxu0 0
      %6523 = vmatprep.subr.bf16.mxu0 0
      %6524 = vmatpush1.bf16.msra.mxu0 0
      %6525 = vmatprep.subr.bf16.mxu0 0
      %6526 = vmatpush1.bf16.msra.mxu0 0
      %6527 = vmatprep.subr.bf16.mxu0 0
      %6528 = vmatpush1.bf16.msra.mxu0 0
      %6529 = vmatprep.subr.bf16.mxu0 0
      %6530 = vmatpush1.bf16.msra.mxu0 0
      %6531 = vmatprep.subr.bf16.mxu0 0
      %6532 = vmatpush1.bf16.msra.mxu0 0
      %6533 = vmatprep.subr.bf16.mxu0 0
      %6534 = vmatpush1.bf16.msra.mxu0 0
      %6535 = vmatprep.subr.bf16.mxu0 0
      %6536 = vmatpush1.bf16.msra.mxu0 0
      %6537 = vmatprep.subr.bf16.mxu0 0
      %6538 = vmatpush1.bf16.msra.mxu0 0
      %6539 = vmatprep.subr.bf16.mxu0 0
      %6540 = vmatpush1.bf16.msra.mxu0 0
      %6541 = vmatprep.mubr.bf16.mxu0 0
      %6542 = vmatmul.mubr.bf16.gmra.mrb[0].mxu0 %v6458
      %v6543 = vpop.f32.mrb[0].mxu0
      %v6544 = vadd.f32 0.0, %v6543
      %v6545 = vpop.f32.mrb[0].mxu0
      %v6546 = vpop.f32.mrb[0].mxu0
      %v6547 = vadd.f32 0.0, %v6546
      %v6548 = vpop.f32.mrb[0].mxu0
      %6549 = vmatprep.mubr.bf16.mxu0 0
      %6550 = vmatmul.mubr.bf16.gmra.mrb[0].mxu0 %v6461
      %v6551 = vpop.f32.mrb[0].mxu0
      %v6552 = vadd.f32 0.0, %v6551
      %v6553 = vpop.f32.mrb[0].mxu0
      %v6554 = vpop.f32.mrb[0].mxu0
      %v6555 = vadd.f32 0.0, %v6554
      %v6556 = vpop.f32.mrb[0].mxu0
      %6557 = vmatprep.mubr.bf16.mxu0 0
      %6558 = vmatmul.mubr.bf16.gmra.mrb[0].mxu0 %v6464
      %v6559 = vpop.f32.mrb[0].mxu0
      %v6560 = vadd.f32 0.0, %v6559
      %v6561 = vpop.f32.mrb[0].mxu0
      %v6562 = vpop.f32.mrb[0].mxu0
      %v6563 = vadd.f32 0.0, %v6562
      %v6564 = vpop.f32.mrb[0].mxu0
      %6565 = vmatprep.mubr.bf16.mxu0 0
      %6566 = vmatmul.mubr.bf16.gmra.mrb[0].mxu0 %v6467
      %v6567 = vpop.f32.mrb[0].mxu0
      %v6568 = vadd.f32 0.0, %v6567
      %v6569 = vpop.f32.mrb[0].mxu0
      %v6570 = vpop.f32.mrb[0].mxu0
      %v6571 = vadd.f32 0.0, %v6570
      %v6572 = vpop.f32.mrb[0].mxu0
      %6573 = vmatprep.mubr.bf16.mxu0 0
      %6574 = vmatmul.mubr.bf16.gmra.mrb[0].mxu0 %v6470
      %v6575 = vpop.f32.mrb[0].mxu0
      %v6576 = vadd.f32 0.0, %v6575
      %v6577 = vpop.f32.mrb[0].mxu0
      %v6578 = vpop.f32.mrb[0].mxu0
      %v6579 = vadd.f32 0.0, %v6578
      %v6580 = vpop.f32.mrb[0].mxu0
      %6581 = vmatprep.mubr.bf16.mxu0 0
      %6582 = vmatmul.mubr.bf16.gmra.mrb[0].mxu0 %v6473
      %v6583 = vpop.f32.mrb[0].mxu0
      %v6584 = vadd.f32 0.0, %v6583
      %v6585 = vpop.f32.mrb[0].mxu0
      %v6586 = vpop.f32.mrb[0].mxu0
      %v6587 = vadd.f32 0.0, %v6586
      %v6588 = vpop.f32.mrb[0].mxu0
      %6589 = vmatprep.mubr.bf16.mxu0 0
      %6590 = vmatmul.mubr.bf16.gmra.mrb[0].mxu0 %v6476
      %v6591 = vpop.f32.mrb[0].mxu0
      %v6592 = vadd.f32 0.0, %v6591
      %v6593 = vpop.f32.mrb[0].mxu0
      %v6594 = vpop.f32.mrb[0].mxu0
      %v6595 = vadd.f32 0.0, %v6594
      %v6596 = vpop.f32.mrb[0].mxu0
      %6597 = vmatprep.mubr.bf16.mxu0 0
      %6598 = vmatmul.mubr.bf16.gmra.mrb[0].mxu0 %v6479
      %v6599 = vpop.f32.mrb[0].mxu0
      %v6600 = vadd.f32 0.0, %v6599
      %v6601 = vpop.f32.mrb[0].mxu0
      %v6602 = vpop.f32.mrb[0].mxu0
      %v6603 = vadd.f32 0.0, %v6602
      %v6604 = vpop.f32.mrb[0].mxu0
      %6605 = vmatprep.mubr.bf16.mxu0 0
      %6606 = vmatmul.mubr.bf16.gmra.mrb[0].mxu0 %v6482
      %v6607 = vpop.f32.mrb[0].mxu0
      %v6608 = vadd.f32 0.0, %v6607
      %v6609 = vpop.f32.mrb[0].mxu0
      %v6610 = vpop.f32.mrb[0].mxu0
      %v6611 = vadd.f32 0.0, %v6610
      %v6612 = vpop.f32.mrb[0].mxu0
      %6613 = vmatprep.mubr.bf16.mxu0 0
      %6614 = vmatmul.mubr.bf16.gmra.mrb[0].mxu0 %v6485
      %v6615 = vpop.f32.mrb[0].mxu0
      %v6616 = vadd.f32 0.0, %v6615
      %v6617 = vpop.f32.mrb[0].mxu0
      %v6618 = vpop.f32.mrb[0].mxu0
      %v6619 = vadd.f32 0.0, %v6618
      %v6620 = vpop.f32.mrb[0].mxu0
      %6621 = vmatprep.mubr.bf16.mxu0 0
      %6622 = vmatmul.mubr.bf16.gmra.mrb[0].mxu0 %v6488
      %v6623 = vpop.f32.mrb[0].mxu0
      %v6624 = vadd.f32 0.0, %v6623
      %v6625 = vpop.f32.mrb[0].mxu0
      %v6626 = vpop.f32.mrb[0].mxu0
      %v6627 = vadd.f32 0.0, %v6626
      %v6628 = vpop.f32.mrb[0].mxu0
      %6629 = vmatprep.mubr.bf16.mxu0 0
      %6630 = vmatmul.mubr.bf16.gmra.mrb[0].mxu0 %v6491
      %v6631 = vpop.f32.mrb[0].mxu0
      %v6632 = vadd.f32 0.0, %v6631
      %v6633 = vpop.f32.mrb[0].mxu0
      %v6634 = vpop.f32.mrb[0].mxu0
      %v6635 = vadd.f32 0.0, %v6634
      %v6636 = vpop.f32.mrb[0].mxu0
      %6637 = vmatprep.mubr.bf16.mxu0 0
      %6638 = vmatmul.mubr.bf16.gmra.mrb[0].mxu0 %v6494
      %v6639 = vpop.f32.mrb[0].mxu0
      %v6640 = vadd.f32 0.0, %v6639
      %v6641 = vpop.f32.mrb[0].mxu0
      %v6642 = vpop.f32.mrb[0].mxu0
      %v6643 = vadd.f32 0.0, %v6642
      %v6644 = vpop.f32.mrb[0].mxu0
      %6645 = vmatprep.mubr.bf16.mxu0 0
      %6646 = vmatmul.mubr.bf16.gmra.mrb[0].mxu0 %v6497
      %v6647 = vpop.f32.mrb[0].mxu0
      %v6648 = vadd.f32 0.0, %v6647
      %v6649 = vpop.f32.mrb[0].mxu0
      %v6650 = vpop.f32.mrb[0].mxu0
      %v6651 = vadd.f32 0.0, %v6650
      %v6652 = vpop.f32.mrb[0].mxu0
      %6653 = vmatprep.mubr.bf16.mxu0 0
      %6654 = vmatmul.mubr.bf16.gmra.mrb[0].mxu0 %v6500
      %v6655 = vpop.f32.mrb[0].mxu0
      %v6656 = vadd.f32 0.0, %v6655
      %v6657 = vpop.f32.mrb[0].mxu0
      %v6658 = vpop.f32.mrb[0].mxu0
      %v6659 = vadd.f32 0.0, %v6658
      %v6660 = vpop.f32.mrb[0].mxu0
      %6661 = vmatprep.mubr.bf16.mxu0 0
      %6662 = vmatmul.mubr.bf16.gmra.mrb[0].mxu0 %v6503
      %v6663 = vpop.f32.mrb[0].mxu0
      %v6664 = vadd.f32 0.0, %v6663
      %v6665 = vpop.f32.mrb[0].mxu0
      %v6666 = vpop.f32.mrb[0].mxu0
      %v6667 = vadd.f32 0.0, %v6666
      %v6668 = vpop.f32.mrb[0].mxu0
      %6669 = vdwg.mxu0
      %v6702 = vunpack.c.l.b16 %v5973
      %v6703 = vunpack.c.l.b16 %v5974
      %v6704 = vunpack.c.l.b16 %v5975
      %v6705 = vunpack.c.l.b16 %v5976
      %v6706 = vunpack.c.l.b16 %v5977
      %v6707 = vunpack.c.l.b16 %v5978
      %v6708 = vunpack.c.l.b16 %v5979
      %v6709 = vunpack.c.l.b16 %v5980
      %v6710 = vunpack.c.l.b16 %v5981
      %v6711 = vunpack.c.l.b16 %v5982
      %v6712 = vunpack.c.l.b16 %v5983
      %v6713 = vunpack.c.l.b16 %v5984
      %v6714 = vunpack.c.l.b16 %v5985
      %v6715 = vunpack.c.l.b16 %v5986
      %v6716 = vunpack.c.l.b16 %v5987
      %v6717 = vunpack.c.l.b16 %v5988
      %v6718 = vunpack.c.l.b16 %v5989
      %v6719 = vunpack.c.l.b16 %v5990
      %v6720 = vunpack.c.l.b16 %v5991
      %v6721 = vunpack.c.l.b16 %v5992
      %v6722 = vunpack.c.l.b16 %v5993
      %v6723 = vunpack.c.l.b16 %v5994
      %v6724 = vunpack.c.l.b16 %v5995
      %v6725 = vunpack.c.l.b16 %v5996
      %v6726 = vunpack.c.l.b16 %v5997
      %v6727 = vunpack.c.l.b16 %v5998
      %v6728 = vunpack.c.l.b16 %v5999
      %v6729 = vunpack.c.l.b16 %v6000
      %v6730 = vunpack.c.l.b16 %v6001
      %v6731 = vunpack.c.l.b16 %v6002
      %v6732 = vunpack.c.l.b16 %v6003
      %v6733 = vunpack.c.l.b16 %v6004
      %v6734 = vpack.c.b16 %v6703, %v6702
      %v6735 = vpack.c.b16 %v6705, %v6704
      %v6736 = vpack.c.b16 %v6707, %v6706
      %v6737 = vpack.c.b16 %v6709, %v6708
      %v6738 = vpack.c.b16 %v6711, %v6710
      %v6739 = vpack.c.b16 %v6713, %v6712
      %v6740 = vpack.c.b16 %v6715, %v6714
      %v6741 = vpack.c.b16 %v6717, %v6716
      %v6742 = vpack.c.b16 %v6719, %v6718
      %v6743 = vpack.c.b16 %v6721, %v6720
      %v6744 = vpack.c.b16 %v6723, %v6722
      %v6745 = vpack.c.b16 %v6725, %v6724
      %v6746 = vpack.c.b16 %v6727, %v6726
      %v6747 = vpack.c.b16 %v6729, %v6728
      %v6748 = vpack.c.b16 %v6731, %v6730
      %v6749 = vpack.c.b16 %v6733, %v6732
      %v6751 = vsel %vm6456, %v6734, 0
      %v6754 = vsel %vm6456, %v6735, 0
      %v6757 = vsel %vm6456, %v6736, 0
      %v6760 = vsel %vm6456, %v6737, 0
      %v6763 = vsel %vm6456, %v6738, 0
      %v6766 = vsel %vm6456, %v6739, 0
      %v6769 = vsel %vm6456, %v6740, 0
      %v6772 = vsel %vm6456, %v6741, 0
      %v6775 = vsel %vm6456, %v6742, 0
      %v6778 = vsel %vm6456, %v6743, 0
      %v6781 = vsel %vm6456, %v6744, 0
      %v6784 = vsel %vm6456, %v6745, 0
      %v6787 = vsel %vm6456, %v6746, 0
      %v6790 = vsel %vm6456, %v6747, 0
      %v6793 = vsel %vm6456, %v6748, 0
      %v6796 = vsel %vm6456, %v6749, 0
      %v6799 = vsel %vm6505, %v6005, 0
      %6801 = vmatprep.subr.bf16.mxu0 0
      %6802 = vmatpush1.bf16.msra.mxu0 %v6799
      %6803 = vmatprep.subr.bf16.mxu0 0
      %6804 = vmatpush1.bf16.msra.mxu0 0
      %6805 = vmatprep.subr.bf16.mxu0 0
      %6806 = vmatpush1.bf16.msra.mxu0 0
      %6807 = vmatprep.subr.bf16.mxu0 0
      %6808 = vmatpush1.bf16.msra.mxu0 0
      %6809 = vmatprep.subr.bf16.mxu0 0
      %6810 = vmatpush1.bf16.msra.mxu0 0
      %6811 = vmatprep.subr.bf16.mxu0 0
      %6812 = vmatpush1.bf16.msra.mxu0 0
      %6813 = vmatprep.subr.bf16.mxu0 0
      %6814 = vmatpush1.bf16.msra.mxu0 0
      %6815 = vmatprep.subr.bf16.mxu0 0
      %6816 = vmatpush1.bf16.msra.mxu0 0
      %6817 = vmatprep.subr.bf16.mxu0 0
      %6818 = vmatpush1.bf16.msra.mxu0 0
      %6819 = vmatprep.subr.bf16.mxu0 0
      %6820 = vmatpush1.bf16.msra.mxu0 0
      %6821 = vmatprep.subr.bf16.mxu0 0
      %6822 = vmatpush1.bf16.msra.mxu0 0
      %6823 = vmatprep.subr.bf16.mxu0 0
      %6824 = vmatpush1.bf16.msra.mxu0 0
      %6825 = vmatprep.subr.bf16.mxu0 0
      %6826 = vmatpush1.bf16.msra.mxu0 0
      %6827 = vmatprep.subr.bf16.mxu0 0
      %6828 = vmatpush1.bf16.msra.mxu0 0
      %6829 = vmatprep.subr.bf16.mxu0 0
      %6830 = vmatpush1.bf16.msra.mxu0 0
      %6831 = vmatprep.subr.bf16.mxu0 0
      %6832 = vmatpush1.bf16.msra.mxu0 0
      %6833 = vmatprep.mubr.bf16.mxu0 0
      %6834 = vmatmul.mubr.bf16.gmra.mrb[0].mxu0 %v6751
      %v6835 = vpop.f32.mrb[0].mxu0
      %v6836 = vadd.f32 %v6544, %v6835
      %v6837 = vpop.f32.mrb[0].mxu0
      %v6838 = vpop.f32.mrb[0].mxu0
      %v6839 = vadd.f32 %v6547, %v6838
      %v6840 = vpop.f32.mrb[0].mxu0
      %6841 = vmatprep.mubr.bf16.mxu0 0
      %6842 = vmatmul.mubr.bf16.gmra.mrb[0].mxu0 %v6754
      %v6843 = vpop.f32.mrb[0].mxu0
      %v6844 = vadd.f32 %v6552, %v6843
      %v6845 = vpop.f32.mrb[0].mxu0
      %v6846 = vpop.f32.mrb[0].mxu0
      %v6847 = vadd.f32 %v6555, %v6846
      %v6848 = vpop.f32.mrb[0].mxu0
      %6849 = vmatprep.mubr.bf16.mxu0 0
      %6850 = vmatmul.mubr.bf16.gmra.mrb[0].mxu0 %v6757
      %v6851 = vpop.f32.mrb[0].mxu0
      %v6852 = vadd.f32 %v6560, %v6851
      %v6853 = vpop.f32.mrb[0].mxu0
      %v6854 = vpop.f32.mrb[0].mxu0
      %v6855 = vadd.f32 %v6563, %v6854
      %v6856 = vpop.f32.mrb[0].mxu0
      %6857 = vmatprep.mubr.bf16.mxu0 0
      %6858 = vmatmul.mubr.bf16.gmra.mrb[0].mxu0 %v6760
      %v6859 = vpop.f32.mrb[0].mxu0
      %v6860 = vadd.f32 %v6568, %v6859
      %v6861 = vpop.f32.mrb[0].mxu0
      %v6862 = vpop.f32.mrb[0].mxu0
      %v6863 = vadd.f32 %v6571, %v6862
      %v6864 = vpop.f32.mrb[0].mxu0
      %6865 = vmatprep.mubr.bf16.mxu0 0
      %6866 = vmatmul.mubr.bf16.gmra.mrb[0].mxu0 %v6763
      %v6867 = vpop.f32.mrb[0].mxu0
      %v6868 = vadd.f32 %v6576, %v6867
      %v6869 = vpop.f32.mrb[0].mxu0
      %v6870 = vpop.f32.mrb[0].mxu0
      %v6871 = vadd.f32 %v6579, %v6870
      %v6872 = vpop.f32.mrb[0].mxu0
      %6873 = vmatprep.mubr.bf16.mxu0 0
      %6874 = vmatmul.mubr.bf16.gmra.mrb[0].mxu0 %v6766
      %v6875 = vpop.f32.mrb[0].mxu0
      %v6876 = vadd.f32 %v6584, %v6875
      %v6877 = vpop.f32.mrb[0].mxu0
      %v6878 = vpop.f32.mrb[0].mxu0
      %v6879 = vadd.f32 %v6587, %v6878
      %v6880 = vpop.f32.mrb[0].mxu0
      %6881 = vmatprep.mubr.bf16.mxu0 0
      %6882 = vmatmul.mubr.bf16.gmra.mrb[0].mxu0 %v6769
      %v6883 = vpop.f32.mrb[0].mxu0
      %v6884 = vadd.f32 %v6592, %v6883
      %v6885 = vpop.f32.mrb[0].mxu0
      %v6886 = vpop.f32.mrb[0].mxu0
      %v6887 = vadd.f32 %v6595, %v6886
      %v6888 = vpop.f32.mrb[0].mxu0
      %6889 = vmatprep.mubr.bf16.mxu0 0
      %6890 = vmatmul.mubr.bf16.gmra.mrb[0].mxu0 %v6772
      %v6891 = vpop.f32.mrb[0].mxu0
      %v6892 = vadd.f32 %v6600, %v6891
      %v6893 = vpop.f32.mrb[0].mxu0
      %v6894 = vpop.f32.mrb[0].mxu0
      %v6895 = vadd.f32 %v6603, %v6894
      %v6896 = vpop.f32.mrb[0].mxu0
      %6897 = vmatprep.mubr.bf16.mxu0 0
      %6898 = vmatmul.mubr.bf16.gmra.mrb[0].mxu0 %v6775
      %v6899 = vpop.f32.mrb[0].mxu0
      %v6900 = vadd.f32 %v6608, %v6899
      %v6901 = vpop.f32.mrb[0].mxu0
      %v6902 = vpop.f32.mrb[0].mxu0
      %v6903 = vadd.f32 %v6611, %v6902
      %v6904 = vpop.f32.mrb[0].mxu0
      %6905 = vmatprep.mubr.bf16.mxu0 0
      %6906 = vmatmul.mubr.bf16.gmra.mrb[0].mxu0 %v6778
      %v6907 = vpop.f32.mrb[0].mxu0
      %v6908 = vadd.f32 %v6616, %v6907
      %v6909 = vpop.f32.mrb[0].mxu0
      %v6910 = vpop.f32.mrb[0].mxu0
      %v6911 = vadd.f32 %v6619, %v6910
      %v6912 = vpop.f32.mrb[0].mxu0
      %6913 = vmatprep.mubr.bf16.mxu0 0
      %6914 = vmatmul.mubr.bf16.gmra.mrb[0].mxu0 %v6781
      %v6915 = vpop.f32.mrb[0].mxu0
      %v6916 = vadd.f32 %v6624, %v6915
      %v6917 = vpop.f32.mrb[0].mxu0
      %v6918 = vpop.f32.mrb[0].mxu0
      %v6919 = vadd.f32 %v6627, %v6918
      %v6920 = vpop.f32.mrb[0].mxu0
      %6921 = vmatprep.mubr.bf16.mxu0 0
      %6922 = vmatmul.mubr.bf16.gmra.mrb[0].mxu0 %v6784
      %v6923 = vpop.f32.mrb[0].mxu0
      %v6924 = vadd.f32 %v6632, %v6923
      %v6925 = vpop.f32.mrb[0].mxu0
      %v6926 = vpop.f32.mrb[0].mxu0
      %v6927 = vadd.f32 %v6635, %v6926
      %v6928 = vpop.f32.mrb[0].mxu0
      %6929 = vmatprep.mubr.bf16.mxu0 0
      %6930 = vmatmul.mubr.bf16.gmra.mrb[0].mxu0 %v6787
      %v6931 = vpop.f32.mrb[0].mxu0
      %v6932 = vadd.f32 %v6640, %v6931
      %v6933 = vpop.f32.mrb[0].mxu0
      %v6934 = vpop.f32.mrb[0].mxu0
      %v6935 = vadd.f32 %v6643, %v6934
      %v6936 = vpop.f32.mrb[0].mxu0
      %6937 = vmatprep.mubr.bf16.mxu0 0
      %6938 = vmatmul.mubr.bf16.gmra.mrb[0].mxu0 %v6790
      %v6939 = vpop.f32.mrb[0].mxu0
      %v6940 = vadd.f32 %v6648, %v6939
      %v6941 = vpop.f32.mrb[0].mxu0
      %v6942 = vpop.f32.mrb[0].mxu0
      %v6943 = vadd.f32 %v6651, %v6942
      %v6944 = vpop.f32.mrb[0].mxu0
      %6945 = vmatprep.mubr.bf16.mxu0 0
      %6946 = vmatmul.mubr.bf16.gmra.mrb[0].mxu0 %v6793
      %v6947 = vpop.f32.mrb[0].mxu0
      %v6948 = vadd.f32 %v6656, %v6947
      %v6949 = vpop.f32.mrb[0].mxu0
      %v6950 = vpop.f32.mrb[0].mxu0
      %v6951 = vadd.f32 %v6659, %v6950
      %v6952 = vpop.f32.mrb[0].mxu0
      %6953 = vmatprep.mubr.bf16.mxu0 0
      %6954 = vmatmul.mubr.bf16.gmra.mrb[0].mxu0 %v6796
      %v6955 = vpop.f32.mrb[0].mxu0
      %v6956 = vadd.f32 %v6664, %v6955
      %v6957 = vpop.f32.mrb[0].mxu0
      %v6958 = vpop.f32.mrb[0].mxu0
      %v6959 = vadd.f32 %v6667, %v6958
      %v6960 = vpop.f32.mrb[0].mxu0
      %6961 = vdwg.mxu0
      %v6962 = vld [vmem:[#allocation3] sm:$0xe]
      %v6963 = vld [vmem:[#allocation3 + $0xc] sm:$0xe]
      %v6964 = vld [vmem:[#allocation3 + $0x18] sm:$0xe]
      %v6965 = vld [vmem:[#allocation3 + $0x24] sm:$0xe]
      %v6966 = vld [vmem:[#allocation3 + $0x30] sm:$0xe]
      %v6967 = vld [vmem:[#allocation3 + $0x3c] sm:$0xe]
      %v6968 = vld [vmem:[#allocation3 + $0x48] sm:$0xe]
      %v6969 = vld [vmem:[#allocation3 + $0x54] sm:$0xe]
      %v6970 = vld [vmem:[#allocation3 + $0x60] sm:$0xe]
      %v6971 = vld [vmem:[#allocation3 + $0x6c] sm:$0xe]
      %v6972 = vld [vmem:[#allocation3 + $0x78] sm:$0xe]
      %v6973 = vld [vmem:[#allocation3 + $0x84] sm:$0xe]
      %v6974 = vld [vmem:[#allocation3 + $0x90] sm:$0xe]
      %v6975 = vld [vmem:[#allocation3 + $0x9c] sm:$0xe]
      %v6976 = vld [vmem:[#allocation3 + $0xa8] sm:$0xe]
      %v6977 = vld [vmem:[#allocation3 + $0xb4] sm:$0xe]
      %v7010 = vrot.slane %v6962, 5
      %v7011 = vrot.slane %v7010, 4
      %v7012 = vrot.slane %v5974, 5
      %v7013 = vsel %vm1853, %v7011, %v7012
      %v7014 = vrot.slane %v7012, 4
      %v7015 = vrot.slane %v6006, 5
      %v7016 = vsel %vm1853, %v7014, %v7015
      %v7017 = vrot.slane %v6963, 5
      %v7018 = vrot.slane %v7017, 4
      %v7019 = vrot.slane %v5976, 5
      %v7020 = vsel %vm1853, %v7018, %v7019
      %v7021 = vrot.slane %v7019, 4
      %v7022 = vrot.slane %v6007, 5
      %v7023 = vsel %vm1853, %v7021, %v7022
      %v7024 = vrot.slane %v6964, 5
      %v7025 = vrot.slane %v7024, 4
      %v7026 = vrot.slane %v5978, 5
      %v7027 = vsel %vm1853, %v7025, %v7026
      %v7028 = vrot.slane %v7026, 4
      %v7029 = vrot.slane %v6008, 5
      %v7030 = vsel %vm1853, %v7028, %v7029
      %v7031 = vrot.slane %v6965, 5
      %v7032 = vrot.slane %v7031, 4
      %v7033 = vrot.slane %v5980, 5
      %v7034 = vsel %vm1853, %v7032, %v7033
      %v7035 = vrot.slane %v7033, 4
      %v7036 = vrot.slane %v6009, 5
      %v7037 = vsel %vm1853, %v7035, %v7036
      %v7038 = vrot.slane %v6966, 5
      %v7039 = vrot.slane %v7038, 4
      %v7040 = vrot.slane %v5982, 5
      %v7041 = vsel %vm1853, %v7039, %v7040
      %v7042 = vrot.slane %v7040, 4
      %v7043 = vrot.slane %v6010, 5
      %v7044 = vsel %vm1853, %v7042, %v7043
      %v7045 = vrot.slane %v6967, 5
      %v7046 = vrot.slane %v7045, 4
      %v7047 = vrot.slane %v5984, 5
      %v7048 = vsel %vm1853, %v7046, %v7047
      %v7049 = vrot.slane %v7047, 4
      %v7050 = vrot.slane %v6011, 5
      %v7051 = vsel %vm1853, %v7049, %v7050
      %v7052 = vrot.slane %v6968, 5
      %v7053 = vrot.slane %v7052, 4
      %v7054 = vrot.slane %v5986, 5
      %v7055 = vsel %vm1853, %v7053, %v7054
      %v7056 = vrot.slane %v7054, 4
      %v7057 = vrot.slane %v6012, 5
      %v7058 = vsel %vm1853, %v7056, %v7057
      %v7059 = vrot.slane %v6969, 5
      %v7060 = vrot.slane %v7059, 4
      %v7061 = vrot.slane %v5988, 5
      %v7062 = vsel %vm1853, %v7060, %v7061
      %v7063 = vrot.slane %v7061, 4
      %v7064 = vrot.slane %v6013, 5
      %v7065 = vsel %vm1853, %v7063, %v7064
      %v7066 = vrot.slane %v6970, 5
      %v7067 = vrot.slane %v7066, 4
      %v7068 = vrot.slane %v5990, 5
      %v7069 = vsel %vm1853, %v7067, %v7068
      %v7070 = vrot.slane %v7068, 4
      %v7071 = vrot.slane %v6014, 5
      %v7072 = vsel %vm1853, %v7070, %v7071
      %v7073 = vrot.slane %v6971, 5
      %v7074 = vrot.slane %v7073, 4
      %v7075 = vrot.slane %v5992, 5
      %v7076 = vsel %vm1853, %v7074, %v7075
      %v7077 = vrot.slane %v7075, 4
      %v7078 = vrot.slane %v6015, 5
      %v7079 = vsel %vm1853, %v7077, %v7078
      %v7080 = vrot.slane %v6972, 5
      %v7081 = vrot.slane %v7080, 4
      %v7082 = vrot.slane %v5994, 5
      %v7083 = vsel %vm1853, %v7081, %v7082
      %v7084 = vrot.slane %v7082, 4
      %v7085 = vrot.slane %v6016, 5
      %v7086 = vsel %vm1853, %v7084, %v7085
      %v7087 = vrot.slane %v6973, 5
      %v7088 = vrot.slane %v7087, 4
      %v7089 = vrot.slane %v5996, 5
      %v7090 = vsel %vm1853, %v7088, %v7089
      %v7091 = vrot.slane %v7089, 4
      %v7092 = vrot.slane %v6017, 5
      %v7093 = vsel %vm1853, %v7091, %v7092
      %v7094 = vrot.slane %v6974, 5
      %v7095 = vrot.slane %v7094, 4
      %v7096 = vrot.slane %v5998, 5
      %v7097 = vsel %vm1853, %v7095, %v7096
      %v7098 = vrot.slane %v7096, 4
      %v7099 = vrot.slane %v6018, 5
      %v7100 = vsel %vm1853, %v7098, %v7099
      %v7101 = vrot.slane %v6975, 5
      %v7102 = vrot.slane %v7101, 4
      %v7103 = vrot.slane %v6000, 5
      %v7104 = vsel %vm1853, %v7102, %v7103
      %v7105 = vrot.slane %v7103, 4
      %v7106 = vrot.slane %v6019, 5
      %v7107 = vsel %vm1853, %v7105, %v7106
      %v7108 = vrot.slane %v6976, 5
      %v7109 = vrot.slane %v7108, 4
      %v7110 = vrot.slane %v6002, 5
      %v7111 = vsel %vm1853, %v7109, %v7110
      %v7112 = vrot.slane %v7110, 4
      %v7113 = vrot.slane %v6020, 5
      %v7114 = vsel %vm1853, %v7112, %v7113
      %v7115 = vrot.slane %v6977, 5
      %v7116 = vrot.slane %v7115, 4
      %v7117 = vrot.slane %v6004, 5
      %v7118 = vsel %vm1853, %v7116, %v7117
      %v7119 = vrot.slane %v7117, 4
      %v7120 = vrot.slane %v6021, 5
      %v7121 = vsel %vm1853, %v7119, %v7120
      %s7122 = scalar_lea.vmem %s3, 8
      %v7123 = vld [vmem:[%s7122] sm:$0xf]
      %v7124 = vunpack.c.l.b16 %v7013
      %v7125 = vunpack.c.l.b16 %v7016
      %v7126 = vunpack.c.l.b16 %v7020
      %v7127 = vunpack.c.l.b16 %v7023
      %v7128 = vunpack.c.l.b16 %v7027
      %v7129 = vunpack.c.l.b16 %v7030
      %v7130 = vunpack.c.l.b16 %v7034
      %v7131 = vunpack.c.l.b16 %v7037
      %v7132 = vunpack.c.l.b16 %v7041
      %v7133 = vunpack.c.l.b16 %v7044
      %v7134 = vunpack.c.l.b16 %v7048
      %v7135 = vunpack.c.l.b16 %v7051
      %v7136 = vunpack.c.l.b16 %v7055
      %v7137 = vunpack.c.l.b16 %v7058
      %v7138 = vunpack.c.l.b16 %v7062
      %v7139 = vunpack.c.l.b16 %v7065
      %v7140 = vunpack.c.l.b16 %v7069
      %v7141 = vunpack.c.l.b16 %v7072
      %v7142 = vunpack.c.l.b16 %v7076
      %v7143 = vunpack.c.l.b16 %v7079
      %v7144 = vunpack.c.l.b16 %v7083
      %v7145 = vunpack.c.l.b16 %v7086
      %v7146 = vunpack.c.l.b16 %v7090
      %v7147 = vunpack.c.l.b16 %v7093
      %v7148 = vunpack.c.l.b16 %v7097
      %v7149 = vunpack.c.l.b16 %v7100
      %v7150 = vunpack.c.l.b16 %v7104
      %v7151 = vunpack.c.l.b16 %v7107
      %v7152 = vunpack.c.l.b16 %v7111
      %v7153 = vunpack.c.l.b16 %v7114
      %v7154 = vunpack.c.l.b16 %v7118
      %v7155 = vunpack.c.l.b16 %v7121
      %v7156 = vpack.c.b16 %v7125, %v7124
      %v7157 = vpack.c.b16 %v7127, %v7126
      %v7158 = vpack.c.b16 %v7129, %v7128
      %v7159 = vpack.c.b16 %v7131, %v7130
      %v7160 = vpack.c.b16 %v7133, %v7132
      %v7161 = vpack.c.b16 %v7135, %v7134
      %v7162 = vpack.c.b16 %v7137, %v7136
      %v7163 = vpack.c.b16 %v7139, %v7138
      %v7164 = vpack.c.b16 %v7141, %v7140
      %v7165 = vpack.c.b16 %v7143, %v7142
      %v7166 = vpack.c.b16 %v7145, %v7144
      %v7167 = vpack.c.b16 %v7147, %v7146
      %v7168 = vpack.c.b16 %v7149, %v7148
      %v7169 = vpack.c.b16 %v7151, %v7150
      %v7170 = vpack.c.b16 %v7153, %v7152
      %v7171 = vpack.c.b16 %v7155, %v7154
      %v7173 = vsel %vm6456, %v7156, 0
      %v7176 = vsel %vm6456, %v7157, 0
      %v7179 = vsel %vm6456, %v7158, 0
      %v7182 = vsel %vm6456, %v7159, 0
      %v7185 = vsel %vm6456, %v7160, 0
      %v7188 = vsel %vm6456, %v7161, 0
      %v7191 = vsel %vm6456, %v7162, 0
      %v7194 = vsel %vm6456, %v7163, 0
      %v7197 = vsel %vm6456, %v7164, 0
      %v7200 = vsel %vm6456, %v7165, 0
      %v7203 = vsel %vm6456, %v7166, 0
      %v7206 = vsel %vm6456, %v7167, 0
      %v7209 = vsel %vm6456, %v7168, 0
      %v7212 = vsel %vm6456, %v7169, 0
      %v7215 = vsel %vm6456, %v7170, 0
      %v7218 = vsel %vm6456, %v7171, 0
      %v7221 = vsel %vm6505, %v7123, 0
      %7223 = vmatprep.subr.bf16.mxu0 0
      %7224 = vmatpush1.bf16.msra.mxu0 %v7221
      %7225 = vmatprep.subr.bf16.mxu0 0
      %7226 = vmatpush1.bf16.msra.mxu0 0
      %7227 = vmatprep.subr.bf16.mxu0 0
      %7228 = vmatpush1.bf16.msra.mxu0 0
      %7229 = vmatprep.subr.bf16.mxu0 0
      %7230 = vmatpush1.bf16.msra.mxu0 0
      %7231 = vmatprep.subr.bf16.mxu0 0
      %7232 = vmatpush1.bf16.msra.mxu0 0
      %7233 = vmatprep.subr.bf16.mxu0 0
      %7234 = vmatpush1.bf16.msra.mxu0 0
      %7235 = vmatprep.subr.bf16.mxu0 0
      %7236 = vmatpush1.bf16.msra.mxu0 0
      %7237 = vmatprep.subr.bf16.mxu0 0
      %7238 = vmatpush1.bf16.msra.mxu0 0
      %7239 = vmatprep.subr.bf16.mxu0 0
      %7240 = vmatpush1.bf16.msra.mxu0 0
      %7241 = vmatprep.subr.bf16.mxu0 0
      %7242 = vmatpush1.bf16.msra.mxu0 0
      %7243 = vmatprep.subr.bf16.mxu0 0
      %7244 = vmatpush1.bf16.msra.mxu0 0
      %7245 = vmatprep.subr.bf16.mxu0 0
      %7246 = vmatpush1.bf16.msra.mxu0 0
      %7247 = vmatprep.subr.bf16.mxu0 0
      %7248 = vmatpush1.bf16.msra.mxu0 0
      %7249 = vmatprep.subr.bf16.mxu0 0
      %7250 = vmatpush1.bf16.msra.mxu0 0
      %7251 = vmatprep.subr.bf16.mxu0 0
      %7252 = vmatpush1.bf16.msra.mxu0 0
      %7253 = vmatprep.subr.bf16.mxu0 0
      %7254 = vmatpush1.bf16.msra.mxu0 0
      %7255 = vmatprep.mubr.bf16.mxu0 0
      %7256 = vmatmul.mubr.bf16.gmra.mrb[0].mxu0 %v7173
      %v7257 = vpop.f32.mrb[0].mxu0
      %v7258 = vadd.f32 0.0, %v7257
      %v7259 = vpop.f32.mrb[0].mxu0
      %v7260 = vpop.f32.mrb[0].mxu0
      %v7261 = vadd.f32 0.0, %v7260
      %v7262 = vpop.f32.mrb[0].mxu0
      %7263 = vmatprep.mubr.bf16.mxu0 0
      %7264 = vmatmul.mubr.bf16.gmra.mrb[0].mxu0 %v7176
      %v7265 = vpop.f32.mrb[0].mxu0
      %v7266 = vadd.f32 0.0, %v7265
      %v7267 = vpop.f32.mrb[0].mxu0
      %v7268 = vpop.f32.mrb[0].mxu0
      %v7269 = vadd.f32 0.0, %v7268
      %v7270 = vpop.f32.mrb[0].mxu0
      %7271 = vmatprep.mubr.bf16.mxu0 0
      %7272 = vmatmul.mubr.bf16.gmra.mrb[0].mxu0 %v7179
      %v7273 = vpop.f32.mrb[0].mxu0
      %v7274 = vadd.f32 0.0, %v7273
      %v7275 = vpop.f32.mrb[0].mxu0
      %v7276 = vpop.f32.mrb[0].mxu0
      %v7277 = vadd.f32 0.0, %v7276
      %v7278 = vpop.f32.mrb[0].mxu0
      %7279 = vmatprep.mubr.bf16.mxu0 0
      %7280 = vmatmul.mubr.bf16.gmra.mrb[0].mxu0 %v7182
      %v7281 = vpop.f32.mrb[0].mxu0
      %v7282 = vadd.f32 0.0, %v7281
      %v7283 = vpop.f32.mrb[0].mxu0
      %v7284 = vpop.f32.mrb[0].mxu0
      %v7285 = vadd.f32 0.0, %v7284
      %v7286 = vpop.f32.mrb[0].mxu0
      %7287 = vmatprep.mubr.bf16.mxu0 0
      %7288 = vmatmul.mubr.bf16.gmra.mrb[0].mxu0 %v7185
      %v7289 = vpop.f32.mrb[0].mxu0
      %v7290 = vadd.f32 0.0, %v7289
      %v7291 = vpop.f32.mrb[0].mxu0
      %v7292 = vpop.f32.mrb[0].mxu0
      %v7293 = vadd.f32 0.0, %v7292
      %v7294 = vpop.f32.mrb[0].mxu0
      %7295 = vmatprep.mubr.bf16.mxu0 0
      %7296 = vmatmul.mubr.bf16.gmra.mrb[0].mxu0 %v7188
      %v7297 = vpop.f32.mrb[0].mxu0
      %v7298 = vadd.f32 0.0, %v7297
      %v7299 = vpop.f32.mrb[0].mxu0
      %v7300 = vpop.f32.mrb[0].mxu0
      %v7301 = vadd.f32 0.0, %v7300
      %v7302 = vpop.f32.mrb[0].mxu0
      %7303 = vmatprep.mubr.bf16.mxu0 0
      %7304 = vmatmul.mubr.bf16.gmra.mrb[0].mxu0 %v7191
      %v7305 = vpop.f32.mrb[0].mxu0
      %v7306 = vadd.f32 0.0, %v7305
      %v7307 = vpop.f32.mrb[0].mxu0
      %v7308 = vpop.f32.mrb[0].mxu0
      %v7309 = vadd.f32 0.0, %v7308
      %v7310 = vpop.f32.mrb[0].mxu0
      %7311 = vmatprep.mubr.bf16.mxu0 0
      %7312 = vmatmul.mubr.bf16.gmra.mrb[0].mxu0 %v7194
      %v7313 = vpop.f32.mrb[0].mxu0
      %v7314 = vadd.f32 0.0, %v7313
      %v7315 = vpop.f32.mrb[0].mxu0
      %v7316 = vpop.f32.mrb[0].mxu0
      %v7317 = vadd.f32 0.0, %v7316
      %v7318 = vpop.f32.mrb[0].mxu0
      %7319 = vmatprep.mubr.bf16.mxu0 0
      %7320 = vmatmul.mubr.bf16.gmra.mrb[0].mxu0 %v7197
      %v7321 = vpop.f32.mrb[0].mxu0
      %v7322 = vadd.f32 0.0, %v7321
      %v7323 = vpop.f32.mrb[0].mxu0
      %v7324 = vpop.f32.mrb[0].mxu0
      %v7325 = vadd.f32 0.0, %v7324
      %v7326 = vpop.f32.mrb[0].mxu0
      %7327 = vmatprep.mubr.bf16.mxu0 0
      %7328 = vmatmul.mubr.bf16.gmra.mrb[0].mxu0 %v7200
      %v7329 = vpop.f32.mrb[0].mxu0
      %v7330 = vadd.f32 0.0, %v7329
      %v7331 = vpop.f32.mrb[0].mxu0
      %v7332 = vpop.f32.mrb[0].mxu0
      %v7333 = vadd.f32 0.0, %v7332
      %v7334 = vpop.f32.mrb[0].mxu0
      %7335 = vmatprep.mubr.bf16.mxu0 0
      %7336 = vmatmul.mubr.bf16.gmra.mrb[0].mxu0 %v7203
      %v7337 = vpop.f32.mrb[0].mxu0
      %v7338 = vadd.f32 0.0, %v7337
      %v7339 = vpop.f32.mrb[0].mxu0
      %v7340 = vpop.f32.mrb[0].mxu0
      %v7341 = vadd.f32 0.0, %v7340
      %v7342 = vpop.f32.mrb[0].mxu0
      %7343 = vmatprep.mubr.bf16.mxu0 0
      %7344 = vmatmul.mubr.bf16.gmra.mrb[0].mxu0 %v7206
      %v7345 = vpop.f32.mrb[0].mxu0
      %v7346 = vadd.f32 0.0, %v7345
      %v7347 = vpop.f32.mrb[0].mxu0
      %v7348 = vpop.f32.mrb[0].mxu0
      %v7349 = vadd.f32 0.0, %v7348
      %v7350 = vpop.f32.mrb[0].mxu0
      %7351 = vmatprep.mubr.bf16.mxu0 0
      %7352 = vmatmul.mubr.bf16.gmra.mrb[0].mxu0 %v7209
      %v7353 = vpop.f32.mrb[0].mxu0
      %v7354 = vadd.f32 0.0, %v7353
      %v7355 = vpop.f32.mrb[0].mxu0
      %v7356 = vpop.f32.mrb[0].mxu0
      %v7357 = vadd.f32 0.0, %v7356
      %v7358 = vpop.f32.mrb[0].mxu0
      %7359 = vmatprep.mubr.bf16.mxu0 0
      %7360 = vmatmul.mubr.bf16.gmra.mrb[0].mxu0 %v7212
      %v7361 = vpop.f32.mrb[0].mxu0
      %v7362 = vadd.f32 0.0, %v7361
      %v7363 = vpop.f32.mrb[0].mxu0
      %v7364 = vpop.f32.mrb[0].mxu0
      %v7365 = vadd.f32 0.0, %v7364
      %v7366 = vpop.f32.mrb[0].mxu0
      %7367 = vmatprep.mubr.bf16.mxu0 0
      %7368 = vmatmul.mubr.bf16.gmra.mrb[0].mxu0 %v7215
      %v7369 = vpop.f32.mrb[0].mxu0
      %v7370 = vadd.f32 0.0, %v7369
      %v7371 = vpop.f32.mrb[0].mxu0
      %v7372 = vpop.f32.mrb[0].mxu0
      %v7373 = vadd.f32 0.0, %v7372
      %v7374 = vpop.f32.mrb[0].mxu0
      %7375 = vmatprep.mubr.bf16.mxu0 0
      %7376 = vmatmul.mubr.bf16.gmra.mrb[0].mxu0 %v7218
      %v7377 = vpop.f32.mrb[0].mxu0
      %v7378 = vadd.f32 0.0, %v7377
      %v7379 = vpop.f32.mrb[0].mxu0
      %v7380 = vpop.f32.mrb[0].mxu0
      %v7381 = vadd.f32 0.0, %v7380
      %v7382 = vpop.f32.mrb[0].mxu0
      %7383 = vdwg.mxu0
      %v7384 = vadd.f32 %v6836, %v7258
      %v7385 = vadd.f32 %v6839, %v7261
      %v7386 = vadd.f32 %v6844, %v7266
      %v7387 = vadd.f32 %v6847, %v7269
      %v7388 = vadd.f32 %v6852, %v7274
      %v7389 = vadd.f32 %v6855, %v7277
      %v7390 = vadd.f32 %v6860, %v7282
      %v7391 = vadd.f32 %v6863, %v7285
      %v7392 = vadd.f32 %v6868, %v7290
      %v7393 = vadd.f32 %v6871, %v7293
      %v7394 = vadd.f32 %v6876, %v7298
      %v7395 = vadd.f32 %v6879, %v7301
      %v7396 = vadd.f32 %v6884, %v7306
      %v7397 = vadd.f32 %v6887, %v7309
      %v7398 = vadd.f32 %v6892, %v7314
      %v7399 = vadd.f32 %v6895, %v7317
      %v7400 = vadd.f32 %v6900, %v7322
      %v7401 = vadd.f32 %v6903, %v7325
      %v7402 = vadd.f32 %v6908, %v7330
      %v7403 = vadd.f32 %v6911, %v7333
      %v7404 = vadd.f32 %v6916, %v7338
      %v7405 = vadd.f32 %v6919, %v7341
      %v7406 = vadd.f32 %v6924, %v7346
      %v7407 = vadd.f32 %v6927, %v7349
      %v7408 = vadd.f32 %v6932, %v7354
      %v7409 = vadd.f32 %v6935, %v7357
      %v7410 = vadd.f32 %v6940, %v7362
      %v7411 = vadd.f32 %v6943, %v7365
      %v7412 = vadd.f32 %v6948, %v7370
      %v7413 = vadd.f32 %v6951, %v7373
      %v7414 = vadd.f32 %v6956, %v7378
      %v7415 = vadd.f32 %v6959, %v7381
      %v7416 = vld [vmem:[%s5856] sm:$0xf]
      %v7417 = vld [vmem:[%s5856 + $0x4] sm:$0xf]
      %v7418 = vld [vmem:[%s5856 + $0xc] sm:$0xf]
      %v7419 = vld [vmem:[%s5856 + $0x10] sm:$0xf]
      %v7420 = vld [vmem:[%s5856 + $0x18] sm:$0xf]
      %v7421 = vld [vmem:[%s5856 + $0x1c] sm:$0xf]
      %v7422 = vld [vmem:[%s5856 + $0x24] sm:$0xf]
      %v7423 = vld [vmem:[%s5856 + $0x28] sm:$0xf]
      %v7424 = vld [vmem:[%s5856 + $0x30] sm:$0xf]
      %v7425 = vld [vmem:[%s5856 + $0x34] sm:$0xf]
      %v7426 = vld [vmem:[%s5856 + $0x3c] sm:$0xf]
      %v7427 = vld [vmem:[%s5856 + $0x40] sm:$0xf]
      %v7428 = vld [vmem:[%s5856 + $0x48] sm:$0xf]
      %v7429 = vld [vmem:[%s5856 + $0x4c] sm:$0xf]
      %v7430 = vld [vmem:[%s5856 + $0x54] sm:$0xf]
      %v7431 = vld [vmem:[%s5856 + $0x58] sm:$0xf]
      %v7432 = vld [vmem:[%s5856 + $0x60] sm:$0xf]
      %v7433 = vld [vmem:[%s5856 + $0x64] sm:$0xf]
      %v7434 = vld [vmem:[%s5856 + $0x6c] sm:$0xf]
      %v7435 = vld [vmem:[%s5856 + $0x70] sm:$0xf]
      %v7436 = vld [vmem:[%s5856 + $0x78] sm:$0xf]
      %v7437 = vld [vmem:[%s5856 + $0x7c] sm:$0xf]
      %v7438 = vld [vmem:[%s5856 + $0x84] sm:$0xf]
      %v7439 = vld [vmem:[%s5856 + $0x88] sm:$0xf]
      %v7440 = vld [vmem:[%s5856 + $0x90] sm:$0xf]
      %v7441 = vld [vmem:[%s5856 + $0x94] sm:$0xf]
      %v7442 = vld [vmem:[%s5856 + $0x9c] sm:$0xf]
      %v7443 = vld [vmem:[%s5856 + $0xa0] sm:$0xf]
      %v7444 = vld [vmem:[%s5856 + $0xa8] sm:$0xf]
      %v7445 = vld [vmem:[%s5856 + $0xac] sm:$0xf]
      %v7446 = vld [vmem:[%s5856 + $0xb4] sm:$0xf]
      %v7447 = vld [vmem:[%s5856 + $0xb8] sm:$0xf]
      %s7448 = scalar_lea.vmem %s3, 12
      %v7449 = vld [vmem:[%s7448] sm:$0xf]
      %v7482 = vunpack.c.l.b16 %v7416
      %v7483 = vunpack.c.l.b16 %v7417
      %v7484 = vunpack.c.l.b16 %v7418
      %v7485 = vunpack.c.l.b16 %v7419
      %v7486 = vunpack.c.l.b16 %v7420
      %v7487 = vunpack.c.l.b16 %v7421
      %v7488 = vunpack.c.l.b16 %v7422
      %v7489 = vunpack.c.l.b16 %v7423
      %v7490 = vunpack.c.l.b16 %v7424
      %v7491 = vunpack.c.l.b16 %v7425
      %v7492 = vunpack.c.l.b16 %v7426
      %v7493 = vunpack.c.l.b16 %v7427
      %v7494 = vunpack.c.l.b16 %v7428
      %v7495 = vunpack.c.l.b16 %v7429
      %v7496 = vunpack.c.l.b16 %v7430
      %v7497 = vunpack.c.l.b16 %v7431
      %v7498 = vunpack.c.l.b16 %v7432
      %v7499 = vunpack.c.l.b16 %v7433
      %v7500 = vunpack.c.l.b16 %v7434
      %v7501 = vunpack.c.l.b16 %v7435
      %v7502 = vunpack.c.l.b16 %v7436
      %v7503 = vunpack.c.l.b16 %v7437
      %v7504 = vunpack.c.l.b16 %v7438
      %v7505 = vunpack.c.l.b16 %v7439
      %v7506 = vunpack.c.l.b16 %v7440
      %v7507 = vunpack.c.l.b16 %v7441
      %v7508 = vunpack.c.l.b16 %v7442
      %v7509 = vunpack.c.l.b16 %v7443
      %v7510 = vunpack.c.l.b16 %v7444
      %v7511 = vunpack.c.l.b16 %v7445
      %v7512 = vunpack.c.l.b16 %v7446
      %v7513 = vunpack.c.l.b16 %v7447
      %v7514 = vpack.c.b16 %v7483, %v7482
      %v7515 = vpack.c.b16 %v7485, %v7484
      %v7516 = vpack.c.b16 %v7487, %v7486
      %v7517 = vpack.c.b16 %v7489, %v7488
      %v7518 = vpack.c.b16 %v7491, %v7490
      %v7519 = vpack.c.b16 %v7493, %v7492
      %v7520 = vpack.c.b16 %v7495, %v7494
      %v7521 = vpack.c.b16 %v7497, %v7496
      %v7522 = vpack.c.b16 %v7499, %v7498
      %v7523 = vpack.c.b16 %v7501, %v7500
      %v7524 = vpack.c.b16 %v7503, %v7502
      %v7525 = vpack.c.b16 %v7505, %v7504
      %v7526 = vpack.c.b16 %v7507, %v7506
      %v7527 = vpack.c.b16 %v7509, %v7508
      %v7528 = vpack.c.b16 %v7511, %v7510
      %v7529 = vpack.c.b16 %v7513, %v7512
      %v7531 = vsel %vm6456, %v7514, 0
      %v7534 = vsel %vm6456, %v7515, 0
      %v7537 = vsel %vm6456, %v7516, 0
      %v7540 = vsel %vm6456, %v7517, 0
      %v7543 = vsel %vm6456, %v7518, 0
      %v7546 = vsel %vm6456, %v7519, 0
      %v7549 = vsel %vm6456, %v7520, 0
      %v7552 = vsel %vm6456, %v7521, 0
      %v7555 = vsel %vm6456, %v7522, 0
      %v7558 = vsel %vm6456, %v7523, 0
      %v7561 = vsel %vm6456, %v7524, 0
      %v7564 = vsel %vm6456, %v7525, 0
      %v7567 = vsel %vm6456, %v7526, 0
      %v7570 = vsel %vm6456, %v7527, 0
      %v7573 = vsel %vm6456, %v7528, 0
      %v7576 = vsel %vm6456, %v7529, 0
      %v7579 = vsel %vm6505, %v7449, 0
      %7581 = vmatprep.subr.bf16.mxu0 0
      %7582 = vmatpush1.bf16.msra.mxu0 %v7579
      %7583 = vmatprep.subr.bf16.mxu0 0
      %7584 = vmatpush1.bf16.msra.mxu0 0
      %7585 = vmatprep.subr.bf16.mxu0 0
      %7586 = vmatpush1.bf16.msra.mxu0 0
      %7587 = vmatprep.subr.bf16.mxu0 0
      %7588 = vmatpush1.bf16.msra.mxu0 0
      %7589 = vmatprep.subr.bf16.mxu0 0
      %7590 = vmatpush1.bf16.msra.mxu0 0
      %7591 = vmatprep.subr.bf16.mxu0 0
      %7592 = vmatpush1.bf16.msra.mxu0 0
      %7593 = vmatprep.subr.bf16.mxu0 0
      %7594 = vmatpush1.bf16.msra.mxu0 0
      %7595 = vmatprep.subr.bf16.mxu0 0
      %7596 = vmatpush1.bf16.msra.mxu0 0
      %7597 = vmatprep.subr.bf16.mxu0 0
      %7598 = vmatpush1.bf16.msra.mxu0 0
      %7599 = vmatprep.subr.bf16.mxu0 0
      %7600 = vmatpush1.bf16.msra.mxu0 0
      %7601 = vmatprep.subr.bf16.mxu0 0
      %7602 = vmatpush1.bf16.msra.mxu0 0
      %7603 = vmatprep.subr.bf16.mxu0 0
      %7604 = vmatpush1.bf16.msra.mxu0 0
      %7605 = vmatprep.subr.bf16.mxu0 0
      %7606 = vmatpush1.bf16.msra.mxu0 0
      %7607 = vmatprep.subr.bf16.mxu0 0
      %7608 = vmatpush1.bf16.msra.mxu0 0
      %7609 = vmatprep.subr.bf16.mxu0 0
      %7610 = vmatpush1.bf16.msra.mxu0 0
      %7611 = vmatprep.subr.bf16.mxu0 0
      %7612 = vmatpush1.bf16.msra.mxu0 0
      %7613 = vmatprep.mubr.bf16.mxu0 0
      %7614 = vmatmul.mubr.bf16.gmra.mrb[0].mxu0 %v7531
      %v7615 = vpop.f32.mrb[0].mxu0
      %v7616 = vadd.f32 0.0, %v7615
      %v7617 = vpop.f32.mrb[0].mxu0
      %v7618 = vpop.f32.mrb[0].mxu0
      %v7619 = vadd.f32 0.0, %v7618
      %v7620 = vpop.f32.mrb[0].mxu0
      %7621 = vmatprep.mubr.bf16.mxu0 0
      %7622 = vmatmul.mubr.bf16.gmra.mrb[0].mxu0 %v7534
      %v7623 = vpop.f32.mrb[0].mxu0
      %v7624 = vadd.f32 0.0, %v7623
      %v7625 = vpop.f32.mrb[0].mxu0
      %v7626 = vpop.f32.mrb[0].mxu0
      %v7627 = vadd.f32 0.0, %v7626
      %v7628 = vpop.f32.mrb[0].mxu0
      %7629 = vmatprep.mubr.bf16.mxu0 0
      %7630 = vmatmul.mubr.bf16.gmra.mrb[0].mxu0 %v7537
      %v7631 = vpop.f32.mrb[0].mxu0
      %v7632 = vadd.f32 0.0, %v7631
      %v7633 = vpop.f32.mrb[0].mxu0
      %v7634 = vpop.f32.mrb[0].mxu0
      %v7635 = vadd.f32 0.0, %v7634
      %v7636 = vpop.f32.mrb[0].mxu0
      %7637 = vmatprep.mubr.bf16.mxu0 0
      %7638 = vmatmul.mubr.bf16.gmra.mrb[0].mxu0 %v7540
      %v7639 = vpop.f32.mrb[0].mxu0
      %v7640 = vadd.f32 0.0, %v7639
      %v7641 = vpop.f32.mrb[0].mxu0
      %v7642 = vpop.f32.mrb[0].mxu0
      %v7643 = vadd.f32 0.0, %v7642
      %v7644 = vpop.f32.mrb[0].mxu0
      %7645 = vmatprep.mubr.bf16.mxu0 0
      %7646 = vmatmul.mubr.bf16.gmra.mrb[0].mxu0 %v7543
      %v7647 = vpop.f32.mrb[0].mxu0
      %v7648 = vadd.f32 0.0, %v7647
      %v7649 = vpop.f32.mrb[0].mxu0
      %v7650 = vpop.f32.mrb[0].mxu0
      %v7651 = vadd.f32 0.0, %v7650
      %v7652 = vpop.f32.mrb[0].mxu0
      %7653 = vmatprep.mubr.bf16.mxu0 0
      %7654 = vmatmul.mubr.bf16.gmra.mrb[0].mxu0 %v7546
      %v7655 = vpop.f32.mrb[0].mxu0
      %v7656 = vadd.f32 0.0, %v7655
      %v7657 = vpop.f32.mrb[0].mxu0
      %v7658 = vpop.f32.mrb[0].mxu0
      %v7659 = vadd.f32 0.0, %v7658
      %v7660 = vpop.f32.mrb[0].mxu0
      %7661 = vmatprep.mubr.bf16.mxu0 0
      %7662 = vmatmul.mubr.bf16.gmra.mrb[0].mxu0 %v7549
      %v7663 = vpop.f32.mrb[0].mxu0
      %v7664 = vadd.f32 0.0, %v7663
      %v7665 = vpop.f32.mrb[0].mxu0
      %v7666 = vpop.f32.mrb[0].mxu0
      %v7667 = vadd.f32 0.0, %v7666
      %v7668 = vpop.f32.mrb[0].mxu0
      %7669 = vmatprep.mubr.bf16.mxu0 0
      %7670 = vmatmul.mubr.bf16.gmra.mrb[0].mxu0 %v7552
      %v7671 = vpop.f32.mrb[0].mxu0
      %v7672 = vadd.f32 0.0, %v7671
      %v7673 = vpop.f32.mrb[0].mxu0
      %v7674 = vpop.f32.mrb[0].mxu0
      %v7675 = vadd.f32 0.0, %v7674
      %v7676 = vpop.f32.mrb[0].mxu0
      %7677 = vmatprep.mubr.bf16.mxu0 0
      %7678 = vmatmul.mubr.bf16.gmra.mrb[0].mxu0 %v7555
      %v7679 = vpop.f32.mrb[0].mxu0
      %v7680 = vadd.f32 0.0, %v7679
      %v7681 = vpop.f32.mrb[0].mxu0
      %v7682 = vpop.f32.mrb[0].mxu0
      %v7683 = vadd.f32 0.0, %v7682
      %v7684 = vpop.f32.mrb[0].mxu0
      %7685 = vmatprep.mubr.bf16.mxu0 0
      %7686 = vmatmul.mubr.bf16.gmra.mrb[0].mxu0 %v7558
      %v7687 = vpop.f32.mrb[0].mxu0
      %v7688 = vadd.f32 0.0, %v7687
      %v7689 = vpop.f32.mrb[0].mxu0
      %v7690 = vpop.f32.mrb[0].mxu0
      %v7691 = vadd.f32 0.0, %v7690
      %v7692 = vpop.f32.mrb[0].mxu0
      %7693 = vmatprep.mubr.bf16.mxu0 0
      %7694 = vmatmul.mubr.bf16.gmra.mrb[0].mxu0 %v7561
      %v7695 = vpop.f32.mrb[0].mxu0
      %v7696 = vadd.f32 0.0, %v7695
      %v7697 = vpop.f32.mrb[0].mxu0
      %v7698 = vpop.f32.mrb[0].mxu0
      %v7699 = vadd.f32 0.0, %v7698
      %v7700 = vpop.f32.mrb[0].mxu0
      %7701 = vmatprep.mubr.bf16.mxu0 0
      %7702 = vmatmul.mubr.bf16.gmra.mrb[0].mxu0 %v7564
      %v7703 = vpop.f32.mrb[0].mxu0
      %v7704 = vadd.f32 0.0, %v7703
      %v7705 = vpop.f32.mrb[0].mxu0
      %v7706 = vpop.f32.mrb[0].mxu0
      %v7707 = vadd.f32 0.0, %v7706
      %v7708 = vpop.f32.mrb[0].mxu0
      %7709 = vmatprep.mubr.bf16.mxu0 0
      %7710 = vmatmul.mubr.bf16.gmra.mrb[0].mxu0 %v7567
      %v7711 = vpop.f32.mrb[0].mxu0
      %v7712 = vadd.f32 0.0, %v7711
      %v7713 = vpop.f32.mrb[0].mxu0
      %v7714 = vpop.f32.mrb[0].mxu0
      %v7715 = vadd.f32 0.0, %v7714
      %v7716 = vpop.f32.mrb[0].mxu0
      %7717 = vmatprep.mubr.bf16.mxu0 0
      %7718 = vmatmul.mubr.bf16.gmra.mrb[0].mxu0 %v7570
      %v7719 = vpop.f32.mrb[0].mxu0
      %v7720 = vadd.f32 0.0, %v7719
      %v7721 = vpop.f32.mrb[0].mxu0
      %v7722 = vpop.f32.mrb[0].mxu0
      %v7723 = vadd.f32 0.0, %v7722
      %v7724 = vpop.f32.mrb[0].mxu0
      %7725 = vmatprep.mubr.bf16.mxu0 0
      %7726 = vmatmul.mubr.bf16.gmra.mrb[0].mxu0 %v7573
      %v7727 = vpop.f32.mrb[0].mxu0
      %v7728 = vadd.f32 0.0, %v7727
      %v7729 = vpop.f32.mrb[0].mxu0
      %v7730 = vpop.f32.mrb[0].mxu0
      %v7731 = vadd.f32 0.0, %v7730
      %v7732 = vpop.f32.mrb[0].mxu0
      %7733 = vmatprep.mubr.bf16.mxu0 0
      %7734 = vmatmul.mubr.bf16.gmra.mrb[0].mxu0 %v7576
      %v7735 = vpop.f32.mrb[0].mxu0
      %v7736 = vadd.f32 0.0, %v7735
      %v7737 = vpop.f32.mrb[0].mxu0
      %v7738 = vpop.f32.mrb[0].mxu0
      %v7739 = vadd.f32 0.0, %v7738
      %v7740 = vpop.f32.mrb[0].mxu0
      %7741 = vdwg.mxu0
      %v7742 = vadd.f32 %v7384, %v7616
      %v7743 = vadd.f32 %v7385, %v7619
      %v7744 = vadd.f32 %v7386, %v7624
      %v7745 = vadd.f32 %v7387, %v7627
      %v7746 = vadd.f32 %v7388, %v7632
      %v7747 = vadd.f32 %v7389, %v7635
      %v7748 = vadd.f32 %v7390, %v7640
      %v7749 = vadd.f32 %v7391, %v7643
      %v7750 = vadd.f32 %v7392, %v7648
      %v7751 = vadd.f32 %v7393, %v7651
      %v7752 = vadd.f32 %v7394, %v7656
      %v7753 = vadd.f32 %v7395, %v7659
      %v7754 = vadd.f32 %v7396, %v7664
      %v7755 = vadd.f32 %v7397, %v7667
      %v7756 = vadd.f32 %v7398, %v7672
      %v7757 = vadd.f32 %v7399, %v7675
      %v7758 = vadd.f32 %v7400, %v7680
      %v7759 = vadd.f32 %v7401, %v7683
      %v7760 = vadd.f32 %v7402, %v7688
      %v7761 = vadd.f32 %v7403, %v7691
      %v7762 = vadd.f32 %v7404, %v7696
      %v7763 = vadd.f32 %v7405, %v7699
      %v7764 = vadd.f32 %v7406, %v7704
      %v7765 = vadd.f32 %v7407, %v7707
      %v7766 = vadd.f32 %v7408, %v7712
      %v7767 = vadd.f32 %v7409, %v7715
      %v7768 = vadd.f32 %v7410, %v7720
      %v7769 = vadd.f32 %v7411, %v7723
      %v7770 = vadd.f32 %v7412, %v7728
      %v7771 = vadd.f32 %v7413, %v7731
      %v7772 = vadd.f32 %v7414, %v7736
      %v7773 = vadd.f32 %v7415, %v7739
      %v7774 = vld [vmem:[%s5856] sm:$0xf]
      %v7775 = vld [vmem:[%s5856 + $0x4] sm:$0xf]
      %v7776 = vld [vmem:[%s5856 + $0x8] sm:$0x1]
      %v7777 = vld [vmem:[%s5856 + $0xc] sm:$0xf]
      %v7778 = vld [vmem:[%s5856 + $0x10] sm:$0xf]
      %v7779 = vld [vmem:[%s5856 + $0x14] sm:$0x1]
      %v7780 = vld [vmem:[%s5856 + $0x18] sm:$0xf]
      %v7781 = vld [vmem:[%s5856 + $0x1c] sm:$0xf]
      %v7782 = vld [vmem:[%s5856 + $0x20] sm:$0x1]
      %v7783 = vld [vmem:[%s5856 + $0x24] sm:$0xf]
      %v7784 = vld [vmem:[%s5856 + $0x28] sm:$0xf]
      %v7785 = vld [vmem:[%s5856 + $0x2c] sm:$0x1]
      %v7786 = vld [vmem:[%s5856 + $0x30] sm:$0xf]
      %v7787 = vld [vmem:[%s5856 + $0x34] sm:$0xf]
      %v7788 = vld [vmem:[%s5856 + $0x38] sm:$0x1]
      %v7789 = vld [vmem:[%s5856 + $0x3c] sm:$0xf]
      %v7790 = vld [vmem:[%s5856 + $0x40] sm:$0xf]
      %v7791 = vld [vmem:[%s5856 + $0x44] sm:$0x1]
      %v7792 = vld [vmem:[%s5856 + $0x48] sm:$0xf]
      %v7793 = vld [vmem:[%s5856 + $0x4c] sm:$0xf]
      %v7794 = vld [vmem:[%s5856 + $0x50] sm:$0x1]
      %v7795 = vld [vmem:[%s5856 + $0x54] sm:$0xf]
      %v7796 = vld [vmem:[%s5856 + $0x58] sm:$0xf]
      %v7797 = vld [vmem:[%s5856 + $0x5c] sm:$0x1]
      %v7798 = vld [vmem:[%s5856 + $0x60] sm:$0xf]
      %v7799 = vld [vmem:[%s5856 + $0x64] sm:$0xf]
      %v7800 = vld [vmem:[%s5856 + $0x68] sm:$0x1]
      %v7801 = vld [vmem:[%s5856 + $0x6c] sm:$0xf]
      %v7802 = vld [vmem:[%s5856 + $0x70] sm:$0xf]
      %v7803 = vld [vmem:[%s5856 + $0x74] sm:$0x1]
      %v7804 = vld [vmem:[%s5856 + $0x78] sm:$0xf]
      %v7805 = vld [vmem:[%s5856 + $0x7c] sm:$0xf]
      %v7806 = vld [vmem:[%s5856 + $0x80] sm:$0x1]
      %v7807 = vld [vmem:[%s5856 + $0x84] sm:$0xf]
      %v7808 = vld [vmem:[%s5856 + $0x88] sm:$0xf]
      %v7809 = vld [vmem:[%s5856 + $0x8c] sm:$0x1]
      %v7810 = vld [vmem:[%s5856 + $0x90] sm:$0xf]
      %v7811 = vld [vmem:[%s5856 + $0x94] sm:$0xf]
      %v7812 = vld [vmem:[%s5856 + $0x98] sm:$0x1]
      %v7813 = vld [vmem:[%s5856 + $0x9c] sm:$0xf]
      %v7814 = vld [vmem:[%s5856 + $0xa0] sm:$0xf]
      %v7815 = vld [vmem:[%s5856 + $0xa4] sm:$0x1]
      %v7816 = vld [vmem:[%s5856 + $0xa8] sm:$0xf]
      %v7817 = vld [vmem:[%s5856 + $0xac] sm:$0xf]
      %v7818 = vld [vmem:[%s5856 + $0xb0] sm:$0x1]
      %v7819 = vld [vmem:[%s5856 + $0xb4] sm:$0xf]
      %v7820 = vld [vmem:[%s5856 + $0xb8] sm:$0xf]
      %v7821 = vld [vmem:[%s5856 + $0xbc] sm:$0x1]
      %v7823 = vshrl.u32 %v7774, 16
      %v7825 = vrot.slane %v7823, 4
      %v7826 = vshll.u32 %v7774, 16
      %v7828 = vrot.slane %v7826, 5
      %v7829 = vor.u32 %v7825, %v7828
      %v7830 = vrot.slane %v7829, 4
      %v7832 = vshll.u32 %v7775, 16
      %v7834 = vrot.slane %v7832, 5
      %v7835 = vsel %vm862, %v7830, %v7834
      %v7836 = vshrl.u32 %v7775, 16
      %v7838 = vrot.slane %v7836, 4
      %v7839 = vor.u32 %v7838, %v7834
      %v7840 = vrot.slane %v7839, 4
      %v7842 = vshll.u32 %v7776, 16
      %v7844 = vrot.slane %v7842, 5
      %v7845 = vsel %vm862, %v7840, %v7844
      %v7847 = vshrl.u32 %v7777, 16
      %v7849 = vrot.slane %v7847, 4
      %v7850 = vshll.u32 %v7777, 16
      %v7852 = vrot.slane %v7850, 5
      %v7853 = vor.u32 %v7849, %v7852
      %v7854 = vrot.slane %v7853, 4
      %v7856 = vshll.u32 %v7778, 16
      %v7858 = vrot.slane %v7856, 5
      %v7859 = vsel %vm862, %v7854, %v7858
      %v7860 = vshrl.u32 %v7778, 16
      %v7862 = vrot.slane %v7860, 4
      %v7863 = vor.u32 %v7862, %v7858
      %v7864 = vrot.slane %v7863, 4
      %v7866 = vshll.u32 %v7779, 16
      %v7868 = vrot.slane %v7866, 5
      %v7869 = vsel %vm862, %v7864, %v7868
      %v7871 = vshrl.u32 %v7780, 16
      %v7873 = vrot.slane %v7871, 4
      %v7874 = vshll.u32 %v7780, 16
      %v7876 = vrot.slane %v7874, 5
      %v7877 = vor.u32 %v7873, %v7876
      %v7878 = vrot.slane %v7877, 4
      %v7880 = vshll.u32 %v7781, 16
      %v7882 = vrot.slane %v7880, 5
      %v7883 = vsel %vm862, %v7878, %v7882
      %v7884 = vshrl.u32 %v7781, 16
      %v7886 = vrot.slane %v7884, 4
      %v7887 = vor.u32 %v7886, %v7882
      %v7888 = vrot.slane %v7887, 4
      %v7890 = vshll.u32 %v7782, 16
      %v7892 = vrot.slane %v7890, 5
      %v7893 = vsel %vm862, %v7888, %v7892
      %v7895 = vshrl.u32 %v7783, 16
      %v7897 = vrot.slane %v7895, 4
      %v7898 = vshll.u32 %v7783, 16
      %v7900 = vrot.slane %v7898, 5
      %v7901 = vor.u32 %v7897, %v7900
      %v7902 = vrot.slane %v7901, 4
      %v7904 = vshll.u32 %v7784, 16
      %v7906 = vrot.slane %v7904, 5
      %v7907 = vsel %vm862, %v7902, %v7906
      %v7908 = vshrl.u32 %v7784, 16
      %v7910 = vrot.slane %v7908, 4
      %v7911 = vor.u32 %v7910, %v7906
      %v7912 = vrot.slane %v7911, 4
      %v7914 = vshll.u32 %v7785, 16
      %v7916 = vrot.slane %v7914, 5
      %v7917 = vsel %vm862, %v7912, %v7916
      %v7919 = vshrl.u32 %v7786, 16
      %v7921 = vrot.slane %v7919, 4
      %v7922 = vshll.u32 %v7786, 16
      %v7924 = vrot.slane %v7922, 5
      %v7925 = vor.u32 %v7921, %v7924
      %v7926 = vrot.slane %v7925, 4
      %v7928 = vshll.u32 %v7787, 16
      %v7930 = vrot.slane %v7928, 5
      %v7931 = vsel %vm862, %v7926, %v7930
      %v7932 = vshrl.u32 %v7787, 16
      %v7934 = vrot.slane %v7932, 4
      %v7935 = vor.u32 %v7934, %v7930
      %v7936 = vrot.slane %v7935, 4
      %v7938 = vshll.u32 %v7788, 16
      %v7940 = vrot.slane %v7938, 5
      %v7941 = vsel %vm862, %v7936, %v7940
      %v7943 = vshrl.u32 %v7789, 16
      %v7945 = vrot.slane %v7943, 4
      %v7946 = vshll.u32 %v7789, 16
      %v7948 = vrot.slane %v7946, 5
      %v7949 = vor.u32 %v7945, %v7948
      %v7950 = vrot.slane %v7949, 4
      %v7952 = vshll.u32 %v7790, 16
      %v7954 = vrot.slane %v7952, 5
      %v7955 = vsel %vm862, %v7950, %v7954
      %v7956 = vshrl.u32 %v7790, 16
      %v7958 = vrot.slane %v7956, 4
      %v7959 = vor.u32 %v7958, %v7954
      %v7960 = vrot.slane %v7959, 4
      %v7962 = vshll.u32 %v7791, 16
      %v7964 = vrot.slane %v7962, 5
      %v7965 = vsel %vm862, %v7960, %v7964
      %v7967 = vshrl.u32 %v7792, 16
      %v7969 = vrot.slane %v7967, 4
      %v7970 = vshll.u32 %v7792, 16
      %v7972 = vrot.slane %v7970, 5
      %v7973 = vor.u32 %v7969, %v7972
      %v7974 = vrot.slane %v7973, 4
      %v7976 = vshll.u32 %v7793, 16
      %v7978 = vrot.slane %v7976, 5
      %v7979 = vsel %vm862, %v7974, %v7978
      %v7980 = vshrl.u32 %v7793, 16
      %v7982 = vrot.slane %v7980, 4
      %v7983 = vor.u32 %v7982, %v7978
      %v7984 = vrot.slane %v7983, 4
      %v7986 = vshll.u32 %v7794, 16
      %v7988 = vrot.slane %v7986, 5
      %v7989 = vsel %vm862, %v7984, %v7988
      %v7991 = vshrl.u32 %v7795, 16
      %v7993 = vrot.slane %v7991, 4
      %v7994 = vshll.u32 %v7795, 16
      %v7996 = vrot.slane %v7994, 5
      %v7997 = vor.u32 %v7993, %v7996
      %v7998 = vrot.slane %v7997, 4
      %v8000 = vshll.u32 %v7796, 16
      %v8002 = vrot.slane %v8000, 5
      %v8003 = vsel %vm862, %v7998, %v8002
      %v8004 = vshrl.u32 %v7796, 16
      %v8006 = vrot.slane %v8004, 4
      %v8007 = vor.u32 %v8006, %v8002
      %v8008 = vrot.slane %v8007, 4
      %v8010 = vshll.u32 %v7797, 16
      %v8012 = vrot.slane %v8010, 5
      %v8013 = vsel %vm862, %v8008, %v8012
      %v8015 = vshrl.u32 %v7798, 16
      %v8017 = vrot.slane %v8015, 4
      %v8018 = vshll.u32 %v7798, 16
      %v8020 = vrot.slane %v8018, 5
      %v8021 = vor.u32 %v8017, %v8020
      %v8022 = vrot.slane %v8021, 4
      %v8024 = vshll.u32 %v7799, 16
      %v8026 = vrot.slane %v8024, 5
      %v8027 = vsel %vm862, %v8022, %v8026
      %v8028 = vshrl.u32 %v7799, 16
      %v8030 = vrot.slane %v8028, 4
      %v8031 = vor.u32 %v8030, %v8026
      %v8032 = vrot.slane %v8031, 4
      %v8034 = vshll.u32 %v7800, 16
      %v8036 = vrot.slane %v8034, 5
      %v8037 = vsel %vm862, %v8032, %v8036
      %v8039 = vshrl.u32 %v7801, 16
      %v8041 = vrot.slane %v8039, 4
      %v8042 = vshll.u32 %v7801, 16
      %v8044 = vrot.slane %v8042, 5
      %v8045 = vor.u32 %v8041, %v8044
      %v8046 = vrot.slane %v8045, 4
      %v8048 = vshll.u32 %v7802, 16
      %v8050 = vrot.slane %v8048, 5
      %v8051 = vsel %vm862, %v8046, %v8050
      %v8052 = vshrl.u32 %v7802, 16
      %v8054 = vrot.slane %v8052, 4
      %v8055 = vor.u32 %v8054, %v8050
      %v8056 = vrot.slane %v8055, 4
      %v8058 = vshll.u32 %v7803, 16
      %v8060 = vrot.slane %v8058, 5
      %v8061 = vsel %vm862, %v8056, %v8060
      %v8063 = vshrl.u32 %v7804, 16
      %v8065 = vrot.slane %v8063, 4
      %v8066 = vshll.u32 %v7804, 16
      %v8068 = vrot.slane %v8066, 5
      %v8069 = vor.u32 %v8065, %v8068
      %v8070 = vrot.slane %v8069, 4
      %v8072 = vshll.u32 %v7805, 16
      %v8074 = vrot.slane %v8072, 5
      %v8075 = vsel %vm862, %v8070, %v8074
      %v8076 = vshrl.u32 %v7805, 16
      %v8078 = vrot.slane %v8076, 4
      %v8079 = vor.u32 %v8078, %v8074
      %v8080 = vrot.slane %v8079, 4
      %v8082 = vshll.u32 %v7806, 16
      %v8084 = vrot.slane %v8082, 5
      %v8085 = vsel %vm862, %v8080, %v8084
      %v8087 = vshrl.u32 %v7807, 16
      %v8089 = vrot.slane %v8087, 4
      %v8090 = vshll.u32 %v7807, 16
      %v8092 = vrot.slane %v8090, 5
      %v8093 = vor.u32 %v8089, %v8092
      %v8094 = vrot.slane %v8093, 4
      %v8096 = vshll.u32 %v7808, 16
      %v8098 = vrot.slane %v8096, 5
      %v8099 = vsel %vm862, %v8094, %v8098
      %v8100 = vshrl.u32 %v7808, 16
      %v8102 = vrot.slane %v8100, 4
      %v8103 = vor.u32 %v8102, %v8098
      %v8104 = vrot.slane %v8103, 4
      %v8106 = vshll.u32 %v7809, 16
      %v8108 = vrot.slane %v8106, 5
      %v8109 = vsel %vm862, %v8104, %v8108
      %v8111 = vshrl.u32 %v7810, 16
      %v8113 = vrot.slane %v8111, 4
      %v8114 = vshll.u32 %v7810, 16
      %v8116 = vrot.slane %v8114, 5
      %v8117 = vor.u32 %v8113, %v8116
      %v8118 = vrot.slane %v8117, 4
      %v8120 = vshll.u32 %v7811, 16
      %v8122 = vrot.slane %v8120, 5
      %v8123 = vsel %vm862, %v8118, %v8122
      %v8124 = vshrl.u32 %v7811, 16
      %v8126 = vrot.slane %v8124, 4
      %v8127 = vor.u32 %v8126, %v8122
      %v8128 = vrot.slane %v8127, 4
      %v8130 = vshll.u32 %v7812, 16
      %v8132 = vrot.slane %v8130, 5
      %v8133 = vsel %vm862, %v8128, %v8132
      %v8135 = vshrl.u32 %v7813, 16
      %v8137 = vrot.slane %v8135, 4
      %v8138 = vshll.u32 %v7813, 16
      %v8140 = vrot.slane %v8138, 5
      %v8141 = vor.u32 %v8137, %v8140
      %v8142 = vrot.slane %v8141, 4
      %v8144 = vshll.u32 %v7814, 16
      %v8146 = vrot.slane %v8144, 5
      %v8147 = vsel %vm862, %v8142, %v8146
      %v8148 = vshrl.u32 %v7814, 16
      %v8150 = vrot.slane %v8148, 4
      %v8151 = vor.u32 %v8150, %v8146
      %v8152 = vrot.slane %v8151, 4
      %v8154 = vshll.u32 %v7815, 16
      %v8156 = vrot.slane %v8154, 5
      %v8157 = vsel %vm862, %v8152, %v8156
      %v8159 = vshrl.u32 %v7816, 16
      %v8161 = vrot.slane %v8159, 4
      %v8162 = vshll.u32 %v7816, 16
      %v8164 = vrot.slane %v8162, 5
      %v8165 = vor.u32 %v8161, %v8164
      %v8166 = vrot.slane %v8165, 4
      %v8168 = vshll.u32 %v7817, 16
      %v8170 = vrot.slane %v8168, 5
      %v8171 = vsel %vm862, %v8166, %v8170
      %v8172 = vshrl.u32 %v7817, 16
      %v8174 = vrot.slane %v8172, 4
      %v8175 = vor.u32 %v8174, %v8170
      %v8176 = vrot.slane %v8175, 4
      %v8178 = vshll.u32 %v7818, 16
      %v8180 = vrot.slane %v8178, 5
      %v8181 = vsel %vm862, %v8176, %v8180
      %v8183 = vshrl.u32 %v7819, 16
      %v8185 = vrot.slane %v8183, 4
      %v8186 = vshll.u32 %v7819, 16
      %v8188 = vrot.slane %v8186, 5
      %v8189 = vor.u32 %v8185, %v8188
      %v8190 = vrot.slane %v8189, 4
      %v8192 = vshll.u32 %v7820, 16
      %v8194 = vrot.slane %v8192, 5
      %v8195 = vsel %vm862, %v8190, %v8194
      %v8196 = vshrl.u32 %v7820, 16
      %v8198 = vrot.slane %v8196, 4
      %v8199 = vor.u32 %v8198, %v8194
      %v8200 = vrot.slane %v8199, 4
      %v8202 = vshll.u32 %v7821, 16
      %v8204 = vrot.slane %v8202, 5
      %v8205 = vsel %vm862, %v8200, %v8204
      %s8206 = scalar_lea.vmem %s3, 16
      %v8207 = vld [vmem:[%s8206] sm:$0xf]
      %v8208 = vunpack.c.l.b16 %v7835
      %v8209 = vunpack.c.l.b16 %v7845
      %v8210 = vunpack.c.l.b16 %v7859
      %v8211 = vunpack.c.l.b16 %v7869
      %v8212 = vunpack.c.l.b16 %v7883
      %v8213 = vunpack.c.l.b16 %v7893
      %v8214 = vunpack.c.l.b16 %v7907
      %v8215 = vunpack.c.l.b16 %v7917
      %v8216 = vunpack.c.l.b16 %v7931
      %v8217 = vunpack.c.l.b16 %v7941
      %v8218 = vunpack.c.l.b16 %v7955
      %v8219 = vunpack.c.l.b16 %v7965
      %v8220 = vunpack.c.l.b16 %v7979
      %v8221 = vunpack.c.l.b16 %v7989
      %v8222 = vunpack.c.l.b16 %v8003
      %v8223 = vunpack.c.l.b16 %v8013
      %v8224 = vunpack.c.l.b16 %v8027
      %v8225 = vunpack.c.l.b16 %v8037
      %v8226 = vunpack.c.l.b16 %v8051
      %v8227 = vunpack.c.l.b16 %v8061
      %v8228 = vunpack.c.l.b16 %v8075
      %v8229 = vunpack.c.l.b16 %v8085
      %v8230 = vunpack.c.l.b16 %v8099
      %v8231 = vunpack.c.l.b16 %v8109
      %v8232 = vunpack.c.l.b16 %v8123
      %v8233 = vunpack.c.l.b16 %v8133
      %v8234 = vunpack.c.l.b16 %v8147
      %v8235 = vunpack.c.l.b16 %v8157
      %v8236 = vunpack.c.l.b16 %v8171
      %v8237 = vunpack.c.l.b16 %v8181
      %v8238 = vunpack.c.l.b16 %v8195
      %v8239 = vunpack.c.l.b16 %v8205
      %v8240 = vpack.c.b16 %v8209, %v8208
      %v8241 = vpack.c.b16 %v8211, %v8210
      %v8242 = vpack.c.b16 %v8213, %v8212
      %v8243 = vpack.c.b16 %v8215, %v8214
      %v8244 = vpack.c.b16 %v8217, %v8216
      %v8245 = vpack.c.b16 %v8219, %v8218
      %v8246 = vpack.c.b16 %v8221, %v8220
      %v8247 = vpack.c.b16 %v8223, %v8222
      %v8248 = vpack.c.b16 %v8225, %v8224
      %v8249 = vpack.c.b16 %v8227, %v8226
      %v8250 = vpack.c.b16 %v8229, %v8228
      %v8251 = vpack.c.b16 %v8231, %v8230
      %v8252 = vpack.c.b16 %v8233, %v8232
      %v8253 = vpack.c.b16 %v8235, %v8234
      %v8254 = vpack.c.b16 %v8237, %v8236
      %v8255 = vpack.c.b16 %v8239, %v8238
      %v8257 = vsel %vm6456, %v8240, 0
      %v8260 = vsel %vm6456, %v8241, 0
      %v8263 = vsel %vm6456, %v8242, 0
      %v8266 = vsel %vm6456, %v8243, 0
      %v8269 = vsel %vm6456, %v8244, 0
      %v8272 = vsel %vm6456, %v8245, 0
      %v8275 = vsel %vm6456, %v8246, 0
      %v8278 = vsel %vm6456, %v8247, 0
      %v8281 = vsel %vm6456, %v8248, 0
      %v8284 = vsel %vm6456, %v8249, 0
      %v8287 = vsel %vm6456, %v8250, 0
      %v8290 = vsel %vm6456, %v8251, 0
      %v8293 = vsel %vm6456, %v8252, 0
      %v8296 = vsel %vm6456, %v8253, 0
      %v8299 = vsel %vm6456, %v8254, 0
      %v8302 = vsel %vm6456, %v8255, 0
      %v8305 = vsel %vm6505, %v8207, 0
      %8307 = vmatprep.subr.bf16.mxu0 0
      %8308 = vmatpush1.bf16.msra.mxu0 %v8305
      %8309 = vmatprep.subr.bf16.mxu0 0
      %8310 = vmatpush1.bf16.msra.mxu0 0
      %8311 = vmatprep.subr.bf16.mxu0 0
      %8312 = vmatpush1.bf16.msra.mxu0 0
      %8313 = vmatprep.subr.bf16.mxu0 0
      %8314 = vmatpush1.bf16.msra.mxu0 0
      %8315 = vmatprep.subr.bf16.mxu0 0
      %8316 = vmatpush1.bf16.msra.mxu0 0
      %8317 = vmatprep.subr.bf16.mxu0 0
      %8318 = vmatpush1.bf16.msra.mxu0 0
      %8319 = vmatprep.subr.bf16.mxu0 0
      %8320 = vmatpush1.bf16.msra.mxu0 0
      %8321 = vmatprep.subr.bf16.mxu0 0
      %8322 = vmatpush1.bf16.msra.mxu0 0
      %8323 = vmatprep.subr.bf16.mxu0 0
      %8324 = vmatpush1.bf16.msra.mxu0 0
      %8325 = vmatprep.subr.bf16.mxu0 0
      %8326 = vmatpush1.bf16.msra.mxu0 0
      %8327 = vmatprep.subr.bf16.mxu0 0
      %8328 = vmatpush1.bf16.msra.mxu0 0
      %8329 = vmatprep.subr.bf16.mxu0 0
      %8330 = vmatpush1.bf16.msra.mxu0 0
      %8331 = vmatprep.subr.bf16.mxu0 0
      %8332 = vmatpush1.bf16.msra.mxu0 0
      %8333 = vmatprep.subr.bf16.mxu0 0
      %8334 = vmatpush1.bf16.msra.mxu0 0
      %8335 = vmatprep.subr.bf16.mxu0 0
      %8336 = vmatpush1.bf16.msra.mxu0 0
      %8337 = vmatprep.subr.bf16.mxu0 0
      %8338 = vmatpush1.bf16.msra.mxu0 0
      %8339 = vmatprep.mubr.bf16.mxu0 0
      %8340 = vmatmul.mubr.bf16.gmra.mrb[0].mxu0 %v8257
      %v8341 = vpop.f32.mrb[0].mxu0
      %v8342 = vadd.f32 0.0, %v8341
      %v8343 = vpop.f32.mrb[0].mxu0
      %v8344 = vpop.f32.mrb[0].mxu0
      %v8345 = vadd.f32 0.0, %v8344
      %v8346 = vpop.f32.mrb[0].mxu0
      %8347 = vmatprep.mubr.bf16.mxu0 0
      %8348 = vmatmul.mubr.bf16.gmra.mrb[0].mxu0 %v8260
      %v8349 = vpop.f32.mrb[0].mxu0
      %v8350 = vadd.f32 0.0, %v8349
      %v8351 = vpop.f32.mrb[0].mxu0
      %v8352 = vpop.f32.mrb[0].mxu0
      %v8353 = vadd.f32 0.0, %v8352
      %v8354 = vpop.f32.mrb[0].mxu0
      %8355 = vmatprep.mubr.bf16.mxu0 0
      %8356 = vmatmul.mubr.bf16.gmra.mrb[0].mxu0 %v8263
      %v8357 = vpop.f32.mrb[0].mxu0
      %v8358 = vadd.f32 0.0, %v8357
      %v8359 = vpop.f32.mrb[0].mxu0
      %v8360 = vpop.f32.mrb[0].mxu0
      %v8361 = vadd.f32 0.0, %v8360
      %v8362 = vpop.f32.mrb[0].mxu0
      %8363 = vmatprep.mubr.bf16.mxu0 0
      %8364 = vmatmul.mubr.bf16.gmra.mrb[0].mxu0 %v8266
      %v8365 = vpop.f32.mrb[0].mxu0
      %v8366 = vadd.f32 0.0, %v8365
      %v8367 = vpop.f32.mrb[0].mxu0
      %v8368 = vpop.f32.mrb[0].mxu0
      %v8369 = vadd.f32 0.0, %v8368
      %v8370 = vpop.f32.mrb[0].mxu0
      %8371 = vmatprep.mubr.bf16.mxu0 0
      %8372 = vmatmul.mubr.bf16.gmra.mrb[0].mxu0 %v8269
      %v8373 = vpop.f32.mrb[0].mxu0
      %v8374 = vadd.f32 0.0, %v8373
      %v8375 = vpop.f32.mrb[0].mxu0
      %v8376 = vpop.f32.mrb[0].mxu0
      %v8377 = vadd.f32 0.0, %v8376
      %v8378 = vpop.f32.mrb[0].mxu0
      %8379 = vmatprep.mubr.bf16.mxu0 0
      %8380 = vmatmul.mubr.bf16.gmra.mrb[0].mxu0 %v8272
      %v8381 = vpop.f32.mrb[0].mxu0
      %v8382 = vadd.f32 0.0, %v8381
      %v8383 = vpop.f32.mrb[0].mxu0
      %v8384 = vpop.f32.mrb[0].mxu0
      %v8385 = vadd.f32 0.0, %v8384
      %v8386 = vpop.f32.mrb[0].mxu0
      %8387 = vmatprep.mubr.bf16.mxu0 0
      %8388 = vmatmul.mubr.bf16.gmra.mrb[0].mxu0 %v8275
      %v8389 = vpop.f32.mrb[0].mxu0
      %v8390 = vadd.f32 0.0, %v8389
      %v8391 = vpop.f32.mrb[0].mxu0
      %v8392 = vpop.f32.mrb[0].mxu0
      %v8393 = vadd.f32 0.0, %v8392
      %v8394 = vpop.f32.mrb[0].mxu0
      %8395 = vmatprep.mubr.bf16.mxu0 0
      %8396 = vmatmul.mubr.bf16.gmra.mrb[0].mxu0 %v8278
      %v8397 = vpop.f32.mrb[0].mxu0
      %v8398 = vadd.f32 0.0, %v8397
      %v8399 = vpop.f32.mrb[0].mxu0
      %v8400 = vpop.f32.mrb[0].mxu0
      %v8401 = vadd.f32 0.0, %v8400
      %v8402 = vpop.f32.mrb[0].mxu0
      %8403 = vmatprep.mubr.bf16.mxu0 0
      %8404 = vmatmul.mubr.bf16.gmra.mrb[0].mxu0 %v8281
      %v8405 = vpop.f32.mrb[0].mxu0
      %v8406 = vadd.f32 0.0, %v8405
      %v8407 = vpop.f32.mrb[0].mxu0
      %v8408 = vpop.f32.mrb[0].mxu0
      %v8409 = vadd.f32 0.0, %v8408
      %v8410 = vpop.f32.mrb[0].mxu0
      %8411 = vmatprep.mubr.bf16.mxu0 0
      %8412 = vmatmul.mubr.bf16.gmra.mrb[0].mxu0 %v8284
      %v8413 = vpop.f32.mrb[0].mxu0
      %v8414 = vadd.f32 0.0, %v8413
      %v8415 = vpop.f32.mrb[0].mxu0
      %v8416 = vpop.f32.mrb[0].mxu0
      %v8417 = vadd.f32 0.0, %v8416
      %v8418 = vpop.f32.mrb[0].mxu0
      %8419 = vmatprep.mubr.bf16.mxu0 0
      %8420 = vmatmul.mubr.bf16.gmra.mrb[0].mxu0 %v8287
      %v8421 = vpop.f32.mrb[0].mxu0
      %v8422 = vadd.f32 0.0, %v8421
      %v8423 = vpop.f32.mrb[0].mxu0
      %v8424 = vpop.f32.mrb[0].mxu0
      %v8425 = vadd.f32 0.0, %v8424
      %v8426 = vpop.f32.mrb[0].mxu0
      %8427 = vmatprep.mubr.bf16.mxu0 0
      %8428 = vmatmul.mubr.bf16.gmra.mrb[0].mxu0 %v8290
      %v8429 = vpop.f32.mrb[0].mxu0
      %v8430 = vadd.f32 0.0, %v8429
      %v8431 = vpop.f32.mrb[0].mxu0
      %v8432 = vpop.f32.mrb[0].mxu0
      %v8433 = vadd.f32 0.0, %v8432
      %v8434 = vpop.f32.mrb[0].mxu0
      %8435 = vmatprep.mubr.bf16.mxu0 0
      %8436 = vmatmul.mubr.bf16.gmra.mrb[0].mxu0 %v8293
      %v8437 = vpop.f32.mrb[0].mxu0
      %v8438 = vadd.f32 0.0, %v8437
      %v8439 = vpop.f32.mrb[0].mxu0
      %v8440 = vpop.f32.mrb[0].mxu0
      %v8441 = vadd.f32 0.0, %v8440
      %v8442 = vpop.f32.mrb[0].mxu0
      %8443 = vmatprep.mubr.bf16.mxu0 0
      %8444 = vmatmul.mubr.bf16.gmra.mrb[0].mxu0 %v8296
      %v8445 = vpop.f32.mrb[0].mxu0
      %v8446 = vadd.f32 0.0, %v8445
      %v8447 = vpop.f32.mrb[0].mxu0
      %v8448 = vpop.f32.mrb[0].mxu0
      %v8449 = vadd.f32 0.0, %v8448
      %v8450 = vpop.f32.mrb[0].mxu0
      %8451 = vmatprep.mubr.bf16.mxu0 0
      %8452 = vmatmul.mubr.bf16.gmra.mrb[0].mxu0 %v8299
      %v8453 = vpop.f32.mrb[0].mxu0
      %v8454 = vadd.f32 0.0, %v8453
      %v8455 = vpop.f32.mrb[0].mxu0
      %v8456 = vpop.f32.mrb[0].mxu0
      %v8457 = vadd.f32 0.0, %v8456
      %v8458 = vpop.f32.mrb[0].mxu0
      %8459 = vmatprep.mubr.bf16.mxu0 0
      %8460 = vmatmul.mubr.bf16.gmra.mrb[0].mxu0 %v8302
      %v8461 = vpop.f32.mrb[0].mxu0
      %v8462 = vadd.f32 0.0, %v8461
      %v8463 = vpop.f32.mrb[0].mxu0
      %v8464 = vpop.f32.mrb[0].mxu0
      %v8465 = vadd.f32 0.0, %v8464
      %v8466 = vpop.f32.mrb[0].mxu0
      %8467 = vdwg.mxu0
      %v8468 = vadd.f32 %v7742, %v8342
      %v8469 = vadd.f32 %v7743, %v8345
      %v8470 = vadd.f32 %v7744, %v8350
      %v8471 = vadd.f32 %v7745, %v8353
      %v8472 = vadd.f32 %v7746, %v8358
      %v8473 = vadd.f32 %v7747, %v8361
      %v8474 = vadd.f32 %v7748, %v8366
      %v8475 = vadd.f32 %v7749, %v8369
      %v8476 = vadd.f32 %v7750, %v8374
      %v8477 = vadd.f32 %v7751, %v8377
      %v8478 = vadd.f32 %v7752, %v8382
      %v8479 = vadd.f32 %v7753, %v8385
      %v8480 = vadd.f32 %v7754, %v8390
      %v8481 = vadd.f32 %v7755, %v8393
      %v8482 = vadd.f32 %v7756, %v8398
      %v8483 = vadd.f32 %v7757, %v8401
      %v8484 = vadd.f32 %v7758, %v8406
      %v8485 = vadd.f32 %v7759, %v8409
      %v8486 = vadd.f32 %v7760, %v8414
      %v8487 = vadd.f32 %v7761, %v8417
      %v8488 = vadd.f32 %v7762, %v8422
      %v8489 = vadd.f32 %v7763, %v8425
      %v8490 = vadd.f32 %v7764, %v8430
      %v8491 = vadd.f32 %v7765, %v8433
      %v8492 = vadd.f32 %v7766, %v8438
      %v8493 = vadd.f32 %v7767, %v8441
      %v8494 = vadd.f32 %v7768, %v8446
      %v8495 = vadd.f32 %v7769, %v8449
      %v8496 = vadd.f32 %v7770, %v8454
      %v8497 = vadd.f32 %v7771, %v8457
      %v8498 = vadd.f32 %v7772, %v8462
      %v8499 = vadd.f32 %v7773, %v8465
      %v8500 = vld [vmem:[%s5856] sm:$0xe]
      %v8501 = vld [vmem:[%s5856 + $0xc] sm:$0xe]
      %v8502 = vld [vmem:[%s5856 + $0x18] sm:$0xe]
      %v8503 = vld [vmem:[%s5856 + $0x24] sm:$0xe]
      %v8504 = vld [vmem:[%s5856 + $0x30] sm:$0xe]
      %v8505 = vld [vmem:[%s5856 + $0x3c] sm:$0xe]
      %v8506 = vld [vmem:[%s5856 + $0x48] sm:$0xe]
      %v8507 = vld [vmem:[%s5856 + $0x54] sm:$0xe]
      %v8508 = vld [vmem:[%s5856 + $0x60] sm:$0xe]
      %v8509 = vld [vmem:[%s5856 + $0x6c] sm:$0xe]
      %v8510 = vld [vmem:[%s5856 + $0x78] sm:$0xe]
      %v8511 = vld [vmem:[%s5856 + $0x84] sm:$0xe]
      %v8512 = vld [vmem:[%s5856 + $0x90] sm:$0xe]
      %v8513 = vld [vmem:[%s5856 + $0x9c] sm:$0xe]
      %v8514 = vld [vmem:[%s5856 + $0xa8] sm:$0xe]
      %v8515 = vld [vmem:[%s5856 + $0xb4] sm:$0xe]
      %v8564 = vrot.slane %v8500, 5
      %v8565 = vrot.slane %v8564, 4
      %v8566 = vrot.slane %v7775, 5
      %v8567 = vsel %vm1853, %v8565, %v8566
      %v8568 = vrot.slane %v8566, 4
      %v8569 = vrot.slane %v7776, 5
      %v8570 = vsel %vm1853, %v8568, %v8569
      %v8571 = vrot.slane %v8501, 5
      %v8572 = vrot.slane %v8571, 4
      %v8573 = vrot.slane %v7778, 5
      %v8574 = vsel %vm1853, %v8572, %v8573
      %v8575 = vrot.slane %v8573, 4
      %v8576 = vrot.slane %v7779, 5
      %v8577 = vsel %vm1853, %v8575, %v8576
      %v8578 = vrot.slane %v8502, 5
      %v8579 = vrot.slane %v8578, 4
      %v8580 = vrot.slane %v7781, 5
      %v8581 = vsel %vm1853, %v8579, %v8580
      %v8582 = vrot.slane %v8580, 4
      %v8583 = vrot.slane %v7782, 5
      %v8584 = vsel %vm1853, %v8582, %v8583
      %v8585 = vrot.slane %v8503, 5
      %v8586 = vrot.slane %v8585, 4
      %v8587 = vrot.slane %v7784, 5
      %v8588 = vsel %vm1853, %v8586, %v8587
      %v8589 = vrot.slane %v8587, 4
      %v8590 = vrot.slane %v7785, 5
      %v8591 = vsel %vm1853, %v8589, %v8590
      %v8592 = vrot.slane %v8504, 5
      %v8593 = vrot.slane %v8592, 4
      %v8594 = vrot.slane %v7787, 5
      %v8595 = vsel %vm1853, %v8593, %v8594
      %v8596 = vrot.slane %v8594, 4
      %v8597 = vrot.slane %v7788, 5
      %v8598 = vsel %vm1853, %v8596, %v8597
      %v8599 = vrot.slane %v8505, 5
      %v8600 = vrot.slane %v8599, 4
      %v8601 = vrot.slane %v7790, 5
      %v8602 = vsel %vm1853, %v8600, %v8601
      %v8603 = vrot.slane %v8601, 4
      %v8604 = vrot.slane %v7791, 5
      %v8605 = vsel %vm1853, %v8603, %v8604
      %v8606 = vrot.slane %v8506, 5
      %v8607 = vrot.slane %v8606, 4
      %v8608 = vrot.slane %v7793, 5
      %v8609 = vsel %vm1853, %v8607, %v8608
      %v8610 = vrot.slane %v8608, 4
      %v8611 = vrot.slane %v7794, 5
      %v8612 = vsel %vm1853, %v8610, %v8611
      %v8613 = vrot.slane %v8507, 5
      %v8614 = vrot.slane %v8613, 4
      %v8615 = vrot.slane %v7796, 5
      %v8616 = vsel %vm1853, %v8614, %v8615
      %v8617 = vrot.slane %v8615, 4
      %v8618 = vrot.slane %v7797, 5
      %v8619 = vsel %vm1853, %v8617, %v8618
      %v8620 = vrot.slane %v8508, 5
      %v8621 = vrot.slane %v8620, 4
      %v8622 = vrot.slane %v7799, 5
      %v8623 = vsel %vm1853, %v8621, %v8622
      %v8624 = vrot.slane %v8622, 4
      %v8625 = vrot.slane %v7800, 5
      %v8626 = vsel %vm1853, %v8624, %v8625
      %v8627 = vrot.slane %v8509, 5
      %v8628 = vrot.slane %v8627, 4
      %v8629 = vrot.slane %v7802, 5
      %v8630 = vsel %vm1853, %v8628, %v8629
      %v8631 = vrot.slane %v8629, 4
      %v8632 = vrot.slane %v7803, 5
      %v8633 = vsel %vm1853, %v8631, %v8632
      %v8634 = vrot.slane %v8510, 5
      %v8635 = vrot.slane %v8634, 4
      %v8636 = vrot.slane %v7805, 5
      %v8637 = vsel %vm1853, %v8635, %v8636
      %v8638 = vrot.slane %v8636, 4
      %v8639 = vrot.slane %v7806, 5
      %v8640 = vsel %vm1853, %v8638, %v8639
      %v8641 = vrot.slane %v8511, 5
      %v8642 = vrot.slane %v8641, 4
      %v8643 = vrot.slane %v7808, 5
      %v8644 = vsel %vm1853, %v8642, %v8643
      %v8645 = vrot.slane %v8643, 4
      %v8646 = vrot.slane %v7809, 5
      %v8647 = vsel %vm1853, %v8645, %v8646
      %v8648 = vrot.slane %v8512, 5
      %v8649 = vrot.slane %v8648, 4
      %v8650 = vrot.slane %v7811, 5
      %v8651 = vsel %vm1853, %v8649, %v8650
      %v8652 = vrot.slane %v8650, 4
      %v8653 = vrot.slane %v7812, 5
      %v8654 = vsel %vm1853, %v8652, %v8653
      %v8655 = vrot.slane %v8513, 5
      %v8656 = vrot.slane %v8655, 4
      %v8657 = vrot.slane %v7814, 5
      %v8658 = vsel %vm1853, %v8656, %v8657
      %v8659 = vrot.slane %v8657, 4
      %v8660 = vrot.slane %v7815, 5
      %v8661 = vsel %vm1853, %v8659, %v8660
      %v8662 = vrot.slane %v8514, 5
      %v8663 = vrot.slane %v8662, 4
      %v8664 = vrot.slane %v7817, 5
      %v8665 = vsel %vm1853, %v8663, %v8664
      %v8666 = vrot.slane %v8664, 4
      %v8667 = vrot.slane %v7818, 5
      %v8668 = vsel %vm1853, %v8666, %v8667
      %v8669 = vrot.slane %v8515, 5
      %v8670 = vrot.slane %v8669, 4
      %v8671 = vrot.slane %v7820, 5
      %v8672 = vsel %vm1853, %v8670, %v8671
      %v8673 = vrot.slane %v8671, 4
      %v8674 = vrot.slane %v7821, 5
      %v8675 = vsel %vm1853, %v8673, %v8674
      %s8676 = scalar_lea.vmem %s3, 20
      %v8677 = vld [vmem:[%s8676] sm:$0xf]
      %v8678 = vunpack.c.l.b16 %v8567
      %v8679 = vunpack.c.l.b16 %v8570
      %v8680 = vunpack.c.l.b16 %v8574
      %v8681 = vunpack.c.l.b16 %v8577
      %v8682 = vunpack.c.l.b16 %v8581
      %v8683 = vunpack.c.l.b16 %v8584
      %v8684 = vunpack.c.l.b16 %v8588
      %v8685 = vunpack.c.l.b16 %v8591
      %v8686 = vunpack.c.l.b16 %v8595
      %v8687 = vunpack.c.l.b16 %v8598
      %v8688 = vunpack.c.l.b16 %v8602
      %v8689 = vunpack.c.l.b16 %v8605
      %v8690 = vunpack.c.l.b16 %v8609
      %v8691 = vunpack.c.l.b16 %v8612
      %v8692 = vunpack.c.l.b16 %v8616
      %v8693 = vunpack.c.l.b16 %v8619
      %v8694 = vunpack.c.l.b16 %v8623
      %v8695 = vunpack.c.l.b16 %v8626
      %v8696 = vunpack.c.l.b16 %v8630
      %v8697 = vunpack.c.l.b16 %v8633
      %v8698 = vunpack.c.l.b16 %v8637
      %v8699 = vunpack.c.l.b16 %v8640
      %v8700 = vunpack.c.l.b16 %v8644
      %v8701 = vunpack.c.l.b16 %v8647
      %v8702 = vunpack.c.l.b16 %v8651
      %v8703 = vunpack.c.l.b16 %v8654
      %v8704 = vunpack.c.l.b16 %v8658
      %v8705 = vunpack.c.l.b16 %v8661
      %v8706 = vunpack.c.l.b16 %v8665
      %v8707 = vunpack.c.l.b16 %v8668
      %v8708 = vunpack.c.l.b16 %v8672
      %v8709 = vunpack.c.l.b16 %v8675
      %v8710 = vpack.c.b16 %v8679, %v8678
      %v8711 = vpack.c.b16 %v8681, %v8680
      %v8712 = vpack.c.b16 %v8683, %v8682
      %v8713 = vpack.c.b16 %v8685, %v8684
      %v8714 = vpack.c.b16 %v8687, %v8686
      %v8715 = vpack.c.b16 %v8689, %v8688
      %v8716 = vpack.c.b16 %v8691, %v8690
      %v8717 = vpack.c.b16 %v8693, %v8692
      %v8718 = vpack.c.b16 %v8695, %v8694
      %v8719 = vpack.c.b16 %v8697, %v8696
      %v8720 = vpack.c.b16 %v8699, %v8698
      %v8721 = vpack.c.b16 %v8701, %v8700
      %v8722 = vpack.c.b16 %v8703, %v8702
      %v8723 = vpack.c.b16 %v8705, %v8704
      %v8724 = vpack.c.b16 %v8707, %v8706
      %v8725 = vpack.c.b16 %v8709, %v8708
      %v8727 = vsel %vm6456, %v8710, 0
      %v8730 = vsel %vm6456, %v8711, 0
      %v8733 = vsel %vm6456, %v8712, 0
      %v8736 = vsel %vm6456, %v8713, 0
      %v8739 = vsel %vm6456, %v8714, 0
      %v8742 = vsel %vm6456, %v8715, 0
      %v8745 = vsel %vm6456, %v8716, 0
      %v8748 = vsel %vm6456, %v8717, 0
      %v8751 = vsel %vm6456, %v8718, 0
      %v8754 = vsel %vm6456, %v8719, 0
      %v8757 = vsel %vm6456, %v8720, 0
      %v8760 = vsel %vm6456, %v8721, 0
      %v8763 = vsel %vm6456, %v8722, 0
      %v8766 = vsel %vm6456, %v8723, 0
      %v8769 = vsel %vm6456, %v8724, 0
      %v8772 = vsel %vm6456, %v8725, 0
      %v8775 = vsel %vm6505, %v8677, 0
      %8777 = vmatprep.subr.bf16.mxu0 0
      %8778 = vmatpush1.bf16.msra.mxu0 %v8775
      %8779 = vmatprep.subr.bf16.mxu0 0
      %8780 = vmatpush1.bf16.msra.mxu0 0
      %8781 = vmatprep.subr.bf16.mxu0 0
      %8782 = vmatpush1.bf16.msra.mxu0 0
      %8783 = vmatprep.subr.bf16.mxu0 0
      %8784 = vmatpush1.bf16.msra.mxu0 0
      %8785 = vmatprep.subr.bf16.mxu0 0
      %8786 = vmatpush1.bf16.msra.mxu0 0
      %8787 = vmatprep.subr.bf16.mxu0 0
      %8788 = vmatpush1.bf16.msra.mxu0 0
      %8789 = vmatprep.subr.bf16.mxu0 0
      %8790 = vmatpush1.bf16.msra.mxu0 0
      %8791 = vmatprep.subr.bf16.mxu0 0
      %8792 = vmatpush1.bf16.msra.mxu0 0
      %8793 = vmatprep.subr.bf16.mxu0 0
      %8794 = vmatpush1.bf16.msra.mxu0 0
      %8795 = vmatprep.subr.bf16.mxu0 0
      %8796 = vmatpush1.bf16.msra.mxu0 0
      %8797 = vmatprep.subr.bf16.mxu0 0
      %8798 = vmatpush1.bf16.msra.mxu0 0
      %8799 = vmatprep.subr.bf16.mxu0 0
      %8800 = vmatpush1.bf16.msra.mxu0 0
      %8801 = vmatprep.subr.bf16.mxu0 0
      %8802 = vmatpush1.bf16.msra.mxu0 0
      %8803 = vmatprep.subr.bf16.mxu0 0
      %8804 = vmatpush1.bf16.msra.mxu0 0
      %8805 = vmatprep.subr.bf16.mxu0 0
      %8806 = vmatpush1.bf16.msra.mxu0 0
      %8807 = vmatprep.subr.bf16.mxu0 0
      %8808 = vmatpush1.bf16.msra.mxu0 0
      %8809 = vmatprep.mubr.bf16.mxu0 0
      %8810 = vmatmul.mubr.bf16.gmra.mrb[0].mxu0 %v8727
      %v8811 = vpop.f32.mrb[0].mxu0
      %v8812 = vadd.f32 0.0, %v8811
      %v8813 = vpop.f32.mrb[0].mxu0
      %v8814 = vpop.f32.mrb[0].mxu0
      %v8815 = vadd.f32 0.0, %v8814
      %v8816 = vpop.f32.mrb[0].mxu0
      %8817 = vmatprep.mubr.bf16.mxu0 0
      %8818 = vmatmul.mubr.bf16.gmra.mrb[0].mxu0 %v8730
      %v8819 = vpop.f32.mrb[0].mxu0
      %v8820 = vadd.f32 0.0, %v8819
      %v8821 = vpop.f32.mrb[0].mxu0
      %v8822 = vpop.f32.mrb[0].mxu0
      %v8823 = vadd.f32 0.0, %v8822
      %v8824 = vpop.f32.mrb[0].mxu0
      %8825 = vmatprep.mubr.bf16.mxu0 0
      %8826 = vmatmul.mubr.bf16.gmra.mrb[0].mxu0 %v8733
      %v8827 = vpop.f32.mrb[0].mxu0
      %v8828 = vadd.f32 0.0, %v8827
      %v8829 = vpop.f32.mrb[0].mxu0
      %v8830 = vpop.f32.mrb[0].mxu0
      %v8831 = vadd.f32 0.0, %v8830
      %v8832 = vpop.f32.mrb[0].mxu0
      %8833 = vmatprep.mubr.bf16.mxu0 0
      %8834 = vmatmul.mubr.bf16.gmra.mrb[0].mxu0 %v8736
      %v8835 = vpop.f32.mrb[0].mxu0
      %v8836 = vadd.f32 0.0, %v8835
      %v8837 = vpop.f32.mrb[0].mxu0
      %v8838 = vpop.f32.mrb[0].mxu0
      %v8839 = vadd.f32 0.0, %v8838
      %v8840 = vpop.f32.mrb[0].mxu0
      %8841 = vmatprep.mubr.bf16.mxu0 0
      %8842 = vmatmul.mubr.bf16.gmra.mrb[0].mxu0 %v8739
      %v8843 = vpop.f32.mrb[0].mxu0
      %v8844 = vadd.f32 0.0, %v8843
      %v8845 = vpop.f32.mrb[0].mxu0
      %v8846 = vpop.f32.mrb[0].mxu0
      %v8847 = vadd.f32 0.0, %v8846
      %v8848 = vpop.f32.mrb[0].mxu0
      %8849 = vmatprep.mubr.bf16.mxu0 0
      %8850 = vmatmul.mubr.bf16.gmra.mrb[0].mxu0 %v8742
      %v8851 = vpop.f32.mrb[0].mxu0
      %v8852 = vadd.f32 0.0, %v8851
      %v8853 = vpop.f32.mrb[0].mxu0
      %v8854 = vpop.f32.mrb[0].mxu0
      %v8855 = vadd.f32 0.0, %v8854
      %v8856 = vpop.f32.mrb[0].mxu0
      %8857 = vmatprep.mubr.bf16.mxu0 0
      %8858 = vmatmul.mubr.bf16.gmra.mrb[0].mxu0 %v8745
      %v8859 = vpop.f32.mrb[0].mxu0
      %v8860 = vadd.f32 0.0, %v8859
      %v8861 = vpop.f32.mrb[0].mxu0
      %v8862 = vpop.f32.mrb[0].mxu0
      %v8863 = vadd.f32 0.0, %v8862
      %v8864 = vpop.f32.mrb[0].mxu0
      %8865 = vmatprep.mubr.bf16.mxu0 0
      %8866 = vmatmul.mubr.bf16.gmra.mrb[0].mxu0 %v8748
      %v8867 = vpop.f32.mrb[0].mxu0
      %v8868 = vadd.f32 0.0, %v8867
      %v8869 = vpop.f32.mrb[0].mxu0
      %v8870 = vpop.f32.mrb[0].mxu0
      %v8871 = vadd.f32 0.0, %v8870
      %v8872 = vpop.f32.mrb[0].mxu0
      %8873 = vmatprep.mubr.bf16.mxu0 0
      %8874 = vmatmul.mubr.bf16.gmra.mrb[0].mxu0 %v8751
      %v8875 = vpop.f32.mrb[0].mxu0
      %v8876 = vadd.f32 0.0, %v8875
      %v8877 = vpop.f32.mrb[0].mxu0
      %v8878 = vpop.f32.mrb[0].mxu0
      %v8879 = vadd.f32 0.0, %v8878
      %v8880 = vpop.f32.mrb[0].mxu0
      %8881 = vmatprep.mubr.bf16.mxu0 0
      %8882 = vmatmul.mubr.bf16.gmra.mrb[0].mxu0 %v8754
      %v8883 = vpop.f32.mrb[0].mxu0
      %v8884 = vadd.f32 0.0, %v8883
      %v8885 = vpop.f32.mrb[0].mxu0
      %v8886 = vpop.f32.mrb[0].mxu0
      %v8887 = vadd.f32 0.0, %v8886
      %v8888 = vpop.f32.mrb[0].mxu0
      %8889 = vmatprep.mubr.bf16.mxu0 0
      %8890 = vmatmul.mubr.bf16.gmra.mrb[0].mxu0 %v8757
      %v8891 = vpop.f32.mrb[0].mxu0
      %v8892 = vadd.f32 0.0, %v8891
      %v8893 = vpop.f32.mrb[0].mxu0
      %v8894 = vpop.f32.mrb[0].mxu0
      %v8895 = vadd.f32 0.0, %v8894
      %v8896 = vpop.f32.mrb[0].mxu0
      %8897 = vmatprep.mubr.bf16.mxu0 0
      %8898 = vmatmul.mubr.bf16.gmra.mrb[0].mxu0 %v8760
      %v8899 = vpop.f32.mrb[0].mxu0
      %v8900 = vadd.f32 0.0, %v8899
      %v8901 = vpop.f32.mrb[0].mxu0
      %v8902 = vpop.f32.mrb[0].mxu0
      %v8903 = vadd.f32 0.0, %v8902
      %v8904 = vpop.f32.mrb[0].mxu0
      %8905 = vmatprep.mubr.bf16.mxu0 0
      %8906 = vmatmul.mubr.bf16.gmra.mrb[0].mxu0 %v8763
      %v8907 = vpop.f32.mrb[0].mxu0
      %v8908 = vadd.f32 0.0, %v8907
      %v8909 = vpop.f32.mrb[0].mxu0
      %v8910 = vpop.f32.mrb[0].mxu0
      %v8911 = vadd.f32 0.0, %v8910
      %v8912 = vpop.f32.mrb[0].mxu0
      %8913 = vmatprep.mubr.bf16.mxu0 0
      %8914 = vmatmul.mubr.bf16.gmra.mrb[0].mxu0 %v8766
      %v8915 = vpop.f32.mrb[0].mxu0
      %v8916 = vadd.f32 0.0, %v8915
      %v8917 = vpop.f32.mrb[0].mxu0
      %v8918 = vpop.f32.mrb[0].mxu0
      %v8919 = vadd.f32 0.0, %v8918
      %v8920 = vpop.f32.mrb[0].mxu0
      %8921 = vmatprep.mubr.bf16.mxu0 0
      %8922 = vmatmul.mubr.bf16.gmra.mrb[0].mxu0 %v8769
      %v8923 = vpop.f32.mrb[0].mxu0
      %v8924 = vadd.f32 0.0, %v8923
      %v8925 = vpop.f32.mrb[0].mxu0
      %v8926 = vpop.f32.mrb[0].mxu0
      %v8927 = vadd.f32 0.0, %v8926
      %v8928 = vpop.f32.mrb[0].mxu0
      %8929 = vmatprep.mubr.bf16.mxu0 0
      %8930 = vmatmul.mubr.bf16.gmra.mrb[0].mxu0 %v8772
      %v8931 = vpop.f32.mrb[0].mxu0
      %v8932 = vadd.f32 0.0, %v8931
      %v8933 = vpop.f32.mrb[0].mxu0
      %v8934 = vpop.f32.mrb[0].mxu0
      %v8935 = vadd.f32 0.0, %v8934
      %v8936 = vpop.f32.mrb[0].mxu0
      %8937 = vdwg.mxu0
      %v8938 = vadd.f32 %v8468, %v8812
      %v8939 = vadd.f32 %v8469, %v8815
      %v8940 = vadd.f32 %v8470, %v8820
      %v8941 = vadd.f32 %v8471, %v8823
      %v8942 = vadd.f32 %v8472, %v8828
      %v8943 = vadd.f32 %v8473, %v8831
      %v8944 = vadd.f32 %v8474, %v8836
      %v8945 = vadd.f32 %v8475, %v8839
      %v8946 = vadd.f32 %v8476, %v8844
      %v8947 = vadd.f32 %v8477, %v8847
      %v8948 = vadd.f32 %v8478, %v8852
      %v8949 = vadd.f32 %v8479, %v8855
      %v8950 = vadd.f32 %v8480, %v8860
      %v8951 = vadd.f32 %v8481, %v8863
      %v8952 = vadd.f32 %v8482, %v8868
      %v8953 = vadd.f32 %v8483, %v8871
      %v8954 = vadd.f32 %v8484, %v8876
      %v8955 = vadd.f32 %v8485, %v8879
      %v8956 = vadd.f32 %v8486, %v8884
      %v8957 = vadd.f32 %v8487, %v8887
      %v8958 = vadd.f32 %v8488, %v8892
      %v8959 = vadd.f32 %v8489, %v8895
      %v8960 = vadd.f32 %v8490, %v8900
      %v8961 = vadd.f32 %v8491, %v8903
      %v8962 = vadd.f32 %v8492, %v8908
      %v8963 = vadd.f32 %v8493, %v8911
      %v8964 = vadd.f32 %v8494, %v8916
      %v8965 = vadd.f32 %v8495, %v8919
      %v8966 = vadd.f32 %v8496, %v8924
      %v8967 = vadd.f32 %v8497, %v8927
      %v8968 = vadd.f32 %v8498, %v8932
      %v8969 = vadd.f32 %v8499, %v8935
      %s8970 = scalar_lea.vmem [#allocation3], 24
      %v8971 = vld [vmem:[%s8970] sm:$0xf]
      %v8972 = vld [vmem:[%s8970 + $0x4] sm:$0xf]
      %v8973 = vld [vmem:[%s8970 + $0xc] sm:$0xf]
      %v8974 = vld [vmem:[%s8970 + $0x10] sm:$0xf]
      %v8975 = vld [vmem:[%s8970 + $0x18] sm:$0xf]
      %v8976 = vld [vmem:[%s8970 + $0x1c] sm:$0xf]
      %v8977 = vld [vmem:[%s8970 + $0x24] sm:$0xf]
      %v8978 = vld [vmem:[%s8970 + $0x28] sm:$0xf]
      %v8979 = vld [vmem:[%s8970 + $0x30] sm:$0xf]
      %v8980 = vld [vmem:[%s8970 + $0x34] sm:$0xf]
      %v8981 = vld [vmem:[%s8970 + $0x3c] sm:$0xf]
      %v8982 = vld [vmem:[%s8970 + $0x40] sm:$0xf]
      %v8983 = vld [vmem:[%s8970 + $0x48] sm:$0xf]
      %v8984 = vld [vmem:[%s8970 + $0x4c] sm:$0xf]
      %v8985 = vld [vmem:[%s8970 + $0x54] sm:$0xf]
      %v8986 = vld [vmem:[%s8970 + $0x58] sm:$0xf]
      %v8987 = vld [vmem:[%s8970 + $0x60] sm:$0xf]
      %v8988 = vld [vmem:[%s8970 + $0x64] sm:$0xf]
      %v8989 = vld [vmem:[%s8970 + $0x6c] sm:$0xf]
      %v8990 = vld [vmem:[%s8970 + $0x70] sm:$0xf]
      %v8991 = vld [vmem:[%s8970 + $0x78] sm:$0xf]
      %v8992 = vld [vmem:[%s8970 + $0x7c] sm:$0xf]
      %v8993 = vld [vmem:[%s8970 + $0x84] sm:$0xf]
      %v8994 = vld [vmem:[%s8970 + $0x88] sm:$0xf]
      %v8995 = vld [vmem:[%s8970 + $0x90] sm:$0xf]
      %v8996 = vld [vmem:[%s8970 + $0x94] sm:$0xf]
      %v8997 = vld [vmem:[%s8970 + $0x9c] sm:$0xf]
      %v8998 = vld [vmem:[%s8970 + $0xa0] sm:$0xf]
      %v8999 = vld [vmem:[%s8970 + $0xa8] sm:$0xf]
      %v9000 = vld [vmem:[%s8970 + $0xac] sm:$0xf]
      %v9001 = vld [vmem:[%s8970 + $0xb4] sm:$0xf]
      %v9002 = vld [vmem:[%s8970 + $0xb8] sm:$0xf]
      %s9003 = scalar_lea.vmem %s3, 24
      %v9004 = vld [vmem:[%s9003] sm:$0xf]
      %v9037 = vunpack.c.l.b16 %v8971
      %v9038 = vunpack.c.l.b16 %v8972
      %v9039 = vunpack.c.l.b16 %v8973
      %v9040 = vunpack.c.l.b16 %v8974
      %v9041 = vunpack.c.l.b16 %v8975
      %v9042 = vunpack.c.l.b16 %v8976
      %v9043 = vunpack.c.l.b16 %v8977
      %v9044 = vunpack.c.l.b16 %v8978
      %v9045 = vunpack.c.l.b16 %v8979
      %v9046 = vunpack.c.l.b16 %v8980
      %v9047 = vunpack.c.l.b16 %v8981
      %v9048 = vunpack.c.l.b16 %v8982
      %v9049 = vunpack.c.l.b16 %v8983
      %v9050 = vunpack.c.l.b16 %v8984
      %v9051 = vunpack.c.l.b16 %v8985
      %v9052 = vunpack.c.l.b16 %v8986
      %v9053 = vunpack.c.l.b16 %v8987
      %v9054 = vunpack.c.l.b16 %v8988
      %v9055 = vunpack.c.l.b16 %v8989
      %v9056 = vunpack.c.l.b16 %v8990
      %v9057 = vunpack.c.l.b16 %v8991
      %v9058 = vunpack.c.l.b16 %v8992
      %v9059 = vunpack.c.l.b16 %v8993
      %v9060 = vunpack.c.l.b16 %v8994
      %v9061 = vunpack.c.l.b16 %v8995
      %v9062 = vunpack.c.l.b16 %v8996
      %v9063 = vunpack.c.l.b16 %v8997
      %v9064 = vunpack.c.l.b16 %v8998
      %v9065 = vunpack.c.l.b16 %v8999
      %v9066 = vunpack.c.l.b16 %v9000
      %v9067 = vunpack.c.l.b16 %v9001
      %v9068 = vunpack.c.l.b16 %v9002
      %v9069 = vpack.c.b16 %v9038, %v9037
      %v9070 = vpack.c.b16 %v9040, %v9039
      %v9071 = vpack.c.b16 %v9042, %v9041
      %v9072 = vpack.c.b16 %v9044, %v9043
      %v9073 = vpack.c.b16 %v9046, %v9045
      %v9074 = vpack.c.b16 %v9048, %v9047
      %v9075 = vpack.c.b16 %v9050, %v9049
      %v9076 = vpack.c.b16 %v9052, %v9051
      %v9077 = vpack.c.b16 %v9054, %v9053
      %v9078 = vpack.c.b16 %v9056, %v9055
      %v9079 = vpack.c.b16 %v9058, %v9057
      %v9080 = vpack.c.b16 %v9060, %v9059
      %v9081 = vpack.c.b16 %v9062, %v9061
      %v9082 = vpack.c.b16 %v9064, %v9063
      %v9083 = vpack.c.b16 %v9066, %v9065
      %v9084 = vpack.c.b16 %v9068, %v9067
      %v9086 = vsel %vm6456, %v9069, 0
      %v9089 = vsel %vm6456, %v9070, 0
      %v9092 = vsel %vm6456, %v9071, 0
      %v9095 = vsel %vm6456, %v9072, 0
      %v9098 = vsel %vm6456, %v9073, 0
      %v9101 = vsel %vm6456, %v9074, 0
      %v9104 = vsel %vm6456, %v9075, 0
      %v9107 = vsel %vm6456, %v9076, 0
      %v9110 = vsel %vm6456, %v9077, 0
      %v9113 = vsel %vm6456, %v9078, 0
      %v9116 = vsel %vm6456, %v9079, 0
      %v9119 = vsel %vm6456, %v9080, 0
      %v9122 = vsel %vm6456, %v9081, 0
      %v9125 = vsel %vm6456, %v9082, 0
      %v9128 = vsel %vm6456, %v9083, 0
      %v9131 = vsel %vm6456, %v9084, 0
      %v9134 = vsel %vm6505, %v9004, 0
      %9136 = vmatprep.subr.bf16.mxu0 0
      %9137 = vmatpush1.bf16.msra.mxu0 %v9134
      %9138 = vmatprep.subr.bf16.mxu0 0
      %9139 = vmatpush1.bf16.msra.mxu0 0
      %9140 = vmatprep.subr.bf16.mxu0 0
      %9141 = vmatpush1.bf16.msra.mxu0 0
      %9142 = vmatprep.subr.bf16.mxu0 0
      %9143 = vmatpush1.bf16.msra.mxu0 0
      %9144 = vmatprep.subr.bf16.mxu0 0
      %9145 = vmatpush1.bf16.msra.mxu0 0
      %9146 = vmatprep.subr.bf16.mxu0 0
      %9147 = vmatpush1.bf16.msra.mxu0 0
      %9148 = vmatprep.subr.bf16.mxu0 0
      %9149 = vmatpush1.bf16.msra.mxu0 0
      %9150 = vmatprep.subr.bf16.mxu0 0
      %9151 = vmatpush1.bf16.msra.mxu0 0
      %9152 = vmatprep.subr.bf16.mxu0 0
      %9153 = vmatpush1.bf16.msra.mxu0 0
      %9154 = vmatprep.subr.bf16.mxu0 0
      %9155 = vmatpush1.bf16.msra.mxu0 0
      %9156 = vmatprep.subr.bf16.mxu0 0
      %9157 = vmatpush1.bf16.msra.mxu0 0
      %9158 = vmatprep.subr.bf16.mxu0 0
      %9159 = vmatpush1.bf16.msra.mxu0 0
      %9160 = vmatprep.subr.bf16.mxu0 0
      %9161 = vmatpush1.bf16.msra.mxu0 0
      %9162 = vmatprep.subr.bf16.mxu0 0
      %9163 = vmatpush1.bf16.msra.mxu0 0
      %9164 = vmatprep.subr.bf16.mxu0 0
      %9165 = vmatpush1.bf16.msra.mxu0 0
      %9166 = vmatprep.subr.bf16.mxu0 0
      %9167 = vmatpush1.bf16.msra.mxu0 0
      %9168 = vmatprep.mubr.bf16.mxu0 0
      %9169 = vmatmul.mubr.bf16.gmra.mrb[0].mxu0 %v9086
      %v9170 = vpop.f32.mrb[0].mxu0
      %v9171 = vadd.f32 0.0, %v9170
      %v9172 = vpop.f32.mrb[0].mxu0
      %v9173 = vpop.f32.mrb[0].mxu0
      %v9174 = vadd.f32 0.0, %v9173
      %v9175 = vpop.f32.mrb[0].mxu0
      %9176 = vmatprep.mubr.bf16.mxu0 0
      %9177 = vmatmul.mubr.bf16.gmra.mrb[0].mxu0 %v9089
      %v9178 = vpop.f32.mrb[0].mxu0
      %v9179 = vadd.f32 0.0, %v9178
      %v9180 = vpop.f32.mrb[0].mxu0
      %v9181 = vpop.f32.mrb[0].mxu0
      %v9182 = vadd.f32 0.0, %v9181
      %v9183 = vpop.f32.mrb[0].mxu0
      %9184 = vmatprep.mubr.bf16.mxu0 0
      %9185 = vmatmul.mubr.bf16.gmra.mrb[0].mxu0 %v9092
      %v9186 = vpop.f32.mrb[0].mxu0
      %v9187 = vadd.f32 0.0, %v9186
      %v9188 = vpop.f32.mrb[0].mxu0
      %v9189 = vpop.f32.mrb[0].mxu0
      %v9190 = vadd.f32 0.0, %v9189
      %v9191 = vpop.f32.mrb[0].mxu0
      %9192 = vmatprep.mubr.bf16.mxu0 0
      %9193 = vmatmul.mubr.bf16.gmra.mrb[0].mxu0 %v9095
      %v9194 = vpop.f32.mrb[0].mxu0
      %v9195 = vadd.f32 0.0, %v9194
      %v9196 = vpop.f32.mrb[0].mxu0
      %v9197 = vpop.f32.mrb[0].mxu0
      %v9198 = vadd.f32 0.0, %v9197
      %v9199 = vpop.f32.mrb[0].mxu0
      %9200 = vmatprep.mubr.bf16.mxu0 0
      %9201 = vmatmul.mubr.bf16.gmra.mrb[0].mxu0 %v9098
      %v9202 = vpop.f32.mrb[0].mxu0
      %v9203 = vadd.f32 0.0, %v9202
      %v9204 = vpop.f32.mrb[0].mxu0
      %v9205 = vpop.f32.mrb[0].mxu0
      %v9206 = vadd.f32 0.0, %v9205
      %v9207 = vpop.f32.mrb[0].mxu0
      %9208 = vmatprep.mubr.bf16.mxu0 0
      %9209 = vmatmul.mubr.bf16.gmra.mrb[0].mxu0 %v9101
      %v9210 = vpop.f32.mrb[0].mxu0
      %v9211 = vadd.f32 0.0, %v9210
      %v9212 = vpop.f32.mrb[0].mxu0
      %v9213 = vpop.f32.mrb[0].mxu0
      %v9214 = vadd.f32 0.0, %v9213
      %v9215 = vpop.f32.mrb[0].mxu0
      %9216 = vmatprep.mubr.bf16.mxu0 0
      %9217 = vmatmul.mubr.bf16.gmra.mrb[0].mxu0 %v9104
      %v9218 = vpop.f32.mrb[0].mxu0
      %v9219 = vadd.f32 0.0, %v9218
      %v9220 = vpop.f32.mrb[0].mxu0
      %v9221 = vpop.f32.mrb[0].mxu0
      %v9222 = vadd.f32 0.0, %v9221
      %v9223 = vpop.f32.mrb[0].mxu0
      %9224 = vmatprep.mubr.bf16.mxu0 0
      %9225 = vmatmul.mubr.bf16.gmra.mrb[0].mxu0 %v9107
      %v9226 = vpop.f32.mrb[0].mxu0
      %v9227 = vadd.f32 0.0, %v9226
      %v9228 = vpop.f32.mrb[0].mxu0
      %v9229 = vpop.f32.mrb[0].mxu0
      %v9230 = vadd.f32 0.0, %v9229
      %v9231 = vpop.f32.mrb[0].mxu0
      %9232 = vmatprep.mubr.bf16.mxu0 0
      %9233 = vmatmul.mubr.bf16.gmra.mrb[0].mxu0 %v9110
      %v9234 = vpop.f32.mrb[0].mxu0
      %v9235 = vadd.f32 0.0, %v9234
      %v9236 = vpop.f32.mrb[0].mxu0
      %v9237 = vpop.f32.mrb[0].mxu0
      %v9238 = vadd.f32 0.0, %v9237
      %v9239 = vpop.f32.mrb[0].mxu0
      %9240 = vmatprep.mubr.bf16.mxu0 0
      %9241 = vmatmul.mubr.bf16.gmra.mrb[0].mxu0 %v9113
      %v9242 = vpop.f32.mrb[0].mxu0
      %v9243 = vadd.f32 0.0, %v9242
      %v9244 = vpop.f32.mrb[0].mxu0
      %v9245 = vpop.f32.mrb[0].mxu0
      %v9246 = vadd.f32 0.0, %v9245
      %v9247 = vpop.f32.mrb[0].mxu0
      %9248 = vmatprep.mubr.bf16.mxu0 0
      %9249 = vmatmul.mubr.bf16.gmra.mrb[0].mxu0 %v9116
      %v9250 = vpop.f32.mrb[0].mxu0
      %v9251 = vadd.f32 0.0, %v9250
      %v9252 = vpop.f32.mrb[0].mxu0
      %v9253 = vpop.f32.mrb[0].mxu0
      %v9254 = vadd.f32 0.0, %v9253
      %v9255 = vpop.f32.mrb[0].mxu0
      %9256 = vmatprep.mubr.bf16.mxu0 0
      %9257 = vmatmul.mubr.bf16.gmra.mrb[0].mxu0 %v9119
      %v9258 = vpop.f32.mrb[0].mxu0
      %v9259 = vadd.f32 0.0, %v9258
      %v9260 = vpop.f32.mrb[0].mxu0
      %v9261 = vpop.f32.mrb[0].mxu0
      %v9262 = vadd.f32 0.0, %v9261
      %v9263 = vpop.f32.mrb[0].mxu0
      %9264 = vmatprep.mubr.bf16.mxu0 0
      %9265 = vmatmul.mubr.bf16.gmra.mrb[0].mxu0 %v9122
      %v9266 = vpop.f32.mrb[0].mxu0
      %v9267 = vadd.f32 0.0, %v9266
      %v9268 = vpop.f32.mrb[0].mxu0
      %v9269 = vpop.f32.mrb[0].mxu0
      %v9270 = vadd.f32 0.0, %v9269
      %v9271 = vpop.f32.mrb[0].mxu0
      %9272 = vmatprep.mubr.bf16.mxu0 0
      %9273 = vmatmul.mubr.bf16.gmra.mrb[0].mxu0 %v9125
      %v9274 = vpop.f32.mrb[0].mxu0
      %v9275 = vadd.f32 0.0, %v9274
      %v9276 = vpop.f32.mrb[0].mxu0
      %v9277 = vpop.f32.mrb[0].mxu0
      %v9278 = vadd.f32 0.0, %v9277
      %v9279 = vpop.f32.mrb[0].mxu0
      %9280 = vmatprep.mubr.bf16.mxu0 0
      %9281 = vmatmul.mubr.bf16.gmra.mrb[0].mxu0 %v9128
      %v9282 = vpop.f32.mrb[0].mxu0
      %v9283 = vadd.f32 0.0, %v9282
      %v9284 = vpop.f32.mrb[0].mxu0
      %v9285 = vpop.f32.mrb[0].mxu0
      %v9286 = vadd.f32 0.0, %v9285
      %v9287 = vpop.f32.mrb[0].mxu0
      %9288 = vmatprep.mubr.bf16.mxu0 0
      %9289 = vmatmul.mubr.bf16.gmra.mrb[0].mxu0 %v9131
      %v9290 = vpop.f32.mrb[0].mxu0
      %v9291 = vadd.f32 0.0, %v9290
      %v9292 = vpop.f32.mrb[0].mxu0
      %v9293 = vpop.f32.mrb[0].mxu0
      %v9294 = vadd.f32 0.0, %v9293
      %v9295 = vpop.f32.mrb[0].mxu0
      %9296 = vdwg.mxu0
      %v9297 = vadd.f32 %v8938, %v9171
      %v9298 = vadd.f32 %v8939, %v9174
      %v9299 = vadd.f32 %v8940, %v9179
      %v9300 = vadd.f32 %v8941, %v9182
      %v9301 = vadd.f32 %v8942, %v9187
      %v9302 = vadd.f32 %v8943, %v9190
      %v9303 = vadd.f32 %v8944, %v9195
      %v9304 = vadd.f32 %v8945, %v9198
      %v9305 = vadd.f32 %v8946, %v9203
      %v9306 = vadd.f32 %v8947, %v9206
      %v9307 = vadd.f32 %v8948, %v9211
      %v9308 = vadd.f32 %v8949, %v9214
      %v9309 = vadd.f32 %v8950, %v9219
      %v9310 = vadd.f32 %v8951, %v9222
      %v9311 = vadd.f32 %v8952, %v9227
      %v9312 = vadd.f32 %v8953, %v9230
      %v9313 = vadd.f32 %v8954, %v9235
      %v9314 = vadd.f32 %v8955, %v9238
      %v9315 = vadd.f32 %v8956, %v9243
      %v9316 = vadd.f32 %v8957, %v9246
      %v9317 = vadd.f32 %v8958, %v9251
      %v9318 = vadd.f32 %v8959, %v9254
      %v9319 = vadd.f32 %v8960, %v9259
      %v9320 = vadd.f32 %v8961, %v9262
      %v9321 = vadd.f32 %v8962, %v9267
      %v9322 = vadd.f32 %v8963, %v9270
      %v9323 = vadd.f32 %v8964, %v9275
      %v9324 = vadd.f32 %v8965, %v9278
      %v9325 = vadd.f32 %v8966, %v9283
      %v9326 = vadd.f32 %v8967, %v9286
      %v9327 = vadd.f32 %v8968, %v9291
      %v9328 = vadd.f32 %v8969, %v9294
      %v9329 = vld [vmem:[%s8970] sm:$0xf]
      %v9330 = vld [vmem:[%s8970 + $0x4] sm:$0xf]
      %v9331 = vld [vmem:[%s8970 + $0x8] sm:$0x1]
      %v9332 = vld [vmem:[%s8970 + $0xc] sm:$0xf]
      %v9333 = vld [vmem:[%s8970 + $0x10] sm:$0xf]
      %v9334 = vld [vmem:[%s8970 + $0x14] sm:$0x1]
      %v9335 = vld [vmem:[%s8970 + $0x18] sm:$0xf]
      %v9336 = vld [vmem:[%s8970 + $0x1c] sm:$0xf]
      %v9337 = vld [vmem:[%s8970 + $0x20] sm:$0x1]
      %v9338 = vld [vmem:[%s8970 + $0x24] sm:$0xf]
      %v9339 = vld [vmem:[%s8970 + $0x28] sm:$0xf]
      %v9340 = vld [vmem:[%s8970 + $0x2c] sm:$0x1]
      %v9341 = vld [vmem:[%s8970 + $0x30] sm:$0xf]
      %v9342 = vld [vmem:[%s8970 + $0x34] sm:$0xf]
      %v9343 = vld [vmem:[%s8970 + $0x38] sm:$0x1]
      %v9344 = vld [vmem:[%s8970 + $0x3c] sm:$0xf]
      %v9345 = vld [vmem:[%s8970 + $0x40] sm:$0xf]
      %v9346 = vld [vmem:[%s8970 + $0x44] sm:$0x1]
      %v9347 = vld [vmem:[%s8970 + $0x48] sm:$0xf]
      %v9348 = vld [vmem:[%s8970 + $0x4c] sm:$0xf]
      %v9349 = vld [vmem:[%s8970 + $0x50] sm:$0x1]
      %v9350 = vld [vmem:[%s8970 + $0x54] sm:$0xf]
      %v9351 = vld [vmem:[%s8970 + $0x58] sm:$0xf]
      %v9352 = vld [vmem:[%s8970 + $0x5c] sm:$0x1]
      %v9353 = vld [vmem:[%s8970 + $0x60] sm:$0xf]
      %v9354 = vld [vmem:[%s8970 + $0x64] sm:$0xf]
      %v9355 = vld [vmem:[%s8970 + $0x68] sm:$0x1]
      %v9356 = vld [vmem:[%s8970 + $0x6c] sm:$0xf]
      %v9357 = vld [vmem:[%s8970 + $0x70] sm:$0xf]
      %v9358 = vld [vmem:[%s8970 + $0x74] sm:$0x1]
      %v9359 = vld [vmem:[%s8970 + $0x78] sm:$0xf]
      %v9360 = vld [vmem:[%s8970 + $0x7c] sm:$0xf]
      %v9361 = vld [vmem:[%s8970 + $0x80] sm:$0x1]
      %v9362 = vld [vmem:[%s8970 + $0x84] sm:$0xf]
      %v9363 = vld [vmem:[%s8970 + $0x88] sm:$0xf]
      %v9364 = vld [vmem:[%s8970 + $0x8c] sm:$0x1]
      %v9365 = vld [vmem:[%s8970 + $0x90] sm:$0xf]
      %v9366 = vld [vmem:[%s8970 + $0x94] sm:$0xf]
      %v9367 = vld [vmem:[%s8970 + $0x98] sm:$0x1]
      %v9368 = vld [vmem:[%s8970 + $0x9c] sm:$0xf]
      %v9369 = vld [vmem:[%s8970 + $0xa0] sm:$0xf]
      %v9370 = vld [vmem:[%s8970 + $0xa4] sm:$0x1]
      %v9371 = vld [vmem:[%s8970 + $0xa8] sm:$0xf]
      %v9372 = vld [vmem:[%s8970 + $0xac] sm:$0xf]
      %v9373 = vld [vmem:[%s8970 + $0xb0] sm:$0x1]
      %v9374 = vld [vmem:[%s8970 + $0xb4] sm:$0xf]
      %v9375 = vld [vmem:[%s8970 + $0xb8] sm:$0xf]
      %v9376 = vld [vmem:[%s8970 + $0xbc] sm:$0x1]
      %v9378 = vshrl.u32 %v9329, 16
      %v9380 = vrot.slane %v9378, 4
      %v9381 = vshll.u32 %v9329, 16
      %v9383 = vrot.slane %v9381, 5
      %v9384 = vor.u32 %v9380, %v9383
      %v9385 = vrot.slane %v9384, 4
      %v9387 = vshll.u32 %v9330, 16
      %v9389 = vrot.slane %v9387, 5
      %v9390 = vsel %vm862, %v9385, %v9389
      %v9391 = vshrl.u32 %v9330, 16
      %v9393 = vrot.slane %v9391, 4
      %v9394 = vor.u32 %v9393, %v9389
      %v9395 = vrot.slane %v9394, 4
      %v9397 = vshll.u32 %v9331, 16
      %v9399 = vrot.slane %v9397, 5
      %v9400 = vsel %vm862, %v9395, %v9399
      %v9402 = vshrl.u32 %v9332, 16
      %v9404 = vrot.slane %v9402, 4
      %v9405 = vshll.u32 %v9332, 16
      %v9407 = vrot.slane %v9405, 5
      %v9408 = vor.u32 %v9404, %v9407
      %v9409 = vrot.slane %v9408, 4
      %v9411 = vshll.u32 %v9333, 16
      %v9413 = vrot.slane %v9411, 5
      %v9414 = vsel %vm862, %v9409, %v9413
      %v9415 = vshrl.u32 %v9333, 16
      %v9417 = vrot.slane %v9415, 4
      %v9418 = vor.u32 %v9417, %v9413
      %v9419 = vrot.slane %v9418, 4
      %v9421 = vshll.u32 %v9334, 16
      %v9423 = vrot.slane %v9421, 5
      %v9424 = vsel %vm862, %v9419, %v9423
      %v9426 = vshrl.u32 %v9335, 16
      %v9428 = vrot.slane %v9426, 4
      %v9429 = vshll.u32 %v9335, 16
      %v9431 = vrot.slane %v9429, 5
      %v9432 = vor.u32 %v9428, %v9431
      %v9433 = vrot.slane %v9432, 4
      %v9435 = vshll.u32 %v9336, 16
      %v9437 = vrot.slane %v9435, 5
      %v9438 = vsel %vm862, %v9433, %v9437
      %v9439 = vshrl.u32 %v9336, 16
      %v9441 = vrot.slane %v9439, 4
      %v9442 = vor.u32 %v9441, %v9437
      %v9443 = vrot.slane %v9442, 4
      %v9445 = vshll.u32 %v9337, 16
      %v9447 = vrot.slane %v9445, 5
      %v9448 = vsel %vm862, %v9443, %v9447
      %v9450 = vshrl.u32 %v9338, 16
      %v9452 = vrot.slane %v9450, 4
      %v9453 = vshll.u32 %v9338, 16
      %v9455 = vrot.slane %v9453, 5
      %v9456 = vor.u32 %v9452, %v9455
      %v9457 = vrot.slane %v9456, 4
      %v9459 = vshll.u32 %v9339, 16
      %v9461 = vrot.slane %v9459, 5
      %v9462 = vsel %vm862, %v9457, %v9461
      %v9463 = vshrl.u32 %v9339, 16
      %v9465 = vrot.slane %v9463, 4
      %v9466 = vor.u32 %v9465, %v9461
      %v9467 = vrot.slane %v9466, 4
      %v9469 = vshll.u32 %v9340, 16
      %v9471 = vrot.slane %v9469, 5
      %v9472 = vsel %vm862, %v9467, %v9471
      %v9474 = vshrl.u32 %v9341, 16
      %v9476 = vrot.slane %v9474, 4
      %v9477 = vshll.u32 %v9341, 16
      %v9479 = vrot.slane %v9477, 5
      %v9480 = vor.u32 %v9476, %v9479
      %v9481 = vrot.slane %v9480, 4
      %v9483 = vshll.u32 %v9342, 16
      %v9485 = vrot.slane %v9483, 5
      %v9486 = vsel %vm862, %v9481, %v9485
      %v9487 = vshrl.u32 %v9342, 16
      %v9489 = vrot.slane %v9487, 4
      %v9490 = vor.u32 %v9489, %v9485
      %v9491 = vrot.slane %v9490, 4
      %v9493 = vshll.u32 %v9343, 16
      %v9495 = vrot.slane %v9493, 5
      %v9496 = vsel %vm862, %v9491, %v9495
      %v9498 = vshrl.u32 %v9344, 16
      %v9500 = vrot.slane %v9498, 4
      %v9501 = vshll.u32 %v9344, 16
      %v9503 = vrot.slane %v9501, 5
      %v9504 = vor.u32 %v9500, %v9503
      %v9505 = vrot.slane %v9504, 4
      %v9507 = vshll.u32 %v9345, 16
      %v9509 = vrot.slane %v9507, 5
      %v9510 = vsel %vm862, %v9505, %v9509
      %v9511 = vshrl.u32 %v9345, 16
      %v9513 = vrot.slane %v9511, 4
      %v9514 = vor.u32 %v9513, %v9509
      %v9515 = vrot.slane %v9514, 4
      %v9517 = vshll.u32 %v9346, 16
      %v9519 = vrot.slane %v9517, 5
      %v9520 = vsel %vm862, %v9515, %v9519
      %v9522 = vshrl.u32 %v9347, 16
      %v9524 = vrot.slane %v9522, 4
      %v9525 = vshll.u32 %v9347, 16
      %v9527 = vrot.slane %v9525, 5
      %v9528 = vor.u32 %v9524, %v9527
      %v9529 = vrot.slane %v9528, 4
      %v9531 = vshll.u32 %v9348, 16
      %v9533 = vrot.slane %v9531, 5
      %v9534 = vsel %vm862, %v9529, %v9533
      %v9535 = vshrl.u32 %v9348, 16
      %v9537 = vrot.slane %v9535, 4
      %v9538 = vor.u32 %v9537, %v9533
      %v9539 = vrot.slane %v9538, 4
      %v9541 = vshll.u32 %v9349, 16
      %v9543 = vrot.slane %v9541, 5
      %v9544 = vsel %vm862, %v9539, %v9543
      %v9546 = vshrl.u32 %v9350, 16
      %v9548 = vrot.slane %v9546, 4
      %v9549 = vshll.u32 %v9350, 16
      %v9551 = vrot.slane %v9549, 5
      %v9552 = vor.u32 %v9548, %v9551
      %v9553 = vrot.slane %v9552, 4
      %v9555 = vshll.u32 %v9351, 16
      %v9557 = vrot.slane %v9555, 5
      %v9558 = vsel %vm862, %v9553, %v9557
      %v9559 = vshrl.u32 %v9351, 16
      %v9561 = vrot.slane %v9559, 4
      %v9562 = vor.u32 %v9561, %v9557
      %v9563 = vrot.slane %v9562, 4
      %v9565 = vshll.u32 %v9352, 16
      %v9567 = vrot.slane %v9565, 5
      %v9568 = vsel %vm862, %v9563, %v9567
      %v9570 = vshrl.u32 %v9353, 16
      %v9572 = vrot.slane %v9570, 4
      %v9573 = vshll.u32 %v9353, 16
      %v9575 = vrot.slane %v9573, 5
      %v9576 = vor.u32 %v9572, %v9575
      %v9577 = vrot.slane %v9576, 4
      %v9579 = vshll.u32 %v9354, 16
      %v9581 = vrot.slane %v9579, 5
      %v9582 = vsel %vm862, %v9577, %v9581
      %v9583 = vshrl.u32 %v9354, 16
      %v9585 = vrot.slane %v9583, 4
      %v9586 = vor.u32 %v9585, %v9581
      %v9587 = vrot.slane %v9586, 4
      %v9589 = vshll.u32 %v9355, 16
      %v9591 = vrot.slane %v9589, 5
      %v9592 = vsel %vm862, %v9587, %v9591
      %v9594 = vshrl.u32 %v9356, 16
      %v9596 = vrot.slane %v9594, 4
      %v9597 = vshll.u32 %v9356, 16
      %v9599 = vrot.slane %v9597, 5
      %v9600 = vor.u32 %v9596, %v9599
      %v9601 = vrot.slane %v9600, 4
      %v9603 = vshll.u32 %v9357, 16
      %v9605 = vrot.slane %v9603, 5
      %v9606 = vsel %vm862, %v9601, %v9605
      %v9607 = vshrl.u32 %v9357, 16
      %v9609 = vrot.slane %v9607, 4
      %v9610 = vor.u32 %v9609, %v9605
      %v9611 = vrot.slane %v9610, 4
      %v9613 = vshll.u32 %v9358, 16
      %v9615 = vrot.slane %v9613, 5
      %v9616 = vsel %vm862, %v9611, %v9615
      %v9618 = vshrl.u32 %v9359, 16
      %v9620 = vrot.slane %v9618, 4
      %v9621 = vshll.u32 %v9359, 16
      %v9623 = vrot.slane %v9621, 5
      %v9624 = vor.u32 %v9620, %v9623
      %v9625 = vrot.slane %v9624, 4
      %v9627 = vshll.u32 %v9360, 16
      %v9629 = vrot.slane %v9627, 5
      %v9630 = vsel %vm862, %v9625, %v9629
      %v9631 = vshrl.u32 %v9360, 16
      %v9633 = vrot.slane %v9631, 4
      %v9634 = vor.u32 %v9633, %v9629
      %v9635 = vrot.slane %v9634, 4
      %v9637 = vshll.u32 %v9361, 16
      %v9639 = vrot.slane %v9637, 5
      %v9640 = vsel %vm862, %v9635, %v9639
      %v9642 = vshrl.u32 %v9362, 16
      %v9644 = vrot.slane %v9642, 4
      %v9645 = vshll.u32 %v9362, 16
      %v9647 = vrot.slane %v9645, 5
      %v9648 = vor.u32 %v9644, %v9647
      %v9649 = vrot.slane %v9648, 4
      %v9651 = vshll.u32 %v9363, 16
      %v9653 = vrot.slane %v9651, 5
      %v9654 = vsel %vm862, %v9649, %v9653
      %v9655 = vshrl.u32 %v9363, 16
      %v9657 = vrot.slane %v9655, 4
      %v9658 = vor.u32 %v9657, %v9653
      %v9659 = vrot.slane %v9658, 4
      %v9661 = vshll.u32 %v9364, 16
      %v9663 = vrot.slane %v9661, 5
      %v9664 = vsel %vm862, %v9659, %v9663
      %v9666 = vshrl.u32 %v9365, 16
      %v9668 = vrot.slane %v9666, 4
      %v9669 = vshll.u32 %v9365, 16
      %v9671 = vrot.slane %v9669, 5
      %v9672 = vor.u32 %v9668, %v9671
      %v9673 = vrot.slane %v9672, 4
      %v9675 = vshll.u32 %v9366, 16
      %v9677 = vrot.slane %v9675, 5
      %v9678 = vsel %vm862, %v9673, %v9677
      %v9679 = vshrl.u32 %v9366, 16
      %v9681 = vrot.slane %v9679, 4
      %v9682 = vor.u32 %v9681, %v9677
      %v9683 = vrot.slane %v9682, 4
      %v9685 = vshll.u32 %v9367, 16
      %v9687 = vrot.slane %v9685, 5
      %v9688 = vsel %vm862, %v9683, %v9687
      %v9690 = vshrl.u32 %v9368, 16
      %v9692 = vrot.slane %v9690, 4
      %v9693 = vshll.u32 %v9368, 16
      %v9695 = vrot.slane %v9693, 5
      %v9696 = vor.u32 %v9692, %v9695
      %v9697 = vrot.slane %v9696, 4
      %v9699 = vshll.u32 %v9369, 16
      %v9701 = vrot.slane %v9699, 5
      %v9702 = vsel %vm862, %v9697, %v9701
      %v9703 = vshrl.u32 %v9369, 16
      %v9705 = vrot.slane %v9703, 4
      %v9706 = vor.u32 %v9705, %v9701
      %v9707 = vrot.slane %v9706, 4
      %v9709 = vshll.u32 %v9370, 16
      %v9711 = vrot.slane %v9709, 5
      %v9712 = vsel %vm862, %v9707, %v9711
      %v9714 = vshrl.u32 %v9371, 16
      %v9716 = vrot.slane %v9714, 4
      %v9717 = vshll.u32 %v9371, 16
      %v9719 = vrot.slane %v9717, 5
      %v9720 = vor.u32 %v9716, %v9719
      %v9721 = vrot.slane %v9720, 4
      %v9723 = vshll.u32 %v9372, 16
      %v9725 = vrot.slane %v9723, 5
      %v9726 = vsel %vm862, %v9721, %v9725
      %v9727 = vshrl.u32 %v9372, 16
      %v9729 = vrot.slane %v9727, 4
      %v9730 = vor.u32 %v9729, %v9725
      %v9731 = vrot.slane %v9730, 4
      %v9733 = vshll.u32 %v9373, 16
      %v9735 = vrot.slane %v9733, 5
      %v9736 = vsel %vm862, %v9731, %v9735
      %v9738 = vshrl.u32 %v9374, 16
      %v9740 = vrot.slane %v9738, 4
      %v9741 = vshll.u32 %v9374, 16
      %v9743 = vrot.slane %v9741, 5
      %v9744 = vor.u32 %v9740, %v9743
      %v9745 = vrot.slane %v9744, 4
      %v9747 = vshll.u32 %v9375, 16
      %v9749 = vrot.slane %v9747, 5
      %v9750 = vsel %vm862, %v9745, %v9749
      %v9751 = vshrl.u32 %v9375, 16
      %v9753 = vrot.slane %v9751, 4
      %v9754 = vor.u32 %v9753, %v9749
      %v9755 = vrot.slane %v9754, 4
      %v9757 = vshll.u32 %v9376, 16
      %v9759 = vrot.slane %v9757, 5
      %v9760 = vsel %vm862, %v9755, %v9759
      %s9761 = scalar_lea.vmem %s3, 28
      %v9762 = vld [vmem:[%s9761] sm:$0xf]
      %v9763 = vunpack.c.l.b16 %v9390
      %v9764 = vunpack.c.l.b16 %v9400
      %v9765 = vunpack.c.l.b16 %v9414
      %v9766 = vunpack.c.l.b16 %v9424
      %v9767 = vunpack.c.l.b16 %v9438
      %v9768 = vunpack.c.l.b16 %v9448
      %v9769 = vunpack.c.l.b16 %v9462
      %v9770 = vunpack.c.l.b16 %v9472
      %v9771 = vunpack.c.l.b16 %v9486
      %v9772 = vunpack.c.l.b16 %v9496
      %v9773 = vunpack.c.l.b16 %v9510
      %v9774 = vunpack.c.l.b16 %v9520
      %v9775 = vunpack.c.l.b16 %v9534
      %v9776 = vunpack.c.l.b16 %v9544
      %v9777 = vunpack.c.l.b16 %v9558
      %v9778 = vunpack.c.l.b16 %v9568
      %v9779 = vunpack.c.l.b16 %v9582
      %v9780 = vunpack.c.l.b16 %v9592
      %v9781 = vunpack.c.l.b16 %v9606
      %v9782 = vunpack.c.l.b16 %v9616
      %v9783 = vunpack.c.l.b16 %v9630
      %v9784 = vunpack.c.l.b16 %v9640
      %v9785 = vunpack.c.l.b16 %v9654
      %v9786 = vunpack.c.l.b16 %v9664
      %v9787 = vunpack.c.l.b16 %v9678
      %v9788 = vunpack.c.l.b16 %v9688
      %v9789 = vunpack.c.l.b16 %v9702
      %v9790 = vunpack.c.l.b16 %v9712
      %v9791 = vunpack.c.l.b16 %v9726
      %v9792 = vunpack.c.l.b16 %v9736
      %v9793 = vunpack.c.l.b16 %v9750
      %v9794 = vunpack.c.l.b16 %v9760
      %v9795 = vpack.c.b16 %v9764, %v9763
      %v9796 = vpack.c.b16 %v9766, %v9765
      %v9797 = vpack.c.b16 %v9768, %v9767
      %v9798 = vpack.c.b16 %v9770, %v9769
      %v9799 = vpack.c.b16 %v9772, %v9771
      %v9800 = vpack.c.b16 %v9774, %v9773
      %v9801 = vpack.c.b16 %v9776, %v9775
      %v9802 = vpack.c.b16 %v9778, %v9777
      %v9803 = vpack.c.b16 %v9780, %v9779
      %v9804 = vpack.c.b16 %v9782, %v9781
      %v9805 = vpack.c.b16 %v9784, %v9783
      %v9806 = vpack.c.b16 %v9786, %v9785
      %v9807 = vpack.c.b16 %v9788, %v9787
      %v9808 = vpack.c.b16 %v9790, %v9789
      %v9809 = vpack.c.b16 %v9792, %v9791
      %v9810 = vpack.c.b16 %v9794, %v9793
      %v9812 = vsel %vm6456, %v9795, 0
      %v9815 = vsel %vm6456, %v9796, 0
      %v9818 = vsel %vm6456, %v9797, 0
      %v9821 = vsel %vm6456, %v9798, 0
      %v9824 = vsel %vm6456, %v9799, 0
      %v9827 = vsel %vm6456, %v9800, 0
      %v9830 = vsel %vm6456, %v9801, 0
      %v9833 = vsel %vm6456, %v9802, 0
      %v9836 = vsel %vm6456, %v9803, 0
      %v9839 = vsel %vm6456, %v9804, 0
      %v9842 = vsel %vm6456, %v9805, 0
      %v9845 = vsel %vm6456, %v9806, 0
      %v9848 = vsel %vm6456, %v9807, 0
      %v9851 = vsel %vm6456, %v9808, 0
      %v9854 = vsel %vm6456, %v9809, 0
      %v9857 = vsel %vm6456, %v9810, 0
      %v9860 = vsel %vm6505, %v9762, 0
      %9862 = vmatprep.subr.bf16.mxu0 0
      %9863 = vmatpush1.bf16.msra.mxu0 %v9860
      %9864 = vmatprep.subr.bf16.mxu0 0
      %9865 = vmatpush1.bf16.msra.mxu0 0
      %9866 = vmatprep.subr.bf16.mxu0 0
      %9867 = vmatpush1.bf16.msra.mxu0 0
      %9868 = vmatprep.subr.bf16.mxu0 0
      %9869 = vmatpush1.bf16.msra.mxu0 0
      %9870 = vmatprep.subr.bf16.mxu0 0
      %9871 = vmatpush1.bf16.msra.mxu0 0
      %9872 = vmatprep.subr.bf16.mxu0 0
      %9873 = vmatpush1.bf16.msra.mxu0 0
      %9874 = vmatprep.subr.bf16.mxu0 0
      %9875 = vmatpush1.bf16.msra.mxu0 0
      %9876 = vmatprep.subr.bf16.mxu0 0
      %9877 = vmatpush1.bf16.msra.mxu0 0
      %9878 = vmatprep.subr.bf16.mxu0 0
      %9879 = vmatpush1.bf16.msra.mxu0 0
      %9880 = vmatprep.subr.bf16.mxu0 0
      %9881 = vmatpush1.bf16.msra.mxu0 0
      %9882 = vmatprep.subr.bf16.mxu0 0
      %9883 = vmatpush1.bf16.msra.mxu0 0
      %9884 = vmatprep.subr.bf16.mxu0 0
      %9885 = vmatpush1.bf16.msra.mxu0 0
      %9886 = vmatprep.subr.bf16.mxu0 0
      %9887 = vmatpush1.bf16.msra.mxu0 0
      %9888 = vmatprep.subr.bf16.mxu0 0
      %9889 = vmatpush1.bf16.msra.mxu0 0
      %9890 = vmatprep.subr.bf16.mxu0 0
      %9891 = vmatpush1.bf16.msra.mxu0 0
      %9892 = vmatprep.subr.bf16.mxu0 0
      %9893 = vmatpush1.bf16.msra.mxu0 0
      %9894 = vmatprep.mubr.bf16.mxu0 0
      %9895 = vmatmul.mubr.bf16.gmra.mrb[0].mxu0 %v9812
      %v9896 = vpop.f32.mrb[0].mxu0
      %v9897 = vadd.f32 0.0, %v9896
      %v9898 = vpop.f32.mrb[0].mxu0
      %v9899 = vpop.f32.mrb[0].mxu0
      %v9900 = vadd.f32 0.0, %v9899
      %v9901 = vpop.f32.mrb[0].mxu0
      %9902 = vmatprep.mubr.bf16.mxu0 0
      %9903 = vmatmul.mubr.bf16.gmra.mrb[0].mxu0 %v9815
      %v9904 = vpop.f32.mrb[0].mxu0
      %v9905 = vadd.f32 0.0, %v9904
      %v9906 = vpop.f32.mrb[0].mxu0
      %v9907 = vpop.f32.mrb[0].mxu0
      %v9908 = vadd.f32 0.0, %v9907
      %v9909 = vpop.f32.mrb[0].mxu0
      %9910 = vmatprep.mubr.bf16.mxu0 0
      %9911 = vmatmul.mubr.bf16.gmra.mrb[0].mxu0 %v9818
      %v9912 = vpop.f32.mrb[0].mxu0
      %v9913 = vadd.f32 0.0, %v9912
      %v9914 = vpop.f32.mrb[0].mxu0
      %v9915 = vpop.f32.mrb[0].mxu0
      %v9916 = vadd.f32 0.0, %v9915
      %v9917 = vpop.f32.mrb[0].mxu0
      %9918 = vmatprep.mubr.bf16.mxu0 0
      %9919 = vmatmul.mubr.bf16.gmra.mrb[0].mxu0 %v9821
      %v9920 = vpop.f32.mrb[0].mxu0
      %v9921 = vadd.f32 0.0, %v9920
      %v9922 = vpop.f32.mrb[0].mxu0
      %v9923 = vpop.f32.mrb[0].mxu0
      %v9924 = vadd.f32 0.0, %v9923
      %v9925 = vpop.f32.mrb[0].mxu0
      %9926 = vmatprep.mubr.bf16.mxu0 0
      %9927 = vmatmul.mubr.bf16.gmra.mrb[0].mxu0 %v9824
      %v9928 = vpop.f32.mrb[0].mxu0
      %v9929 = vadd.f32 0.0, %v9928
      %v9930 = vpop.f32.mrb[0].mxu0
      %v9931 = vpop.f32.mrb[0].mxu0
      %v9932 = vadd.f32 0.0, %v9931
      %v9933 = vpop.f32.mrb[0].mxu0
      %9934 = vmatprep.mubr.bf16.mxu0 0
      %9935 = vmatmul.mubr.bf16.gmra.mrb[0].mxu0 %v9827
      %v9936 = vpop.f32.mrb[0].mxu0
      %v9937 = vadd.f32 0.0, %v9936
      %v9938 = vpop.f32.mrb[0].mxu0
      %v9939 = vpop.f32.mrb[0].mxu0
      %v9940 = vadd.f32 0.0, %v9939
      %v9941 = vpop.f32.mrb[0].mxu0
      %9942 = vmatprep.mubr.bf16.mxu0 0
      %9943 = vmatmul.mubr.bf16.gmra.mrb[0].mxu0 %v9830
      %v9944 = vpop.f32.mrb[0].mxu0
      %v9945 = vadd.f32 0.0, %v9944
      %v9946 = vpop.f32.mrb[0].mxu0
      %v9947 = vpop.f32.mrb[0].mxu0
      %v9948 = vadd.f32 0.0, %v9947
      %v9949 = vpop.f32.mrb[0].mxu0
      %9950 = vmatprep.mubr.bf16.mxu0 0
      %9951 = vmatmul.mubr.bf16.gmra.mrb[0].mxu0 %v9833
      %v9952 = vpop.f32.mrb[0].mxu0
      %v9953 = vadd.f32 0.0, %v9952
      %v9954 = vpop.f32.mrb[0].mxu0
      %v9955 = vpop.f32.mrb[0].mxu0
      %v9956 = vadd.f32 0.0, %v9955
      %v9957 = vpop.f32.mrb[0].mxu0
      %9958 = vmatprep.mubr.bf16.mxu0 0
      %9959 = vmatmul.mubr.bf16.gmra.mrb[0].mxu0 %v9836
      %v9960 = vpop.f32.mrb[0].mxu0
      %v9961 = vadd.f32 0.0, %v9960
      %v9962 = vpop.f32.mrb[0].mxu0
      %v9963 = vpop.f32.mrb[0].mxu0
      %v9964 = vadd.f32 0.0, %v9963
      %v9965 = vpop.f32.mrb[0].mxu0
      %9966 = vmatprep.mubr.bf16.mxu0 0
      %9967 = vmatmul.mubr.bf16.gmra.mrb[0].mxu0 %v9839
      %v9968 = vpop.f32.mrb[0].mxu0
      %v9969 = vadd.f32 0.0, %v9968
      %v9970 = vpop.f32.mrb[0].mxu0
      %v9971 = vpop.f32.mrb[0].mxu0
      %v9972 = vadd.f32 0.0, %v9971
      %v9973 = vpop.f32.mrb[0].mxu0
      %9974 = vmatprep.mubr.bf16.mxu0 0
      %9975 = vmatmul.mubr.bf16.gmra.mrb[0].mxu0 %v9842
      %v9976 = vpop.f32.mrb[0].mxu0
      %v9977 = vadd.f32 0.0, %v9976
      %v9978 = vpop.f32.mrb[0].mxu0
      %v9979 = vpop.f32.mrb[0].mxu0
      %v9980 = vadd.f32 0.0, %v9979
      %v9981 = vpop.f32.mrb[0].mxu0
      %9982 = vmatprep.mubr.bf16.mxu0 0
      %9983 = vmatmul.mubr.bf16.gmra.mrb[0].mxu0 %v9845
      %v9984 = vpop.f32.mrb[0].mxu0
      %v9985 = vadd.f32 0.0, %v9984
      %v9986 = vpop.f32.mrb[0].mxu0
      %v9987 = vpop.f32.mrb[0].mxu0
      %v9988 = vadd.f32 0.0, %v9987
      %v9989 = vpop.f32.mrb[0].mxu0
      %9990 = vmatprep.mubr.bf16.mxu0 0
      %9991 = vmatmul.mubr.bf16.gmra.mrb[0].mxu0 %v9848
      %v9992 = vpop.f32.mrb[0].mxu0
      %v9993 = vadd.f32 0.0, %v9992
      %v9994 = vpop.f32.mrb[0].mxu0
      %v9995 = vpop.f32.mrb[0].mxu0
      %v9996 = vadd.f32 0.0, %v9995
      %v9997 = vpop.f32.mrb[0].mxu0
      %9998 = vmatprep.mubr.bf16.mxu0 0
      %9999 = vmatmul.mubr.bf16.gmra.mrb[0].mxu0 %v9851
      %v10000 = vpop.f32.mrb[0].mxu0
      %v10001 = vadd.f32 0.0, %v10000
      %v10002 = vpop.f32.mrb[0].mxu0
      %v10003 = vpop.f32.mrb[0].mxu0
      %v10004 = vadd.f32 0.0, %v10003
      %v10005 = vpop.f32.mrb[0].mxu0
      %10006 = vmatprep.mubr.bf16.mxu0 0
      %10007 = vmatmul.mubr.bf16.gmra.mrb[0].mxu0 %v9854
      %v10008 = vpop.f32.mrb[0].mxu0
      %v10009 = vadd.f32 0.0, %v10008
      %v10010 = vpop.f32.mrb[0].mxu0
      %v10011 = vpop.f32.mrb[0].mxu0
      %v10012 = vadd.f32 0.0, %v10011
      %v10013 = vpop.f32.mrb[0].mxu0
      %10014 = vmatprep.mubr.bf16.mxu0 0
      %10015 = vmatmul.mubr.bf16.gmra.mrb[0].mxu0 %v9857
      %v10016 = vpop.f32.mrb[0].mxu0
      %v10017 = vadd.f32 0.0, %v10016
      %v10018 = vpop.f32.mrb[0].mxu0
      %v10019 = vpop.f32.mrb[0].mxu0
      %v10020 = vadd.f32 0.0, %v10019
      %v10021 = vpop.f32.mrb[0].mxu0
      %10022 = vdwg.mxu0
      %v10023 = vadd.f32 %v9297, %v9897
      %v10024 = vadd.f32 %v9298, %v9900
      %v10025 = vadd.f32 %v9299, %v9905
      %v10026 = vadd.f32 %v9300, %v9908
      %v10027 = vadd.f32 %v9301, %v9913
      %v10028 = vadd.f32 %v9302, %v9916
      %v10029 = vadd.f32 %v9303, %v9921
      %v10030 = vadd.f32 %v9304, %v9924
      %v10031 = vadd.f32 %v9305, %v9929
      %v10032 = vadd.f32 %v9306, %v9932
      %v10033 = vadd.f32 %v9307, %v9937
      %v10034 = vadd.f32 %v9308, %v9940
      %v10035 = vadd.f32 %v9309, %v9945
      %v10036 = vadd.f32 %v9310, %v9948
      %v10037 = vadd.f32 %v9311, %v9953
      %v10038 = vadd.f32 %v9312, %v9956
      %v10039 = vadd.f32 %v9313, %v9961
      %v10040 = vadd.f32 %v9314, %v9964
      %v10041 = vadd.f32 %v9315, %v9969
      %v10042 = vadd.f32 %v9316, %v9972
      %v10043 = vadd.f32 %v9317, %v9977
      %v10044 = vadd.f32 %v9318, %v9980
      %v10045 = vadd.f32 %v9319, %v9985
      %v10046 = vadd.f32 %v9320, %v9988
      %v10047 = vadd.f32 %v9321, %v9993
      %v10048 = vadd.f32 %v9322, %v9996
      %v10049 = vadd.f32 %v9323, %v10001
      %v10050 = vadd.f32 %v9324, %v10004
      %v10051 = vadd.f32 %v9325, %v10009
      %v10052 = vadd.f32 %v9326, %v10012
      %v10053 = vadd.f32 %v9327, %v10017
      %v10054 = vadd.f32 %v9328, %v10020
      %v10055 = vld [vmem:[%s8970] sm:$0xe]
      %v10056 = vld [vmem:[%s8970 + $0xc] sm:$0xe]
      %v10057 = vld [vmem:[%s8970 + $0x18] sm:$0xe]
      %v10058 = vld [vmem:[%s8970 + $0x24] sm:$0xe]
      %v10059 = vld [vmem:[%s8970 + $0x30] sm:$0xe]
      %v10060 = vld [vmem:[%s8970 + $0x3c] sm:$0xe]
      %v10061 = vld [vmem:[%s8970 + $0x48] sm:$0xe]
      %v10062 = vld [vmem:[%s8970 + $0x54] sm:$0xe]
      %v10063 = vld [vmem:[%s8970 + $0x60] sm:$0xe]
      %v10064 = vld [vmem:[%s8970 + $0x6c] sm:$0xe]
      %v10065 = vld [vmem:[%s8970 + $0x78] sm:$0xe]
      %v10066 = vld [vmem:[%s8970 + $0x84] sm:$0xe]
      %v10067 = vld [vmem:[%s8970 + $0x90] sm:$0xe]
      %v10068 = vld [vmem:[%s8970 + $0x9c] sm:$0xe]
      %v10069 = vld [vmem:[%s8970 + $0xa8] sm:$0xe]
      %v10070 = vld [vmem:[%s8970 + $0xb4] sm:$0xe]
      %v10119 = vrot.slane %v10055, 5
      %v10120 = vrot.slane %v10119, 4
      %v10121 = vrot.slane %v9330, 5
      %v10122 = vsel %vm1853, %v10120, %v10121
      %v10123 = vrot.slane %v10121, 4
      %v10124 = vrot.slane %v9331, 5
      %v10125 = vsel %vm1853, %v10123, %v10124
      %v10126 = vrot.slane %v10056, 5
      %v10127 = vrot.slane %v10126, 4
      %v10128 = vrot.slane %v9333, 5
      %v10129 = vsel %vm1853, %v10127, %v10128
      %v10130 = vrot.slane %v10128, 4
      %v10131 = vrot.slane %v9334, 5
      %v10132 = vsel %vm1853, %v10130, %v10131
      %v10133 = vrot.slane %v10057, 5
      %v10134 = vrot.slane %v10133, 4
      %v10135 = vrot.slane %v9336, 5
      %v10136 = vsel %vm1853, %v10134, %v10135
      %v10137 = vrot.slane %v10135, 4
      %v10138 = vrot.slane %v9337, 5
      %v10139 = vsel %vm1853, %v10137, %v10138
      %v10140 = vrot.slane %v10058, 5
      %v10141 = vrot.slane %v10140, 4
      %v10142 = vrot.slane %v9339, 5
      %v10143 = vsel %vm1853, %v10141, %v10142
      %v10144 = vrot.slane %v10142, 4
      %v10145 = vrot.slane %v9340, 5
      %v10146 = vsel %vm1853, %v10144, %v10145
      %v10147 = vrot.slane %v10059, 5
      %v10148 = vrot.slane %v10147, 4
      %v10149 = vrot.slane %v9342, 5
      %v10150 = vsel %vm1853, %v10148, %v10149
      %v10151 = vrot.slane %v10149, 4
      %v10152 = vrot.slane %v9343, 5
      %v10153 = vsel %vm1853, %v10151, %v10152
      %v10154 = vrot.slane %v10060, 5
      %v10155 = vrot.slane %v10154, 4
      %v10156 = vrot.slane %v9345, 5
      %v10157 = vsel %vm1853, %v10155, %v10156
      %v10158 = vrot.slane %v10156, 4
      %v10159 = vrot.slane %v9346, 5
      %v10160 = vsel %vm1853, %v10158, %v10159
      %v10161 = vrot.slane %v10061, 5
      %v10162 = vrot.slane %v10161, 4
      %v10163 = vrot.slane %v9348, 5
      %v10164 = vsel %vm1853, %v10162, %v10163
      %v10165 = vrot.slane %v10163, 4
      %v10166 = vrot.slane %v9349, 5
      %v10167 = vsel %vm1853, %v10165, %v10166
      %v10168 = vrot.slane %v10062, 5
      %v10169 = vrot.slane %v10168, 4
      %v10170 = vrot.slane %v9351, 5
      %v10171 = vsel %vm1853, %v10169, %v10170
      %v10172 = vrot.slane %v10170, 4
      %v10173 = vrot.slane %v9352, 5
      %v10174 = vsel %vm1853, %v10172, %v10173
      %v10175 = vrot.slane %v10063, 5
      %v10176 = vrot.slane %v10175, 4
      %v10177 = vrot.slane %v9354, 5
      %v10178 = vsel %vm1853, %v10176, %v10177
      %v10179 = vrot.slane %v10177, 4
      %v10180 = vrot.slane %v9355, 5
      %v10181 = vsel %vm1853, %v10179, %v10180
      %v10182 = vrot.slane %v10064, 5
      %v10183 = vrot.slane %v10182, 4
      %v10184 = vrot.slane %v9357, 5
      %v10185 = vsel %vm1853, %v10183, %v10184
      %v10186 = vrot.slane %v10184, 4
      %v10187 = vrot.slane %v9358, 5
      %v10188 = vsel %vm1853, %v10186, %v10187
      %v10189 = vrot.slane %v10065, 5
      %v10190 = vrot.slane %v10189, 4
      %v10191 = vrot.slane %v9360, 5
      %v10192 = vsel %vm1853, %v10190, %v10191
      %v10193 = vrot.slane %v10191, 4
      %v10194 = vrot.slane %v9361, 5
      %v10195 = vsel %vm1853, %v10193, %v10194
      %v10196 = vrot.slane %v10066, 5
      %v10197 = vrot.slane %v10196, 4
      %v10198 = vrot.slane %v9363, 5
      %v10199 = vsel %vm1853, %v10197, %v10198
      %v10200 = vrot.slane %v10198, 4
      %v10201 = vrot.slane %v9364, 5
      %v10202 = vsel %vm1853, %v10200, %v10201
      %v10203 = vrot.slane %v10067, 5
      %v10204 = vrot.slane %v10203, 4
      %v10205 = vrot.slane %v9366, 5
      %v10206 = vsel %vm1853, %v10204, %v10205
      %v10207 = vrot.slane %v10205, 4
      %v10208 = vrot.slane %v9367, 5
      %v10209 = vsel %vm1853, %v10207, %v10208
      %v10210 = vrot.slane %v10068, 5
      %v10211 = vrot.slane %v10210, 4
      %v10212 = vrot.slane %v9369, 5
      %v10213 = vsel %vm1853, %v10211, %v10212
      %v10214 = vrot.slane %v10212, 4
      %v10215 = vrot.slane %v9370, 5
      %v10216 = vsel %vm1853, %v10214, %v10215
      %v10217 = vrot.slane %v10069, 5
      %v10218 = vrot.slane %v10217, 4
      %v10219 = vrot.slane %v9372, 5
      %v10220 = vsel %vm1853, %v10218, %v10219
      %v10221 = vrot.slane %v10219, 4
      %v10222 = vrot.slane %v9373, 5
      %v10223 = vsel %vm1853, %v10221, %v10222
      %v10224 = vrot.slane %v10070, 5
      %v10225 = vrot.slane %v10224, 4
      %v10226 = vrot.slane %v9375, 5
      %v10227 = vsel %vm1853, %v10225, %v10226
      %v10228 = vrot.slane %v10226, 4
      %v10229 = vrot.slane %v9376, 5
      %v10230 = vsel %vm1853, %v10228, %v10229
      %s10231 = scalar_lea.vmem %s3, 32
      %v10232 = vld [vmem:[%s10231] sm:$0xf]
      %v10233 = vunpack.c.l.b16 %v10122
      %v10234 = vunpack.c.l.b16 %v10125
      %v10235 = vunpack.c.l.b16 %v10129
      %v10236 = vunpack.c.l.b16 %v10132
      %v10237 = vunpack.c.l.b16 %v10136
      %v10238 = vunpack.c.l.b16 %v10139
      %v10239 = vunpack.c.l.b16 %v10143
      %v10240 = vunpack.c.l.b16 %v10146
      %v10241 = vunpack.c.l.b16 %v10150
      %v10242 = vunpack.c.l.b16 %v10153
      %v10243 = vunpack.c.l.b16 %v10157
      %v10244 = vunpack.c.l.b16 %v10160
      %v10245 = vunpack.c.l.b16 %v10164
      %v10246 = vunpack.c.l.b16 %v10167
      %v10247 = vunpack.c.l.b16 %v10171
      %v10248 = vunpack.c.l.b16 %v10174
      %v10249 = vunpack.c.l.b16 %v10178
      %v10250 = vunpack.c.l.b16 %v10181
      %v10251 = vunpack.c.l.b16 %v10185
      %v10252 = vunpack.c.l.b16 %v10188
      %v10253 = vunpack.c.l.b16 %v10192
      %v10254 = vunpack.c.l.b16 %v10195
      %v10255 = vunpack.c.l.b16 %v10199
      %v10256 = vunpack.c.l.b16 %v10202
      %v10257 = vunpack.c.l.b16 %v10206
      %v10258 = vunpack.c.l.b16 %v10209
      %v10259 = vunpack.c.l.b16 %v10213
      %v10260 = vunpack.c.l.b16 %v10216
      %v10261 = vunpack.c.l.b16 %v10220
      %v10262 = vunpack.c.l.b16 %v10223
      %v10263 = vunpack.c.l.b16 %v10227
      %v10264 = vunpack.c.l.b16 %v10230
      %v10265 = vpack.c.b16 %v10234, %v10233
      %v10266 = vpack.c.b16 %v10236, %v10235
      %v10267 = vpack.c.b16 %v10238, %v10237
      %v10268 = vpack.c.b16 %v10240, %v10239
      %v10269 = vpack.c.b16 %v10242, %v10241
      %v10270 = vpack.c.b16 %v10244, %v10243
      %v10271 = vpack.c.b16 %v10246, %v10245
      %v10272 = vpack.c.b16 %v10248, %v10247
      %v10273 = vpack.c.b16 %v10250, %v10249
      %v10274 = vpack.c.b16 %v10252, %v10251
      %v10275 = vpack.c.b16 %v10254, %v10253
      %v10276 = vpack.c.b16 %v10256, %v10255
      %v10277 = vpack.c.b16 %v10258, %v10257
      %v10278 = vpack.c.b16 %v10260, %v10259
      %v10279 = vpack.c.b16 %v10262, %v10261
      %v10280 = vpack.c.b16 %v10264, %v10263
      %v10282 = vsel %vm6456, %v10265, 0
      %v10285 = vsel %vm6456, %v10266, 0
      %v10288 = vsel %vm6456, %v10267, 0
      %v10291 = vsel %vm6456, %v10268, 0
      %v10294 = vsel %vm6456, %v10269, 0
      %v10297 = vsel %vm6456, %v10270, 0
      %v10300 = vsel %vm6456, %v10271, 0
      %v10303 = vsel %vm6456, %v10272, 0
      %v10306 = vsel %vm6456, %v10273, 0
      %v10309 = vsel %vm6456, %v10274, 0
      %v10312 = vsel %vm6456, %v10275, 0
      %v10315 = vsel %vm6456, %v10276, 0
      %v10318 = vsel %vm6456, %v10277, 0
      %v10321 = vsel %vm6456, %v10278, 0
      %v10324 = vsel %vm6456, %v10279, 0
      %v10327 = vsel %vm6456, %v10280, 0
      %v10330 = vsel %vm6505, %v10232, 0
      %10332 = vmatprep.subr.bf16.mxu0 0
      %10333 = vmatpush1.bf16.msra.mxu0 %v10330
      %10334 = vmatprep.subr.bf16.mxu0 0
      %10335 = vmatpush1.bf16.msra.mxu0 0
      %10336 = vmatprep.subr.bf16.mxu0 0
      %10337 = vmatpush1.bf16.msra.mxu0 0
      %10338 = vmatprep.subr.bf16.mxu0 0
      %10339 = vmatpush1.bf16.msra.mxu0 0
      %10340 = vmatprep.subr.bf16.mxu0 0
      %10341 = vmatpush1.bf16.msra.mxu0 0
      %10342 = vmatprep.subr.bf16.mxu0 0
      %10343 = vmatpush1.bf16.msra.mxu0 0
      %10344 = vmatprep.subr.bf16.mxu0 0
      %10345 = vmatpush1.bf16.msra.mxu0 0
      %10346 = vmatprep.subr.bf16.mxu0 0
      %10347 = vmatpush1.bf16.msra.mxu0 0
      %10348 = vmatprep.subr.bf16.mxu0 0
      %10349 = vmatpush1.bf16.msra.mxu0 0
      %10350 = vmatprep.subr.bf16.mxu0 0
      %10351 = vmatpush1.bf16.msra.mxu0 0
      %10352 = vmatprep.subr.bf16.mxu0 0
      %10353 = vmatpush1.bf16.msra.mxu0 0
      %10354 = vmatprep.subr.bf16.mxu0 0
      %10355 = vmatpush1.bf16.msra.mxu0 0
      %10356 = vmatprep.subr.bf16.mxu0 0
      %10357 = vmatpush1.bf16.msra.mxu0 0
      %10358 = vmatprep.subr.bf16.mxu0 0
      %10359 = vmatpush1.bf16.msra.mxu0 0
      %10360 = vmatprep.subr.bf16.mxu0 0
      %10361 = vmatpush1.bf16.msra.mxu0 0
      %10362 = vmatprep.subr.bf16.mxu0 0
      %10363 = vmatpush1.bf16.msra.mxu0 0
      %10364 = vmatprep.mubr.bf16.mxu0 0
      %10365 = vmatmul.mubr.bf16.gmra.mrb[0].mxu0 %v10282
      %v10366 = vpop.f32.mrb[0].mxu0
      %v10367 = vadd.f32 0.0, %v10366
      %v10368 = vpop.f32.mrb[0].mxu0
      %v10369 = vpop.f32.mrb[0].mxu0
      %v10370 = vadd.f32 0.0, %v10369
      %v10371 = vpop.f32.mrb[0].mxu0
      %10372 = vmatprep.mubr.bf16.mxu0 0
      %10373 = vmatmul.mubr.bf16.gmra.mrb[0].mxu0 %v10285
      %v10374 = vpop.f32.mrb[0].mxu0
      %v10375 = vadd.f32 0.0, %v10374
      %v10376 = vpop.f32.mrb[0].mxu0
      %v10377 = vpop.f32.mrb[0].mxu0
      %v10378 = vadd.f32 0.0, %v10377
      %v10379 = vpop.f32.mrb[0].mxu0
      %10380 = vmatprep.mubr.bf16.mxu0 0
      %10381 = vmatmul.mubr.bf16.gmra.mrb[0].mxu0 %v10288
      %v10382 = vpop.f32.mrb[0].mxu0
      %v10383 = vadd.f32 0.0, %v10382
      %v10384 = vpop.f32.mrb[0].mxu0
      %v10385 = vpop.f32.mrb[0].mxu0
      %v10386 = vadd.f32 0.0, %v10385
      %v10387 = vpop.f32.mrb[0].mxu0
      %10388 = vmatprep.mubr.bf16.mxu0 0
      %10389 = vmatmul.mubr.bf16.gmra.mrb[0].mxu0 %v10291
      %v10390 = vpop.f32.mrb[0].mxu0
      %v10391 = vadd.f32 0.0, %v10390
      %v10392 = vpop.f32.mrb[0].mxu0
      %v10393 = vpop.f32.mrb[0].mxu0
      %v10394 = vadd.f32 0.0, %v10393
      %v10395 = vpop.f32.mrb[0].mxu0
      %10396 = vmatprep.mubr.bf16.mxu0 0
      %10397 = vmatmul.mubr.bf16.gmra.mrb[0].mxu0 %v10294
      %v10398 = vpop.f32.mrb[0].mxu0
      %v10399 = vadd.f32 0.0, %v10398
      %v10400 = vpop.f32.mrb[0].mxu0
      %v10401 = vpop.f32.mrb[0].mxu0
      %v10402 = vadd.f32 0.0, %v10401
      %v10403 = vpop.f32.mrb[0].mxu0
      %10404 = vmatprep.mubr.bf16.mxu0 0
      %10405 = vmatmul.mubr.bf16.gmra.mrb[0].mxu0 %v10297
      %v10406 = vpop.f32.mrb[0].mxu0
      %v10407 = vadd.f32 0.0, %v10406
      %v10408 = vpop.f32.mrb[0].mxu0
      %v10409 = vpop.f32.mrb[0].mxu0
      %v10410 = vadd.f32 0.0, %v10409
      %v10411 = vpop.f32.mrb[0].mxu0
      %10412 = vmatprep.mubr.bf16.mxu0 0
      %10413 = vmatmul.mubr.bf16.gmra.mrb[0].mxu0 %v10300
      %v10414 = vpop.f32.mrb[0].mxu0
      %v10415 = vadd.f32 0.0, %v10414
      %v10416 = vpop.f32.mrb[0].mxu0
      %v10417 = vpop.f32.mrb[0].mxu0
      %v10418 = vadd.f32 0.0, %v10417
      %v10419 = vpop.f32.mrb[0].mxu0
      %10420 = vmatprep.mubr.bf16.mxu0 0
      %10421 = vmatmul.mubr.bf16.gmra.mrb[0].mxu0 %v10303
      %v10422 = vpop.f32.mrb[0].mxu0
      %v10423 = vadd.f32 0.0, %v10422
      %v10424 = vpop.f32.mrb[0].mxu0
      %v10425 = vpop.f32.mrb[0].mxu0
      %v10426 = vadd.f32 0.0, %v10425
      %v10427 = vpop.f32.mrb[0].mxu0
      %10428 = vmatprep.mubr.bf16.mxu0 0
      %10429 = vmatmul.mubr.bf16.gmra.mrb[0].mxu0 %v10306
      %v10430 = vpop.f32.mrb[0].mxu0
      %v10431 = vadd.f32 0.0, %v10430
      %v10432 = vpop.f32.mrb[0].mxu0
      %v10433 = vpop.f32.mrb[0].mxu0
      %v10434 = vadd.f32 0.0, %v10433
      %v10435 = vpop.f32.mrb[0].mxu0
      %10436 = vmatprep.mubr.bf16.mxu0 0
      %10437 = vmatmul.mubr.bf16.gmra.mrb[0].mxu0 %v10309
      %v10438 = vpop.f32.mrb[0].mxu0
      %v10439 = vadd.f32 0.0, %v10438
      %v10440 = vpop.f32.mrb[0].mxu0
      %v10441 = vpop.f32.mrb[0].mxu0
      %v10442 = vadd.f32 0.0, %v10441
      %v10443 = vpop.f32.mrb[0].mxu0
      %10444 = vmatprep.mubr.bf16.mxu0 0
      %10445 = vmatmul.mubr.bf16.gmra.mrb[0].mxu0 %v10312
      %v10446 = vpop.f32.mrb[0].mxu0
      %v10447 = vadd.f32 0.0, %v10446
      %v10448 = vpop.f32.mrb[0].mxu0
      %v10449 = vpop.f32.mrb[0].mxu0
      %v10450 = vadd.f32 0.0, %v10449
      %v10451 = vpop.f32.mrb[0].mxu0
      %10452 = vmatprep.mubr.bf16.mxu0 0
      %10453 = vmatmul.mubr.bf16.gmra.mrb[0].mxu0 %v10315
      %v10454 = vpop.f32.mrb[0].mxu0
      %v10455 = vadd.f32 0.0, %v10454
      %v10456 = vpop.f32.mrb[0].mxu0
      %v10457 = vpop.f32.mrb[0].mxu0
      %v10458 = vadd.f32 0.0, %v10457
      %v10459 = vpop.f32.mrb[0].mxu0
      %10460 = vmatprep.mubr.bf16.mxu0 0
      %10461 = vmatmul.mubr.bf16.gmra.mrb[0].mxu0 %v10318
      %v10462 = vpop.f32.mrb[0].mxu0
      %v10463 = vadd.f32 0.0, %v10462
      %v10464 = vpop.f32.mrb[0].mxu0
      %v10465 = vpop.f32.mrb[0].mxu0
      %v10466 = vadd.f32 0.0, %v10465
      %v10467 = vpop.f32.mrb[0].mxu0
      %10468 = vmatprep.mubr.bf16.mxu0 0
      %10469 = vmatmul.mubr.bf16.gmra.mrb[0].mxu0 %v10321
      %v10470 = vpop.f32.mrb[0].mxu0
      %v10471 = vadd.f32 0.0, %v10470
      %v10472 = vpop.f32.mrb[0].mxu0
      %v10473 = vpop.f32.mrb[0].mxu0
      %v10474 = vadd.f32 0.0, %v10473
      %v10475 = vpop.f32.mrb[0].mxu0
      %10476 = vmatprep.mubr.bf16.mxu0 0
      %10477 = vmatmul.mubr.bf16.gmra.mrb[0].mxu0 %v10324
      %v10478 = vpop.f32.mrb[0].mxu0
      %v10479 = vadd.f32 0.0, %v10478
      %v10480 = vpop.f32.mrb[0].mxu0
      %v10481 = vpop.f32.mrb[0].mxu0
      %v10482 = vadd.f32 0.0, %v10481
      %v10483 = vpop.f32.mrb[0].mxu0
      %10484 = vmatprep.mubr.bf16.mxu0 0
      %10485 = vmatmul.mubr.bf16.gmra.mrb[0].mxu0 %v10327
      %v10486 = vpop.f32.mrb[0].mxu0
      %v10487 = vadd.f32 0.0, %v10486
      %v10488 = vpop.f32.mrb[0].mxu0
      %v10489 = vpop.f32.mrb[0].mxu0
      %v10490 = vadd.f32 0.0, %v10489
      %v10491 = vpop.f32.mrb[0].mxu0
      %10492 = vdwg.mxu0
      %v10493 = vadd.f32 %v10023, %v10367
      %v10494 = vadd.f32 %v10024, %v10370
      %v10495 = vadd.f32 %v10025, %v10375
      %v10496 = vadd.f32 %v10026, %v10378
      %v10497 = vadd.f32 %v10027, %v10383
      %v10498 = vadd.f32 %v10028, %v10386
      %v10499 = vadd.f32 %v10029, %v10391
      %v10500 = vadd.f32 %v10030, %v10394
      %v10501 = vadd.f32 %v10031, %v10399
      %v10502 = vadd.f32 %v10032, %v10402
      %v10503 = vadd.f32 %v10033, %v10407
      %v10504 = vadd.f32 %v10034, %v10410
      %v10505 = vadd.f32 %v10035, %v10415
      %v10506 = vadd.f32 %v10036, %v10418
      %v10507 = vadd.f32 %v10037, %v10423
      %v10508 = vadd.f32 %v10038, %v10426
      %v10509 = vadd.f32 %v10039, %v10431
      %v10510 = vadd.f32 %v10040, %v10434
      %v10511 = vadd.f32 %v10041, %v10439
      %v10512 = vadd.f32 %v10042, %v10442
      %v10513 = vadd.f32 %v10043, %v10447
      %v10514 = vadd.f32 %v10044, %v10450
      %v10515 = vadd.f32 %v10045, %v10455
      %v10516 = vadd.f32 %v10046, %v10458
      %v10517 = vadd.f32 %v10047, %v10463
      %v10518 = vadd.f32 %v10048, %v10466
      %v10519 = vadd.f32 %v10049, %v10471
      %v10520 = vadd.f32 %v10050, %v10474
      %v10521 = vadd.f32 %v10051, %v10479
      %v10522 = vadd.f32 %v10052, %v10482
      %v10523 = vadd.f32 %v10053, %v10487
      %v10524 = vadd.f32 %v10054, %v10490
      %v10525 = vld [vmem:[%s4] sm:$0x1]
      %v10527 = vlaneseq
      %v10528 = vshrl.u32 %v10527, 7
      %v10529 = vsub.s32 0, %v10528
      %v10530 = vrot.slane %v10525, %v10529
      %v10532 = vadd.f32 %v10493, %v10530
      %v10533 = vadd.f32 %v10494, %v10530
      %v10534 = vadd.f32 %v10495, %v10530
      %v10535 = vadd.f32 %v10496, %v10530
      %v10536 = vadd.f32 %v10497, %v10530
      %v10537 = vadd.f32 %v10498, %v10530
      %v10538 = vadd.f32 %v10499, %v10530
      %v10539 = vadd.f32 %v10500, %v10530
      %v10540 = vadd.f32 %v10501, %v10530
      %v10541 = vadd.f32 %v10502, %v10530
      %v10542 = vadd.f32 %v10503, %v10530
      %v10543 = vadd.f32 %v10504, %v10530
      %v10544 = vadd.f32 %v10505, %v10530
      %v10545 = vadd.f32 %v10506, %v10530
      %v10546 = vadd.f32 %v10507, %v10530
      %v10547 = vadd.f32 %v10508, %v10530
      %v10548 = vadd.f32 %v10509, %v10530
      %v10549 = vadd.f32 %v10510, %v10530
      %v10550 = vadd.f32 %v10511, %v10530
      %v10551 = vadd.f32 %v10512, %v10530
      %v10552 = vadd.f32 %v10513, %v10530
      %v10553 = vadd.f32 %v10514, %v10530
      %v10554 = vadd.f32 %v10515, %v10530
      %v10555 = vadd.f32 %v10516, %v10530
      %v10556 = vadd.f32 %v10517, %v10530
      %v10557 = vadd.f32 %v10518, %v10530
      %v10558 = vadd.f32 %v10519, %v10530
      %v10559 = vadd.f32 %v10520, %v10530
      %v10560 = vadd.f32 %v10521, %v10530
      %v10561 = vadd.f32 %v10522, %v10530
      %v10562 = vadd.f32 %v10523, %v10530
      %v10563 = vadd.f32 %v10524, %v10530
      %v10564 = vmax.f32 %v10532, 0.0
      %v10565 = vmax.f32 %v10533, 0.0
      %v10566 = vmax.f32 %v10534, 0.0
      %v10567 = vmax.f32 %v10535, 0.0
      %v10568 = vmax.f32 %v10536, 0.0
      %v10569 = vmax.f32 %v10537, 0.0
      %v10570 = vmax.f32 %v10538, 0.0
      %v10571 = vmax.f32 %v10539, 0.0
      %v10572 = vmax.f32 %v10540, 0.0
      %v10573 = vmax.f32 %v10541, 0.0
      %v10574 = vmax.f32 %v10542, 0.0
      %v10575 = vmax.f32 %v10543, 0.0
      %v10576 = vmax.f32 %v10544, 0.0
      %v10577 = vmax.f32 %v10545, 0.0
      %v10578 = vmax.f32 %v10546, 0.0
      %v10579 = vmax.f32 %v10547, 0.0
      %v10580 = vmax.f32 %v10548, 0.0
      %v10581 = vmax.f32 %v10549, 0.0
      %v10582 = vmax.f32 %v10550, 0.0
      %v10583 = vmax.f32 %v10551, 0.0
      %v10584 = vmax.f32 %v10552, 0.0
      %v10585 = vmax.f32 %v10553, 0.0
      %v10586 = vmax.f32 %v10554, 0.0
      %v10587 = vmax.f32 %v10555, 0.0
      %v10588 = vmax.f32 %v10556, 0.0
      %v10589 = vmax.f32 %v10557, 0.0
      %v10590 = vmax.f32 %v10558, 0.0
      %v10591 = vmax.f32 %v10559, 0.0
      %v10592 = vmax.f32 %v10560, 0.0
      %v10593 = vmax.f32 %v10561, 0.0
      %v10594 = vmax.f32 %v10562, 0.0
      %v10595 = vmax.f32 %v10563, 0.0
      %v10596 = vsel %vm6456, %v10564, -inf
      %v10597 = vsel %vm6456, %v10566, -inf
      %v10598 = vmax.f32 %v10596, %v10597
      %v10599 = vsel %vm6456, %v10565, -inf
      %v10600 = vsel %vm6456, %v10567, -inf
      %v10601 = vmax.f32 %v10599, %v10600
      %v10602 = vsel %vm6456, %v10568, -inf
      %v10603 = vsel %vm6456, %v10570, -inf
      %v10604 = vmax.f32 %v10602, %v10603
      %v10605 = vsel %vm6456, %v10569, -inf
      %v10606 = vsel %vm6456, %v10571, -inf
      %v10607 = vmax.f32 %v10605, %v10606
      %v10608 = vsel %vm6456, %v10572, -inf
      %v10609 = vsel %vm6456, %v10574, -inf
      %v10610 = vmax.f32 %v10608, %v10609
      %v10611 = vsel %vm6456, %v10573, -inf
      %v10612 = vsel %vm6456, %v10575, -inf
      %v10613 = vmax.f32 %v10611, %v10612
      %v10614 = vsel %vm6456, %v10576, -inf
      %v10615 = vsel %vm6456, %v10578, -inf
      %v10616 = vmax.f32 %v10614, %v10615
      %v10617 = vsel %vm6456, %v10577, -inf
      %v10618 = vsel %vm6456, %v10579, -inf
      %v10619 = vmax.f32 %v10617, %v10618
      %v10620 = vsel %vm6456, %v10580, -inf
      %v10621 = vsel %vm6456, %v10582, -inf
      %v10622 = vmax.f32 %v10620, %v10621
      %v10623 = vsel %vm6456, %v10581, -inf
      %v10624 = vsel %vm6456, %v10583, -inf
      %v10625 = vmax.f32 %v10623, %v10624
      %v10626 = vsel %vm6456, %v10584, -inf
      %v10627 = vsel %vm6456, %v10586, -inf
      %v10628 = vmax.f32 %v10626, %v10627
      %v10629 = vsel %vm6456, %v10585, -inf
      %v10630 = vsel %vm6456, %v10587, -inf
      %v10631 = vmax.f32 %v10629, %v10630
      %v10632 = vsel %vm6456, %v10588, -inf
      %v10633 = vsel %vm6456, %v10590, -inf
      %v10634 = vmax.f32 %v10632, %v10633
      %v10635 = vsel %vm6456, %v10589, -inf
      %v10636 = vsel %vm6456, %v10591, -inf
      %v10637 = vmax.f32 %v10635, %v10636
      %v10638 = vsel %vm6456, %v10592, -inf
      %v10639 = vsel %vm6456, %v10594, -inf
      %v10640 = vmax.f32 %v10638, %v10639
      %v10641 = vsel %vm6456, %v10593, -inf
      %v10642 = vsel %vm6456, %v10595, -inf
      %v10643 = vmax.f32 %v10641, %v10642
      %v10660 = vcombine.high %v10598, %v10598
      %v10662 = vunpack.c.l.s4 1983009808
      %v10663 = vunpack.c.0.s8 %v10662
      %v10664 = vlaneseq
      %v10665 = vshrl.u32 %v10664, 7
      %v10666 = vsub.s32 %v10663, %v10665
      %v10667 = vrot.slane %v10598, %v10666
      %v10669 = vunpack.c.l.s4 1983009808
      %v10670 = vunpack.c.0.s8 %v10669
      %v10671 = vlaneseq
      %v10672 = vshrl.u32 %v10671, 7
      %v10673 = vsub.s32 %v10670, %v10672
      %v10674 = vrot.slane %v10660, %v10673
      %v10675 = vcombine.high %v10667, %v10667
      %v10676 = vcombine.high %v10674, %v10674
      %v10677 = vcombine.high %v10601, %v10601
      %v10679 = vunpack.c.l.s4 1983009808
      %v10680 = vunpack.c.0.s8 %v10679
      %v10681 = vlaneseq
      %v10682 = vshrl.u32 %v10681, 7
      %v10683 = vsub.s32 %v10680, %v10682
      %v10684 = vrot.slane %v10601, %v10683
      %v10686 = vunpack.c.l.s4 1983009808
      %v10687 = vunpack.c.0.s8 %v10686
      %v10688 = vlaneseq
      %v10689 = vshrl.u32 %v10688, 7
      %v10690 = vsub.s32 %v10687, %v10689
      %v10691 = vrot.slane %v10677, %v10690
      %v10692 = vcombine.high %v10684, %v10684
      %v10693 = vcombine.high %v10691, %v10691
      %v10694 = vcombine.high %v10604, %v10604
      %v10696 = vunpack.c.l.s4 1983009808
      %v10697 = vunpack.c.0.s8 %v10696
      %v10698 = vlaneseq
      %v10699 = vshrl.u32 %v10698, 7
      %v10700 = vsub.s32 %v10697, %v10699
      %v10701 = vrot.slane %v10604, %v10700
      %v10703 = vunpack.c.l.s4 1983009808
      %v10704 = vunpack.c.0.s8 %v10703
      %v10705 = vlaneseq
      %v10706 = vshrl.u32 %v10705, 7
      %v10707 = vsub.s32 %v10704, %v10706
      %v10708 = vrot.slane %v10694, %v10707
      %v10709 = vcombine.high %v10701, %v10701
      %v10710 = vcombine.high %v10708, %v10708
      %v10711 = vcombine.high %v10607, %v10607
      %v10713 = vunpack.c.l.s4 1983009808
      %v10714 = vunpack.c.0.s8 %v10713
      %v10715 = vlaneseq
      %v10716 = vshrl.u32 %v10715, 7
      %v10717 = vsub.s32 %v10714, %v10716
      %v10718 = vrot.slane %v10607, %v10717
      %v10720 = vunpack.c.l.s4 1983009808
      %v10721 = vunpack.c.0.s8 %v10720
      %v10722 = vlaneseq
      %v10723 = vshrl.u32 %v10722, 7
      %v10724 = vsub.s32 %v10721, %v10723
      %v10725 = vrot.slane %v10711, %v10724
      %v10726 = vcombine.high %v10718, %v10718
      %v10727 = vcombine.high %v10725, %v10725
      %v10728 = vcombine.high %v10610, %v10610
      %v10730 = vunpack.c.l.s4 1983009808
      %v10731 = vunpack.c.0.s8 %v10730
      %v10732 = vlaneseq
      %v10733 = vshrl.u32 %v10732, 7
      %v10734 = vsub.s32 %v10731, %v10733
      %v10735 = vrot.slane %v10610, %v10734
      %v10737 = vunpack.c.l.s4 1983009808
      %v10738 = vunpack.c.0.s8 %v10737
      %v10739 = vlaneseq
      %v10740 = vshrl.u32 %v10739, 7
      %v10741 = vsub.s32 %v10738, %v10740
      %v10742 = vrot.slane %v10728, %v10741
      %v10743 = vcombine.high %v10735, %v10735
      %v10744 = vcombine.high %v10742, %v10742
      %v10745 = vcombine.high %v10613, %v10613
      %v10747 = vunpack.c.l.s4 1983009808
      %v10748 = vunpack.c.0.s8 %v10747
      %v10749 = vlaneseq
      %v10750 = vshrl.u32 %v10749, 7
      %v10751 = vsub.s32 %v10748, %v10750
      %v10752 = vrot.slane %v10613, %v10751
      %v10754 = vunpack.c.l.s4 1983009808
      %v10755 = vunpack.c.0.s8 %v10754
      %v10756 = vlaneseq
      %v10757 = vshrl.u32 %v10756, 7
      %v10758 = vsub.s32 %v10755, %v10757
      %v10759 = vrot.slane %v10745, %v10758
      %v10760 = vcombine.high %v10752, %v10752
      %v10761 = vcombine.high %v10759, %v10759
      %v10762 = vcombine.high %v10616, %v10616
      %v10764 = vunpack.c.l.s4 1983009808
      %v10765 = vunpack.c.0.s8 %v10764
      %v10766 = vlaneseq
      %v10767 = vshrl.u32 %v10766, 7
      %v10768 = vsub.s32 %v10765, %v10767
      %v10769 = vrot.slane %v10616, %v10768
      %v10771 = vunpack.c.l.s4 1983009808
      %v10772 = vunpack.c.0.s8 %v10771
      %v10773 = vlaneseq
      %v10774 = vshrl.u32 %v10773, 7
      %v10775 = vsub.s32 %v10772, %v10774
      %v10776 = vrot.slane %v10762, %v10775
      %v10777 = vcombine.high %v10769, %v10769
      %v10778 = vcombine.high %v10776, %v10776
      %v10779 = vcombine.high %v10619, %v10619
      %v10781 = vunpack.c.l.s4 1983009808
      %v10782 = vunpack.c.0.s8 %v10781
      %v10783 = vlaneseq
      %v10784 = vshrl.u32 %v10783, 7
      %v10785 = vsub.s32 %v10782, %v10784
      %v10786 = vrot.slane %v10619, %v10785
      %v10788 = vunpack.c.l.s4 1983009808
      %v10789 = vunpack.c.0.s8 %v10788
      %v10790 = vlaneseq
      %v10791 = vshrl.u32 %v10790, 7
      %v10792 = vsub.s32 %v10789, %v10791
      %v10793 = vrot.slane %v10779, %v10792
      %v10794 = vcombine.high %v10786, %v10786
      %v10795 = vcombine.high %v10793, %v10793
      %v10796 = vcombine.high %v10622, %v10622
      %v10798 = vunpack.c.l.s4 1983009808
      %v10799 = vunpack.c.0.s8 %v10798
      %v10800 = vlaneseq
      %v10801 = vshrl.u32 %v10800, 7
      %v10802 = vsub.s32 %v10799, %v10801
      %v10803 = vrot.slane %v10622, %v10802
      %v10805 = vunpack.c.l.s4 1983009808
      %v10806 = vunpack.c.0.s8 %v10805
      %v10807 = vlaneseq
      %v10808 = vshrl.u32 %v10807, 7
      %v10809 = vsub.s32 %v10806, %v10808
      %v10810 = vrot.slane %v10796, %v10809
      %v10811 = vcombine.high %v10803, %v10803
      %v10812 = vcombine.high %v10810, %v10810
      %v10813 = vcombine.high %v10625, %v10625
      %v10815 = vunpack.c.l.s4 1983009808
      %v10816 = vunpack.c.0.s8 %v10815
      %v10817 = vlaneseq
      %v10818 = vshrl.u32 %v10817, 7
      %v10819 = vsub.s32 %v10816, %v10818
      %v10820 = vrot.slane %v10625, %v10819
      %v10822 = vunpack.c.l.s4 1983009808
      %v10823 = vunpack.c.0.s8 %v10822
      %v10824 = vlaneseq
      %v10825 = vshrl.u32 %v10824, 7
      %v10826 = vsub.s32 %v10823, %v10825
      %v10827 = vrot.slane %v10813, %v10826
      %v10828 = vcombine.high %v10820, %v10820
      %v10829 = vcombine.high %v10827, %v10827
      %v10830 = vcombine.high %v10628, %v10628
      %v10832 = vunpack.c.l.s4 1983009808
      %v10833 = vunpack.c.0.s8 %v10832
      %v10834 = vlaneseq
      %v10835 = vshrl.u32 %v10834, 7
      %v10836 = vsub.s32 %v10833, %v10835
      %v10837 = vrot.slane %v10628, %v10836
      %v10839 = vunpack.c.l.s4 1983009808
      %v10840 = vunpack.c.0.s8 %v10839
      %v10841 = vlaneseq
      %v10842 = vshrl.u32 %v10841, 7
      %v10843 = vsub.s32 %v10840, %v10842
      %v10844 = vrot.slane %v10830, %v10843
      %v10845 = vcombine.high %v10837, %v10837
      %v10846 = vcombine.high %v10844, %v10844
      %v10847 = vcombine.high %v10631, %v10631
      %v10849 = vunpack.c.l.s4 1983009808
      %v10850 = vunpack.c.0.s8 %v10849
      %v10851 = vlaneseq
      %v10852 = vshrl.u32 %v10851, 7
      %v10853 = vsub.s32 %v10850, %v10852
      %v10854 = vrot.slane %v10631, %v10853
      %v10856 = vunpack.c.l.s4 1983009808
      %v10857 = vunpack.c.0.s8 %v10856
      %v10858 = vlaneseq
      %v10859 = vshrl.u32 %v10858, 7
      %v10860 = vsub.s32 %v10857, %v10859
      %v10861 = vrot.slane %v10847, %v10860
      %v10862 = vcombine.high %v10854, %v10854
      %v10863 = vcombine.high %v10861, %v10861
      %v10864 = vcombine.high %v10634, %v10634
      %v10866 = vunpack.c.l.s4 1983009808
      %v10867 = vunpack.c.0.s8 %v10866
      %v10868 = vlaneseq
      %v10869 = vshrl.u32 %v10868, 7
      %v10870 = vsub.s32 %v10867, %v10869
      %v10871 = vrot.slane %v10634, %v10870
      %v10873 = vunpack.c.l.s4 1983009808
      %v10874 = vunpack.c.0.s8 %v10873
      %v10875 = vlaneseq
      %v10876 = vshrl.u32 %v10875, 7
      %v10877 = vsub.s32 %v10874, %v10876
      %v10878 = vrot.slane %v10864, %v10877
      %v10879 = vcombine.high %v10871, %v10871
      %v10880 = vcombine.high %v10878, %v10878
      %v10881 = vcombine.high %v10637, %v10637
      %v10883 = vunpack.c.l.s4 1983009808
      %v10884 = vunpack.c.0.s8 %v10883
      %v10885 = vlaneseq
      %v10886 = vshrl.u32 %v10885, 7
      %v10887 = vsub.s32 %v10884, %v10886
      %v10888 = vrot.slane %v10637, %v10887
      %v10890 = vunpack.c.l.s4 1983009808
      %v10891 = vunpack.c.0.s8 %v10890
      %v10892 = vlaneseq
      %v10893 = vshrl.u32 %v10892, 7
      %v10894 = vsub.s32 %v10891, %v10893
      %v10895 = vrot.slane %v10881, %v10894
      %v10896 = vcombine.high %v10888, %v10888
      %v10897 = vcombine.high %v10895, %v10895
      %v10898 = vcombine.high %v10640, %v10640
      %v10900 = vunpack.c.l.s4 1983009808
      %v10901 = vunpack.c.0.s8 %v10900
      %v10902 = vlaneseq
      %v10903 = vshrl.u32 %v10902, 7
      %v10904 = vsub.s32 %v10901, %v10903
      %v10905 = vrot.slane %v10640, %v10904
      %v10907 = vunpack.c.l.s4 1983009808
      %v10908 = vunpack.c.0.s8 %v10907
      %v10909 = vlaneseq
      %v10910 = vshrl.u32 %v10909, 7
      %v10911 = vsub.s32 %v10908, %v10910
      %v10912 = vrot.slane %v10898, %v10911
      %v10913 = vcombine.high %v10905, %v10905
      %v10914 = vcombine.high %v10912, %v10912
      %v10915 = vcombine.high %v10643, %v10643
      %v10917 = vunpack.c.l.s4 1983009808
      %v10918 = vunpack.c.0.s8 %v10917
      %v10919 = vlaneseq
      %v10920 = vshrl.u32 %v10919, 7
      %v10921 = vsub.s32 %v10918, %v10920
      %v10922 = vrot.slane %v10643, %v10921
      %v10924 = vunpack.c.l.s4 1983009808
      %v10925 = vunpack.c.0.s8 %v10924
      %v10926 = vlaneseq
      %v10927 = vshrl.u32 %v10926, 7
      %v10928 = vsub.s32 %v10925, %v10927
      %v10929 = vrot.slane %v10915, %v10928
      %v10930 = vcombine.high %v10922, %v10922
      %v10931 = vcombine.high %v10929, %v10929
      %vm10996 = vcmask 58368
      %v10997 = vsel %vm10996, %v10667, -inf
      %v10998 = vrot.slane %v10997, 4
      %v10999 = vmax.f32 %v10997, %v10998
      %v11000 = vrot.slane %v10999, 2
      %v11001 = vmax.f32 %v10999, %v11000
      %v11002 = vrot.slane %v11001, 1
      %v11003 = vmax.f32 %v11001, %v11002
      %v11004 = vsel %vm10996, %v10675, -inf
      %v11005 = vrot.slane %v11004, 4
      %v11006 = vmax.f32 %v11004, %v11005
      %v11007 = vrot.slane %v11006, 2
      %v11008 = vmax.f32 %v11006, %v11007
      %v11009 = vrot.slane %v11008, 1
      %v11010 = vmax.f32 %v11008, %v11009
      %v11011 = vsel %vm10996, %v10674, -inf
      %v11012 = vrot.slane %v11011, 4
      %v11013 = vmax.f32 %v11011, %v11012
      %v11014 = vrot.slane %v11013, 2
      %v11015 = vmax.f32 %v11013, %v11014
      %v11016 = vrot.slane %v11015, 1
      %v11017 = vmax.f32 %v11015, %v11016
      %v11018 = vsel %vm10996, %v10676, -inf
      %v11019 = vrot.slane %v11018, 4
      %v11020 = vmax.f32 %v11018, %v11019
      %v11021 = vrot.slane %v11020, 2
      %v11022 = vmax.f32 %v11020, %v11021
      %v11023 = vrot.slane %v11022, 1
      %v11024 = vmax.f32 %v11022, %v11023
      %v11025 = vsel %vm10996, %v10684, -inf
      %v11026 = vrot.slane %v11025, 4
      %v11027 = vmax.f32 %v11025, %v11026
      %v11028 = vrot.slane %v11027, 2
      %v11029 = vmax.f32 %v11027, %v11028
      %v11030 = vrot.slane %v11029, 1
      %v11031 = vmax.f32 %v11029, %v11030
      %v11032 = vsel %vm10996, %v10692, -inf
      %v11033 = vrot.slane %v11032, 4
      %v11034 = vmax.f32 %v11032, %v11033
      %v11035 = vrot.slane %v11034, 2
      %v11036 = vmax.f32 %v11034, %v11035
      %v11037 = vrot.slane %v11036, 1
      %v11038 = vmax.f32 %v11036, %v11037
      %v11039 = vsel %vm10996, %v10691, -inf
      %v11040 = vrot.slane %v11039, 4
      %v11041 = vmax.f32 %v11039, %v11040
      %v11042 = vrot.slane %v11041, 2
      %v11043 = vmax.f32 %v11041, %v11042
      %v11044 = vrot.slane %v11043, 1
      %v11045 = vmax.f32 %v11043, %v11044
      %v11046 = vsel %vm10996, %v10693, -inf
      %v11047 = vrot.slane %v11046, 4
      %v11048 = vmax.f32 %v11046, %v11047
      %v11049 = vrot.slane %v11048, 2
      %v11050 = vmax.f32 %v11048, %v11049
      %v11051 = vrot.slane %v11050, 1
      %v11052 = vmax.f32 %v11050, %v11051
      %v11053 = vsel %vm10996, %v10701, -inf
      %v11054 = vrot.slane %v11053, 4
      %v11055 = vmax.f32 %v11053, %v11054
      %v11056 = vrot.slane %v11055, 2
      %v11057 = vmax.f32 %v11055, %v11056
      %v11058 = vrot.slane %v11057, 1
      %v11059 = vmax.f32 %v11057, %v11058
      %v11060 = vsel %vm10996, %v10709, -inf
      %v11061 = vrot.slane %v11060, 4
      %v11062 = vmax.f32 %v11060, %v11061
      %v11063 = vrot.slane %v11062, 2
      %v11064 = vmax.f32 %v11062, %v11063
      %v11065 = vrot.slane %v11064, 1
      %v11066 = vmax.f32 %v11064, %v11065
      %v11067 = vsel %vm10996, %v10708, -inf
      %v11068 = vrot.slane %v11067, 4
      %v11069 = vmax.f32 %v11067, %v11068
      %v11070 = vrot.slane %v11069, 2
      %v11071 = vmax.f32 %v11069, %v11070
      %v11072 = vrot.slane %v11071, 1
      %v11073 = vmax.f32 %v11071, %v11072
      %v11074 = vsel %vm10996, %v10710, -inf
      %v11075 = vrot.slane %v11074, 4
      %v11076 = vmax.f32 %v11074, %v11075
      %v11077 = vrot.slane %v11076, 2
      %v11078 = vmax.f32 %v11076, %v11077
      %v11079 = vrot.slane %v11078, 1
      %v11080 = vmax.f32 %v11078, %v11079
      %v11081 = vsel %vm10996, %v10718, -inf
      %v11082 = vrot.slane %v11081, 4
      %v11083 = vmax.f32 %v11081, %v11082
      %v11084 = vrot.slane %v11083, 2
      %v11085 = vmax.f32 %v11083, %v11084
      %v11086 = vrot.slane %v11085, 1
      %v11087 = vmax.f32 %v11085, %v11086
      %v11088 = vsel %vm10996, %v10726, -inf
      %v11089 = vrot.slane %v11088, 4
      %v11090 = vmax.f32 %v11088, %v11089
      %v11091 = vrot.slane %v11090, 2
      %v11092 = vmax.f32 %v11090, %v11091
      %v11093 = vrot.slane %v11092, 1
      %v11094 = vmax.f32 %v11092, %v11093
      %v11095 = vsel %vm10996, %v10725, -inf
      %v11096 = vrot.slane %v11095, 4
      %v11097 = vmax.f32 %v11095, %v11096
      %v11098 = vrot.slane %v11097, 2
      %v11099 = vmax.f32 %v11097, %v11098
      %v11100 = vrot.slane %v11099, 1
      %v11101 = vmax.f32 %v11099, %v11100
      %v11102 = vsel %vm10996, %v10727, -inf
      %v11103 = vrot.slane %v11102, 4
      %v11104 = vmax.f32 %v11102, %v11103
      %v11105 = vrot.slane %v11104, 2
      %v11106 = vmax.f32 %v11104, %v11105
      %v11107 = vrot.slane %v11106, 1
      %v11108 = vmax.f32 %v11106, %v11107
      %v11109 = vsel %vm10996, %v10735, -inf
      %v11110 = vrot.slane %v11109, 4
      %v11111 = vmax.f32 %v11109, %v11110
      %v11112 = vrot.slane %v11111, 2
      %v11113 = vmax.f32 %v11111, %v11112
      %v11114 = vrot.slane %v11113, 1
      %v11115 = vmax.f32 %v11113, %v11114
      %v11116 = vsel %vm10996, %v10743, -inf
      %v11117 = vrot.slane %v11116, 4
      %v11118 = vmax.f32 %v11116, %v11117
      %v11119 = vrot.slane %v11118, 2
      %v11120 = vmax.f32 %v11118, %v11119
      %v11121 = vrot.slane %v11120, 1
      %v11122 = vmax.f32 %v11120, %v11121
      %v11123 = vsel %vm10996, %v10742, -inf
      %v11124 = vrot.slane %v11123, 4
      %v11125 = vmax.f32 %v11123, %v11124
      %v11126 = vrot.slane %v11125, 2
      %v11127 = vmax.f32 %v11125, %v11126
      %v11128 = vrot.slane %v11127, 1
      %v11129 = vmax.f32 %v11127, %v11128
      %v11130 = vsel %vm10996, %v10744, -inf
      %v11131 = vrot.slane %v11130, 4
      %v11132 = vmax.f32 %v11130, %v11131
      %v11133 = vrot.slane %v11132, 2
      %v11134 = vmax.f32 %v11132, %v11133
      %v11135 = vrot.slane %v11134, 1
      %v11136 = vmax.f32 %v11134, %v11135
      %v11137 = vsel %vm10996, %v10752, -inf
      %v11138 = vrot.slane %v11137, 4
      %v11139 = vmax.f32 %v11137, %v11138
      %v11140 = vrot.slane %v11139, 2
      %v11141 = vmax.f32 %v11139, %v11140
      %v11142 = vrot.slane %v11141, 1
      %v11143 = vmax.f32 %v11141, %v11142
      %v11144 = vsel %vm10996, %v10760, -inf
      %v11145 = vrot.slane %v11144, 4
      %v11146 = vmax.f32 %v11144, %v11145
      %v11147 = vrot.slane %v11146, 2
      %v11148 = vmax.f32 %v11146, %v11147
      %v11149 = vrot.slane %v11148, 1
      %v11150 = vmax.f32 %v11148, %v11149
      %v11151 = vsel %vm10996, %v10759, -inf
      %v11152 = vrot.slane %v11151, 4
      %v11153 = vmax.f32 %v11151, %v11152
      %v11154 = vrot.slane %v11153, 2
      %v11155 = vmax.f32 %v11153, %v11154
      %v11156 = vrot.slane %v11155, 1
      %v11157 = vmax.f32 %v11155, %v11156
      %v11158 = vsel %vm10996, %v10761, -inf
      %v11159 = vrot.slane %v11158, 4
      %v11160 = vmax.f32 %v11158, %v11159
      %v11161 = vrot.slane %v11160, 2
      %v11162 = vmax.f32 %v11160, %v11161
      %v11163 = vrot.slane %v11162, 1
      %v11164 = vmax.f32 %v11162, %v11163
      %v11165 = vsel %vm10996, %v10769, -inf
      %v11166 = vrot.slane %v11165, 4
      %v11167 = vmax.f32 %v11165, %v11166
      %v11168 = vrot.slane %v11167, 2
      %v11169 = vmax.f32 %v11167, %v11168
      %v11170 = vrot.slane %v11169, 1
      %v11171 = vmax.f32 %v11169, %v11170
      %v11172 = vsel %vm10996, %v10777, -inf
      %v11173 = vrot.slane %v11172, 4
      %v11174 = vmax.f32 %v11172, %v11173
      %v11175 = vrot.slane %v11174, 2
      %v11176 = vmax.f32 %v11174, %v11175
      %v11177 = vrot.slane %v11176, 1
      %v11178 = vmax.f32 %v11176, %v11177
      %v11179 = vsel %vm10996, %v10776, -inf
      %v11180 = vrot.slane %v11179, 4
      %v11181 = vmax.f32 %v11179, %v11180
      %v11182 = vrot.slane %v11181, 2
      %v11183 = vmax.f32 %v11181, %v11182
      %v11184 = vrot.slane %v11183, 1
      %v11185 = vmax.f32 %v11183, %v11184
      %v11186 = vsel %vm10996, %v10778, -inf
      %v11187 = vrot.slane %v11186, 4
      %v11188 = vmax.f32 %v11186, %v11187
      %v11189 = vrot.slane %v11188, 2
      %v11190 = vmax.f32 %v11188, %v11189
      %v11191 = vrot.slane %v11190, 1
      %v11192 = vmax.f32 %v11190, %v11191
      %v11193 = vsel %vm10996, %v10786, -inf
      %v11194 = vrot.slane %v11193, 4
      %v11195 = vmax.f32 %v11193, %v11194
      %v11196 = vrot.slane %v11195, 2
      %v11197 = vmax.f32 %v11195, %v11196
      %v11198 = vrot.slane %v11197, 1
      %v11199 = vmax.f32 %v11197, %v11198
      %v11200 = vsel %vm10996, %v10794, -inf
      %v11201 = vrot.slane %v11200, 4
      %v11202 = vmax.f32 %v11200, %v11201
      %v11203 = vrot.slane %v11202, 2
      %v11204 = vmax.f32 %v11202, %v11203
      %v11205 = vrot.slane %v11204, 1
      %v11206 = vmax.f32 %v11204, %v11205
      %v11207 = vsel %vm10996, %v10793, -inf
      %v11208 = vrot.slane %v11207, 4
      %v11209 = vmax.f32 %v11207, %v11208
      %v11210 = vrot.slane %v11209, 2
      %v11211 = vmax.f32 %v11209, %v11210
      %v11212 = vrot.slane %v11211, 1
      %v11213 = vmax.f32 %v11211, %v11212
      %v11214 = vsel %vm10996, %v10795, -inf
      %v11215 = vrot.slane %v11214, 4
      %v11216 = vmax.f32 %v11214, %v11215
      %v11217 = vrot.slane %v11216, 2
      %v11218 = vmax.f32 %v11216, %v11217
      %v11219 = vrot.slane %v11218, 1
      %v11220 = vmax.f32 %v11218, %v11219
      %v11221 = vsel %vm10996, %v10803, -inf
      %v11222 = vrot.slane %v11221, 4
      %v11223 = vmax.f32 %v11221, %v11222
      %v11224 = vrot.slane %v11223, 2
      %v11225 = vmax.f32 %v11223, %v11224
      %v11226 = vrot.slane %v11225, 1
      %v11227 = vmax.f32 %v11225, %v11226
      %v11228 = vsel %vm10996, %v10811, -inf
      %v11229 = vrot.slane %v11228, 4
      %v11230 = vmax.f32 %v11228, %v11229
      %v11231 = vrot.slane %v11230, 2
      %v11232 = vmax.f32 %v11230, %v11231
      %v11233 = vrot.slane %v11232, 1
      %v11234 = vmax.f32 %v11232, %v11233
      %v11235 = vsel %vm10996, %v10810, -inf
      %v11236 = vrot.slane %v11235, 4
      %v11237 = vmax.f32 %v11235, %v11236
      %v11238 = vrot.slane %v11237, 2
      %v11239 = vmax.f32 %v11237, %v11238
      %v11240 = vrot.slane %v11239, 1
      %v11241 = vmax.f32 %v11239, %v11240
      %v11242 = vsel %vm10996, %v10812, -inf
      %v11243 = vrot.slane %v11242, 4
      %v11244 = vmax.f32 %v11242, %v11243
      %v11245 = vrot.slane %v11244, 2
      %v11246 = vmax.f32 %v11244, %v11245
      %v11247 = vrot.slane %v11246, 1
      %v11248 = vmax.f32 %v11246, %v11247
      %v11249 = vsel %vm10996, %v10820, -inf
      %v11250 = vrot.slane %v11249, 4
      %v11251 = vmax.f32 %v11249, %v11250
      %v11252 = vrot.slane %v11251, 2
      %v11253 = vmax.f32 %v11251, %v11252
      %v11254 = vrot.slane %v11253, 1
      %v11255 = vmax.f32 %v11253, %v11254
      %v11256 = vsel %vm10996, %v10828, -inf
      %v11257 = vrot.slane %v11256, 4
      %v11258 = vmax.f32 %v11256, %v11257
      %v11259 = vrot.slane %v11258, 2
      %v11260 = vmax.f32 %v11258, %v11259
      %v11261 = vrot.slane %v11260, 1
      %v11262 = vmax.f32 %v11260, %v11261
      %v11263 = vsel %vm10996, %v10827, -inf
      %v11264 = vrot.slane %v11263, 4
      %v11265 = vmax.f32 %v11263, %v11264
      %v11266 = vrot.slane %v11265, 2
      %v11267 = vmax.f32 %v11265, %v11266
      %v11268 = vrot.slane %v11267, 1
      %v11269 = vmax.f32 %v11267, %v11268
      %v11270 = vsel %vm10996, %v10829, -inf
      %v11271 = vrot.slane %v11270, 4
      %v11272 = vmax.f32 %v11270, %v11271
      %v11273 = vrot.slane %v11272, 2
      %v11274 = vmax.f32 %v11272, %v11273
      %v11275 = vrot.slane %v11274, 1
      %v11276 = vmax.f32 %v11274, %v11275
      %v11277 = vsel %vm10996, %v10837, -inf
      %v11278 = vrot.slane %v11277, 4
      %v11279 = vmax.f32 %v11277, %v11278
      %v11280 = vrot.slane %v11279, 2
      %v11281 = vmax.f32 %v11279, %v11280
      %v11282 = vrot.slane %v11281, 1
      %v11283 = vmax.f32 %v11281, %v11282
      %v11284 = vsel %vm10996, %v10845, -inf
      %v11285 = vrot.slane %v11284, 4
      %v11286 = vmax.f32 %v11284, %v11285
      %v11287 = vrot.slane %v11286, 2
      %v11288 = vmax.f32 %v11286, %v11287
      %v11289 = vrot.slane %v11288, 1
      %v11290 = vmax.f32 %v11288, %v11289
      %v11291 = vsel %vm10996, %v10844, -inf
      %v11292 = vrot.slane %v11291, 4
      %v11293 = vmax.f32 %v11291, %v11292
      %v11294 = vrot.slane %v11293, 2
      %v11295 = vmax.f32 %v11293, %v11294
      %v11296 = vrot.slane %v11295, 1
      %v11297 = vmax.f32 %v11295, %v11296
      %v11298 = vsel %vm10996, %v10846, -inf
      %v11299 = vrot.slane %v11298, 4
      %v11300 = vmax.f32 %v11298, %v11299
      %v11301 = vrot.slane %v11300, 2
      %v11302 = vmax.f32 %v11300, %v11301
      %v11303 = vrot.slane %v11302, 1
      %v11304 = vmax.f32 %v11302, %v11303
      %v11305 = vsel %vm10996, %v10854, -inf
      %v11306 = vrot.slane %v11305, 4
      %v11307 = vmax.f32 %v11305, %v11306
      %v11308 = vrot.slane %v11307, 2
      %v11309 = vmax.f32 %v11307, %v11308
      %v11310 = vrot.slane %v11309, 1
      %v11311 = vmax.f32 %v11309, %v11310
      %v11312 = vsel %vm10996, %v10862, -inf
      %v11313 = vrot.slane %v11312, 4
      %v11314 = vmax.f32 %v11312, %v11313
      %v11315 = vrot.slane %v11314, 2
      %v11316 = vmax.f32 %v11314, %v11315
      %v11317 = vrot.slane %v11316, 1
      %v11318 = vmax.f32 %v11316, %v11317
      %v11319 = vsel %vm10996, %v10861, -inf
      %v11320 = vrot.slane %v11319, 4
      %v11321 = vmax.f32 %v11319, %v11320
      %v11322 = vrot.slane %v11321, 2
      %v11323 = vmax.f32 %v11321, %v11322
      %v11324 = vrot.slane %v11323, 1
      %v11325 = vmax.f32 %v11323, %v11324
      %v11326 = vsel %vm10996, %v10863, -inf
      %v11327 = vrot.slane %v11326, 4
      %v11328 = vmax.f32 %v11326, %v11327
      %v11329 = vrot.slane %v11328, 2
      %v11330 = vmax.f32 %v11328, %v11329
      %v11331 = vrot.slane %v11330, 1
      %v11332 = vmax.f32 %v11330, %v11331
      %v11333 = vsel %vm10996, %v10871, -inf
      %v11334 = vrot.slane %v11333, 4
      %v11335 = vmax.f32 %v11333, %v11334
      %v11336 = vrot.slane %v11335, 2
      %v11337 = vmax.f32 %v11335, %v11336
      %v11338 = vrot.slane %v11337, 1
      %v11339 = vmax.f32 %v11337, %v11338
      %v11340 = vsel %vm10996, %v10879, -inf
      %v11341 = vrot.slane %v11340, 4
      %v11342 = vmax.f32 %v11340, %v11341
      %v11343 = vrot.slane %v11342, 2
      %v11344 = vmax.f32 %v11342, %v11343
      %v11345 = vrot.slane %v11344, 1
      %v11346 = vmax.f32 %v11344, %v11345
      %v11347 = vsel %vm10996, %v10878, -inf
      %v11348 = vrot.slane %v11347, 4
      %v11349 = vmax.f32 %v11347, %v11348
      %v11350 = vrot.slane %v11349, 2
      %v11351 = vmax.f32 %v11349, %v11350
      %v11352 = vrot.slane %v11351, 1
      %v11353 = vmax.f32 %v11351, %v11352
      %v11354 = vsel %vm10996, %v10880, -inf
      %v11355 = vrot.slane %v11354, 4
      %v11356 = vmax.f32 %v11354, %v11355
      %v11357 = vrot.slane %v11356, 2
      %v11358 = vmax.f32 %v11356, %v11357
      %v11359 = vrot.slane %v11358, 1
      %v11360 = vmax.f32 %v11358, %v11359
      %v11361 = vsel %vm10996, %v10888, -inf
      %v11362 = vrot.slane %v11361, 4
      %v11363 = vmax.f32 %v11361, %v11362
      %v11364 = vrot.slane %v11363, 2
      %v11365 = vmax.f32 %v11363, %v11364
      %v11366 = vrot.slane %v11365, 1
      %v11367 = vmax.f32 %v11365, %v11366
      %v11368 = vsel %vm10996, %v10896, -inf
      %v11369 = vrot.slane %v11368, 4
      %v11370 = vmax.f32 %v11368, %v11369
      %v11371 = vrot.slane %v11370, 2
      %v11372 = vmax.f32 %v11370, %v11371
      %v11373 = vrot.slane %v11372, 1
      %v11374 = vmax.f32 %v11372, %v11373
      %v11375 = vsel %vm10996, %v10895, -inf
      %v11376 = vrot.slane %v11375, 4
      %v11377 = vmax.f32 %v11375, %v11376
      %v11378 = vrot.slane %v11377, 2
      %v11379 = vmax.f32 %v11377, %v11378
      %v11380 = vrot.slane %v11379, 1
      %v11381 = vmax.f32 %v11379, %v11380
      %v11382 = vsel %vm10996, %v10897, -inf
      %v11383 = vrot.slane %v11382, 4
      %v11384 = vmax.f32 %v11382, %v11383
      %v11385 = vrot.slane %v11384, 2
      %v11386 = vmax.f32 %v11384, %v11385
      %v11387 = vrot.slane %v11386, 1
      %v11388 = vmax.f32 %v11386, %v11387
      %v11389 = vsel %vm10996, %v10905, -inf
      %v11390 = vrot.slane %v11389, 4
      %v11391 = vmax.f32 %v11389, %v11390
      %v11392 = vrot.slane %v11391, 2
      %v11393 = vmax.f32 %v11391, %v11392
      %v11394 = vrot.slane %v11393, 1
      %v11395 = vmax.f32 %v11393, %v11394
      %v11396 = vsel %vm10996, %v10913, -inf
      %v11397 = vrot.slane %v11396, 4
      %v11398 = vmax.f32 %v11396, %v11397
      %v11399 = vrot.slane %v11398, 2
      %v11400 = vmax.f32 %v11398, %v11399
      %v11401 = vrot.slane %v11400, 1
      %v11402 = vmax.f32 %v11400, %v11401
      %v11403 = vsel %vm10996, %v10912, -inf
      %v11404 = vrot.slane %v11403, 4
      %v11405 = vmax.f32 %v11403, %v11404
      %v11406 = vrot.slane %v11405, 2
      %v11407 = vmax.f32 %v11405, %v11406
      %v11408 = vrot.slane %v11407, 1
      %v11409 = vmax.f32 %v11407, %v11408
      %v11410 = vsel %vm10996, %v10914, -inf
      %v11411 = vrot.slane %v11410, 4
      %v11412 = vmax.f32 %v11410, %v11411
      %v11413 = vrot.slane %v11412, 2
      %v11414 = vmax.f32 %v11412, %v11413
      %v11415 = vrot.slane %v11414, 1
      %v11416 = vmax.f32 %v11414, %v11415
      %v11417 = vsel %vm10996, %v10922, -inf
      %v11418 = vrot.slane %v11417, 4
      %v11419 = vmax.f32 %v11417, %v11418
      %v11420 = vrot.slane %v11419, 2
      %v11421 = vmax.f32 %v11419, %v11420
      %v11422 = vrot.slane %v11421, 1
      %v11423 = vmax.f32 %v11421, %v11422
      %v11424 = vsel %vm10996, %v10930, -inf
      %v11425 = vrot.slane %v11424, 4
      %v11426 = vmax.f32 %v11424, %v11425
      %v11427 = vrot.slane %v11426, 2
      %v11428 = vmax.f32 %v11426, %v11427
      %v11429 = vrot.slane %v11428, 1
      %v11430 = vmax.f32 %v11428, %v11429
      %v11431 = vsel %vm10996, %v10929, -inf
      %v11432 = vrot.slane %v11431, 4
      %v11433 = vmax.f32 %v11431, %v11432
      %v11434 = vrot.slane %v11433, 2
      %v11435 = vmax.f32 %v11433, %v11434
      %v11436 = vrot.slane %v11435, 1
      %v11437 = vmax.f32 %v11435, %v11436
      %v11438 = vsel %vm10996, %v10931, -inf
      %v11439 = vrot.slane %v11438, 4
      %v11440 = vmax.f32 %v11438, %v11439
      %v11441 = vrot.slane %v11440, 2
      %v11442 = vmax.f32 %v11440, %v11441
      %v11443 = vrot.slane %v11442, 1
      %v11444 = vmax.f32 %v11442, %v11443
      %vm11509 = vcmask 1041409
      %v11510 = vsel %vm11509, %v11010, %v11003
      %vm11511 = vcmask 1042434
      %v11512 = vsel %vm11511, %v11017, %v11510
      %vm11513 = vcmask 1043459
      %v11514 = vsel %vm11513, %v11024, %v11512
      %vm11515 = vcmask 1044484
      %v11516 = vsel %vm11515, %v11031, %v11514
      %vm11517 = vcmask 1045509
      %v11518 = vsel %vm11517, %v11038, %v11516
      %vm11519 = vcmask 1046534
      %v11520 = vsel %vm11519, %v11045, %v11518
      %vm11521 = vcmask 1047559
      %v11522 = vsel %vm11521, %v11052, %v11520
      %v11523 = vsel %vm11509, %v11066, %v11059
      %v11524 = vsel %vm11511, %v11073, %v11523
      %v11525 = vsel %vm11513, %v11080, %v11524
      %v11526 = vsel %vm11515, %v11087, %v11525
      %v11527 = vsel %vm11517, %v11094, %v11526
      %v11528 = vsel %vm11519, %v11101, %v11527
      %v11529 = vsel %vm11521, %v11108, %v11528
      %v11530 = vsel %vm11509, %v11122, %v11115
      %v11531 = vsel %vm11511, %v11129, %v11530
      %v11532 = vsel %vm11513, %v11136, %v11531
      %v11533 = vsel %vm11515, %v11143, %v11532
      %v11534 = vsel %vm11517, %v11150, %v11533
      %v11535 = vsel %vm11519, %v11157, %v11534
      %v11536 = vsel %vm11521, %v11164, %v11535
      %v11537 = vsel %vm11509, %v11178, %v11171
      %v11538 = vsel %vm11511, %v11185, %v11537
      %v11539 = vsel %vm11513, %v11192, %v11538
      %v11540 = vsel %vm11515, %v11199, %v11539
      %v11541 = vsel %vm11517, %v11206, %v11540
      %v11542 = vsel %vm11519, %v11213, %v11541
      %v11543 = vsel %vm11521, %v11220, %v11542
      %v11544 = vsel %vm11509, %v11234, %v11227
      %v11545 = vsel %vm11511, %v11241, %v11544
      %v11546 = vsel %vm11513, %v11248, %v11545
      %v11547 = vsel %vm11515, %v11255, %v11546
      %v11548 = vsel %vm11517, %v11262, %v11547
      %v11549 = vsel %vm11519, %v11269, %v11548
      %v11550 = vsel %vm11521, %v11276, %v11549
      %v11551 = vsel %vm11509, %v11290, %v11283
      %v11552 = vsel %vm11511, %v11297, %v11551
      %v11553 = vsel %vm11513, %v11304, %v11552
      %v11554 = vsel %vm11515, %v11311, %v11553
      %v11555 = vsel %vm11517, %v11318, %v11554
      %v11556 = vsel %vm11519, %v11325, %v11555
      %v11557 = vsel %vm11521, %v11332, %v11556
      %v11558 = vsel %vm11509, %v11346, %v11339
      %v11559 = vsel %vm11511, %v11353, %v11558
      %v11560 = vsel %vm11513, %v11360, %v11559
      %v11561 = vsel %vm11515, %v11367, %v11560
      %v11562 = vsel %vm11517, %v11374, %v11561
      %v11563 = vsel %vm11519, %v11381, %v11562
      %v11564 = vsel %vm11521, %v11388, %v11563
      %v11565 = vsel %vm11509, %v11402, %v11395
      %v11566 = vsel %vm11511, %v11409, %v11565
      %v11567 = vsel %vm11513, %v11416, %v11566
      %v11568 = vsel %vm11515, %v11423, %v11567
      %v11569 = vsel %vm11517, %v11430, %v11568
      %v11570 = vsel %vm11519, %v11437, %v11569
      %v11571 = vsel %vm11521, %v11444, %v11570
      %11580 = vst.msk [vmem:[%s224] sm:$0xff] %vm6456, %v11522
      %11581 = vst.msk [vmem:[%s224 + $0x8] sm:$0xff] %vm6456, %v11529
      %11582 = vst.msk [vmem:[%s224 + $0x10] sm:$0xff] %vm6456, %v11536
      %11583 = vst.msk [vmem:[%s224 + $0x18] sm:$0xff] %vm6456, %v11543
      %11584 = vst.msk [vmem:[%s224 + $0x20] sm:$0xff] %vm6456, %v11550
      %11585 = vst.msk [vmem:[%s224 + $0x28] sm:$0xff] %vm6456, %v11557
      %11586 = vst.msk [vmem:[%s224 + $0x30] sm:$0xff] %vm6456, %v11564
      %11587 = vst.msk [vmem:[%s224 + $0x38] sm:$0xff] %vm6456, %v11571
      %p11588 = scmp.lt.s32.totalorder %s16, 1
      %s11589 = scalar_select %p11588, %s16, 1
      %s11590 = smul.addr %s11589, 8
      %s11591 = smul.addr %s11590, 8
      %s11592 = scalar_lea.vmem %s5, %s11591
      // Predicated region
      $region41: #{vgg_block_forward.1} parent=39 // pred_check
        %p11593 = pneg %p144
      $region42: #{vgg_block_forward.1} parent=39 // pred_check_branch
        %11595 = sbr.rel (%p11593) target = $region44
      $region43: #{vgg_block_forward.1} parent=39 // pred_region
        _
      $region44: #{vgg_block_forward.1} parent=39 // pred_fallthru
        _
    $region40: #{vgg_block_forward.1} parent=5 // pred_fallthru
      _
    %p11596 = scmp.le.s32.totalorder 2, %s11
    // Predicated region
    $region45: #{vgg_block_forward.1} parent=5 // pred_check
      %p11597 = pneg %p11596
    $region46: #{vgg_block_forward.1} parent=5 // pred_check_branch
      %11599 = sbr.rel (%p11597) target = $region48
    $region47: #{vgg_block_forward.1} parent=5 // pred_region
      %s11600 = ssub.s32 %s11, 2
      // Predicated region
      $region49: #{vgg_block_forward.1} parent=47 // pred_check
        %p11601 = pneg %p150
      $region50: #{vgg_block_forward.1} parent=47 // pred_check_branch
        %11603 = sbr.rel (%p11601) target = $region52
      $region51: #{vgg_block_forward.1} parent=47 // pred_region
        %p11604 = scmp.lt.s32.totalorder %s17, 1
        %s11605 = scalar_select %p11604, %s17, 1
        %s11606 = smul.addr %s11605, 8
        %s11607 = smul.addr %s11606, 8
        %s11608 = scalar_lea.vmem %s5, %s11607
      $region52: #{vgg_block_forward.1} parent=47 // pred_fallthru
        _
    $region48: #{vgg_block_forward.1} parent=5 // pred_fallthru
      _
  $region6: #{vgg_block_forward.1} parent=0 // loop_footer
    %s15 = sadd.s32 1, %s11
  $region7: #{vgg_block_forward.1} parent=0 // loop_footer_branch
    %10 = sbr.rel target = $region3
  $region8: #{vgg_block_forward.1} parent=0 // loop_exit
    _

</llo_original>
